<compile_context>
chip_gen: v5e
topology: v5e:2x2
jax: 0.10.0
libtpu: 0.0.40
codegen_flags: <defaults>
</compile_context>

<pallas_src>
import functools
import math

import jax
import jax.numpy as jnp
from jax.experimental import pallas as pl
from jax.experimental.pallas import tpu as pltpu


# ----------------------------------------------------------------------------
# helpers
# ----------------------------------------------------------------------------
def _round_up(x, m):
    return ((x + m - 1) // m) * m


# Safe on v7x's 64 MiB physical VMEM, generous on v5e/v6e; worst-case working
# set of the kernels below is only a few MiB.
_VMEM_LIMIT = 48 * 1024 * 1024
_ACT_DTYPE = jnp.bfloat16          # inter-layer activation dtype (end-to-end)
_MIN_LANE_M = 128                  # below this spatial size, use plain jnp


def _apply_act(v, activation):
    """Elementwise activation usable both inside Pallas kernels and in jnp glue."""
    if activation == "lrelu":
        return jnp.where(v >= 0, v, 0.2 * v)
    if activation == "relu":
        return jnp.maximum(v, 0.0)
    if activation == "sigmoid":
        return 1.0 / (1.0 + jnp.exp(-v))     # exact (no approx reciprocal)
    if activation == "tanh":
        return jnp.tanh(v)
    return v


# ----------------------------------------------------------------------------
# Pallas kernels
# ----------------------------------------------------------------------------
def _matmul_kernel(w_ref, x_ref, bias_ref, o_ref, acc_ref, *, activation):
    """One (tco, tm) output tile; K is the innermost ("arbitrary") grid axis."""
    @pl.when(pl.program_id(2) == 0)
    def _():
        acc_ref[...] = jnp.zeros_like(acc_ref)

    acc_ref[...] += jnp.dot(w_ref[...], x_ref[...],
                            preferred_element_type=jnp.float32)

    @pl.when(pl.program_id(2) == pl.num_programs(2) - 1)
    def _():
        acc = acc_ref[...] + bias_ref[...]
        o_ref[...] = _apply_act(acc, activation).astype(o_ref.dtype)


def _pick_m_tile(mp):
    """Pick a lane-dim tile that divides mp (multiple of 128) and, when
    possible, yields >=2 blocks so both v7x TensorCores stay busy."""
    tile = 128
    for cand in (512, 384, 256, 128):
        if cand <= mp and mp % cand == 0:
            tile = cand
            break
    if mp // tile < 2:
        for cand in (256, 128):
            if mp % cand == 0 and mp // cand >= 2:
                tile = cand
                break
    return tile


def matmul_bias_act(wm, cols, bias, activation=None):
    """Channels-first fused conv GEMM: out[Cout, M] = wm[Cout, K] @ cols[K, M].

    bf16 MXU inputs, f32 VMEM accumulator, bf16 output.  Spatial M is the lane
    axis (lane-dense stores even for tiny Cout); Cout pads only to a multiple
    of 16 sublanes.  tk divides Kp, so K <= 2048 needs a single K step.
    """
    Cout, K = wm.shape
    _, M = cols.shape

    Coutp = _round_up(Cout, 16)
    if Coutp > 256:
        tco = 128
        Coutp = _round_up(Coutp, tco)
    else:
        tco = Coutp

    Kp = _round_up(K, 128)
    if Kp <= 2048:
        tk = Kp
    else:
        tk = 2048
        while Kp % tk:
            tk -= 128

    Mp = _round_up(M, 128)
    tm = _pick_m_tile(Mp)

    w_p = jnp.pad(wm.astype(jnp.bfloat16), ((0, Coutp - Cout), (0, Kp - K)))
    x_p = jnp.pad(cols.astype(jnp.bfloat16), ((0, Kp - K), (0, Mp - M)))
    b_p = jnp.pad(bias.astype(jnp.float32).reshape(Cout, 1),
                  ((0, Coutp - Cout), (0, 0)))

    grid = (Coutp // tco, Mp // tm, Kp // tk)
    kern = functools.partial(_matmul_kernel, activation=activation)
    trans = Coutp * Mp if activation in ("sigmoid", "tanh") else 0
    cost = pl.CostEstimate(
        flops=2 * Coutp * Mp * Kp,
        transcendentals=trans,
        bytes_accessed=2 * Coutp * Kp + 2 * Kp * Mp + 2 * Coutp * Mp)

    out = pl.pallas_call(
        kern,
        out_shape=jax.ShapeDtypeStruct((Coutp, Mp), _ACT_DTYPE),
        grid=grid,
        in_specs=[
            pl.BlockSpec((tco, tk), lambda i, j, k: (i, k)),
            pl.BlockSpec((tk, tm), lambda i, j, k: (k, j)),
            pl.BlockSpec((tco, 1), lambda i, j, k: (i, 0)),
        ],
        out_specs=pl.BlockSpec((tco, tm), lambda i, j, k: (i, j)),
        scratch_shapes=[pltpu.VMEM((tco, tm), jnp.float32)],
        compiler_params=pltpu.CompilerParams(
            dimension_semantics=("parallel", "parallel", "arbitrary"),
            vmem_limit_bytes=_VMEM_LIMIT),
        cost_estimate=cost,
    )(w_p, x_p, b_p)
    return out[:Cout, :M]


def _inorm_lrelu_kernel(x_ref, g_ref, b_ref, o_ref, *, inv_l, eps, slope):
    """Single-read statistics (sum / sum-of-squares) + normalize + affine + LReLU."""
    x = x_ref[...].astype(jnp.float32)
    s1 = jnp.sum(x, axis=1, keepdims=True)
    s2 = jnp.sum(x * x, axis=1, keepdims=True)
    mean = s1 * inv_l
    var = jnp.maximum(s2 * inv_l - mean * mean, 0.0)
    y = (x - mean) * jax.lax.rsqrt(var + eps)
    y = y * g_ref[...] + b_ref[...]
    o_ref[...] = jnp.where(y >= 0, y, slope * y).astype(o_ref.dtype)


def instance_norm_lrelu(x, gamma, beta, eps=1e-5, slope=0.2):
    """InstanceNorm2d (biased var, eps=1e-5, affine) fused with LeakyReLU(0.2).

    bf16 in / bf16 out, f32 statistics; row-tiled over (N*C).
    """
    N, C, H, W = x.shape
    R, L = N * C, H * W

    if L < _MIN_LANE_M:
        # tiny feature maps (bottleneck 2x2 / 4x4): a kernel launch costs more
        # than the op itself.
        xf = x.astype(jnp.float32)
        mean = xf.mean(axis=(2, 3), keepdims=True)
        var = jnp.mean((xf - mean) ** 2, axis=(2, 3), keepdims=True)
        y = (xf - mean) * jax.lax.rsqrt(var + eps)
        y = y * gamma.reshape(1, C, 1, 1) + beta.reshape(1, C, 1, 1)
        return jnp.where(y >= 0, y, slope * y).astype(_ACT_DTYPE)

    xm = x.astype(_ACT_DTYPE).reshape(R, L)
    g = jnp.tile(gamma, N).reshape(R, 1).astype(jnp.float32)
    b = jnp.tile(beta, N).reshape(R, 1).astype(jnp.float32)

    budget = 4 * 1024 * 1024                      # per-block bf16 bytes
    tr = max(16, (budget // (L * 2)) // 16 * 16)
    tr = min(tr, _round_up(R, 16))
    Rp = _round_up(R, tr)
    xm = jnp.pad(xm, ((0, Rp - R), (0, 0)))
    g = jnp.pad(g, ((0, Rp - R), (0, 0)))
    b = jnp.pad(b, ((0, Rp - R), (0, 0)))

    kern = functools.partial(_inorm_lrelu_kernel, inv_l=1.0 / L, eps=eps,
                             slope=slope)
    y = pl.pallas_call(
        kern,
        out_shape=jax.ShapeDtypeStruct((Rp, L), _ACT_DTYPE),
        grid=(Rp // tr,),
        in_specs=[
            pl.BlockSpec((tr, L), lambda i: (i, 0)),
            pl.BlockSpec((tr, 1), lambda i: (i, 0)),
            pl.BlockSpec((tr, 1), lambda i: (i, 0)),
        ],
        out_specs=pl.BlockSpec((tr, L), lambda i: (i, 0)),
        compiler_params=pltpu.CompilerParams(
            dimension_semantics=("parallel",),
            vmem_limit_bytes=_VMEM_LIMIT),
    )(xm, g, b)
    return y[:R].reshape(N, C, H, W)


# ----------------------------------------------------------------------------
# glue ops (deliberately left to XLA per the performance review)
# ----------------------------------------------------------------------------
def avg_pool_3s2p1(x):
    """nn.AvgPool2d(3, 2, 1), count_include_pad=True.

    Nine strided-slice adds fuse cleanly in XLA; the previous Pallas version
    materialized a [9, R, L] stack in HBM (~18x the necessary traffic).
    """
    N, C, H, W = x.shape
    Ho = (H - 1) // 2 + 1
    Wo = (W - 1) // 2 + 1
    xp = jnp.pad(x, ((0, 0), (0, 0), (1, 1), (1, 1)))
    acc = jnp.zeros((N, C, Ho, Wo), jnp.float32)
    for kh in range(3):
        for kw in range(3):
            acc = acc + xp[:, :, kh:kh + 2 * Ho:2,
                           kw:kw + 2 * Wo:2].astype(jnp.float32)
    return (acc * (1.0 / 9.0)).astype(_ACT_DTYPE)


def upsample_bilinear_x2(x):
    """nn.UpsamplingBilinear2d(scale_factor=2) -> align_corners=True."""
    N, C, H, W = x.shape

    def interp_matrix(in_size, out_size):
        if in_size == 1:
            return jnp.ones((out_size, 1), jnp.float32)
        pos = jnp.arange(out_size, dtype=jnp.float32) * (in_size - 1) / (out_size - 1)
        lo = jnp.floor(pos).astype(jnp.int32)
        hi = jnp.minimum(lo + 1, in_size - 1)
        w_hi = pos - lo.astype(jnp.float32)
        w_lo = 1.0 - w_hi
        m = jnp.zeros((out_size, in_size), jnp.float32)
        rows = jnp.arange(out_size)
        m = m.at[rows, lo].add(w_lo)
        m = m.at[rows, hi].add(w_hi)
        return m

    mh = interp_matrix(H, 2 * H)
    mw = interp_matrix(W, 2 * W)
    y = jnp.einsum("oh,nchw,pw->ncop", mh, x.astype(jnp.float32), mw)
    return y.astype(_ACT_DTYPE)


# ----------------------------------------------------------------------------
# conv2d = im2col (bf16 glue) + channels-first tiled Pallas GEMM
# ----------------------------------------------------------------------------
def conv2d(x, w, b=None, stride=1, padding=0, groups=1, activation=None):
    """Exact nn.Conv2d semantics (NCHW, cross-correlation)."""
    N, Cin, H, W = x.shape
    Cout, Cin_g, KH, KW = w.shape
    Hout = (H + 2 * padding - KH) // stride + 1
    Wout = (W + 2 * padding - KW) // stride + 1
    M = N * Hout * Wout
    K2 = KH * KW
    K = Cin * K2

    x = x.astype(_ACT_DTYPE)          # cast BEFORE building patches

    if KH == 1 and KW == 1 and stride == 1 and padding == 0:
        cols = jnp.moveaxis(x.reshape(N, Cin, H * W), 0, 1).reshape(Cin, M)
    else:
        # TODO(synk): im2col is still materialized by XLA (bf16, 9x activation
        # bytes for 3x3 convs); a halo-resident manual-DMA tile would remove it.
        xp = jnp.pad(x, ((0, 0), (0, 0), (padding, padding), (padding, padding)))
        slabs = [xp[:, :, kh:kh + stride * Hout:stride,
                    kw:kw + stride * Wout:stride]
                 for kh in range(KH) for kw in range(KW)]
        cols = jnp.stack(slabs, axis=2)                   # [N, Cin, K2, Ho, Wo]
        cols = jnp.moveaxis(cols, 0, 2).reshape(K, M)     # [Cin*K2, N*Ho*Wo]

    if groups == 1:
        wm = w.reshape(Cout, K)
    else:
        # lane-dense block-diagonal grouped GEMM: one dense K = G*Kg pass.
        G = groups
        Cout_g = Cout // G
        Kg = Cin_g * K2
        wg = w.reshape(G, Cout_g, Kg)
        eye = jnp.eye(G, dtype=w.dtype)
        wm = jnp.einsum("gok,gh->gohk", wg, eye).reshape(Cout, G * Kg)

    bias = b if b is not None else jnp.zeros((Cout,), jnp.float32)

    if M >= _MIN_LANE_M:
        y = matmul_bias_act(wm, cols, bias, activation)   # [Cout, M] bf16
    else:
        # tiny GEMM (SE squeeze/excite, 2x2 bottleneck, SACat): fixed launch /
        # pad overhead dominates, keep it in XLA.
        y = jnp.dot(wm.astype(jnp.float32), cols.astype(jnp.float32))
        y = _apply_act(y + bias.reshape(Cout, 1).astype(jnp.float32), activation)
        y = y.astype(_ACT_DTYPE)

    out = y.reshape(Cout, N, Hout, Wout)
    return jnp.moveaxis(out, 1, 0)    # [N, Cout, Ho, Wo]; free when N == 1


# ----------------------------------------------------------------------------
# Module blocks (functional, params = nested dicts)
# ----------------------------------------------------------------------------
def conv_base(p, x, stride, padding):
    x = conv2d(x, p["conv"]["w"], p["conv"]["b"], stride, padding)
    return instance_norm_lrelu(x, p["gamma"], p["beta"])


def res_block(p, x):
    r = conv_base(p["cb1"], x, 1, 1)
    r = conv_base(p["cb2"], r, 1, 1)
    return r + x


def down_res_block(p, x):
    r = conv_base(p["cb1"], x, 2, 1)                       # 4x4 stride 2 pad 1
    r = conv_base(p["cb2"], r, 1, 1)                       # 3x3 stride 1 pad 1
    d = avg_pool_3s2p1(x)
    d = conv2d(d, p["skip"]["w"], p["skip"]["b"], 1, 0, activation="lrelu")
    return r + d


def se_block(p, x):
    pooled = jnp.mean(x.astype(jnp.float32), axis=(2, 3), keepdims=True)
    g = conv2d(pooled, p["w1"]["w"], p["w1"]["b"], 1, 0, activation="relu")
    g = conv2d(g, p["w2"]["w"], p["w2"]["b"], 1, 0, activation="sigmoid")
    return x * g


def se_resnext_block(p, x, cardinality):
    skip = x if p["shortcut"] is None else conv2d(
        x, p["shortcut"]["w"], p["shortcut"]["b"], 1, 0)
    h = conv_base(p["cb"], x, 1, 0)                        # 1x1, bias=False
    h = conv2d(h, p["gconv"]["w"], p["gconv"]["b"], 1, 1, groups=cardinality)
    h = instance_norm_lrelu(h, p["gamma"], p["beta"])
    h = se_block(p["se"], h)
    return h + skip


def sa_cat(p, x, feature):
    h = jnp.concatenate([x, feature], axis=1)
    h = conv2d(h, p["c1"]["w"], p["c1"]["b"], 1, 0, activation="relu")
    h = conv2d(h, p["c2"]["w"], p["c2"]["b"], 1, 0, activation="sigmoid")
    return h


def sa_cat_resnext_block(p, x, feature):
    h = se_resnext_block(p["se"], x, cardinality=32)
    h = h * sa_cat(p["sa"], h, feature)
    return h + x


def up_block(p, x, cardinality=16):
    for lp in p["layers"]:
        x = se_resnext_block(lp, x, cardinality)
    return upsample_bilinear_x2(x)


def feature_extractor(p, style_feat):
    # TODO(synk): pretrained ResNet34 trunk replaced by its output (`style_feat`).
    x = conv_base(p["cb"], style_feat, 1, 0)               # 1x1, bias=False
    x = res_block(p["rb1"], x)
    x = res_block(p["rb2"], x)
    return x


def generator_forward(p, x, h, style_feat):
    x = jnp.concatenate([x, h], axis=1)
    x = conv_base(p["c1"], x, 1, 1)
    d1 = down_res_block(p["d1"], x)
    d2 = down_res_block(p["d2"], d1)
    d3 = down_res_block(p["d3"], d2)
    d4 = down_res_block(p["d4"], d3)
    x = res_block(p["dr1"], d4)
    x = res_block(p["dr2"], x)
    feat = feature_extractor(p["feat"], style_feat)
    for lp in p["bottleneck"]:
        x = sa_cat_resnext_block(lp, x, feat)
    x = up_block(p["u1"], jnp.concatenate([x, d4], axis=1), 16)
    x = up_block(p["u2"], jnp.concatenate([x, d3], axis=1), 16)
    x = up_block(p["u3"], jnp.concatenate([x, d2], axis=1), 16)
    x = up_block(p["u4"], jnp.concatenate([x, d1], axis=1), 16)
    # out head: Conv -> InstanceNorm2d(no affine) -> LeakyReLU -> Conv -> Tanh
    f = p["out_c1"]["w"].shape[0]
    x = conv2d(x, p["out_c1"]["w"], p["out_c1"]["b"], 1, 1)
    x = instance_norm_lrelu(x, jnp.ones((f,), jnp.float32),
                            jnp.zeros((f,), jnp.float32))
    x = conv2d(x, p["out_c2"]["w"], p["out_c2"]["b"], 1, 1, activation="tanh")
    return x.astype(jnp.float32)


# ----------------------------------------------------------------------------
# Deterministic parameter initialization
# ----------------------------------------------------------------------------
def init_conv(ks, cin, cout, k, groups=1, bias=True):
    cin_g = cin // groups
    fan_in = cin_g * k * k
    w = jax.random.normal(next(ks), (cout, cin_g, k, k), jnp.float32) / math.sqrt(fan_in)
    b = (jax.random.normal(next(ks), (cout,), jnp.float32) * 0.01
         if bias else jnp.zeros((cout,), jnp.float32))
    return {"w": w, "b": b}


def init_conv_base(ks, cin, cout, k, bias=True):
    return {"conv": init_conv(ks, cin, cout, k, 1, bias),
            "gamma": jnp.ones((cout,), jnp.float32),
            "beta": jnp.zeros((cout,), jnp.float32)}


def init_down_res(ks, cin, cout):
    return {"cb1": init_conv_base(ks, cin, cout, 4),
            "cb2": init_conv_base(ks, cout, cout, 3),
            "skip": init_conv(ks, cin, cout, 1)}


def init_res_block(ks, cin, cout):
    return {"cb1": init_conv_base(ks, cin, cout, 3),
            "cb2": init_conv_base(ks, cout, cout, 3)}


def init_se_block(ks, c):
    mid = int(c / 16)
    return {"w1": init_conv(ks, c, mid, 1, bias=False),
            "w2": init_conv(ks, mid, c, 1, bias=False)}


def init_se_resnext(ks, cin, cout, cardinality):
    return {"cb": init_conv_base(ks, cin, cout, 1, bias=False),
            "gconv": init_conv(ks, cout, cout, 3, groups=cardinality, bias=True),
            "gamma": jnp.ones((cout,), jnp.float32),
            "beta": jnp.zeros((cout,), jnp.float32),
            "se": init_se_block(ks, cout),
            "shortcut": (init_conv(ks, cin, cout, 1, bias=False) if cin != cout else None)}


def init_sa_cat(ks, cin, cout):
    return {"c1": init_conv(ks, cin * 2, cout, 1, bias=False),
            "c2": init_conv(ks, cout, cout, 1, bias=False)}


def init_sacat_resnext(ks, cin, cout):
    return {"se": init_se_resnext(ks, cin, cout, 32),
            "sa": init_sa_cat(ks, cout, cout)}


def init_up_block(ks, cin, cout, n_layers):
    layers = [init_se_resnext(ks, cin, cout, 16)]
    for _ in range(n_layers - 1):
        layers.append(init_se_resnext(ks, cout, cout, 16))
    return {"layers": layers}


def init_feature_extractor(ks, mid_channels, out_channels):
    return {"cb": init_conv_base(ks, mid_channels, out_channels, 1, bias=False),
            "rb1": init_res_block(ks, out_channels, out_channels),
            "rb2": init_res_block(ks, out_channels, out_channels)}


def init_generator(ks, in_channels=5, feature=16, num_layers=1, up_layers=(1, 1, 1, 1)):
    f = feature
    return {
        "c1": init_conv_base(ks, in_channels, f, 3),
        "d1": init_down_res(ks, f, f * 2),
        "d2": init_down_res(ks, f * 2, f * 4),
        "d3": init_down_res(ks, f * 4, f * 8),
        "d4": init_down_res(ks, f * 8, f * 8),
        "dr1": init_res_block(ks, f * 8, f * 8),
        "dr2": init_res_block(ks, f * 8, f * 8),
        "feat": init_feature_extractor(ks, 512, f * 8),    # mid_channels=512 (module default)
        "bottleneck": [init_sacat_resnext(ks, f * 8, f * 8) for _ in range(num_layers)],
        "u1": init_up_block(ks, f * 16, f * 8, up_layers[0]),
        "u2": init_up_block(ks, f * 16, f * 4, up_layers[1]),
        "u3": init_up_block(ks, f * 8, f * 2, up_layers[2]),
        "u4": init_up_block(ks, f * 4, f, up_layers[3]),
        "out_c1": init_conv(ks, f, f, 3),
        "out_c2": init_conv(ks, f, 3, 3),
    }


# ----------------------------------------------------------------------------
if __name__ == "__main__":
    key = jax.random.PRNGKey(0)
    kp, kx, kh, kst = jax.random.split(key, 4)

    # Small but consistent configuration: feature=16, one bottleneck layer,
    # one SE-ResNeXt layer per UpBlock; input 32x32 -> bottleneck 2x2.
    B, S = 1, 32
    feature = 16
    params = init_generator(iter(jax.random.split(kp, 1024)),
                            in_channels=5, feature=feature,
                            num_layers=1, up_layers=(1, 1, 1, 1))

    x = jax.random.normal(kx, (B, 1, S, S), jnp.float32)            # sketch
    h = jax.random.normal(kh, (B, 4, S, S), jnp.float32)            # hints (cat -> 5 ch)
    # style_feat = output of the (untranslatable) pretrained ResNet34 trunk + x2 upsample
    style_feat = jax.random.normal(kst, (B, 512, S // 16, S // 16), jnp.float32)

    fwd = jax.jit(lambda a, b, c: generator_forward(params, a, b, c))
    out = fwd(x, h, style_feat)
    out = jax.block_until_ready(out)

    assert out.shape == (B, 3, S, S), out.shape
    assert bool(jnp.all(jnp.isfinite(out)))
    print("KERNEL_OK")
</pallas_src>

<mosaic_0001>
module attributes {stable_mosaic.version = 11 : i64} {
  func.func @_matmul_kernel(%arg0: i32, %arg1: i32, %arg2: i32, %arg3: memref<16x128xbf16, #tpu.memory_space<vmem>>, %arg4: memref<128x512xbf16, #tpu.memory_space<vmem>>, %arg5: memref<16x1xf32, #tpu.memory_space<vmem>>, %arg6: memref<16x512xbf16, #tpu.memory_space<vmem>>, %arg7: memref<16x512xf32, #tpu.memory_space<vmem>>) attributes {dimension_semantics = [#tpu.dimension_semantics<parallel>, #tpu.dimension_semantics<parallel>, #tpu.dimension_semantics<arbitrary>], iteration_bounds = array<i64: 1, 2, 1>, scalar_prefetch = 0 : i64, scratch_operands = 1 : i64, tpu.core_type = #tpu.core_type<tc>, window_params = [{transform_indices = @transform_0, window_bounds = array<i64: 16, 128>}, {transform_indices = @transform_1, window_bounds = array<i64: 128, 512>}, {transform_indices = @transform_2, window_bounds = array<i64: 16, 1>}, {transform_indices = @transform_3, window_bounds = array<i64: 16, 512>}]} {
    %c0_i32 = arith.constant 0 : i32
    %0 = arith.cmpi eq, %arg2, %c0_i32 : i32
    %1 = arith.extui %0 : i1 to i32
    %c0_i32_0 = arith.constant 0 : i32
    %2 = arith.cmpi ne, %1, %c0_i32_0 : i32
    scf.if %2 {
      %cst_10 = arith.constant 0.000000e+00 : f32
      %12 = vector.broadcast %cst_10 : f32 to vector<16x512xf32>
      %c0_11 = arith.constant 0 : index
      %c0_12 = arith.constant 0 : index
      %13 = vector.load %arg7[%c0_11, %c0_12] : memref<16x512xf32, #tpu.memory_space<vmem>>, vector<16x512xf32>
      tpu.vector_store %arg7[%c0_11, %c0_12], %12 {strides = array<i32>} : memref<16x512xf32, #tpu.memory_space<vmem>>, vector<16x512xf32>,
    } else {
    }
    %c0 = arith.constant 0 : index
    %c0_1 = arith.constant 0 : index
    %3 = vector.load %arg7[%c0, %c0_1] : memref<16x512xf32, #tpu.memory_space<vmem>>, vector<16x512xf32>
    %c0_2 = arith.constant 0 : index
    %c0_3 = arith.constant 0 : index
    %4 = vector.load %arg3[%c0_2, %c0_3] : memref<16x128xbf16, #tpu.memory_space<vmem>>, vector<16x128xbf16>
    %c0_4 = arith.constant 0 : index
    %c0_5 = arith.constant 0 : index
    %5 = vector.load %arg4[%c0_4, %c0_5] : memref<128x512xbf16, #tpu.memory_space<vmem>>, vector<128x512xbf16>
    %cst = arith.constant dense<0.000000e+00> : vector<16x512xf32>
    %6 = tpu.matmul %4, %5, %cst {dimension_numbers = #tpu.dot_dimension_numbers<[1], [0], [0], [1], [0, 0, 1, 1], [], []>} : vector<16x128xbf16>, vector<128x512xbf16>, vector<16x512xf32> -> vector<16x512xf32>
    %7 = arith.addf %3, %6 : vector<16x512xf32>
    %c0_6 = arith.constant 0 : index
    %c0_7 = arith.constant 0 : index
    %8 = vector.load %arg7[%c0_6, %c0_7] : memref<16x512xf32, #tpu.memory_space<vmem>>, vector<16x512xf32>
    tpu.vector_store %arg7[%c0_6, %c0_7], %7 {strides = array<i32>} : memref<16x512xf32, #tpu.memory_space<vmem>>, vector<16x512xf32>,
    %c0_i32_8 = arith.constant 0 : i32
    %9 = arith.cmpi eq, %arg2, %c0_i32_8 : i32
    %10 = arith.extui %9 : i1 to i32
    %c0_i32_9 = arith.constant 0 : i32
    %11 = arith.cmpi ne, %10, %c0_i32_9 : i32
    scf.if %11 {
      %c0_10 = arith.constant 0 : index
      %c0_11 = arith.constant 0 : index
      %12 = vector.load %arg7[%c0_10, %c0_11] : memref<16x512xf32, #tpu.memory_space<vmem>>, vector<16x512xf32>
      %c0_12 = arith.constant 0 : index
      %c0_13 = arith.constant 0 : index
      %13 = vector.load %arg5[%c0_12, %c0_13] : memref<16x1xf32, #tpu.memory_space<vmem>>, vector<16x1xf32>
      %14 = vector.broadcast %13 : vector<16x1xf32> to vector<16x512xf32>
      %15 = arith.addf %12, %14 : vector<16x512xf32>
      %16 = arith.truncf %15 : vector<16x512xf32> to vector<16x512xbf16>
      %c0_14 = arith.constant 0 : index
      %c0_15 = arith.constant 0 : index
      %17 = vector.load %arg6[%c0_14, %c0_15] : memref<16x512xbf16, #tpu.memory_space<vmem>>, vector<16x512xbf16>
      tpu.vector_store %arg6[%c0_14, %c0_15], %16 {strides = array<i32>} : memref<16x512xbf16, #tpu.memory_space<vmem>>, vector<16x512xbf16>,
    } else {
    }
    return
  }
  func.func @transform_0(%arg0: i32, %arg1: i32, %arg2: i32) -> (i32, i32) {
    %c0_i32 = arith.constant 0 : i32
    return %arg0, %arg2 : i32, i32
  }
  func.func @transform_1(%arg0: i32, %arg1: i32, %arg2: i32) -> (i32, i32) {
    %c0_i32 = arith.constant 0 : i32
    return %arg2, %arg1 : i32, i32
  }
  func.func @transform_2(%arg0: i32, %arg1: i32, %arg2: i32) -> (i32, i32) {
    %c0_i32 = arith.constant 0 : i32
    %c0_i32_0 = arith.constant 0 : i32
    return %arg0, %c0_i32 : i32, i32
  }
  func.func @transform_3(%arg0: i32, %arg1: i32, %arg2: i32) -> (i32, i32) {
    %c0_i32 = arith.constant 0 : i32
    return %arg0, %arg1 : i32, i32
  }
}

module attributes {stable_mosaic.version = 11 : i64} {
  func.func @_inorm_lrelu_kernel(%arg0: i32, %arg1: memref<16x1024xbf16, #tpu.memory_space<vmem>>, %arg2: memref<16x1xf32, #tpu.memory_space<vmem>>, %arg3: memref<16x1xf32, #tpu.memory_space<vmem>>, %arg4: memref<16x1024xbf16, #tpu.memory_space<vmem>>) attributes {dimension_semantics = [#tpu.dimension_semantics<parallel>], iteration_bounds = array<i64: 1>, scalar_prefetch = 0 : i64, scratch_operands = 0 : i64, tpu.core_type = #tpu.core_type<tc>, window_params = [{transform_indices = @transform_0, window_bounds = array<i64: 16, 1024>}, {transform_indices = @transform_1, window_bounds = array<i64: 16, 1>}, {transform_indices = @transform_2, window_bounds = array<i64: 16, 1>}, {transform_indices = @transform_3, window_bounds = array<i64: 16, 1024>}]} {
    %c0 = arith.constant 0 : index
    %c0_0 = arith.constant 0 : index
    %0 = vector.load %arg1[%c0, %c0_0] : memref<16x1024xbf16, #tpu.memory_space<vmem>>, vector<16x1024xbf16>
    %1 = arith.extf %0 : vector<16x1024xbf16> to vector<16x1024xf32>
    %cst = arith.constant dense<0.000000e+00> : vector<16xf32>
    %2 = vector.multi_reduction <add>, %1, %cst [1] : vector<16x1024xf32> to vector<16xf32>
    %3 = vector.shape_cast %2 : vector<16xf32> to vector<16x1xf32>
    %4 = arith.mulf %1, %1 : vector<16x1024xf32>
    %cst_1 = arith.constant dense<0.000000e+00> : vector<16xf32>
    %5 = vector.multi_reduction <add>, %4, %cst_1 [1] : vector<16x1024xf32> to vector<16xf32>
    %6 = vector.shape_cast %5 : vector<16xf32> to vector<16x1xf32>
    %cst_2 = arith.constant 9.765625E-4 : f32
    %7 = vector.broadcast %cst_2 : f32 to vector<16x1xf32>
    %8 = arith.mulf %3, %7 : vector<16x1xf32>
    %cst_3 = arith.constant 9.765625E-4 : f32
    %9 = vector.broadcast %cst_3 : f32 to vector<16x1xf32>
    %10 = arith.mulf %6, %9 : vector<16x1xf32>
    %11 = arith.mulf %8, %8 : vector<16x1xf32>
    %12 = arith.subf %10, %11 : vector<16x1xf32>
    %cst_4 = arith.constant 0.000000e+00 : f32
    %13 = vector.broadcast %cst_4 : f32 to vector<16x1xf32>
    %14 = arith.maximumf %12, %13 : vector<16x1xf32>
    %15 = vector.broadcast %8 : vector<16x1xf32> to vector<16x1024xf32>
    %16 = arith.subf %1, %15 : vector<16x1024xf32>
    %cst_5 = arith.constant 9.99999974E-6 : f32
    %17 = vector.broadcast %cst_5 : f32 to vector<16x1xf32>
    %18 = arith.addf %14, %17 : vector<16x1xf32>
    %19 = math.rsqrt %18 : vector<16x1xf32>
    %20 = vector.broadcast %19 : vector<16x1xf32> to vector<16x1024xf32>
    %21 = arith.mulf %16, %20 : vector<16x1024xf32>
    %c0_6 = arith.constant 0 : index
    %c0_7 = arith.constant 0 : index
    %22 = vector.load %arg2[%c0_6, %c0_7] : memref<16x1xf32, #tpu.memory_space<vmem>>, vector<16x1xf32>
    %23 = vector.broadcast %22 : vector<16x1xf32> to vector<16x1024xf32>
    %24 = arith.mulf %21, %23 : vector<16x1024xf32>
    %c0_8 = arith.constant 0 : index
    %c0_9 = arith.constant 0 : index
    %25 = vector.load %arg3[%c0_8, %c0_9] : memref<16x1xf32, #tpu.memory_space<vmem>>, vector<16x1xf32>
    %26 = vector.broadcast %25 : vector<16x1xf32> to vector<16x1024xf32>
    %27 = arith.addf %24, %26 : vector<16x1024xf32>
    %cst_10 = arith.constant 0.000000e+00 : f32
    %28 = vector.broadcast %cst_10 : f32 to vector<16x1024xf32>
    %29 = arith.cmpf oge, %27, %28 : vector<16x1024xf32>
    %cst_11 = arith.constant 2.000000e-01 : f32
    %30 = vector.broadcast %cst_11 : f32 to vector<16x1024xf32>
    %31 = arith.mulf %30, %27 : vector<16x1024xf32>
    %32 = arith.select %29, %27, %31 : vector<16x1024xi1>, vector<16x1024xf32>
    %33 = arith.truncf %32 : vector<16x1024xf32> to vector<16x1024xbf16>
    %c0_12 = arith.constant 0 : index
    %c0_13 = arith.constant 0 : index
    %34 = vector.load %arg4[%c0_12, %c0_13] : memref<16x1024xbf16, #tpu.memory_space<vmem>>, vector<16x1024xbf16>
    tpu.vector_store %arg4[%c0_12, %c0_13], %33 {strides = array<i32>} : memref<16x1024xbf16, #tpu.memory_space<vmem>>, vector<16x1024xbf16>,
    return
  }
  func.func @transform_0(%arg0: i32) -> (i32, i32) {
    %c0_i32 = arith.constant 0 : i32
    %c0_i32_0 = arith.constant 0 : i32
    return %arg0, %c0_i32 : i32, i32
  }
  func.func @transform_1(%arg0: i32) -> (i32, i32) {
    %c0_i32 = arith.constant 0 : i32
    %c0_i32_0 = arith.constant 0 : i32
    return %arg0, %c0_i32 : i32, i32
  }
  func.func @transform_2(%arg0: i32) -> (i32, i32) {
    %c0_i32 = arith.constant 0 : i32
    %c0_i32_0 = arith.constant 0 : i32
    return %arg0, %c0_i32 : i32, i32
  }
  func.func @transform_3(%arg0: i32) -> (i32, i32) {
    %c0_i32 = arith.constant 0 : i32
    %c0_i32_0 = arith.constant 0 : i32
    return %arg0, %c0_i32 : i32, i32
  }
}

module attributes {stable_mosaic.version = 11 : i64} {
  func.func @_matmul_kernel(%arg0: i32, %arg1: i32, %arg2: i32, %arg3: memref<32x256xbf16, #tpu.memory_space<vmem>>, %arg4: memref<256x128xbf16, #tpu.memory_space<vmem>>, %arg5: memref<32x1xf32, #tpu.memory_space<vmem>>, %arg6: memref<32x128xbf16, #tpu.memory_space<vmem>>, %arg7: memref<32x128xf32, #tpu.memory_space<vmem>>) attributes {dimension_semantics = [#tpu.dimension_semantics<parallel>, #tpu.dimension_semantics<parallel>, #tpu.dimension_semantics<arbitrary>], iteration_bounds = array<i64: 1, 2, 1>, scalar_prefetch = 0 : i64, scratch_operands = 1 : i64, tpu.core_type = #tpu.core_type<tc>, window_params = [{transform_indices = @transform_0, window_bounds = array<i64: 32, 256>}, {transform_indices = @transform_1, window_bounds = array<i64: 256, 128>}, {transform_indices = @transform_2, window_bounds = array<i64: 32, 1>}, {transform_indices = @transform_3, window_bounds = array<i64: 32, 128>}]} {
    %c0_i32 = arith.constant 0 : i32
    %0 = arith.cmpi eq, %arg2, %c0_i32 : i32
    %1 = arith.extui %0 : i1 to i32
    %c0_i32_0 = arith.constant 0 : i32
    %2 = arith.cmpi ne, %1, %c0_i32_0 : i32
    scf.if %2 {
      %cst_10 = arith.constant 0.000000e+00 : f32
      %12 = vector.broadcast %cst_10 : f32 to vector<32x128xf32>
      %c0_11 = arith.constant 0 : index
      %c0_12 = arith.constant 0 : index
      %13 = vector.load %arg7[%c0_11, %c0_12] : memref<32x128xf32, #tpu.memory_space<vmem>>, vector<32x128xf32>
      tpu.vector_store %arg7[%c0_11, %c0_12], %12 {strides = array<i32>} : memref<32x128xf32, #tpu.memory_space<vmem>>, vector<32x128xf32>,
    } else {
    }
    %c0 = arith.constant 0 : index
    %c0_1 = arith.constant 0 : index
    %3 = vector.load %arg7[%c0, %c0_1] : memref<32x128xf32, #tpu.memory_space<vmem>>, vector<32x128xf32>
    %c0_2 = arith.constant 0 : index
    %c0_3 = arith.constant 0 : index
    %4 = vector.load %arg3[%c0_2, %c0_3] : memref<32x256xbf16, #tpu.memory_space<vmem>>, vector<32x256xbf16>
    %c0_4 = arith.constant 0 : index
    %c0_5 = arith.constant 0 : index
    %5 = vector.load %arg4[%c0_4, %c0_5] : memref<256x128xbf16, #tpu.memory_space<vmem>>, vector<256x128xbf16>
    %cst = arith.constant dense<0.000000e+00> : vector<32x128xf32>
    %6 = tpu.matmul %4, %5, %cst {dimension_numbers = #tpu.dot_dimension_numbers<[1], [0], [0], [1], [0, 0, 1, 1], [], []>} : vector<32x256xbf16>, vector<256x128xbf16>, vector<32x128xf32> -> vector<32x128xf32>
    %7 = arith.addf %3, %6 : vector<32x128xf32>
    %c0_6 = arith.constant 0 : index
    %c0_7 = arith.constant 0 : index
    %8 = vector.load %arg7[%c0_6, %c0_7] : memref<32x128xf32, #tpu.memory_space<vmem>>, vector<32x128xf32>
    tpu.vector_store %arg7[%c0_6, %c0_7], %7 {strides = array<i32>} : memref<32x128xf32, #tpu.memory_space<vmem>>, vector<32x128xf32>,
    %c0_i32_8 = arith.constant 0 : i32
    %9 = arith.cmpi eq, %arg2, %c0_i32_8 : i32
    %10 = arith.extui %9 : i1 to i32
    %c0_i32_9 = arith.constant 0 : i32
    %11 = arith.cmpi ne, %10, %c0_i32_9 : i32
    scf.if %11 {
      %c0_10 = arith.constant 0 : index
      %c0_11 = arith.constant 0 : index
      %12 = vector.load %arg7[%c0_10, %c0_11] : memref<32x128xf32, #tpu.memory_space<vmem>>, vector<32x128xf32>
      %c0_12 = arith.constant 0 : index
      %c0_13 = arith.constant 0 : index
      %13 = vector.load %arg5[%c0_12, %c0_13] : memref<32x1xf32, #tpu.memory_space<vmem>>, vector<32x1xf32>
      %14 = vector.broadcast %13 : vector<32x1xf32> to vector<32x128xf32>
      %15 = arith.addf %12, %14 : vector<32x128xf32>
      %16 = arith.truncf %15 : vector<32x128xf32> to vector<32x128xbf16>
      %c0_14 = arith.constant 0 : index
      %c0_15 = arith.constant 0 : index
      %17 = vector.load %arg6[%c0_14, %c0_15] : memref<32x128xbf16, #tpu.memory_space<vmem>>, vector<32x128xbf16>
      tpu.vector_store %arg6[%c0_14, %c0_15], %16 {strides = array<i32>} : memref<32x128xbf16, #tpu.memory_space<vmem>>, vector<32x128xbf16>,
    } else {
    }
    return
  }
  func.func @transform_0(%arg0: i32, %arg1: i32, %arg2: i32) -> (i32, i32) {
    %c0_i32 = arith.constant 0 : i32
    return %arg0, %arg2 : i32, i32
  }
  func.func @transform_1(%arg0: i32, %arg1: i32, %arg2: i32) -> (i32, i32) {
    %c0_i32 = arith.constant 0 : i32
    return %arg2, %arg1 : i32, i32
  }
  func.func @transform_2(%arg0: i32, %arg1: i32, %arg2: i32) -> (i32, i32) {
    %c0_i32 = arith.constant 0 : i32
    %c0_i32_0 = arith.constant 0 : i32
    return %arg0, %c0_i32 : i32, i32
  }
  func.func @transform_3(%arg0: i32, %arg1: i32, %arg2: i32) -> (i32, i32) {
    %c0_i32 = arith.constant 0 : i32
    return %arg0, %arg1 : i32, i32
  }
}

module attributes {stable_mosaic.version = 11 : i64} {
  func.func @_inorm_lrelu_kernel(%arg0: i32, %arg1: memref<32x256xbf16, #tpu.memory_space<vmem>>, %arg2: memref<32x1xf32, #tpu.memory_space<vmem>>, %arg3: memref<32x1xf32, #tpu.memory_space<vmem>>, %arg4: memref<32x256xbf16, #tpu.memory_space<vmem>>) attributes {dimension_semantics = [#tpu.dimension_semantics<parallel>], iteration_bounds = array<i64: 1>, scalar_prefetch = 0 : i64, scratch_operands = 0 : i64, tpu.core_type = #tpu.core_type<tc>, window_params = [{transform_indices = @transform_0, window_bounds = array<i64: 32, 256>}, {transform_indices = @transform_1, window_bounds = array<i64: 32, 1>}, {transform_indices = @transform_2, window_bounds = array<i64: 32, 1>}, {transform_indices = @transform_3, window_bounds = array<i64: 32, 256>}]} {
    %c0 = arith.constant 0 : index
    %c0_0 = arith.constant 0 : index
    %0 = vector.load %arg1[%c0, %c0_0] : memref<32x256xbf16, #tpu.memory_space<vmem>>, vector<32x256xbf16>
    %1 = arith.extf %0 : vector<32x256xbf16> to vector<32x256xf32>
    %cst = arith.constant dense<0.000000e+00> : vector<32xf32>
    %2 = vector.multi_reduction <add>, %1, %cst [1] : vector<32x256xf32> to vector<32xf32>
    %3 = vector.shape_cast %2 : vector<32xf32> to vector<32x1xf32>
    %4 = arith.mulf %1, %1 : vector<32x256xf32>
    %cst_1 = arith.constant dense<0.000000e+00> : vector<32xf32>
    %5 = vector.multi_reduction <add>, %4, %cst_1 [1] : vector<32x256xf32> to vector<32xf32>
    %6 = vector.shape_cast %5 : vector<32xf32> to vector<32x1xf32>
    %cst_2 = arith.constant 3.906250e-03 : f32
    %7 = vector.broadcast %cst_2 : f32 to vector<32x1xf32>
    %8 = arith.mulf %3, %7 : vector<32x1xf32>
    %cst_3 = arith.constant 3.906250e-03 : f32
    %9 = vector.broadcast %cst_3 : f32 to vector<32x1xf32>
    %10 = arith.mulf %6, %9 : vector<32x1xf32>
    %11 = arith.mulf %8, %8 : vector<32x1xf32>
    %12 = arith.subf %10, %11 : vector<32x1xf32>
    %cst_4 = arith.constant 0.000000e+00 : f32
    %13 = vector.broadcast %cst_4 : f32 to vector<32x1xf32>
    %14 = arith.maximumf %12, %13 : vector<32x1xf32>
    %15 = vector.broadcast %8 : vector<32x1xf32> to vector<32x256xf32>
    %16 = arith.subf %1, %15 : vector<32x256xf32>
    %cst_5 = arith.constant 9.99999974E-6 : f32
    %17 = vector.broadcast %cst_5 : f32 to vector<32x1xf32>
    %18 = arith.addf %14, %17 : vector<32x1xf32>
    %19 = math.rsqrt %18 : vector<32x1xf32>
    %20 = vector.broadcast %19 : vector<32x1xf32> to vector<32x256xf32>
    %21 = arith.mulf %16, %20 : vector<32x256xf32>
    %c0_6 = arith.constant 0 : index
    %c0_7 = arith.constant 0 : index
    %22 = vector.load %arg2[%c0_6, %c0_7] : memref<32x1xf32, #tpu.memory_space<vmem>>, vector<32x1xf32>
    %23 = vector.broadcast %22 : vector<32x1xf32> to vector<32x256xf32>
    %24 = arith.mulf %21, %23 : vector<32x256xf32>
    %c0_8 = arith.constant 0 : index
    %c0_9 = arith.constant 0 : index
    %25 = vector.load %arg3[%c0_8, %c0_9] : memref<32x1xf32, #tpu.memory_space<vmem>>, vector<32x1xf32>
    %26 = vector.broadcast %25 : vector<32x1xf32> to vector<32x256xf32>
    %27 = arith.addf %24, %26 : vector<32x256xf32>
    %cst_10 = arith.constant 0.000000e+00 : f32
    %28 = vector.broadcast %cst_10 : f32 to vector<32x256xf32>
    %29 = arith.cmpf oge, %27, %28 : vector<32x256xf32>
    %cst_11 = arith.constant 2.000000e-01 : f32
    %30 = vector.broadcast %cst_11 : f32 to vector<32x256xf32>
    %31 = arith.mulf %30, %27 : vector<32x256xf32>
    %32 = arith.select %29, %27, %31 : vector<32x256xi1>, vector<32x256xf32>
    %33 = arith.truncf %32 : vector<32x256xf32> to vector<32x256xbf16>
    %c0_12 = arith.constant 0 : index
    %c0_13 = arith.constant 0 : index
    %34 = vector.load %arg4[%c0_12, %c0_13] : memref<32x256xbf16, #tpu.memory_space<vmem>>, vector<32x256xbf16>
    tpu.vector_store %arg4[%c0_12, %c0_13], %33 {strides = array<i32>} : memref<32x256xbf16, #tpu.memory_space<vmem>>, vector<32x256xbf16>,
    return
  }
  func.func @transform_0(%arg0: i32) -> (i32, i32) {
    %c0_i32 = arith.constant 0 : i32
    %c0_i32_0 = arith.constant 0 : i32
    return %arg0, %c0_i32 : i32, i32
  }
  func.func @transform_1(%arg0: i32) -> (i32, i32) {
    %c0_i32 = arith.constant 0 : i32
    %c0_i32_0 = arith.constant 0 : i32
    return %arg0, %c0_i32 : i32, i32
  }
  func.func @transform_2(%arg0: i32) -> (i32, i32) {
    %c0_i32 = arith.constant 0 : i32
    %c0_i32_0 = arith.constant 0 : i32
    return %arg0, %c0_i32 : i32, i32
  }
  func.func @transform_3(%arg0: i32) -> (i32, i32) {
    %c0_i32 = arith.constant 0 : i32
    %c0_i32_0 = arith.constant 0 : i32
    return %arg0, %c0_i32 : i32, i32
  }
}

module attributes {stable_mosaic.version = 11 : i64} {
  func.func @_matmul_kernel(%arg0: i32, %arg1: i32, %arg2: i32, %arg3: memref<32x384xbf16, #tpu.memory_space<vmem>>, %arg4: memref<384x128xbf16, #tpu.memory_space<vmem>>, %arg5: memref<32x1xf32, #tpu.memory_space<vmem>>, %arg6: memref<32x128xbf16, #tpu.memory_space<vmem>>, %arg7: memref<32x128xf32, #tpu.memory_space<vmem>>) attributes {dimension_semantics = [#tpu.dimension_semantics<parallel>, #tpu.dimension_semantics<parallel>, #tpu.dimension_semantics<arbitrary>], iteration_bounds = array<i64: 1, 2, 1>, scalar_prefetch = 0 : i64, scratch_operands = 1 : i64, tpu.core_type = #tpu.core_type<tc>, window_params = [{transform_indices = @transform_0, window_bounds = array<i64: 32, 384>}, {transform_indices = @transform_1, window_bounds = array<i64: 384, 128>}, {transform_indices = @transform_2, window_bounds = array<i64: 32, 1>}, {transform_indices = @transform_3, window_bounds = array<i64: 32, 128>}]} {
    %c0_i32 = arith.constant 0 : i32
    %0 = arith.cmpi eq, %arg2, %c0_i32 : i32
    %1 = arith.extui %0 : i1 to i32
    %c0_i32_0 = arith.constant 0 : i32
    %2 = arith.cmpi ne, %1, %c0_i32_0 : i32
    scf.if %2 {
      %cst_10 = arith.constant 0.000000e+00 : f32
      %12 = vector.broadcast %cst_10 : f32 to vector<32x128xf32>
      %c0_11 = arith.constant 0 : index
      %c0_12 = arith.constant 0 : index
      %13 = vector.load %arg7[%c0_11, %c0_12] : memref<32x128xf32, #tpu.memory_space<vmem>>, vector<32x128xf32>
      tpu.vector_store %arg7[%c0_11, %c0_12], %12 {strides = array<i32>} : memref<32x128xf32, #tpu.memory_space<vmem>>, vector<32x128xf32>,
    } else {
    }
    %c0 = arith.constant 0 : index
    %c0_1 = arith.constant 0 : index
    %3 = vector.load %arg7[%c0, %c0_1] : memref<32x128xf32, #tpu.memory_space<vmem>>, vector<32x128xf32>
    %c0_2 = arith.constant 0 : index
    %c0_3 = arith.constant 0 : index
    %4 = vector.load %arg3[%c0_2, %c0_3] : memref<32x384xbf16, #tpu.memory_space<vmem>>, vector<32x384xbf16>
    %c0_4 = arith.constant 0 : index
    %c0_5 = arith.constant 0 : index
    %5 = vector.load %arg4[%c0_4, %c0_5] : memref<384x128xbf16, #tpu.memory_space<vmem>>, vector<384x128xbf16>
    %cst = arith.constant dense<0.000000e+00> : vector<32x128xf32>
    %6 = tpu.matmul %4, %5, %cst {dimension_numbers = #tpu.dot_dimension_numbers<[1], [0], [0], [1], [0, 0, 1, 1], [], []>} : vector<32x384xbf16>, vector<384x128xbf16>, vector<32x128xf32> -> vector<32x128xf32>
    %7 = arith.addf %3, %6 : vector<32x128xf32>
    %c0_6 = arith.constant 0 : index
    %c0_7 = arith.constant 0 : index
    %8 = vector.load %arg7[%c0_6, %c0_7] : memref<32x128xf32, #tpu.memory_space<vmem>>, vector<32x128xf32>
    tpu.vector_store %arg7[%c0_6, %c0_7], %7 {strides = array<i32>} : memref<32x128xf32, #tpu.memory_space<vmem>>, vector<32x128xf32>,
    %c0_i32_8 = arith.constant 0 : i32
    %9 = arith.cmpi eq, %arg2, %c0_i32_8 : i32
    %10 = arith.extui %9 : i1 to i32
    %c0_i32_9 = arith.constant 0 : i32
    %11 = arith.cmpi ne, %10, %c0_i32_9 : i32
    scf.if %11 {
      %c0_10 = arith.constant 0 : index
      %c0_11 = arith.constant 0 : index
      %12 = vector.load %arg7[%c0_10, %c0_11] : memref<32x128xf32, #tpu.memory_space<vmem>>, vector<32x128xf32>
      %c0_12 = arith.constant 0 : index
      %c0_13 = arith.constant 0 : index
      %13 = vector.load %arg5[%c0_12, %c0_13] : memref<32x1xf32, #tpu.memory_space<vmem>>, vector<32x1xf32>
      %14 = vector.broadcast %13 : vector<32x1xf32> to vector<32x128xf32>
      %15 = arith.addf %12, %14 : vector<32x128xf32>
      %16 = arith.truncf %15 : vector<32x128xf32> to vector<32x128xbf16>
      %c0_14 = arith.constant 0 : index
      %c0_15 = arith.constant 0 : index
      %17 = vector.load %arg6[%c0_14, %c0_15] : memref<32x128xbf16, #tpu.memory_space<vmem>>, vector<32x128xbf16>
      tpu.vector_store %arg6[%c0_14, %c0_15], %16 {strides = array<i32>} : memref<32x128xbf16, #tpu.memory_space<vmem>>, vector<32x128xbf16>,
    } else {
    }
    return
  }
  func.func @transform_0(%arg0: i32, %arg1: i32, %arg2: i32) -> (i32, i32) {
    %c0_i32 = arith.constant 0 : i32
    return %arg0, %arg2 : i32, i32
  }
  func.func @transform_1(%arg0: i32, %arg1: i32, %arg2: i32) -> (i32, i32) {
    %c0_i32 = arith.constant 0 : i32
    return %arg2, %arg1 : i32, i32
  }
  func.func @transform_2(%arg0: i32, %arg1: i32, %arg2: i32) -> (i32, i32) {
    %c0_i32 = arith.constant 0 : i32
    %c0_i32_0 = arith.constant 0 : i32
    return %arg0, %c0_i32 : i32, i32
  }
  func.func @transform_3(%arg0: i32, %arg1: i32, %arg2: i32) -> (i32, i32) {
    %c0_i32 = arith.constant 0 : i32
    return %arg0, %arg1 : i32, i32
  }
}

module attributes {stable_mosaic.version = 11 : i64} {
  func.func @_matmul_kernel(%arg0: i32, %arg1: i32, %arg2: i32, %arg3: memref<32x128xbf16, #tpu.memory_space<vmem>>, %arg4: memref<128x128xbf16, #tpu.memory_space<vmem>>, %arg5: memref<32x1xf32, #tpu.memory_space<vmem>>, %arg6: memref<32x128xbf16, #tpu.memory_space<vmem>>, %arg7: memref<32x128xf32, #tpu.memory_space<vmem>>) attributes {dimension_semantics = [#tpu.dimension_semantics<parallel>, #tpu.dimension_semantics<parallel>, #tpu.dimension_semantics<arbitrary>], iteration_bounds = array<i64: 1, 2, 1>, scalar_prefetch = 0 : i64, scratch_operands = 1 : i64, tpu.core_type = #tpu.core_type<tc>, window_params = [{transform_indices = @transform_0, window_bounds = array<i64: 32, 128>}, {transform_indices = @transform_1, window_bounds = array<i64: 128, 128>}, {transform_indices = @transform_2, window_bounds = array<i64: 32, 1>}, {transform_indices = @transform_3, window_bounds = array<i64: 32, 128>}]} {
    %c0_i32 = arith.constant 0 : i32
    %0 = arith.cmpi eq, %arg2, %c0_i32 : i32
    %1 = arith.extui %0 : i1 to i32
    %c0_i32_0 = arith.constant 0 : i32
    %2 = arith.cmpi ne, %1, %c0_i32_0 : i32
    scf.if %2 {
      %cst_10 = arith.constant 0.000000e+00 : f32
      %12 = vector.broadcast %cst_10 : f32 to vector<32x128xf32>
      %c0_11 = arith.constant 0 : index
      %c0_12 = arith.constant 0 : index
      %13 = vector.load %arg7[%c0_11, %c0_12] : memref<32x128xf32, #tpu.memory_space<vmem>>, vector<32x128xf32>
      tpu.vector_store %arg7[%c0_11, %c0_12], %12 {strides = array<i32>} : memref<32x128xf32, #tpu.memory_space<vmem>>, vector<32x128xf32>,
    } else {
    }
    %c0 = arith.constant 0 : index
    %c0_1 = arith.constant 0 : index
    %3 = vector.load %arg7[%c0, %c0_1] : memref<32x128xf32, #tpu.memory_space<vmem>>, vector<32x128xf32>
    %c0_2 = arith.constant 0 : index
    %c0_3 = arith.constant 0 : index
    %4 = vector.load %arg3[%c0_2, %c0_3] : memref<32x128xbf16, #tpu.memory_space<vmem>>, vector<32x128xbf16>
    %c0_4 = arith.constant 0 : index
    %c0_5 = arith.constant 0 : index
    %5 = vector.load %arg4[%c0_4, %c0_5] : memref<128x128xbf16, #tpu.memory_space<vmem>>, vector<128x128xbf16>
    %cst = arith.constant dense<0.000000e+00> : vector<32x128xf32>
    %6 = tpu.matmul %4, %5, %cst {dimension_numbers = #tpu.dot_dimension_numbers<[1], [0], [0], [1], [0, 0, 1, 1], [], []>} : vector<32x128xbf16>, vector<128x128xbf16>, vector<32x128xf32> -> vector<32x128xf32>
    %7 = arith.addf %3, %6 : vector<32x128xf32>
    %c0_6 = arith.constant 0 : index
    %c0_7 = arith.constant 0 : index
    %8 = vector.load %arg7[%c0_6, %c0_7] : memref<32x128xf32, #tpu.memory_space<vmem>>, vector<32x128xf32>
    tpu.vector_store %arg7[%c0_6, %c0_7], %7 {strides = array<i32>} : memref<32x128xf32, #tpu.memory_space<vmem>>, vector<32x128xf32>,
    %c0_i32_8 = arith.constant 0 : i32
    %9 = arith.cmpi eq, %arg2, %c0_i32_8 : i32
    %10 = arith.extui %9 : i1 to i32
    %c0_i32_9 = arith.constant 0 : i32
    %11 = arith.cmpi ne, %10, %c0_i32_9 : i32
    scf.if %11 {
      %c0_10 = arith.constant 0 : index
      %c0_11 = arith.constant 0 : index
      %12 = vector.load %arg7[%c0_10, %c0_11] : memref<32x128xf32, #tpu.memory_space<vmem>>, vector<32x128xf32>
      %c0_12 = arith.constant 0 : index
      %c0_13 = arith.constant 0 : index
      %13 = vector.load %arg5[%c0_12, %c0_13] : memref<32x1xf32, #tpu.memory_space<vmem>>, vector<32x1xf32>
      %14 = vector.broadcast %13 : vector<32x1xf32> to vector<32x128xf32>
      %15 = arith.addf %12, %14 : vector<32x128xf32>
      %cst_14 = arith.constant 0.000000e+00 : f32
      %16 = vector.broadcast %cst_14 : f32 to vector<32x128xf32>
      %17 = arith.cmpf oge, %15, %16 : vector<32x128xf32>
      %cst_15 = arith.constant 2.000000e-01 : f32
      %18 = vector.broadcast %cst_15 : f32 to vector<32x128xf32>
      %19 = arith.mulf %18, %15 : vector<32x128xf32>
      %20 = arith.select %17, %15, %19 : vector<32x128xi1>, vector<32x128xf32>
      %21 = arith.truncf %20 : vector<32x128xf32> to vector<32x128xbf16>
      %c0_16 = arith.constant 0 : index
      %c0_17 = arith.constant 0 : index
      %22 = vector.load %arg6[%c0_16, %c0_17] : memref<32x128xbf16, #tpu.memory_space<vmem>>, vector<32x128xbf16>
      tpu.vector_store %arg6[%c0_16, %c0_17], %21 {strides = array<i32>} : memref<32x128xbf16, #tpu.memory_space<vmem>>, vector<32x128xbf16>,
    } else {
    }
    return
  }
  func.func @transform_0(%arg0: i32, %arg1: i32, %arg2: i32) -> (i32, i32) {
    %c0_i32 = arith.constant 0 : i32
    return %arg0, %arg2 : i32, i32
  }
  func.func @transform_1(%arg0: i32, %arg1: i32, %arg2: i32) -> (i32, i32) {
    %c0_i32 = arith.constant 0 : i32
    return %arg2, %arg1 : i32, i32
  }
  func.func @transform_2(%arg0: i32, %arg1: i32, %arg2: i32) -> (i32, i32) {
    %c0_i32 = arith.constant 0 : i32
    %c0_i32_0 = arith.constant 0 : i32
    return %arg0, %c0_i32 : i32, i32
  }
  func.func @transform_3(%arg0: i32, %arg1: i32, %arg2: i32) -> (i32, i32) {
    %c0_i32 = arith.constant 0 : i32
    return %arg0, %arg1 : i32, i32
  }
}

module attributes {stable_mosaic.version = 11 : i64} {
  func.func @_matmul_kernel(%arg0: i32, %arg1: i32, %arg2: i32, %arg3: memref<16x128xbf16, #tpu.memory_space<vmem>>, %arg4: memref<128x128xbf16, #tpu.memory_space<vmem>>, %arg5: memref<16x1xf32, #tpu.memory_space<vmem>>, %arg6: memref<16x128xbf16, #tpu.memory_space<vmem>>, %arg7: memref<16x128xf32, #tpu.memory_space<vmem>>) attributes {dimension_semantics = [#tpu.dimension_semantics<parallel>, #tpu.dimension_semantics<parallel>, #tpu.dimension_semantics<arbitrary>], iteration_bounds = array<i64: 1, 2, 1>, scalar_prefetch = 0 : i64, scratch_operands = 1 : i64, tpu.core_type = #tpu.core_type<tc>, window_params = [{transform_indices = @transform_0, window_bounds = array<i64: 16, 128>}, {transform_indices = @transform_1, window_bounds = array<i64: 128, 128>}, {transform_indices = @transform_2, window_bounds = array<i64: 16, 1>}, {transform_indices = @transform_3, window_bounds = array<i64: 16, 128>}]} {
    %c0_i32 = arith.constant 0 : i32
    %0 = arith.cmpi eq, %arg2, %c0_i32 : i32
    %1 = arith.extui %0 : i1 to i32
    %c0_i32_0 = arith.constant 0 : i32
    %2 = arith.cmpi ne, %1, %c0_i32_0 : i32
    scf.if %2 {
      %cst_10 = arith.constant 0.000000e+00 : f32
      %12 = vector.broadcast %cst_10 : f32 to vector<16x128xf32>
      %c0_11 = arith.constant 0 : index
      %c0_12 = arith.constant 0 : index
      %13 = vector.load %arg7[%c0_11, %c0_12] : memref<16x128xf32, #tpu.memory_space<vmem>>, vector<16x128xf32>
      tpu.vector_store %arg7[%c0_11, %c0_12], %12 {strides = array<i32>} : memref<16x128xf32, #tpu.memory_space<vmem>>, vector<16x128xf32>,
    } else {
    }
    %c0 = arith.constant 0 : index
    %c0_1 = arith.constant 0 : index
    %3 = vector.load %arg7[%c0, %c0_1] : memref<16x128xf32, #tpu.memory_space<vmem>>, vector<16x128xf32>
    %c0_2 = arith.constant 0 : index
    %c0_3 = arith.constant 0 : index
    %4 = vector.load %arg3[%c0_2, %c0_3] : memref<16x128xbf16, #tpu.memory_space<vmem>>, vector<16x128xbf16>
    %c0_4 = arith.constant 0 : index
    %c0_5 = arith.constant 0 : index
    %5 = vector.load %arg4[%c0_4, %c0_5] : memref<128x128xbf16, #tpu.memory_space<vmem>>, vector<128x128xbf16>
    %cst = arith.constant dense<0.000000e+00> : vector<16x128xf32>
    %6 = tpu.matmul %4, %5, %cst {dimension_numbers = #tpu.dot_dimension_numbers<[1], [0], [0], [1], [0, 0, 1, 1], [], []>} : vector<16x128xbf16>, vector<128x128xbf16>, vector<16x128xf32> -> vector<16x128xf32>
    %7 = arith.addf %3, %6 : vector<16x128xf32>
    %c0_6 = arith.constant 0 : index
    %c0_7 = arith.constant 0 : index
    %8 = vector.load %arg7[%c0_6, %c0_7] : memref<16x128xf32, #tpu.memory_space<vmem>>, vector<16x128xf32>
    tpu.vector_store %arg7[%c0_6, %c0_7], %7 {strides = array<i32>} : memref<16x128xf32, #tpu.memory_space<vmem>>, vector<16x128xf32>,
    %c0_i32_8 = arith.constant 0 : i32
    %9 = arith.cmpi eq, %arg2, %c0_i32_8 : i32
    %10 = arith.extui %9 : i1 to i32
    %c0_i32_9 = arith.constant 0 : i32
    %11 = arith.cmpi ne, %10, %c0_i32_9 : i32
    scf.if %11 {
      %c0_10 = arith.constant 0 : index
      %c0_11 = arith.constant 0 : index
      %12 = vector.load %arg7[%c0_10, %c0_11] : memref<16x128xf32, #tpu.memory_space<vmem>>, vector<16x128xf32>
      %c0_12 = arith.constant 0 : index
      %c0_13 = arith.constant 0 : index
      %13 = vector.load %arg5[%c0_12, %c0_13] : memref<16x1xf32, #tpu.memory_space<vmem>>, vector<16x1xf32>
      %14 = vector.broadcast %13 : vector<16x1xf32> to vector<16x128xf32>
      %15 = arith.addf %12, %14 : vector<16x128xf32>
      %16 = arith.truncf %15 : vector<16x128xf32> to vector<16x128xbf16>
      %c0_14 = arith.constant 0 : index
      %c0_15 = arith.constant 0 : index
      %17 = vector.load %arg6[%c0_14, %c0_15] : memref<16x128xbf16, #tpu.memory_space<vmem>>, vector<16x128xbf16>
      tpu.vector_store %arg6[%c0_14, %c0_15], %16 {strides = array<i32>} : memref<16x128xbf16, #tpu.memory_space<vmem>>, vector<16x128xbf16>,
    } else {
    }
    return
  }
  func.func @transform_0(%arg0: i32, %arg1: i32, %arg2: i32) -> (i32, i32) {
    %c0_i32 = arith.constant 0 : i32
    return %arg0, %arg2 : i32, i32
  }
  func.func @transform_1(%arg0: i32, %arg1: i32, %arg2: i32) -> (i32, i32) {
    %c0_i32 = arith.constant 0 : i32
    return %arg2, %arg1 : i32, i32
  }
  func.func @transform_2(%arg0: i32, %arg1: i32, %arg2: i32) -> (i32, i32) {
    %c0_i32 = arith.constant 0 : i32
    %c0_i32_0 = arith.constant 0 : i32
    return %arg0, %c0_i32 : i32, i32
  }
  func.func @transform_3(%arg0: i32, %arg1: i32, %arg2: i32) -> (i32, i32) {
    %c0_i32 = arith.constant 0 : i32
    return %arg0, %arg1 : i32, i32
  }
}

module attributes {stable_mosaic.version = 11 : i64} {
  func.func @_inorm_lrelu_kernel(%arg0: i32, %arg1: memref<16x256xbf16, #tpu.memory_space<vmem>>, %arg2: memref<16x1xf32, #tpu.memory_space<vmem>>, %arg3: memref<16x1xf32, #tpu.memory_space<vmem>>, %arg4: memref<16x256xbf16, #tpu.memory_space<vmem>>) attributes {dimension_semantics = [#tpu.dimension_semantics<parallel>], iteration_bounds = array<i64: 1>, scalar_prefetch = 0 : i64, scratch_operands = 0 : i64, tpu.core_type = #tpu.core_type<tc>, window_params = [{transform_indices = @transform_0, window_bounds = array<i64: 16, 256>}, {transform_indices = @transform_1, window_bounds = array<i64: 16, 1>}, {transform_indices = @transform_2, window_bounds = array<i64: 16, 1>}, {transform_indices = @transform_3, window_bounds = array<i64: 16, 256>}]} {
    %c0 = arith.constant 0 : index
    %c0_0 = arith.constant 0 : index
    %0 = vector.load %arg1[%c0, %c0_0] : memref<16x256xbf16, #tpu.memory_space<vmem>>, vector<16x256xbf16>
    %1 = arith.extf %0 : vector<16x256xbf16> to vector<16x256xf32>
    %cst = arith.constant dense<0.000000e+00> : vector<16xf32>
    %2 = vector.multi_reduction <add>, %1, %cst [1] : vector<16x256xf32> to vector<16xf32>
    %3 = vector.shape_cast %2 : vector<16xf32> to vector<16x1xf32>
    %4 = arith.mulf %1, %1 : vector<16x256xf32>
    %cst_1 = arith.constant dense<0.000000e+00> : vector<16xf32>
    %5 = vector.multi_reduction <add>, %4, %cst_1 [1] : vector<16x256xf32> to vector<16xf32>
    %6 = vector.shape_cast %5 : vector<16xf32> to vector<16x1xf32>
    %cst_2 = arith.constant 3.906250e-03 : f32
    %7 = vector.broadcast %cst_2 : f32 to vector<16x1xf32>
    %8 = arith.mulf %3, %7 : vector<16x1xf32>
    %cst_3 = arith.constant 3.906250e-03 : f32
    %9 = vector.broadcast %cst_3 : f32 to vector<16x1xf32>
    %10 = arith.mulf %6, %9 : vector<16x1xf32>
    %11 = arith.mulf %8, %8 : vector<16x1xf32>
    %12 = arith.subf %10, %11 : vector<16x1xf32>
    %cst_4 = arith.constant 0.000000e+00 : f32
    %13 = vector.broadcast %cst_4 : f32 to vector<16x1xf32>
    %14 = arith.maximumf %12, %13 : vector<16x1xf32>
    %15 = vector.broadcast %8 : vector<16x1xf32> to vector<16x256xf32>
    %16 = arith.subf %1, %15 : vector<16x256xf32>
    %cst_5 = arith.constant 9.99999974E-6 : f32
    %17 = vector.broadcast %cst_5 : f32 to vector<16x1xf32>
    %18 = arith.addf %14, %17 : vector<16x1xf32>
    %19 = math.rsqrt %18 : vector<16x1xf32>
    %20 = vector.broadcast %19 : vector<16x1xf32> to vector<16x256xf32>
    %21 = arith.mulf %16, %20 : vector<16x256xf32>
    %c0_6 = arith.constant 0 : index
    %c0_7 = arith.constant 0 : index
    %22 = vector.load %arg2[%c0_6, %c0_7] : memref<16x1xf32, #tpu.memory_space<vmem>>, vector<16x1xf32>
    %23 = vector.broadcast %22 : vector<16x1xf32> to vector<16x256xf32>
    %24 = arith.mulf %21, %23 : vector<16x256xf32>
    %c0_8 = arith.constant 0 : index
    %c0_9 = arith.constant 0 : index
    %25 = vector.load %arg3[%c0_8, %c0_9] : memref<16x1xf32, #tpu.memory_space<vmem>>, vector<16x1xf32>
    %26 = vector.broadcast %25 : vector<16x1xf32> to vector<16x256xf32>
    %27 = arith.addf %24, %26 : vector<16x256xf32>
    %cst_10 = arith.constant 0.000000e+00 : f32
    %28 = vector.broadcast %cst_10 : f32 to vector<16x256xf32>
    %29 = arith.cmpf oge, %27, %28 : vector<16x256xf32>
    %cst_11 = arith.constant 2.000000e-01 : f32
    %30 = vector.broadcast %cst_11 : f32 to vector<16x256xf32>
    %31 = arith.mulf %30, %27 : vector<16x256xf32>
    %32 = arith.select %29, %27, %31 : vector<16x256xi1>, vector<16x256xf32>
    %33 = arith.truncf %32 : vector<16x256xf32> to vector<16x256xbf16>
    %c0_12 = arith.constant 0 : index
    %c0_13 = arith.constant 0 : index
    %34 = vector.load %arg4[%c0_12, %c0_13] : memref<16x256xbf16, #tpu.memory_space<vmem>>, vector<16x256xbf16>
    tpu.vector_store %arg4[%c0_12, %c0_13], %33 {strides = array<i32>} : memref<16x256xbf16, #tpu.memory_space<vmem>>, vector<16x256xbf16>,
    return
  }
  func.func @transform_0(%arg0: i32) -> (i32, i32) {
    %c0_i32 = arith.constant 0 : i32
    %c0_i32_0 = arith.constant 0 : i32
    return %arg0, %c0_i32 : i32, i32
  }
  func.func @transform_1(%arg0: i32) -> (i32, i32) {
    %c0_i32 = arith.constant 0 : i32
    %c0_i32_0 = arith.constant 0 : i32
    return %arg0, %c0_i32 : i32, i32
  }
  func.func @transform_2(%arg0: i32) -> (i32, i32) {
    %c0_i32 = arith.constant 0 : i32
    %c0_i32_0 = arith.constant 0 : i32
    return %arg0, %c0_i32 : i32, i32
  }
  func.func @transform_3(%arg0: i32) -> (i32, i32) {
    %c0_i32 = arith.constant 0 : i32
    %c0_i32_0 = arith.constant 0 : i32
    return %arg0, %c0_i32 : i32, i32
  }
}

module attributes {stable_mosaic.version = 11 : i64} {
  func.func @_matmul_kernel(%arg0: i32, %arg1: i32, %arg2: i32, %arg3: memref<16x256xbf16, #tpu.memory_space<vmem>>, %arg4: memref<256x128xbf16, #tpu.memory_space<vmem>>, %arg5: memref<16x1xf32, #tpu.memory_space<vmem>>, %arg6: memref<16x128xbf16, #tpu.memory_space<vmem>>, %arg7: memref<16x128xf32, #tpu.memory_space<vmem>>) attributes {dimension_semantics = [#tpu.dimension_semantics<parallel>, #tpu.dimension_semantics<parallel>, #tpu.dimension_semantics<arbitrary>], iteration_bounds = array<i64: 1, 2, 1>, scalar_prefetch = 0 : i64, scratch_operands = 1 : i64, tpu.core_type = #tpu.core_type<tc>, window_params = [{transform_indices = @transform_0, window_bounds = array<i64: 16, 256>}, {transform_indices = @transform_1, window_bounds = array<i64: 256, 128>}, {transform_indices = @transform_2, window_bounds = array<i64: 16, 1>}, {transform_indices = @transform_3, window_bounds = array<i64: 16, 128>}]} {
    %c0_i32 = arith.constant 0 : i32
    %0 = arith.cmpi eq, %arg2, %c0_i32 : i32
    %1 = arith.extui %0 : i1 to i32
    %c0_i32_0 = arith.constant 0 : i32
    %2 = arith.cmpi ne, %1, %c0_i32_0 : i32
    scf.if %2 {
      %cst_10 = arith.constant 0.000000e+00 : f32
      %12 = vector.broadcast %cst_10 : f32 to vector<16x128xf32>
      %c0_11 = arith.constant 0 : index
      %c0_12 = arith.constant 0 : index
      %13 = vector.load %arg7[%c0_11, %c0_12] : memref<16x128xf32, #tpu.memory_space<vmem>>, vector<16x128xf32>
      tpu.vector_store %arg7[%c0_11, %c0_12], %12 {strides = array<i32>} : memref<16x128xf32, #tpu.memory_space<vmem>>, vector<16x128xf32>,
    } else {
    }
    %c0 = arith.constant 0 : index
    %c0_1 = arith.constant 0 : index
    %3 = vector.load %arg7[%c0, %c0_1] : memref<16x128xf32, #tpu.memory_space<vmem>>, vector<16x128xf32>
    %c0_2 = arith.constant 0 : index
    %c0_3 = arith.constant 0 : index
    %4 = vector.load %arg3[%c0_2, %c0_3] : memref<16x256xbf16, #tpu.memory_space<vmem>>, vector<16x256xbf16>
    %c0_4 = arith.constant 0 : index
    %c0_5 = arith.constant 0 : index
    %5 = vector.load %arg4[%c0_4, %c0_5] : memref<256x128xbf16, #tpu.memory_space<vmem>>, vector<256x128xbf16>
    %cst = arith.constant dense<0.000000e+00> : vector<16x128xf32>
    %6 = tpu.matmul %4, %5, %cst {dimension_numbers = #tpu.dot_dimension_numbers<[1], [0], [0], [1], [0, 0, 1, 1], [], []>} : vector<16x256xbf16>, vector<256x128xbf16>, vector<16x128xf32> -> vector<16x128xf32>
    %7 = arith.addf %3, %6 : vector<16x128xf32>
    %c0_6 = arith.constant 0 : index
    %c0_7 = arith.constant 0 : index
    %8 = vector.load %arg7[%c0_6, %c0_7] : memref<16x128xf32, #tpu.memory_space<vmem>>, vector<16x128xf32>
    tpu.vector_store %arg7[%c0_6, %c0_7], %7 {strides = array<i32>} : memref<16x128xf32, #tpu.memory_space<vmem>>, vector<16x128xf32>,
    %c0_i32_8 = arith.constant 0 : i32
    %9 = arith.cmpi eq, %arg2, %c0_i32_8 : i32
    %10 = arith.extui %9 : i1 to i32
    %c0_i32_9 = arith.constant 0 : i32
    %11 = arith.cmpi ne, %10, %c0_i32_9 : i32
    scf.if %11 {
      %c0_10 = arith.constant 0 : index
      %c0_11 = arith.constant 0 : index
      %12 = vector.load %arg7[%c0_10, %c0_11] : memref<16x128xf32, #tpu.memory_space<vmem>>, vector<16x128xf32>
      %c0_12 = arith.constant 0 : index
      %c0_13 = arith.constant 0 : index
      %13 = vector.load %arg5[%c0_12, %c0_13] : memref<16x1xf32, #tpu.memory_space<vmem>>, vector<16x1xf32>
      %14 = vector.broadcast %13 : vector<16x1xf32> to vector<16x128xf32>
      %15 = arith.addf %12, %14 : vector<16x128xf32>
      %16 = arith.truncf %15 : vector<16x128xf32> to vector<16x128xbf16>
      %c0_14 = arith.constant 0 : index
      %c0_15 = arith.constant 0 : index
      %17 = vector.load %arg6[%c0_14, %c0_15] : memref<16x128xbf16, #tpu.memory_space<vmem>>, vector<16x128xbf16>
      tpu.vector_store %arg6[%c0_14, %c0_15], %16 {strides = array<i32>} : memref<16x128xbf16, #tpu.memory_space<vmem>>, vector<16x128xbf16>,
    } else {
    }
    return
  }
  func.func @transform_0(%arg0: i32, %arg1: i32, %arg2: i32) -> (i32, i32) {
    %c0_i32 = arith.constant 0 : i32
    return %arg0, %arg2 : i32, i32
  }
  func.func @transform_1(%arg0: i32, %arg1: i32, %arg2: i32) -> (i32, i32) {
    %c0_i32 = arith.constant 0 : i32
    return %arg2, %arg1 : i32, i32
  }
  func.func @transform_2(%arg0: i32, %arg1: i32, %arg2: i32) -> (i32, i32) {
    %c0_i32 = arith.constant 0 : i32
    %c0_i32_0 = arith.constant 0 : i32
    return %arg0, %c0_i32 : i32, i32
  }
  func.func @transform_3(%arg0: i32, %arg1: i32, %arg2: i32) -> (i32, i32) {
    %c0_i32 = arith.constant 0 : i32
    return %arg0, %arg1 : i32, i32
  }
}

module attributes {stable_mosaic.version = 11 : i64} {
  func.func @_matmul_kernel(%arg0: i32, %arg1: i32, %arg2: i32, %arg3: memref<16x256xbf16, #tpu.memory_space<vmem>>, %arg4: memref<256x512xbf16, #tpu.memory_space<vmem>>, %arg5: memref<16x1xf32, #tpu.memory_space<vmem>>, %arg6: memref<16x512xbf16, #tpu.memory_space<vmem>>, %arg7: memref<16x512xf32, #tpu.memory_space<vmem>>) attributes {dimension_semantics = [#tpu.dimension_semantics<parallel>, #tpu.dimension_semantics<parallel>, #tpu.dimension_semantics<arbitrary>], iteration_bounds = array<i64: 1, 2, 1>, scalar_prefetch = 0 : i64, scratch_operands = 1 : i64, tpu.core_type = #tpu.core_type<tc>, window_params = [{transform_indices = @transform_0, window_bounds = array<i64: 16, 256>}, {transform_indices = @transform_1, window_bounds = array<i64: 256, 512>}, {transform_indices = @transform_2, window_bounds = array<i64: 16, 1>}, {transform_indices = @transform_3, window_bounds = array<i64: 16, 512>}]} {
    %c0_i32 = arith.constant 0 : i32
    %0 = arith.cmpi eq, %arg2, %c0_i32 : i32
    %1 = arith.extui %0 : i1 to i32
    %c0_i32_0 = arith.constant 0 : i32
    %2 = arith.cmpi ne, %1, %c0_i32_0 : i32
    scf.if %2 {
      %cst_10 = arith.constant 0.000000e+00 : f32
      %12 = vector.broadcast %cst_10 : f32 to vector<16x512xf32>
      %c0_11 = arith.constant 0 : index
      %c0_12 = arith.constant 0 : index
      %13 = vector.load %arg7[%c0_11, %c0_12] : memref<16x512xf32, #tpu.memory_space<vmem>>, vector<16x512xf32>
      tpu.vector_store %arg7[%c0_11, %c0_12], %12 {strides = array<i32>} : memref<16x512xf32, #tpu.memory_space<vmem>>, vector<16x512xf32>,
    } else {
    }
    %c0 = arith.constant 0 : index
    %c0_1 = arith.constant 0 : index
    %3 = vector.load %arg7[%c0, %c0_1] : memref<16x512xf32, #tpu.memory_space<vmem>>, vector<16x512xf32>
    %c0_2 = arith.constant 0 : index
    %c0_3 = arith.constant 0 : index
    %4 = vector.load %arg3[%c0_2, %c0_3] : memref<16x256xbf16, #tpu.memory_space<vmem>>, vector<16x256xbf16>
    %c0_4 = arith.constant 0 : index
    %c0_5 = arith.constant 0 : index
    %5 = vector.load %arg4[%c0_4, %c0_5] : memref<256x512xbf16, #tpu.memory_space<vmem>>, vector<256x512xbf16>
    %cst = arith.constant dense<0.000000e+00> : vector<16x512xf32>
    %6 = tpu.matmul %4, %5, %cst {dimension_numbers = #tpu.dot_dimension_numbers<[1], [0], [0], [1], [0, 0, 1, 1], [], []>} : vector<16x256xbf16>, vector<256x512xbf16>, vector<16x512xf32> -> vector<16x512xf32>
    %7 = arith.addf %3, %6 : vector<16x512xf32>
    %c0_6 = arith.constant 0 : index
    %c0_7 = arith.constant 0 : index
    %8 = vector.load %arg7[%c0_6, %c0_7] : memref<16x512xf32, #tpu.memory_space<vmem>>, vector<16x512xf32>
    tpu.vector_store %arg7[%c0_6, %c0_7], %7 {strides = array<i32>} : memref<16x512xf32, #tpu.memory_space<vmem>>, vector<16x512xf32>,
    %c0_i32_8 = arith.constant 0 : i32
    %9 = arith.cmpi eq, %arg2, %c0_i32_8 : i32
    %10 = arith.extui %9 : i1 to i32
    %c0_i32_9 = arith.constant 0 : i32
    %11 = arith.cmpi ne, %10, %c0_i32_9 : i32
    scf.if %11 {
      %c0_10 = arith.constant 0 : index
      %c0_11 = arith.constant 0 : index
      %12 = vector.load %arg7[%c0_10, %c0_11] : memref<16x512xf32, #tpu.memory_space<vmem>>, vector<16x512xf32>
      %c0_12 = arith.constant 0 : index
      %c0_13 = arith.constant 0 : index
      %13 = vector.load %arg5[%c0_12, %c0_13] : memref<16x1xf32, #tpu.memory_space<vmem>>, vector<16x1xf32>
      %14 = vector.broadcast %13 : vector<16x1xf32> to vector<16x512xf32>
      %15 = arith.addf %12, %14 : vector<16x512xf32>
      %16 = arith.truncf %15 : vector<16x512xf32> to vector<16x512xbf16>
      %c0_14 = arith.constant 0 : index
      %c0_15 = arith.constant 0 : index
      %17 = vector.load %arg6[%c0_14, %c0_15] : memref<16x512xbf16, #tpu.memory_space<vmem>>, vector<16x512xbf16>
      tpu.vector_store %arg6[%c0_14, %c0_15], %16 {strides = array<i32>} : memref<16x512xbf16, #tpu.memory_space<vmem>>, vector<16x512xbf16>,
    } else {
    }
    return
  }
  func.func @transform_0(%arg0: i32, %arg1: i32, %arg2: i32) -> (i32, i32) {
    %c0_i32 = arith.constant 0 : i32
    return %arg0, %arg2 : i32, i32
  }
  func.func @transform_1(%arg0: i32, %arg1: i32, %arg2: i32) -> (i32, i32) {
    %c0_i32 = arith.constant 0 : i32
    return %arg2, %arg1 : i32, i32
  }
  func.func @transform_2(%arg0: i32, %arg1: i32, %arg2: i32) -> (i32, i32) {
    %c0_i32 = arith.constant 0 : i32
    %c0_i32_0 = arith.constant 0 : i32
    return %arg0, %c0_i32 : i32, i32
  }
  func.func @transform_3(%arg0: i32, %arg1: i32, %arg2: i32) -> (i32, i32) {
    %c0_i32 = arith.constant 0 : i32
    return %arg0, %arg1 : i32, i32
  }
}

module attributes {stable_mosaic.version = 11 : i64} {
  func.func @_matmul_kernel(%arg0: i32, %arg1: i32, %arg2: i32, %arg3: memref<16x256xbf16, #tpu.memory_space<vmem>>, %arg4: memref<256x512xbf16, #tpu.memory_space<vmem>>, %arg5: memref<16x1xf32, #tpu.memory_space<vmem>>, %arg6: memref<16x512xbf16, #tpu.memory_space<vmem>>, %arg7: memref<16x512xf32, #tpu.memory_space<vmem>>) attributes {dimension_semantics = [#tpu.dimension_semantics<parallel>, #tpu.dimension_semantics<parallel>, #tpu.dimension_semantics<arbitrary>], iteration_bounds = array<i64: 1, 2, 1>, scalar_prefetch = 0 : i64, scratch_operands = 1 : i64, tpu.core_type = #tpu.core_type<tc>, window_params = [{transform_indices = @transform_0, window_bounds = array<i64: 16, 256>}, {transform_indices = @transform_1, window_bounds = array<i64: 256, 512>}, {transform_indices = @transform_2, window_bounds = array<i64: 16, 1>}, {transform_indices = @transform_3, window_bounds = array<i64: 16, 512>}]} {
    %c0_i32 = arith.constant 0 : i32
    %0 = arith.cmpi eq, %arg2, %c0_i32 : i32
    %1 = arith.extui %0 : i1 to i32
    %c0_i32_0 = arith.constant 0 : i32
    %2 = arith.cmpi ne, %1, %c0_i32_0 : i32
    scf.if %2 {
      %cst_10 = arith.constant 0.000000e+00 : f32
      %12 = vector.broadcast %cst_10 : f32 to vector<16x512xf32>
      %c0_11 = arith.constant 0 : index
      %c0_12 = arith.constant 0 : index
      %13 = vector.load %arg7[%c0_11, %c0_12] : memref<16x512xf32, #tpu.memory_space<vmem>>, vector<16x512xf32>
      tpu.vector_store %arg7[%c0_11, %c0_12], %12 {strides = array<i32>} : memref<16x512xf32, #tpu.memory_space<vmem>>, vector<16x512xf32>,
    } else {
    }
    %c0 = arith.constant 0 : index
    %c0_1 = arith.constant 0 : index
    %3 = vector.load %arg7[%c0, %c0_1] : memref<16x512xf32, #tpu.memory_space<vmem>>, vector<16x512xf32>
    %c0_2 = arith.constant 0 : index
    %c0_3 = arith.constant 0 : index
    %4 = vector.load %arg3[%c0_2, %c0_3] : memref<16x256xbf16, #tpu.memory_space<vmem>>, vector<16x256xbf16>
    %c0_4 = arith.constant 0 : index
    %c0_5 = arith.constant 0 : index
    %5 = vector.load %arg4[%c0_4, %c0_5] : memref<256x512xbf16, #tpu.memory_space<vmem>>, vector<256x512xbf16>
    %cst = arith.constant dense<0.000000e+00> : vector<16x512xf32>
    %6 = tpu.matmul %4, %5, %cst {dimension_numbers = #tpu.dot_dimension_numbers<[1], [0], [0], [1], [0, 0, 1, 1], [], []>} : vector<16x256xbf16>, vector<256x512xbf16>, vector<16x512xf32> -> vector<16x512xf32>
    %7 = arith.addf %3, %6 : vector<16x512xf32>
    %c0_6 = arith.constant 0 : index
    %c0_7 = arith.constant 0 : index
    %8 = vector.load %arg7[%c0_6, %c0_7] : memref<16x512xf32, #tpu.memory_space<vmem>>, vector<16x512xf32>
    tpu.vector_store %arg7[%c0_6, %c0_7], %7 {strides = array<i32>} : memref<16x512xf32, #tpu.memory_space<vmem>>, vector<16x512xf32>,
    %c0_i32_8 = arith.constant 0 : i32
    %9 = arith.cmpi eq, %arg2, %c0_i32_8 : i32
    %10 = arith.extui %9 : i1 to i32
    %c0_i32_9 = arith.constant 0 : i32
    %11 = arith.cmpi ne, %10, %c0_i32_9 : i32
    scf.if %11 {
      %c0_10 = arith.constant 0 : index
      %c0_11 = arith.constant 0 : index
      %12 = vector.load %arg7[%c0_10, %c0_11] : memref<16x512xf32, #tpu.memory_space<vmem>>, vector<16x512xf32>
      %c0_12 = arith.constant 0 : index
      %c0_13 = arith.constant 0 : index
      %13 = vector.load %arg5[%c0_12, %c0_13] : memref<16x1xf32, #tpu.memory_space<vmem>>, vector<16x1xf32>
      %14 = vector.broadcast %13 : vector<16x1xf32> to vector<16x512xf32>
      %15 = arith.addf %12, %14 : vector<16x512xf32>
      %16 = math.tanh %15 : vector<16x512xf32>
      %17 = arith.truncf %16 : vector<16x512xf32> to vector<16x512xbf16>
      %c0_14 = arith.constant 0 : index
      %c0_15 = arith.constant 0 : index
      %18 = vector.load %arg6[%c0_14, %c0_15] : memref<16x512xbf16, #tpu.memory_space<vmem>>, vector<16x512xbf16>
      tpu.vector_store %arg6[%c0_14, %c0_15], %17 {strides = array<i32>} : memref<16x512xbf16, #tpu.memory_space<vmem>>, vector<16x512xbf16>,
    } else {
    }
    return
  }
  func.func @transform_0(%arg0: i32, %arg1: i32, %arg2: i32) -> (i32, i32) {
    %c0_i32 = arith.constant 0 : i32
    return %arg0, %arg2 : i32, i32
  }
  func.func @transform_1(%arg0: i32, %arg1: i32, %arg2: i32) -> (i32, i32) {
    %c0_i32 = arith.constant 0 : i32
    return %arg2, %arg1 : i32, i32
  }
  func.func @transform_2(%arg0: i32, %arg1: i32, %arg2: i32) -> (i32, i32) {
    %c0_i32 = arith.constant 0 : i32
    %c0_i32_0 = arith.constant 0 : i32
    return %arg0, %c0_i32 : i32, i32
  }
  func.func @transform_3(%arg0: i32, %arg1: i32, %arg2: i32) -> (i32, i32) {
    %c0_i32 = arith.constant 0 : i32
    return %arg0, %arg1 : i32, i32
  }
}

</mosaic_0001>

<llo_original>
// kernel: _lambda_.16
$region0: #{_lambda_.16}
  #allocation0 [shape = 'u32[]', space=smem, size = 0x4, offset = 0x4, fixed_abs, tag = 'smem constant byte address 0x4 - core index']
  #allocation1 [shape = 'u32[72,128]{1,0:T(1,128)}', space=vmem, size = 0x9000, scoped, tag = 'internal scratch']
  %s0 = inlined_call_operand.vmem [shape: bf16[16,1024], index: 0, kind: input, shape index: {}]
  %s1 = inlined_call_operand.vmem [shape: f32[16,1], index: 1, kind: input, shape index: {}]
  %s2 = inlined_call_operand.vmem [shape: f32[16,1], index: 2, kind: input, shape index: {}]
  %s3 = inlined_call_operand.vmem [shape: bf16[16,1024], index: 3, kind: output, shape index: {}]
  %s4 = sld [smem:[#allocation0]]
  $region22: #{_lambda_.16} parent=0
    _
  %s6 = ssub.s32 1, %s4
  %s7 = scalar_select 0, %s6, %s4
  // Predicated region
  $region2: #{_lambda_.16} parent=0 // pred_check
    _
  $region3: #{_lambda_.16} parent=0 // pred_check_branch
    %9 = sbr.rel (0) target = $region5
  $region4: #{_lambda_.16} parent=0 // pred_region
    _
  $region5: #{_lambda_.16} parent=0 // pred_fallthru
    _
  // Predicated region
  $region6: #{_lambda_.16} parent=0 // pred_check
    _
  $region7: #{_lambda_.16} parent=0 // pred_check_branch
    %11 = sbr.rel (0) target = $region9
  $region8: #{_lambda_.16} parent=0 // pred_region
    _
  $region9: #{_lambda_.16} parent=0 // pred_fallthru
    _
  // Predicated region
  $region10: #{_lambda_.16} parent=0 // pred_check
    _
  $region11: #{_lambda_.16} parent=0 // pred_check_branch
    %13 = sbr.rel (0) target = $region13
  $region12: #{_lambda_.16} parent=0 // pred_region
    _
  $region13: #{_lambda_.16} parent=0 // pred_fallthru
    _
  %v14 = vld [vmem:[%s0] sm:$0xff]
  %v15 = vld [vmem:[%s0 + $0x8] sm:$0xff]
  %v16 = vld [vmem:[%s0 + $0x10] sm:$0xff]
  %v17 = vld [vmem:[%s0 + $0x18] sm:$0xff]
  %v18 = vld [vmem:[%s0 + $0x20] sm:$0xff]
  %v19 = vld [vmem:[%s0 + $0x28] sm:$0xff]
  %v20 = vld [vmem:[%s0 + $0x30] sm:$0xff]
  %v21 = vld [vmem:[%s0 + $0x38] sm:$0xff]
  %v22 = vunpack.c.l.bf16 %v14
  %v23 = vunpack.c.h.bf16 %v14
  %v24 = vunpack.c.l.bf16 %v15
  %v25 = vunpack.c.h.bf16 %v15
  %v26 = vunpack.c.l.bf16 %v16
  %v27 = vunpack.c.h.bf16 %v16
  %v28 = vunpack.c.l.bf16 %v17
  %v29 = vunpack.c.h.bf16 %v17
  %v30 = vunpack.c.l.bf16 %v18
  %v31 = vunpack.c.h.bf16 %v18
  %v32 = vunpack.c.l.bf16 %v19
  %v33 = vunpack.c.h.bf16 %v19
  %v34 = vunpack.c.l.bf16 %v20
  %v35 = vunpack.c.h.bf16 %v20
  %v36 = vunpack.c.l.bf16 %v21
  %v37 = vunpack.c.h.bf16 %v21
  %v38 = vadd.f32 %v22, %v23
  %v39 = vadd.f32 %v38, %v24
  %v40 = vadd.f32 %v39, %v25
  %v41 = vadd.f32 %v40, %v26
  %v42 = vadd.f32 %v41, %v27
  %v43 = vadd.f32 %v42, %v28
  %v44 = vadd.f32 %v43, %v29
  %45 = vadd.xlane.f32.xlu0 %v44
  %v46 = vpop.xlane.xlu0 %45
  %v47 = vadd.f32 %v30, %v31
  %v48 = vadd.f32 %v47, %v32
  %v49 = vadd.f32 %v48, %v33
  %v50 = vadd.f32 %v49, %v34
  %v51 = vadd.f32 %v50, %v35
  %v52 = vadd.f32 %v51, %v36
  %v53 = vadd.f32 %v52, %v37
  %54 = vadd.xlane.f32.xlu0 %v53
  %v55 = vpop.xlane.xlu0 %54
  %v56 = vmul.f32 %v22, %v22
  %v57 = vmul.f32 %v23, %v23
  %v58 = vmul.f32 %v24, %v24
  %v59 = vmul.f32 %v25, %v25
  %v60 = vmul.f32 %v26, %v26
  %v61 = vmul.f32 %v27, %v27
  %v62 = vmul.f32 %v28, %v28
  %v63 = vmul.f32 %v29, %v29
  %v64 = vmul.f32 %v30, %v30
  %v65 = vmul.f32 %v31, %v31
  %v66 = vmul.f32 %v32, %v32
  %v67 = vmul.f32 %v33, %v33
  %v68 = vmul.f32 %v34, %v34
  %v69 = vmul.f32 %v35, %v35
  %v70 = vmul.f32 %v36, %v36
  %v71 = vmul.f32 %v37, %v37
  %v72 = vadd.f32 %v56, %v57
  %v73 = vadd.f32 %v72, %v58
  %v74 = vadd.f32 %v73, %v59
  %v75 = vadd.f32 %v74, %v60
  %v76 = vadd.f32 %v75, %v61
  %v77 = vadd.f32 %v76, %v62
  %v78 = vadd.f32 %v77, %v63
  %79 = vadd.xlane.f32.xlu0 %v78
  %v80 = vpop.xlane.xlu0 %79
  %v81 = vadd.f32 %v64, %v65
  %v82 = vadd.f32 %v81, %v66
  %v83 = vadd.f32 %v82, %v67
  %v84 = vadd.f32 %v83, %v68
  %v85 = vadd.f32 %v84, %v69
  %v86 = vadd.f32 %v85, %v70
  %v87 = vadd.f32 %v86, %v71
  %88 = vadd.xlane.f32.xlu0 %v87
  %v89 = vpop.xlane.xlu0 %88
  %v90 = vmul.f32 %v46, 0.0009765625
  %v91 = vmul.f32 %v55, 0.0009765625
  %v92 = vmul.f32 %v80, 0.0009765625
  %v93 = vmul.f32 %v89, 0.0009765625
  %v94 = vmul.f32 %v90, %v90
  %v95 = vmul.f32 %v91, %v91
  %v96 = vsub.f32 %v92, %v94
  %v97 = vsub.f32 %v93, %v95
  %v98 = vmax.f32 %v96, 0.0
  %v99 = vmax.f32 %v97, 0.0
  %v100 = vsub.f32 %v22, %v90
  %v101 = vsub.f32 %v23, %v90
  %v102 = vsub.f32 %v24, %v90
  %v103 = vsub.f32 %v25, %v90
  %v104 = vsub.f32 %v26, %v90
  %v105 = vsub.f32 %v27, %v90
  %v106 = vsub.f32 %v28, %v90
  %v107 = vsub.f32 %v29, %v90
  %v108 = vsub.f32 %v30, %v91
  %v109 = vsub.f32 %v31, %v91
  %v110 = vsub.f32 %v32, %v91
  %v111 = vsub.f32 %v33, %v91
  %v112 = vsub.f32 %v34, %v91
  %v113 = vsub.f32 %v35, %v91
  %v114 = vsub.f32 %v36, %v91
  %v115 = vsub.f32 %v37, %v91
  %v116 = vadd.f32 %v98, 1e-05
  %v117 = vadd.f32 %v99, 1e-05
  %v118 = vrsqrt.pop %v116
  %v119 = vmul.f32 %v118, %v116
  %v120 = vmul.f32 %v119, %v118
  %v121 = vmul.f32 0.5, %v120
  %v122 = vsub.f32 1.5, %v121
  %v123 = vmul.f32 %v118, %v122
  %vm124 = vweird.f32 %v116
  %vm125 = vweird.f32 %v118
  %vm126 = vmor %vm124, %vm125
  %v127 = vsel %vm126, %v118, %v123
  %v128 = vrsqrt.pop %v117
  %v129 = vmul.f32 %v128, %v117
  %v130 = vmul.f32 %v129, %v128
  %v131 = vmul.f32 0.5, %v130
  %v132 = vsub.f32 1.5, %v131
  %v133 = vmul.f32 %v128, %v132
  %vm134 = vweird.f32 %v117
  %vm135 = vweird.f32 %v128
  %vm136 = vmor %vm134, %vm135
  %v137 = vsel %vm136, %v128, %v133
  %v138 = vmul.f32 %v100, %v127
  %v139 = vmul.f32 %v101, %v127
  %v140 = vmul.f32 %v102, %v127
  %v141 = vmul.f32 %v103, %v127
  %v142 = vmul.f32 %v104, %v127
  %v143 = vmul.f32 %v105, %v127
  %v144 = vmul.f32 %v106, %v127
  %v145 = vmul.f32 %v107, %v127
  %v146 = vmul.f32 %v108, %v137
  %v147 = vmul.f32 %v109, %v137
  %v148 = vmul.f32 %v110, %v137
  %v149 = vmul.f32 %v111, %v137
  %v150 = vmul.f32 %v112, %v137
  %v151 = vmul.f32 %v113, %v137
  %v152 = vmul.f32 %v114, %v137
  %v153 = vmul.f32 %v115, %v137
  %v154 = vld [vmem:[%s1] sm:$0xff]
  %v155 = vld [vmem:[%s1 + $0x8] sm:$0xff]
  %157 = vset.pattern.permute.xlu0 0
  %158 = vperm.xlu0 %157, %v154
  %v159 = vpop.permute.xlu0 %158
  %162 = vset.pattern.permute.xlu0 0
  %163 = vperm.xlu0 %162, %v155
  %v164 = vpop.permute.xlu0 %163
  %v166 = vmul.f32 %v138, %v159
  %v167 = vmul.f32 %v139, %v159
  %v168 = vmul.f32 %v140, %v159
  %v169 = vmul.f32 %v141, %v159
  %v170 = vmul.f32 %v142, %v159
  %v171 = vmul.f32 %v143, %v159
  %v172 = vmul.f32 %v144, %v159
  %v173 = vmul.f32 %v145, %v159
  %v174 = vmul.f32 %v146, %v164
  %v175 = vmul.f32 %v147, %v164
  %v176 = vmul.f32 %v148, %v164
  %v177 = vmul.f32 %v149, %v164
  %v178 = vmul.f32 %v150, %v164
  %v179 = vmul.f32 %v151, %v164
  %v180 = vmul.f32 %v152, %v164
  %v181 = vmul.f32 %v153, %v164
  %v182 = vld [vmem:[%s2] sm:$0xff]
  %v183 = vld [vmem:[%s2 + $0x8] sm:$0xff]
  %185 = vset.pattern.permute.xlu0 0
  %186 = vperm.xlu0 %185, %v182
  %v187 = vpop.permute.xlu0 %186
  %190 = vset.pattern.permute.xlu0 0
  %191 = vperm.xlu0 %190, %v183
  %v192 = vpop.permute.xlu0 %191
  %v194 = vadd.f32 %v166, %v187
  %v195 = vadd.f32 %v167, %v187
  %v196 = vadd.f32 %v168, %v187
  %v197 = vadd.f32 %v169, %v187
  %v198 = vadd.f32 %v170, %v187
  %v199 = vadd.f32 %v171, %v187
  %v200 = vadd.f32 %v172, %v187
  %v201 = vadd.f32 %v173, %v187
  %v202 = vadd.f32 %v174, %v192
  %v203 = vadd.f32 %v175, %v192
  %v204 = vadd.f32 %v176, %v192
  %v205 = vadd.f32 %v177, %v192
  %v206 = vadd.f32 %v178, %v192
  %v207 = vadd.f32 %v179, %v192
  %v208 = vadd.f32 %v180, %v192
  %v209 = vadd.f32 %v181, %v192
  %vm210 = vcmp.ge.f32.partialorder %v194, 0.0
  %vm211 = vcmp.ge.f32.partialorder %v195, 0.0
  %vm212 = vcmp.ge.f32.partialorder %v196, 0.0
  %vm213 = vcmp.ge.f32.partialorder %v197, 0.0
  %vm214 = vcmp.ge.f32.partialorder %v198, 0.0
  %vm215 = vcmp.ge.f32.partialorder %v199, 0.0
  %vm216 = vcmp.ge.f32.partialorder %v200, 0.0
  %vm217 = vcmp.ge.f32.partialorder %v201, 0.0
  %vm218 = vcmp.ge.f32.partialorder %v202, 0.0
  %vm219 = vcmp.ge.f32.partialorder %v203, 0.0
  %vm220 = vcmp.ge.f32.partialorder %v204, 0.0
  %vm221 = vcmp.ge.f32.partialorder %v205, 0.0
  %vm222 = vcmp.ge.f32.partialorder %v206, 0.0
  %vm223 = vcmp.ge.f32.partialorder %v207, 0.0
  %vm224 = vcmp.ge.f32.partialorder %v208, 0.0
  %vm225 = vcmp.ge.f32.partialorder %v209, 0.0
  %v226 = vmul.f32 %v194, 0.2
  %v227 = vmul.f32 %v195, 0.2
  %v228 = vmul.f32 %v196, 0.2
  %v229 = vmul.f32 %v197, 0.2
  %v230 = vmul.f32 %v198, 0.2
  %v231 = vmul.f32 %v199, 0.2
  %v232 = vmul.f32 %v200, 0.2
  %v233 = vmul.f32 %v201, 0.2
  %v234 = vmul.f32 %v202, 0.2
  %v235 = vmul.f32 %v203, 0.2
  %v236 = vmul.f32 %v204, 0.2
  %v237 = vmul.f32 %v205, 0.2
  %v238 = vmul.f32 %v206, 0.2
  %v239 = vmul.f32 %v207, 0.2
  %v240 = vmul.f32 %v208, 0.2
  %v241 = vmul.f32 %v209, 0.2
  %v242 = vsel %vm210, %v194, %v226
  %v243 = vsel %vm211, %v195, %v227
  %v244 = vsel %vm212, %v196, %v228
  %v245 = vsel %vm213, %v197, %v229
  %v246 = vsel %vm214, %v198, %v230
  %v247 = vsel %vm215, %v199, %v231
  %v248 = vsel %vm216, %v200, %v232
  %v249 = vsel %vm217, %v201, %v233
  %v250 = vsel %vm218, %v202, %v234
  %v251 = vsel %vm219, %v203, %v235
  %v252 = vsel %vm220, %v204, %v236
  %v253 = vsel %vm221, %v205, %v237
  %v254 = vsel %vm222, %v206, %v238
  %v255 = vsel %vm223, %v207, %v239
  %v256 = vsel %vm224, %v208, %v240
  %v257 = vsel %vm225, %v209, %v241
  %v258 = vpack.c.bf16 %v243, %v242
  %v259 = vpack.c.bf16 %v245, %v244
  %v260 = vpack.c.bf16 %v247, %v246
  %v261 = vpack.c.bf16 %v249, %v248
  %v262 = vpack.c.bf16 %v251, %v250
  %v263 = vpack.c.bf16 %v253, %v252
  %v264 = vpack.c.bf16 %v255, %v254
  %v265 = vpack.c.bf16 %v257, %v256
  %266 = vst [vmem:[%s3] sm:$0xff] %v258
  %267 = vst [vmem:[%s3 + $0x8] sm:$0xff] %v259
  %268 = vst [vmem:[%s3 + $0x10] sm:$0xff] %v260
  %269 = vst [vmem:[%s3 + $0x18] sm:$0xff] %v261
  %270 = vst [vmem:[%s3 + $0x20] sm:$0xff] %v262
  %271 = vst [vmem:[%s3 + $0x28] sm:$0xff] %v263
  %272 = vst [vmem:[%s3 + $0x30] sm:$0xff] %v264
  %273 = vst [vmem:[%s3 + $0x38] sm:$0xff] %v265
  // Predicated region
  $region14: #{_lambda_.16} parent=0 // pred_check
    _
  $region15: #{_lambda_.16} parent=0 // pred_check_branch
    %275 = sbr.rel (0) target = $region17
  $region16: #{_lambda_.16} parent=0 // pred_region
    _
  $region17: #{_lambda_.16} parent=0 // pred_fallthru
    _
  // Predicated region
  $region18: #{_lambda_.16} parent=0 // pred_check
    _
  $region19: #{_lambda_.16} parent=0 // pred_check_branch
    %277 = sbr.rel (0) target = $region21
  $region20: #{_lambda_.16} parent=0 // pred_region
    _
  $region21: #{_lambda_.16} parent=0 // pred_fallthru
    _

// kernel: _lambda_.15
$region0: #{_lambda_.15}
  #allocation0 [shape = 'u32[]', space=smem, size = 0x4, offset = 0x4, fixed_abs, tag = 'smem constant byte address 0x4 - core index']
  #allocation1 [shape = 'u32[72,128]{1,0:T(1,128)}', space=vmem, size = 0x9000, scoped, tag = 'internal scratch']
  #allocation2 [shape = 'f32[16,512]{1,0:T(8,128)}', space=vmem, size = 0x8000, scoped, tag = 'scratch operand']
  %s0 = inlined_call_operand.vmem [shape: bf16[16,128], index: 0, kind: input, shape index: {}]
  %s1 = inlined_call_operand.vmem [shape: bf16[128,1024], index: 1, kind: input, shape index: {}]
  %s2 = inlined_call_operand.vmem [shape: f32[16,1], index: 2, kind: input, shape index: {}]
  %s3 = inlined_call_operand.vmem [shape: bf16[16,1024], index: 3, kind: output, shape index: {}]
  %s4 = sld [smem:[#allocation0]]
  $region95: #{_lambda_.15} parent=0
    _
  %s6 = ssub.s32 1, %s4
  %s7 = scalar_select 0, %s6, %s4
  $region1: #{_lambda_.15} parent=0
    #allocation3 [shape = 'u8[262144]{0}', space=vmem, size = 0x40000, scoped, tag = 'input window, operand 1']
    #allocation4 [shape = 'u8[32768]{0}', space=vmem, size = 0x8000, scoped, tag = 'output window, operand 0']
    loop: start=0, step=1, limit=4
    $region2: #{_lambda_.15} parent=1 // loop_pre_header
      _
    $region3: #{_lambda_.15} parent=1 // loop_header
      %s9 = sphi 0, %s13
      %p10 = scmp.ge.s32.totalorder %s9, 4
      %s16 = sphi 0, %s35
      %s17 = sphi 0, %s31
      %s18 = sphi 0, %s27
      %s19 = sphi 0, %s16
      %s20 = sphi 0, %s17
      %s21 = sphi 0, %s18
      %s22 = sphi 0, %s19
      %s23 = sphi 0, %s20
      %s24 = sphi 0, %s21
      %s40 = sphi 0, %s42
      %s43 = sphi 0, %s40
      %s44 = sphi 0, %s43
      %s60 = sphi 0, %s44
      %s68 = sphi 0, %s70
      %s71 = sphi 0, %s68
      %s72 = sphi 0, %s71
      %s88 = sphi 0, %s72
      %s94 = sphi 0, %s96
      %s97 = sphi 0, %s94
      %s98 = sphi 0, %s97
      %s114 = sphi 0, %s98
      %s122 = sphi 0, %s124
      %s125 = sphi 0, %s122
      %s126 = sphi 0, %s125
      %s142 = sphi 0, %s126
    $region4: #{_lambda_.15} parent=1 // loop_header_branch
      %12 = sbr.rel (%p10) target = $region8
    $region5: #{_lambda_.15} parent=1 // loop_body
      %s14 = ssub.s32 %s9, 1
      %s15 = ssub.s32 %s9, 2
      %s25 = sadd.s32 1, %s18
      %p26 = scmp.ge.s32.totalorder %s25, 1
      %s27 = scalar_select %p26, 0, %s25
      %s28 = sadd.s32 1, %s17
      %s29 = scalar_select %p26, %s28, %s17
      %p30 = scmp.ge.s32.totalorder %s29, 2
      %s31 = scalar_select %p30, 0, %s29
      %s32 = sadd.s32 1, %s16
      %s33 = scalar_select %p30, %s32, %s16
      %p34 = scmp.ge.s32.totalorder %s33, 1
      %s35 = scalar_select %p34, 0, %s33
      %s36 = ssub.s32 %s16, %s35
      %s37 = ssub.s32 %s18, %s27
      %s38 = sor.u32 %s36, %s37
      %p39 = scmp.eq.s32.totalorder %s38, 0
      %s41 = sadd.s32 %s40, 1
      %s42 = scalar_select %p39, %s40, %s41
      %p45 = pneg %p39
      %p46 = scmp.eq.s32.totalorder %s9, 1
      %p47 = por %p45, %p46
      %p48 = scmp.ne.s32.totalorder %s40, %s43
      %p49 = scmp.eq.s32.totalorder %s9, 0
      %p50 = por %p48, %p49
      %p51 = scmp.ne.s32.totalorder %s40, %s43
      %p52 = scmp.eq.s32.totalorder %s14, 1
      %p53 = por %p51, %p52
      %p54 = scmp.ne.s32.totalorder %s43, %s44
      %p55 = scmp.eq.s32.totalorder %s14, 0
      %p56 = por %p54, %p55
      %p57 = scmp.ne.s32.totalorder %s43, %s44
      %p58 = scmp.eq.s32.totalorder %s15, 1
      %p59 = por %p57, %p58
      %p61 = scmp.ne.s32.totalorder %s44, %s60
      %p62 = scmp.eq.s32.totalorder %s15, 0
      %p63 = por %p61, %p62
      %s64 = ssub.s32 %s18, %s27
      %s65 = ssub.s32 %s17, %s31
      %s66 = sor.u32 %s64, %s65
      %p67 = scmp.eq.s32.totalorder %s66, 0
      %s69 = sadd.s32 %s68, 1
      %s70 = scalar_select %p67, %s68, %s69
      %p73 = pneg %p67
      %p74 = scmp.eq.s32.totalorder %s9, 1
      %p75 = por %p73, %p74
      %p76 = scmp.ne.s32.totalorder %s68, %s71
      %p77 = scmp.eq.s32.totalorder %s9, 0
      %p78 = por %p76, %p77
      %p79 = scmp.ne.s32.totalorder %s68, %s71
      %p80 = scmp.eq.s32.totalorder %s14, 1
      %p81 = por %p79, %p80
      %p82 = scmp.ne.s32.totalorder %s71, %s72
      %p83 = scmp.eq.s32.totalorder %s14, 0
      %p84 = por %p82, %p83
      %p85 = scmp.ne.s32.totalorder %s71, %s72
      %p86 = scmp.eq.s32.totalorder %s15, 1
      %p87 = por %p85, %p86
      %p89 = scmp.ne.s32.totalorder %s72, %s88
      %p90 = scmp.eq.s32.totalorder %s15, 0
      %p91 = por %p89, %p90
      %s92 = ssub.s32 %s16, %s35
      %p93 = scmp.eq.s32.totalorder %s92, 0
      %s95 = sadd.s32 %s94, 1
      %s96 = scalar_select %p93, %s94, %s95
      %p99 = pneg %p93
      %p100 = scmp.eq.s32.totalorder %s9, 1
      %p101 = por %p99, %p100
      %p102 = scmp.ne.s32.totalorder %s94, %s97
      %p103 = scmp.eq.s32.totalorder %s9, 0
      %p104 = por %p102, %p103
      %p105 = scmp.ne.s32.totalorder %s94, %s97
      %p106 = scmp.eq.s32.totalorder %s14, 1
      %p107 = por %p105, %p106
      %p108 = scmp.ne.s32.totalorder %s97, %s98
      %p109 = scmp.eq.s32.totalorder %s14, 0
      %p110 = por %p108, %p109
      %p111 = scmp.ne.s32.totalorder %s97, %s98
      %p112 = scmp.eq.s32.totalorder %s15, 1
      %p113 = por %p111, %p112
      %p115 = scmp.ne.s32.totalorder %s98, %s114
      %p116 = scmp.eq.s32.totalorder %s15, 0
      %p117 = por %p115, %p116
      %s118 = ssub.s32 %s16, %s35
      %s119 = ssub.s32 %s17, %s31
      %s120 = sor.u32 %s118, %s119
      %p121 = scmp.eq.s32.totalorder %s120, 0
      %s123 = sadd.s32 %s122, 1
      %s124 = scalar_select %p121, %s122, %s123
      %p127 = pneg %p121
      %p128 = scmp.eq.s32.totalorder %s9, 1
      %p129 = por %p127, %p128
      %p130 = scmp.ne.s32.totalorder %s122, %s125
      %p131 = scmp.eq.s32.totalorder %s9, 0
      %p132 = por %p130, %p131
      %p133 = scmp.ne.s32.totalorder %s122, %s125
      %p134 = scmp.eq.s32.totalorder %s14, 1
      %p135 = por %p133, %p134
      %p136 = scmp.ne.s32.totalorder %s125, %s126
      %p137 = scmp.eq.s32.totalorder %s14, 0
      %p138 = por %p136, %p137
      %p139 = scmp.ne.s32.totalorder %s125, %s126
      %p140 = scmp.eq.s32.totalorder %s15, 1
      %p141 = por %p139, %p140
      %p143 = scmp.ne.s32.totalorder %s126, %s142
      %p144 = scmp.eq.s32.totalorder %s15, 0
      %p145 = por %p143, %p144
      %p146 = scmp.le.s32.totalorder 1, %s9
      %p147 = scmp.lt.s32.totalorder %s9, 3
      %p148 = pnand %p146, %p147
      %p149 = pneg %p148
      // Predicated region
      $region9: #{_lambda_.15} parent=5 // pred_check
        _
      $region10: #{_lambda_.15} parent=5 // pred_check_branch
        %151 = sbr.rel (%p148) target = $region12
      $region11: #{_lambda_.15} parent=5 // pred_region
        %s152 = ssub.s32 %s9, 1
        // Predicated region
        $region13: #{_lambda_.15} parent=11 // pred_check
          %p153 = pneg %p56
        $region14: #{_lambda_.15} parent=11 // pred_check_branch
          %155 = sbr.rel (%p153) target = $region16
        $region15: #{_lambda_.15} parent=11 // pred_region
          %s156 = smul.u32 2, %s19
          %p157 = scmp.lt.s32.totalorder %s156, 1
          %s158 = scalar_select %p157, %s156, 1
          %p159 = scmp.lt.s32.totalorder %s21, 0
          %s160 = scalar_select %p159, %s21, 0
          %s161 = sadd.s32 %s160, %s158
          %s162 = smul.addr %s161, 4
          %s163 = scalar_lea.vmem %s0, %s162
          %s164 = smul.u32 2, %s19
        $region16: #{_lambda_.15} parent=11 // pred_fallthru
          _
        // Predicated region
        $region17: #{_lambda_.15} parent=11 // pred_check
          %p165 = pneg %p110
        $region18: #{_lambda_.15} parent=11 // pred_check_branch
          %167 = sbr.rel (%p165) target = $region20
        $region19: #{_lambda_.15} parent=11 // pred_region
          %s168 = smul.u32 2, %s19
          %p169 = scmp.lt.s32.totalorder %s168, 1
          %s170 = scalar_select %p169, %s168, 1
          %s171 = smul.addr %s170, 8
          %s172 = scalar_lea.vmem %s2, %s171
          %s173 = smul.u32 2, %s19
        $region20: #{_lambda_.15} parent=11 // pred_fallthru
          _
      $region12: #{_lambda_.15} parent=5 // pred_fallthru
        _
      %p174 = scmp.lt.s32.totalorder %s9, 2
      // Predicated region
      $region21: #{_lambda_.15} parent=5 // pred_check
        %p175 = pneg %p174
      $region22: #{_lambda_.15} parent=5 // pred_check_branch
        %177 = sbr.rel (%p175) target = $region24
      $region23: #{_lambda_.15} parent=5 // pred_region
        // Predicated region
        $region25: #{_lambda_.15} parent=23 // pred_check
          %p178 = pneg %p78
        $region26: #{_lambda_.15} parent=23 // pred_check_branch
          %180 = sbr.rel (%p178) target = $region28
        $region27: #{_lambda_.15} parent=23 // pred_region
          %s181 = sand.u32 %s68, 1
          %s182 = sand.u32 %s68, 1
          %s183 = smul.addr %s182, 256
          %s184 = scalar_lea.vmem [#allocation3], %s183
          %s185 = smul.u32 16, %s18
          %s186 = smul.u32 4, %s17
          %s187 = smul.addr %s185, 8
          %s188 = sadd.s32 %s186, %s187
          %s189 = smul.addr %s188, 4
          %s190 = scalar_lea.vmem %s1, %s189
          // Predicated region
          $region29: #{_lambda_.15} parent=27 // pred_check
            _
          $region30: #{_lambda_.15} parent=27 // pred_check_branch
            %192 = sbr.rel (0) target = $region32
          $region31: #{_lambda_.15} parent=27 // pred_region
            // Predicated region
            $region33: #{_lambda_.15} parent=31 // pred_check
              _
            $region34: #{_lambda_.15} parent=31 // pred_check_branch
              %194 = sbr.rel (0) target = $region36
            $region35: #{_lambda_.15} parent=31 // pred_region
              loop: start=0, step=1, limit=1
              $region37: #{_lambda_.15} parent=35 // loop_pre_header
                _
              $region38: #{_lambda_.15} parent=35 // loop_header
                %s196 = sphi 0, %s200
                %p197 = scmp.ge.s32.totalorder %s196, 1
                %s201 = sphi %s190, %s190
                %s202 = sphi %s184, %s184
              $region39: #{_lambda_.15} parent=35 // loop_header_branch
                %199 = sbr.rel (%p197) target = $region43
              $region40: #{_lambda_.15} parent=35 // loop_body
                %v203 = vld [vmem:[%s201] sm:$0xff]
                %204 = vst [vmem:[%s202] sm:$0xff] %v203
                %v205 = vld [vmem:[%s201 + $0x8] sm:$0xff]
                %206 = vst [vmem:[%s202 + $0x8] sm:$0xff] %v205
                %v207 = vld [vmem:[%s201 + $0x20] sm:$0xff]
                %208 = vst [vmem:[%s202 + $0x10] sm:$0xff] %v207
                %v209 = vld [vmem:[%s201 + $0x28] sm:$0xff]
                %210 = vst [vmem:[%s202 + $0x18] sm:$0xff] %v209
                %v211 = vld [vmem:[%s201 + $0x40] sm:$0xff]
                %212 = vst [vmem:[%s202 + $0x20] sm:$0xff] %v211
                %v213 = vld [vmem:[%s201 + $0x48] sm:$0xff]
                %214 = vst [vmem:[%s202 + $0x28] sm:$0xff] %v213
                %v215 = vld [vmem:[%s201 + $0x60] sm:$0xff]
                %216 = vst [vmem:[%s202 + $0x30] sm:$0xff] %v215
                %v217 = vld [vmem:[%s201 + $0x68] sm:$0xff]
                %218 = vst [vmem:[%s202 + $0x38] sm:$0xff] %v217
                %v219 = vld [vmem:[%s201 + $0x80] sm:$0xff]
                %220 = vst [vmem:[%s202 + $0x40] sm:$0xff] %v219
                %v221 = vld [vmem:[%s201 + $0x88] sm:$0xff]
                %222 = vst [vmem:[%s202 + $0x48] sm:$0xff] %v221
                %v223 = vld [vmem:[%s201 + $0xa0] sm:$0xff]
                %224 = vst [vmem:[%s202 + $0x50] sm:$0xff] %v223
                %v225 = vld [vmem:[%s201 + $0xa8] sm:$0xff]
                %226 = vst [vmem:[%s202 + $0x58] sm:$0xff] %v225
                %v227 = vld [vmem:[%s201 + $0xc0] sm:$0xff]
                %228 = vst [vmem:[%s202 + $0x60] sm:$0xff] %v227
                %v229 = vld [vmem:[%s201 + $0xc8] sm:$0xff]
                %230 = vst [vmem:[%s202 + $0x68] sm:$0xff] %v229
                %v231 = vld [vmem:[%s201 + $0xe0] sm:$0xff]
                %232 = vst [vmem:[%s202 + $0x70] sm:$0xff] %v231
                %v233 = vld [vmem:[%s201 + $0xe8] sm:$0xff]
                %234 = vst [vmem:[%s202 + $0x78] sm:$0xff] %v233
                %v235 = vld [vmem:[%s201 + $0x100] sm:$0xff]
                %236 = vst [vmem:[%s202 + $0x80] sm:$0xff] %v235
                %v237 = vld [vmem:[%s201 + $0x108] sm:$0xff]
                %238 = vst [vmem:[%s202 + $0x88] sm:$0xff] %v237
                %v239 = vld [vmem:[%s201 + $0x120] sm:$0xff]
                %240 = vst [vmem:[%s202 + $0x90] sm:$0xff] %v239
                %v241 = vld [vmem:[%s201 + $0x128] sm:$0xff]
                %242 = vst [vmem:[%s202 + $0x98] sm:$0xff] %v241
                %v243 = vld [vmem:[%s201 + $0x140] sm:$0xff]
                %244 = vst [vmem:[%s202 + $0xa0] sm:$0xff] %v243
                %v245 = vld [vmem:[%s201 + $0x148] sm:$0xff]
                %246 = vst [vmem:[%s202 + $0xa8] sm:$0xff] %v245
                %v247 = vld [vmem:[%s201 + $0x160] sm:$0xff]
                %248 = vst [vmem:[%s202 + $0xb0] sm:$0xff] %v247
                %v249 = vld [vmem:[%s201 + $0x168] sm:$0xff]
                %250 = vst [vmem:[%s202 + $0xb8] sm:$0xff] %v249
                %v251 = vld [vmem:[%s201 + $0x180] sm:$0xff]
                %252 = vst [vmem:[%s202 + $0xc0] sm:$0xff] %v251
                %v253 = vld [vmem:[%s201 + $0x188] sm:$0xff]
                %254 = vst [vmem:[%s202 + $0xc8] sm:$0xff] %v253
                %v255 = vld [vmem:[%s201 + $0x1a0] sm:$0xff]
                %256 = vst [vmem:[%s202 + $0xd0] sm:$0xff] %v255
                %v257 = vld [vmem:[%s201 + $0x1a8] sm:$0xff]
                %258 = vst [vmem:[%s202 + $0xd8] sm:$0xff] %v257
                %v259 = vld [vmem:[%s201 + $0x1c0] sm:$0xff]
                %260 = vst [vmem:[%s202 + $0xe0] sm:$0xff] %v259
                %v261 = vld [vmem:[%s201 + $0x1c8] sm:$0xff]
                %262 = vst [vmem:[%s202 + $0xe8] sm:$0xff] %v261
                %v263 = vld [vmem:[%s201 + $0x1e0] sm:$0xff]
                %264 = vst [vmem:[%s202 + $0xf0] sm:$0xff] %v263
                %v265 = vld [vmem:[%s201 + $0x1e8] sm:$0xff]
                %266 = vst [vmem:[%s202 + $0xf8] sm:$0xff] %v265
              $region41: #{_lambda_.15} parent=35 // loop_footer
                %s200 = sadd.s32 1, %s196
              $region42: #{_lambda_.15} parent=35 // loop_footer_branch
                %195 = sbr.rel target = $region38
              $region43: #{_lambda_.15} parent=35 // loop_exit
                _
            $region36: #{_lambda_.15} parent=31 // pred_fallthru
              _
            // Predicated region
            $region44: #{_lambda_.15} parent=31 // pred_check
              _
            $region45: #{_lambda_.15} parent=31 // pred_check_branch
              %268 = sbr.rel target = $region47
            $region46: #{_lambda_.15} parent=31 // pred_region
              _
            $region47: #{_lambda_.15} parent=31 // pred_fallthru
              _
          $region32: #{_lambda_.15} parent=27 // pred_fallthru
            _
          %269 = vnop
        $region28: #{_lambda_.15} parent=23 // pred_fallthru
          _
      $region24: #{_lambda_.15} parent=5 // pred_fallthru
        _
      %p270 = scmp.le.s32.totalorder 1, %s9
      %p271 = scmp.lt.s32.totalorder %s9, 3
      %p272 = pnand %p270, %p271
      %p273 = pneg %p272
      // Predicated region
      $region48: #{_lambda_.15} parent=5 // pred_check
        _
      $region49: #{_lambda_.15} parent=5 // pred_check_branch
        %275 = sbr.rel (%p272) target = $region51
      $region50: #{_lambda_.15} parent=5 // pred_region
        %s276 = ssub.s32 %s9, 1
        %s277 = sand.u32 %s71, 1
        %s278 = sand.u32 %s71, 1
        %s279 = smul.addr %s278, 256
        %s280 = scalar_lea.vmem [#allocation3], %s279
        // Predicated region
        $region52: #{_lambda_.15} parent=50 // pred_check
          %p281 = pneg %p84
        $region53: #{_lambda_.15} parent=50 // pred_check_branch
          %283 = sbr.rel (%p281) target = $region55
        $region54: #{_lambda_.15} parent=50 // pred_region
          _
        $region55: #{_lambda_.15} parent=50 // pred_fallthru
          _
        %s284 = smul.u32 2, %s19
        %p285 = scmp.lt.s32.totalorder %s284, 1
        %s286 = scalar_select %p285, %s284, 1
        %p287 = scmp.lt.s32.totalorder %s21, 0
        %s288 = scalar_select %p287, %s21, 0
        %s289 = sadd.s32 %s288, %s286
        %s290 = smul.addr %s289, 4
        %s291 = scalar_lea.vmem %s0, %s290
        %p292 = pneg %p56
        %p293 = pneg %p53
        %s294 = sand.u32 %s71, 1
        %s295 = sand.u32 %s71, 1
        %s296 = smul.addr %s295, 256
        %s297 = scalar_lea.vmem [#allocation3], %s296
        %p298 = pneg %p84
        %p299 = pneg %p81
        %s300 = smul.u32 2, %s19
        %p301 = scmp.lt.s32.totalorder %s300, 1
        %s302 = scalar_select %p301, %s300, 1
        %s303 = smul.addr %s302, 8
        %s304 = scalar_lea.vmem %s2, %s303
        %p305 = pneg %p110
        %p306 = pneg %p107
        %p307 = pneg %p138
        %p308 = pneg %p135
        %s309 = sand.u32 %s125, 1
        %s310 = sand.u32 %s125, 1
        %s311 = smul.addr %s310, 32
        %s312 = scalar_lea.vmem [#allocation4], %s311
        %s313 = smul.u32 2, %s19
        %p314 = scmp.lt.s32.totalorder %s313, 1
        %s315 = scalar_select %p314, %s313, 1
        %p316 = scmp.lt.s32.totalorder %s21, 0
        %s317 = scalar_select %p316, %s21, 0
        %s318 = sadd.s32 %s317, %s315
        %s319 = smul.addr %s318, 4
        %s320 = scalar_lea.vmem %s0, %s319
        %s321 = smul.u32 2, %s19
        %s322 = smul.u32 16, %s21
        %s323 = smul.u32 4, %s20
        %s324 = smul.u32 2, %s19
        %p325 = scmp.lt.s32.totalorder %s324, 1
        %s326 = scalar_select %p325, %s324, 1
        %s327 = smul.addr %s326, 8
        %s328 = scalar_lea.vmem %s2, %s327
        %s329 = smul.u32 2, %s19
        %s330 = smul.u32 2, %s19
        %s331 = smul.u32 4, %s20
        %p332 = scmp.eq.s32.totalorder %s21, 0
        // Predicated region
        $region56: #{_lambda_.15} parent=50 // pred_check
          %p333 = pneg %p332
        $region57: #{_lambda_.15} parent=50 // pred_check_branch
          %335 = sbr.rel (%p333) target = $region59
        $region58: #{_lambda_.15} parent=50 // pred_region
          %336 = vst [vmem:[#allocation2] sm:$0xff] 0.0
          %337 = vst [vmem:[#allocation2 + $0x8] sm:$0xff] 0.0
          %338 = vst [vmem:[#allocation2 + $0x10] sm:$0xff] 0.0
          %339 = vst [vmem:[#allocation2 + $0x18] sm:$0xff] 0.0
          %340 = vst [vmem:[#allocation2 + $0x20] sm:$0xff] 0.0
          %341 = vst [vmem:[#allocation2 + $0x28] sm:$0xff] 0.0
          %342 = vst [vmem:[#allocation2 + $0x30] sm:$0xff] 0.0
          %343 = vst [vmem:[#allocation2 + $0x38] sm:$0xff] 0.0
        $region59: #{_lambda_.15} parent=50 // pred_fallthru
          _
        %v344 = vld [vmem:[#allocation2] sm:$0xff]
        %v345 = vld [vmem:[#allocation2 + $0x8] sm:$0xff]
        %v346 = vld [vmem:[#allocation2 + $0x10] sm:$0xff]
        %v347 = vld [vmem:[#allocation2 + $0x18] sm:$0xff]
        %v348 = vld [vmem:[#allocation2 + $0x20] sm:$0xff]
        %v349 = vld [vmem:[#allocation2 + $0x28] sm:$0xff]
        %v350 = vld [vmem:[#allocation2 + $0x30] sm:$0xff]
        %v351 = vld [vmem:[#allocation2 + $0x38] sm:$0xff]
        %v352 = vld [vmem:[%s320] sm:$0xf]
        %v353 = vld [vmem:[%s320 + $0x4] sm:$0xf]
        %v354 = vld [vmem:[%s280] sm:$0xff]
        %v355 = vld [vmem:[%s280 + $0x8] sm:$0xff]
        %v356 = vld [vmem:[%s280 + $0x10] sm:$0xff]
        %v357 = vld [vmem:[%s280 + $0x18] sm:$0xff]
        %v358 = vld [vmem:[%s280 + $0x20] sm:$0xff]
        %v359 = vld [vmem:[%s280 + $0x28] sm:$0xff]
        %v360 = vld [vmem:[%s280 + $0x30] sm:$0xff]
        %v361 = vld [vmem:[%s280 + $0x38] sm:$0xff]
        %v362 = vld [vmem:[%s280 + $0x40] sm:$0xff]
        %v363 = vld [vmem:[%s280 + $0x48] sm:$0xff]
        %v364 = vld [vmem:[%s280 + $0x50] sm:$0xff]
        %v365 = vld [vmem:[%s280 + $0x58] sm:$0xff]
        %v366 = vld [vmem:[%s280 + $0x60] sm:$0xff]
        %v367 = vld [vmem:[%s280 + $0x68] sm:$0xff]
        %v368 = vld [vmem:[%s280 + $0x70] sm:$0xff]
        %v369 = vld [vmem:[%s280 + $0x78] sm:$0xff]
        %v370 = vld [vmem:[%s280 + $0x80] sm:$0xff]
        %v371 = vld [vmem:[%s280 + $0x88] sm:$0xff]
        %v372 = vld [vmem:[%s280 + $0x90] sm:$0xff]
        %v373 = vld [vmem:[%s280 + $0x98] sm:$0xff]
        %v374 = vld [vmem:[%s280 + $0xa0] sm:$0xff]
        %v375 = vld [vmem:[%s280 + $0xa8] sm:$0xff]
        %v376 = vld [vmem:[%s280 + $0xb0] sm:$0xff]
        %v377 = vld [vmem:[%s280 + $0xb8] sm:$0xff]
        %v378 = vld [vmem:[%s280 + $0xc0] sm:$0xff]
        %v379 = vld [vmem:[%s280 + $0xc8] sm:$0xff]
        %v380 = vld [vmem:[%s280 + $0xd0] sm:$0xff]
        %v381 = vld [vmem:[%s280 + $0xd8] sm:$0xff]
        %v382 = vld [vmem:[%s280 + $0xe0] sm:$0xff]
        %v383 = vld [vmem:[%s280 + $0xe8] sm:$0xff]
        %v384 = vld [vmem:[%s280 + $0xf0] sm:$0xff]
        %v385 = vld [vmem:[%s280 + $0xf8] sm:$0xff]
        %v388 = vunpack.c.l.b16 %v352
        %v389 = vunpack.c.l.b16 %v353
        %v390 = vpack.c.b16 %v389, %v388
        %v424 = vunpack.c.l.b16 %v354
        %v425 = vunpack.c.h.b16 %v354
        %v426 = vunpack.c.l.b16 %v355
        %v427 = vunpack.c.h.b16 %v355
        %v428 = vunpack.c.l.b16 %v356
        %v429 = vunpack.c.h.b16 %v356
        %v430 = vunpack.c.l.b16 %v357
        %v431 = vunpack.c.h.b16 %v357
        %v432 = vunpack.c.l.b16 %v358
        %v433 = vunpack.c.h.b16 %v358
        %v434 = vunpack.c.l.b16 %v359
        %v435 = vunpack.c.h.b16 %v359
        %v436 = vunpack.c.l.b16 %v360
        %v437 = vunpack.c.h.b16 %v360
        %v438 = vunpack.c.l.b16 %v361
        %v439 = vunpack.c.h.b16 %v361
        %v440 = vunpack.c.l.b16 %v362
        %v441 = vunpack.c.h.b16 %v362
        %v442 = vunpack.c.l.b16 %v363
        %v443 = vunpack.c.h.b16 %v363
        %v444 = vunpack.c.l.b16 %v364
        %v445 = vunpack.c.h.b16 %v364
        %v446 = vunpack.c.l.b16 %v365
        %v447 = vunpack.c.h.b16 %v365
        %v448 = vunpack.c.l.b16 %v366
        %v449 = vunpack.c.h.b16 %v366
        %v450 = vunpack.c.l.b16 %v367
        %v451 = vunpack.c.h.b16 %v367
        %v452 = vunpack.c.l.b16 %v368
        %v453 = vunpack.c.h.b16 %v368
        %v454 = vunpack.c.l.b16 %v369
        %v455 = vunpack.c.h.b16 %v369
        %v456 = vunpack.c.l.b16 %v370
        %v457 = vunpack.c.h.b16 %v370
        %v458 = vunpack.c.l.b16 %v371
        %v459 = vunpack.c.h.b16 %v371
        %v460 = vunpack.c.l.b16 %v372
        %v461 = vunpack.c.h.b16 %v372
        %v462 = vunpack.c.l.b16 %v373
        %v463 = vunpack.c.h.b16 %v373
        %v464 = vunpack.c.l.b16 %v374
        %v465 = vunpack.c.h.b16 %v374
        %v466 = vunpack.c.l.b16 %v375
        %v467 = vunpack.c.h.b16 %v375
        %v468 = vunpack.c.l.b16 %v376
        %v469 = vunpack.c.h.b16 %v376
        %v470 = vunpack.c.l.b16 %v377
        %v471 = vunpack.c.h.b16 %v377
        %v472 = vunpack.c.l.b16 %v378
        %v473 = vunpack.c.h.b16 %v378
        %v474 = vunpack.c.l.b16 %v379
        %v475 = vunpack.c.h.b16 %v379
        %v476 = vunpack.c.l.b16 %v380
        %v477 = vunpack.c.h.b16 %v380
        %v478 = vunpack.c.l.b16 %v381
        %v479 = vunpack.c.h.b16 %v381
        %v480 = vunpack.c.l.b16 %v382
        %v481 = vunpack.c.h.b16 %v382
        %v482 = vunpack.c.l.b16 %v383
        %v483 = vunpack.c.h.b16 %v383
        %v484 = vunpack.c.l.b16 %v384
        %v485 = vunpack.c.h.b16 %v384
        %v486 = vunpack.c.l.b16 %v385
        %v487 = vunpack.c.h.b16 %v385
        %v488 = vpack.c.b16 %v428, %v424
        %v489 = vpack.c.b16 %v429, %v425
        %v490 = vpack.c.b16 %v430, %v426
        %v491 = vpack.c.b16 %v431, %v427
        %v492 = vpack.c.b16 %v436, %v432
        %v493 = vpack.c.b16 %v437, %v433
        %v494 = vpack.c.b16 %v438, %v434
        %v495 = vpack.c.b16 %v439, %v435
        %v496 = vpack.c.b16 %v444, %v440
        %v497 = vpack.c.b16 %v445, %v441
        %v498 = vpack.c.b16 %v446, %v442
        %v499 = vpack.c.b16 %v447, %v443
        %v500 = vpack.c.b16 %v452, %v448
        %v501 = vpack.c.b16 %v453, %v449
        %v502 = vpack.c.b16 %v454, %v450
        %v503 = vpack.c.b16 %v455, %v451
        %v504 = vpack.c.b16 %v460, %v456
        %v505 = vpack.c.b16 %v461, %v457
        %v506 = vpack.c.b16 %v462, %v458
        %v507 = vpack.c.b16 %v463, %v459
        %v508 = vpack.c.b16 %v468, %v464
        %v509 = vpack.c.b16 %v469, %v465
        %v510 = vpack.c.b16 %v470, %v466
        %v511 = vpack.c.b16 %v471, %v467
        %v512 = vpack.c.b16 %v476, %v472
        %v513 = vpack.c.b16 %v477, %v473
        %v514 = vpack.c.b16 %v478, %v474
        %v515 = vpack.c.b16 %v479, %v475
        %v516 = vpack.c.b16 %v484, %v480
        %v517 = vpack.c.b16 %v485, %v481
        %v518 = vpack.c.b16 %v486, %v482
        %v519 = vpack.c.b16 %v487, %v483
        %552 = vmatpush.bf16.msra.mxu0 %v516
        %553 = vmatpush.bf16.msra.mxu0 %v512
        %554 = vmatpush.bf16.msra.mxu0 %v508
        %555 = vmatpush.bf16.msra.mxu0 %v504
        %556 = vmatpush.bf16.msra.mxu0 %v500
        %557 = vmatpush.bf16.msra.mxu0 %v496
        %558 = vmatpush.bf16.msra.mxu0 %v492
        %559 = vmatpush.bf16.msra.mxu0 %v488
        %560 = vmatmul.bf16.gmra.mxu0 %v390
        %v561 = vpop.f32.mrf.mxu0
        %v562 = vadd.f32 0.0, %v561
        %v563 = vpop.f32.mrf.mxu0
        %v564 = vadd.f32 0.0, %v563
        %565 = vdwg.mxu0
        %566 = vmatpush.bf16.msra.mxu0 %v517
        %567 = vmatpush.bf16.msra.mxu0 %v513
        %568 = vmatpush.bf16.msra.mxu0 %v509
        %569 = vmatpush.bf16.msra.mxu0 %v505
        %570 = vmatpush.bf16.msra.mxu0 %v501
        %571 = vmatpush.bf16.msra.mxu0 %v497
        %572 = vmatpush.bf16.msra.mxu0 %v493
        %573 = vmatpush.bf16.msra.mxu0 %v489
        %574 = vmatmul.bf16.gmra.mxu0 %v390
        %v575 = vpop.f32.mrf.mxu0
        %v576 = vadd.f32 0.0, %v575
        %v577 = vpop.f32.mrf.mxu0
        %v578 = vadd.f32 0.0, %v577
        %579 = vdwg.mxu0
        %580 = vmatpush.bf16.msra.mxu0 %v518
        %581 = vmatpush.bf16.msra.mxu0 %v514
        %582 = vmatpush.bf16.msra.mxu0 %v510
        %583 = vmatpush.bf16.msra.mxu0 %v506
        %584 = vmatpush.bf16.msra.mxu0 %v502
        %585 = vmatpush.bf16.msra.mxu0 %v498
        %586 = vmatpush.bf16.msra.mxu0 %v494
        %587 = vmatpush.bf16.msra.mxu0 %v490
        %588 = vmatmul.bf16.gmra.mxu0 %v390
        %v589 = vpop.f32.mrf.mxu0
        %v590 = vadd.f32 0.0, %v589
        %v591 = vpop.f32.mrf.mxu0
        %v592 = vadd.f32 0.0, %v591
        %593 = vdwg.mxu0
        %594 = vmatpush.bf16.msra.mxu0 %v519
        %595 = vmatpush.bf16.msra.mxu0 %v515
        %596 = vmatpush.bf16.msra.mxu0 %v511
        %597 = vmatpush.bf16.msra.mxu0 %v507
        %598 = vmatpush.bf16.msra.mxu0 %v503
        %599 = vmatpush.bf16.msra.mxu0 %v499
        %600 = vmatpush.bf16.msra.mxu0 %v495
        %601 = vmatpush.bf16.msra.mxu0 %v491
        %602 = vmatmul.bf16.gmra.mxu0 %v390
        %v603 = vpop.f32.mrf.mxu0
        %v604 = vadd.f32 0.0, %v603
        %v605 = vpop.f32.mrf.mxu0
        %v606 = vadd.f32 0.0, %v605
        %607 = vdwg.mxu0
        %v608 = vadd.f32 %v344, %v562
        %v609 = vadd.f32 %v345, %v576
        %v610 = vadd.f32 %v346, %v590
        %v611 = vadd.f32 %v347, %v604
        %v612 = vadd.f32 %v348, %v564
        %v613 = vadd.f32 %v349, %v578
        %v614 = vadd.f32 %v350, %v592
        %v615 = vadd.f32 %v351, %v606
        %616 = vst [vmem:[#allocation2] sm:$0xff] %v608
        %617 = vst [vmem:[#allocation2 + $0x8] sm:$0xff] %v609
        %618 = vst [vmem:[#allocation2 + $0x10] sm:$0xff] %v610
        %619 = vst [vmem:[#allocation2 + $0x18] sm:$0xff] %v611
        %620 = vst [vmem:[#allocation2 + $0x20] sm:$0xff] %v612
        %621 = vst [vmem:[#allocation2 + $0x28] sm:$0xff] %v613
        %622 = vst [vmem:[#allocation2 + $0x30] sm:$0xff] %v614
        %623 = vst [vmem:[#allocation2 + $0x38] sm:$0xff] %v615
        // Predicated region
        $region60: #{_lambda_.15} parent=50 // pred_check
          %p624 = pneg %p332
        $region61: #{_lambda_.15} parent=50 // pred_check_branch
          %626 = sbr.rel (%p624) target = $region63
        $region62: #{_lambda_.15} parent=50 // pred_region
          %v627 = vld [vmem:[#allocation2] sm:$0xff]
          %v628 = vld [vmem:[#allocation2 + $0x8] sm:$0xff]
          %v629 = vld [vmem:[#allocation2 + $0x10] sm:$0xff]
          %v630 = vld [vmem:[#allocation2 + $0x18] sm:$0xff]
          %v631 = vld [vmem:[#allocation2 + $0x20] sm:$0xff]
          %v632 = vld [vmem:[#allocation2 + $0x28] sm:$0xff]
          %v633 = vld [vmem:[#allocation2 + $0x30] sm:$0xff]
          %v634 = vld [vmem:[#allocation2 + $0x38] sm:$0xff]
          %v635 = vld [vmem:[%s328] sm:$0xff]
          %v636 = vld [vmem:[%s328 + $0x8] sm:$0xff]
          %638 = vset.pattern.permute.xlu0 0
          %639 = vperm.xlu0 %638, %v635
          %v640 = vpop.permute.xlu0 %639
          %643 = vset.pattern.permute.xlu0 0
          %644 = vperm.xlu0 %643, %v636
          %v645 = vpop.permute.xlu0 %644
          %v647 = vadd.f32 %v627, %v640
          %v648 = vadd.f32 %v628, %v640
          %v649 = vadd.f32 %v629, %v640
          %v650 = vadd.f32 %v630, %v640
          %v651 = vadd.f32 %v631, %v645
          %v652 = vadd.f32 %v632, %v645
          %v653 = vadd.f32 %v633, %v645
          %v654 = vadd.f32 %v634, %v645
          %v655 = vpack.c.bf16 %v648, %v647
          %v656 = vpack.c.bf16 %v650, %v649
          %v657 = vpack.c.bf16 %v652, %v651
          %v658 = vpack.c.bf16 %v654, %v653
          %659 = vst [vmem:[%s312] sm:$0xff] %v655
          %660 = vst [vmem:[%s312 + $0x8] sm:$0xff] %v656
          %661 = vst [vmem:[%s312 + $0x10] sm:$0xff] %v657
          %662 = vst [vmem:[%s312 + $0x18] sm:$0xff] %v658
        $region63: #{_lambda_.15} parent=50 // pred_fallthru
          _
        %s663 = sand.u32 %s125, 1
        %s664 = sand.u32 %s125, 1
        %s665 = smul.addr %s664, 32
        %s666 = scalar_lea.vmem [#allocation4], %s665
        // Predicated region
        $region64: #{_lambda_.15} parent=50 // pred_check
          %p667 = pneg %p135
        $region65: #{_lambda_.15} parent=50 // pred_check_branch
          %669 = sbr.rel (%p667) target = $region67
        $region66: #{_lambda_.15} parent=50 // pred_region
          %s670 = smul.u32 2, %s19
          %s671 = smul.u32 4, %s20
          %s672 = smul.addr %s670, 8
          %s673 = sadd.s32 %s671, %s672
          %s674 = smul.addr %s673, 4
          %s675 = scalar_lea.vmem %s3, %s674
          // Predicated region
          $region68: #{_lambda_.15} parent=66 // pred_check
            _
          $region69: #{_lambda_.15} parent=66 // pred_check_branch
            %677 = sbr.rel (0) target = $region71
          $region70: #{_lambda_.15} parent=66 // pred_region
            // Predicated region
            $region72: #{_lambda_.15} parent=70 // pred_check
              _
            $region73: #{_lambda_.15} parent=70 // pred_check_branch
              %679 = sbr.rel (0) target = $region75
            $region74: #{_lambda_.15} parent=70 // pred_region
              loop: start=0, step=1, limit=1
              $region76: #{_lambda_.15} parent=74 // loop_pre_header
                _
              $region77: #{_lambda_.15} parent=74 // loop_header
                %s681 = sphi 0, %s685
                %p682 = scmp.ge.s32.totalorder %s681, 1
                %s686 = sphi %s666, %s666
                %s687 = sphi %s675, %s675
              $region78: #{_lambda_.15} parent=74 // loop_header_branch
                %684 = sbr.rel (%p682) target = $region82
              $region79: #{_lambda_.15} parent=74 // loop_body
                %v688 = vld [vmem:[%s686] sm:$0xff]
                %689 = vst [vmem:[%s687] sm:$0xff] %v688
                %v690 = vld [vmem:[%s686 + $0x8] sm:$0xff]
                %691 = vst [vmem:[%s687 + $0x8] sm:$0xff] %v690
                %v692 = vld [vmem:[%s686 + $0x10] sm:$0xff]
                %693 = vst [vmem:[%s687 + $0x20] sm:$0xff] %v692
                %v694 = vld [vmem:[%s686 + $0x18] sm:$0xff]
                %695 = vst [vmem:[%s687 + $0x28] sm:$0xff] %v694
              $region80: #{_lambda_.15} parent=74 // loop_footer
                %s685 = sadd.s32 1, %s681
              $region81: #{_lambda_.15} parent=74 // loop_footer_branch
                %680 = sbr.rel target = $region77
              $region82: #{_lambda_.15} parent=74 // loop_exit
                _
            $region75: #{_lambda_.15} parent=70 // pred_fallthru
              _
            // Predicated region
            $region83: #{_lambda_.15} parent=70 // pred_check
              _
            $region84: #{_lambda_.15} parent=70 // pred_check_branch
              %697 = sbr.rel target = $region86
            $region85: #{_lambda_.15} parent=70 // pred_region
              _
            $region86: #{_lambda_.15} parent=70 // pred_fallthru
              _
          $region71: #{_lambda_.15} parent=66 // pred_fallthru
            _
          %698 = vnop
        $region67: #{_lambda_.15} parent=50 // pred_fallthru
          _
      $region51: #{_lambda_.15} parent=5 // pred_fallthru
        _
      %p699 = scmp.le.s32.totalorder 2, %s9
      // Predicated region
      $region87: #{_lambda_.15} parent=5 // pred_check
        %p700 = pneg %p699
      $region88: #{_lambda_.15} parent=5 // pred_check_branch
        %702 = sbr.rel (%p700) target = $region90
      $region89: #{_lambda_.15} parent=5 // pred_region
        %s703 = ssub.s32 %s9, 2
        // Predicated region
        $region91: #{_lambda_.15} parent=89 // pred_check
          %p704 = pneg %p141
        $region92: #{_lambda_.15} parent=89 // pred_check_branch
          %706 = sbr.rel (%p704) target = $region94
        $region93: #{_lambda_.15} parent=89 // pred_region
          %s707 = sand.u32 %s126, 1
          %s708 = sand.u32 %s126, 1
          %s709 = smul.addr %s708, 32
          %s710 = scalar_lea.vmem [#allocation4], %s709
        $region94: #{_lambda_.15} parent=89 // pred_fallthru
          _
      $region90: #{_lambda_.15} parent=5 // pred_fallthru
        _
    $region6: #{_lambda_.15} parent=1 // loop_footer
      %s13 = sadd.s32 1, %s9
    $region7: #{_lambda_.15} parent=1 // loop_footer_branch
      %8 = sbr.rel target = $region3
    $region8: #{_lambda_.15} parent=1 // loop_exit
      _

// kernel: _lambda_.17
$region0: #{_lambda_.17}
  #allocation0 [shape = 'u32[]', space=smem, size = 0x4, offset = 0x4, fixed_abs, tag = 'smem constant byte address 0x4 - core index']
  #allocation1 [shape = 'u32[72,128]{1,0:T(1,128)}', space=vmem, size = 0x9000, scoped, tag = 'internal scratch']
  #allocation2 [shape = 'f32[32,128]{1,0:T(8,128)}', space=vmem, size = 0x4000, scoped, tag = 'scratch operand']
  %s0 = inlined_call_operand.vmem [shape: bf16[32,256], index: 0, kind: input, shape index: {}]
  %s1 = inlined_call_operand.vmem [shape: bf16[256,256], index: 1, kind: input, shape index: {}]
  %s2 = inlined_call_operand.vmem [shape: f32[32,1], index: 2, kind: input, shape index: {}]
  %s3 = inlined_call_operand.vmem [shape: bf16[32,256], index: 3, kind: output, shape index: {}]
  %s4 = sld [smem:[#allocation0]]
  $region131: #{_lambda_.17} parent=0
    _
  %s6 = ssub.s32 1, %s4
  %s7 = scalar_select 0, %s6, %s4
  $region1: #{_lambda_.17} parent=0
    #allocation3 [shape = 'u8[131072]{0}', space=vmem, size = 0x20000, scoped, tag = 'input window, operand 1']
    #allocation4 [shape = 'u8[16384]{0}', space=vmem, size = 0x4000, scoped, tag = 'output window, operand 0']
    loop: start=0, step=1, limit=4
    $region2: #{_lambda_.17} parent=1 // loop_pre_header
      _
    $region3: #{_lambda_.17} parent=1 // loop_header
      %s9 = sphi 0, %s13
      %p10 = scmp.ge.s32.totalorder %s9, 4
      %s16 = sphi 0, %s35
      %s17 = sphi 0, %s31
      %s18 = sphi 0, %s27
      %s19 = sphi 0, %s16
      %s20 = sphi 0, %s17
      %s21 = sphi 0, %s18
      %s22 = sphi 0, %s19
      %s23 = sphi 0, %s20
      %s24 = sphi 0, %s21
      %s40 = sphi 0, %s42
      %s43 = sphi 0, %s40
      %s44 = sphi 0, %s43
      %s60 = sphi 0, %s44
      %s68 = sphi 0, %s70
      %s71 = sphi 0, %s68
      %s72 = sphi 0, %s71
      %s88 = sphi 0, %s72
      %s94 = sphi 0, %s96
      %s97 = sphi 0, %s94
      %s98 = sphi 0, %s97
      %s114 = sphi 0, %s98
      %s122 = sphi 0, %s124
      %s125 = sphi 0, %s122
      %s126 = sphi 0, %s125
      %s142 = sphi 0, %s126
    $region4: #{_lambda_.17} parent=1 // loop_header_branch
      %12 = sbr.rel (%p10) target = $region8
    $region5: #{_lambda_.17} parent=1 // loop_body
      %s14 = ssub.s32 %s9, 1
      %s15 = ssub.s32 %s9, 2
      %s25 = sadd.s32 1, %s18
      %p26 = scmp.ge.s32.totalorder %s25, 1
      %s27 = scalar_select %p26, 0, %s25
      %s28 = sadd.s32 1, %s17
      %s29 = scalar_select %p26, %s28, %s17
      %p30 = scmp.ge.s32.totalorder %s29, 2
      %s31 = scalar_select %p30, 0, %s29
      %s32 = sadd.s32 1, %s16
      %s33 = scalar_select %p30, %s32, %s16
      %p34 = scmp.ge.s32.totalorder %s33, 1
      %s35 = scalar_select %p34, 0, %s33
      %s36 = ssub.s32 %s16, %s35
      %s37 = ssub.s32 %s18, %s27
      %s38 = sor.u32 %s36, %s37
      %p39 = scmp.eq.s32.totalorder %s38, 0
      %s41 = sadd.s32 %s40, 1
      %s42 = scalar_select %p39, %s40, %s41
      %p45 = pneg %p39
      %p46 = scmp.eq.s32.totalorder %s9, 1
      %p47 = por %p45, %p46
      %p48 = scmp.ne.s32.totalorder %s40, %s43
      %p49 = scmp.eq.s32.totalorder %s9, 0
      %p50 = por %p48, %p49
      %p51 = scmp.ne.s32.totalorder %s40, %s43
      %p52 = scmp.eq.s32.totalorder %s14, 1
      %p53 = por %p51, %p52
      %p54 = scmp.ne.s32.totalorder %s43, %s44
      %p55 = scmp.eq.s32.totalorder %s14, 0
      %p56 = por %p54, %p55
      %p57 = scmp.ne.s32.totalorder %s43, %s44
      %p58 = scmp.eq.s32.totalorder %s15, 1
      %p59 = por %p57, %p58
      %p61 = scmp.ne.s32.totalorder %s44, %s60
      %p62 = scmp.eq.s32.totalorder %s15, 0
      %p63 = por %p61, %p62
      %s64 = ssub.s32 %s18, %s27
      %s65 = ssub.s32 %s17, %s31
      %s66 = sor.u32 %s64, %s65
      %p67 = scmp.eq.s32.totalorder %s66, 0
      %s69 = sadd.s32 %s68, 1
      %s70 = scalar_select %p67, %s68, %s69
      %p73 = pneg %p67
      %p74 = scmp.eq.s32.totalorder %s9, 1
      %p75 = por %p73, %p74
      %p76 = scmp.ne.s32.totalorder %s68, %s71
      %p77 = scmp.eq.s32.totalorder %s9, 0
      %p78 = por %p76, %p77
      %p79 = scmp.ne.s32.totalorder %s68, %s71
      %p80 = scmp.eq.s32.totalorder %s14, 1
      %p81 = por %p79, %p80
      %p82 = scmp.ne.s32.totalorder %s71, %s72
      %p83 = scmp.eq.s32.totalorder %s14, 0
      %p84 = por %p82, %p83
      %p85 = scmp.ne.s32.totalorder %s71, %s72
      %p86 = scmp.eq.s32.totalorder %s15, 1
      %p87 = por %p85, %p86
      %p89 = scmp.ne.s32.totalorder %s72, %s88
      %p90 = scmp.eq.s32.totalorder %s15, 0
      %p91 = por %p89, %p90
      %s92 = ssub.s32 %s16, %s35
      %p93 = scmp.eq.s32.totalorder %s92, 0
      %s95 = sadd.s32 %s94, 1
      %s96 = scalar_select %p93, %s94, %s95
      %p99 = pneg %p93
      %p100 = scmp.eq.s32.totalorder %s9, 1
      %p101 = por %p99, %p100
      %p102 = scmp.ne.s32.totalorder %s94, %s97
      %p103 = scmp.eq.s32.totalorder %s9, 0
      %p104 = por %p102, %p103
      %p105 = scmp.ne.s32.totalorder %s94, %s97
      %p106 = scmp.eq.s32.totalorder %s14, 1
      %p107 = por %p105, %p106
      %p108 = scmp.ne.s32.totalorder %s97, %s98
      %p109 = scmp.eq.s32.totalorder %s14, 0
      %p110 = por %p108, %p109
      %p111 = scmp.ne.s32.totalorder %s97, %s98
      %p112 = scmp.eq.s32.totalorder %s15, 1
      %p113 = por %p111, %p112
      %p115 = scmp.ne.s32.totalorder %s98, %s114
      %p116 = scmp.eq.s32.totalorder %s15, 0
      %p117 = por %p115, %p116
      %s118 = ssub.s32 %s16, %s35
      %s119 = ssub.s32 %s17, %s31
      %s120 = sor.u32 %s118, %s119
      %p121 = scmp.eq.s32.totalorder %s120, 0
      %s123 = sadd.s32 %s122, 1
      %s124 = scalar_select %p121, %s122, %s123
      %p127 = pneg %p121
      %p128 = scmp.eq.s32.totalorder %s9, 1
      %p129 = por %p127, %p128
      %p130 = scmp.ne.s32.totalorder %s122, %s125
      %p131 = scmp.eq.s32.totalorder %s9, 0
      %p132 = por %p130, %p131
      %p133 = scmp.ne.s32.totalorder %s122, %s125
      %p134 = scmp.eq.s32.totalorder %s14, 1
      %p135 = por %p133, %p134
      %p136 = scmp.ne.s32.totalorder %s125, %s126
      %p137 = scmp.eq.s32.totalorder %s14, 0
      %p138 = por %p136, %p137
      %p139 = scmp.ne.s32.totalorder %s125, %s126
      %p140 = scmp.eq.s32.totalorder %s15, 1
      %p141 = por %p139, %p140
      %p143 = scmp.ne.s32.totalorder %s126, %s142
      %p144 = scmp.eq.s32.totalorder %s15, 0
      %p145 = por %p143, %p144
      %p146 = scmp.le.s32.totalorder 1, %s9
      %p147 = scmp.lt.s32.totalorder %s9, 3
      %p148 = pnand %p146, %p147
      %p149 = pneg %p148
      // Predicated region
      $region9: #{_lambda_.17} parent=5 // pred_check
        _
      $region10: #{_lambda_.17} parent=5 // pred_check_branch
        %151 = sbr.rel (%p148) target = $region12
      $region11: #{_lambda_.17} parent=5 // pred_region
        %s152 = ssub.s32 %s9, 1
        // Predicated region
        $region13: #{_lambda_.17} parent=11 // pred_check
          %p153 = pneg %p56
        $region14: #{_lambda_.17} parent=11 // pred_check_branch
          %155 = sbr.rel (%p153) target = $region16
        $region15: #{_lambda_.17} parent=11 // pred_region
          %s156 = smul.u32 4, %s19
          %s157 = smul.u32 2, %s21
          %p158 = scmp.lt.s32.totalorder %s156, 3
          %s159 = scalar_select %p158, %s156, 3
          %p160 = scmp.lt.s32.totalorder %s157, 1
          %s161 = scalar_select %p160, %s157, 1
          %s162 = smul.addr %s159, 2
          %s163 = sadd.s32 %s161, %s162
          %s164 = smul.addr %s163, 4
          %s165 = scalar_lea.vmem %s0, %s164
          %s166 = smul.u32 4, %s19
          %s167 = smul.u32 2, %s21
        $region16: #{_lambda_.17} parent=11 // pred_fallthru
          _
        // Predicated region
        $region17: #{_lambda_.17} parent=11 // pred_check
          %p168 = pneg %p110
        $region18: #{_lambda_.17} parent=11 // pred_check_branch
          %170 = sbr.rel (%p168) target = $region20
        $region19: #{_lambda_.17} parent=11 // pred_region
          %s171 = smul.u32 4, %s19
          %p172 = scmp.lt.s32.totalorder %s171, 3
          %s173 = scalar_select %p172, %s171, 3
          %s174 = smul.addr %s173, 8
          %s175 = scalar_lea.vmem %s2, %s174
          %s176 = smul.u32 4, %s19
        $region20: #{_lambda_.17} parent=11 // pred_fallthru
          _
      $region12: #{_lambda_.17} parent=5 // pred_fallthru
        _
      %p177 = scmp.lt.s32.totalorder %s9, 2
      // Predicated region
      $region21: #{_lambda_.17} parent=5 // pred_check
        %p178 = pneg %p177
      $region22: #{_lambda_.17} parent=5 // pred_check_branch
        %180 = sbr.rel (%p178) target = $region24
      $region23: #{_lambda_.17} parent=5 // pred_region
        // Predicated region
        $region25: #{_lambda_.17} parent=23 // pred_check
          %p181 = pneg %p78
        $region26: #{_lambda_.17} parent=23 // pred_check_branch
          %183 = sbr.rel (%p181) target = $region28
        $region27: #{_lambda_.17} parent=23 // pred_region
          %s184 = sand.u32 %s68, 1
          %s185 = sand.u32 %s68, 1
          %s186 = smul.addr %s185, 128
          %s187 = scalar_lea.vmem [#allocation3], %s186
          %s188 = smul.u32 32, %s18
          %s189 = smul.addr %s188, 2
          %s190 = sadd.s32 %s17, %s189
          %s191 = smul.addr %s190, 4
          %s192 = scalar_lea.vmem %s1, %s191
          // Predicated region
          $region29: #{_lambda_.17} parent=27 // pred_check
            _
          $region30: #{_lambda_.17} parent=27 // pred_check_branch
            %194 = sbr.rel (0) target = $region32
          $region31: #{_lambda_.17} parent=27 // pred_region
            // Predicated region
            $region33: #{_lambda_.17} parent=31 // pred_check
              _
            $region34: #{_lambda_.17} parent=31 // pred_check_branch
              %196 = sbr.rel target = $region36
            $region35: #{_lambda_.17} parent=31 // pred_region
              // Predicated region
              $region48: #{_lambda_.17} parent=35 // pred_check
                _
              $region49: #{_lambda_.17} parent=35 // pred_check_branch
                %274 = sbr.rel (0) target = $region51
              $region50: #{_lambda_.17} parent=35 // pred_region
                loop: start=0, step=1, limit=1
                $region52: #{_lambda_.17} parent=50 // loop_pre_header
                  _
                $region53: #{_lambda_.17} parent=50 // loop_header
                  %s276 = sphi 0, %s280
                  %p277 = scmp.ge.s32.totalorder %s276, 1
                  %s281 = sphi %s192, %s192
                  %s282 = sphi %s187, %s187
                $region54: #{_lambda_.17} parent=50 // loop_header_branch
                  %279 = sbr.rel (%p277) target = $region58
                $region55: #{_lambda_.17} parent=50 // loop_body
                  _
                $region56: #{_lambda_.17} parent=50 // loop_footer
                  %s280 = sadd.s32 1, %s276
                $region57: #{_lambda_.17} parent=50 // loop_footer_branch
                  %275 = sbr.rel target = $region53
                $region58: #{_lambda_.17} parent=50 // loop_exit
                  _
                %s284 = ssub.s32 16, 1
                loop: start=0, step=1, limit=1
                $region59: #{_lambda_.17} parent=50 // loop_pre_header
                  _
                $region60: #{_lambda_.17} parent=50 // loop_header
                  %s286 = sphi 0, %s290
                  %p287 = scmp.ge.s32.totalorder %s286, 1
                  %s291 = sphi %s192, %s192
                  %s292 = sphi %s187, %s187
                $region61: #{_lambda_.17} parent=50 // loop_header_branch
                  %289 = sbr.rel (%p287) target = $region65
                $region62: #{_lambda_.17} parent=50 // loop_body
                  %v293 = vld [vmem:[%s291] sm:%s284]
                  %294 = vst [vmem:[%s292] sm:%s284] %v293
                  %v295 = vld [vmem:[%s291 + $0x8] sm:%s284]
                  %296 = vst [vmem:[%s292 + $0x4] sm:%s284] %v295
                  %v297 = vld [vmem:[%s291 + $0x10] sm:%s284]
                  %298 = vst [vmem:[%s292 + $0x8] sm:%s284] %v297
                  %v299 = vld [vmem:[%s291 + $0x18] sm:%s284]
                  %300 = vst [vmem:[%s292 + $0xc] sm:%s284] %v299
                  %v301 = vld [vmem:[%s291 + $0x20] sm:%s284]
                  %302 = vst [vmem:[%s292 + $0x10] sm:%s284] %v301
                  %v303 = vld [vmem:[%s291 + $0x28] sm:%s284]
                  %304 = vst [vmem:[%s292 + $0x14] sm:%s284] %v303
                  %v305 = vld [vmem:[%s291 + $0x30] sm:%s284]
                  %306 = vst [vmem:[%s292 + $0x18] sm:%s284] %v305
                  %v307 = vld [vmem:[%s291 + $0x38] sm:%s284]
                  %308 = vst [vmem:[%s292 + $0x1c] sm:%s284] %v307
                  %v309 = vld [vmem:[%s291 + $0x40] sm:%s284]
                  %310 = vst [vmem:[%s292 + $0x20] sm:%s284] %v309
                  %v311 = vld [vmem:[%s291 + $0x48] sm:%s284]
                  %312 = vst [vmem:[%s292 + $0x24] sm:%s284] %v311
                  %v313 = vld [vmem:[%s291 + $0x50] sm:%s284]
                  %314 = vst [vmem:[%s292 + $0x28] sm:%s284] %v313
                  %v315 = vld [vmem:[%s291 + $0x58] sm:%s284]
                  %316 = vst [vmem:[%s292 + $0x2c] sm:%s284] %v315
                  %v317 = vld [vmem:[%s291 + $0x60] sm:%s284]
                  %318 = vst [vmem:[%s292 + $0x30] sm:%s284] %v317
                  %v319 = vld [vmem:[%s291 + $0x68] sm:%s284]
                  %320 = vst [vmem:[%s292 + $0x34] sm:%s284] %v319
                  %v321 = vld [vmem:[%s291 + $0x70] sm:%s284]
                  %322 = vst [vmem:[%s292 + $0x38] sm:%s284] %v321
                  %v323 = vld [vmem:[%s291 + $0x78] sm:%s284]
                  %324 = vst [vmem:[%s292 + $0x3c] sm:%s284] %v323
                  %v325 = vld [vmem:[%s291 + $0x80] sm:%s284]
                  %326 = vst [vmem:[%s292 + $0x40] sm:%s284] %v325
                  %v327 = vld [vmem:[%s291 + $0x88] sm:%s284]
                  %328 = vst [vmem:[%s292 + $0x44] sm:%s284] %v327
                  %v329 = vld [vmem:[%s291 + $0x90] sm:%s284]
                  %330 = vst [vmem:[%s292 + $0x48] sm:%s284] %v329
                  %v331 = vld [vmem:[%s291 + $0x98] sm:%s284]
                  %332 = vst [vmem:[%s292 + $0x4c] sm:%s284] %v331
                  %v333 = vld [vmem:[%s291 + $0xa0] sm:%s284]
                  %334 = vst [vmem:[%s292 + $0x50] sm:%s284] %v333
                  %v335 = vld [vmem:[%s291 + $0xa8] sm:%s284]
                  %336 = vst [vmem:[%s292 + $0x54] sm:%s284] %v335
                  %v337 = vld [vmem:[%s291 + $0xb0] sm:%s284]
                  %338 = vst [vmem:[%s292 + $0x58] sm:%s284] %v337
                  %v339 = vld [vmem:[%s291 + $0xb8] sm:%s284]
                  %340 = vst [vmem:[%s292 + $0x5c] sm:%s284] %v339
                  %v341 = vld [vmem:[%s291 + $0xc0] sm:%s284]
                  %342 = vst [vmem:[%s292 + $0x60] sm:%s284] %v341
                  %v343 = vld [vmem:[%s291 + $0xc8] sm:%s284]
                  %344 = vst [vmem:[%s292 + $0x64] sm:%s284] %v343
                  %v345 = vld [vmem:[%s291 + $0xd0] sm:%s284]
                  %346 = vst [vmem:[%s292 + $0x68] sm:%s284] %v345
                  %v347 = vld [vmem:[%s291 + $0xd8] sm:%s284]
                  %348 = vst [vmem:[%s292 + $0x6c] sm:%s284] %v347
                  %v349 = vld [vmem:[%s291 + $0xe0] sm:%s284]
                  %350 = vst [vmem:[%s292 + $0x70] sm:%s284] %v349
                  %v351 = vld [vmem:[%s291 + $0xe8] sm:%s284]
                  %352 = vst [vmem:[%s292 + $0x74] sm:%s284] %v351
                  %v353 = vld [vmem:[%s291 + $0xf0] sm:%s284]
                  %354 = vst [vmem:[%s292 + $0x78] sm:%s284] %v353
                  %v355 = vld [vmem:[%s291 + $0xf8] sm:%s284]
                  %356 = vst [vmem:[%s292 + $0x7c] sm:%s284] %v355
                $region63: #{_lambda_.17} parent=50 // loop_footer
                  %s290 = sadd.s32 1, %s286
                $region64: #{_lambda_.17} parent=50 // loop_footer_branch
                  %285 = sbr.rel target = $region60
                $region65: #{_lambda_.17} parent=50 // loop_exit
                  _
              $region51: #{_lambda_.17} parent=35 // pred_fallthru
                _
            $region36: #{_lambda_.17} parent=31 // pred_fallthru
              _
            // Predicated region
            $region37: #{_lambda_.17} parent=31 // pred_check
              _
            $region38: #{_lambda_.17} parent=31 // pred_check_branch
              %198 = sbr.rel (0) target = $region40
            $region39: #{_lambda_.17} parent=31 // pred_region
              %s200 = ssub.s32 16, 1
              loop: start=0, step=1, limit=1
              $region41: #{_lambda_.17} parent=39 // loop_pre_header
                _
              $region42: #{_lambda_.17} parent=39 // loop_header
                %s202 = sphi 0, %s206
                %p203 = scmp.ge.s32.totalorder %s202, 1
                %s207 = sphi %s192, %s192
                %s208 = sphi %s187, %s187
              $region43: #{_lambda_.17} parent=39 // loop_header_branch
                %205 = sbr.rel (%p203) target = $region47
              $region44: #{_lambda_.17} parent=39 // loop_body
                %v209 = vld [vmem:[%s207] sm:%s200]
                %210 = vst [vmem:[%s208] sm:%s200] %v209
                %v211 = vld [vmem:[%s207 + $0x8] sm:%s200]
                %212 = vst [vmem:[%s208 + $0x4] sm:%s200] %v211
                %v213 = vld [vmem:[%s207 + $0x10] sm:%s200]
                %214 = vst [vmem:[%s208 + $0x8] sm:%s200] %v213
                %v215 = vld [vmem:[%s207 + $0x18] sm:%s200]
                %216 = vst [vmem:[%s208 + $0xc] sm:%s200] %v215
                %v217 = vld [vmem:[%s207 + $0x20] sm:%s200]
                %218 = vst [vmem:[%s208 + $0x10] sm:%s200] %v217
                %v219 = vld [vmem:[%s207 + $0x28] sm:%s200]
                %220 = vst [vmem:[%s208 + $0x14] sm:%s200] %v219
                %v221 = vld [vmem:[%s207 + $0x30] sm:%s200]
                %222 = vst [vmem:[%s208 + $0x18] sm:%s200] %v221
                %v223 = vld [vmem:[%s207 + $0x38] sm:%s200]
                %224 = vst [vmem:[%s208 + $0x1c] sm:%s200] %v223
                %v225 = vld [vmem:[%s207 + $0x40] sm:%s200]
                %226 = vst [vmem:[%s208 + $0x20] sm:%s200] %v225
                %v227 = vld [vmem:[%s207 + $0x48] sm:%s200]
                %228 = vst [vmem:[%s208 + $0x24] sm:%s200] %v227
                %v229 = vld [vmem:[%s207 + $0x50] sm:%s200]
                %230 = vst [vmem:[%s208 + $0x28] sm:%s200] %v229
                %v231 = vld [vmem:[%s207 + $0x58] sm:%s200]
                %232 = vst [vmem:[%s208 + $0x2c] sm:%s200] %v231
                %v233 = vld [vmem:[%s207 + $0x60] sm:%s200]
                %234 = vst [vmem:[%s208 + $0x30] sm:%s200] %v233
                %v235 = vld [vmem:[%s207 + $0x68] sm:%s200]
                %236 = vst [vmem:[%s208 + $0x34] sm:%s200] %v235
                %v237 = vld [vmem:[%s207 + $0x70] sm:%s200]
                %238 = vst [vmem:[%s208 + $0x38] sm:%s200] %v237
                %v239 = vld [vmem:[%s207 + $0x78] sm:%s200]
                %240 = vst [vmem:[%s208 + $0x3c] sm:%s200] %v239
                %v241 = vld [vmem:[%s207 + $0x80] sm:%s200]
                %242 = vst [vmem:[%s208 + $0x40] sm:%s200] %v241
                %v243 = vld [vmem:[%s207 + $0x88] sm:%s200]
                %244 = vst [vmem:[%s208 + $0x44] sm:%s200] %v243
                %v245 = vld [vmem:[%s207 + $0x90] sm:%s200]
                %246 = vst [vmem:[%s208 + $0x48] sm:%s200] %v245
                %v247 = vld [vmem:[%s207 + $0x98] sm:%s200]
                %248 = vst [vmem:[%s208 + $0x4c] sm:%s200] %v247
                %v249 = vld [vmem:[%s207 + $0xa0] sm:%s200]
                %250 = vst [vmem:[%s208 + $0x50] sm:%s200] %v249
                %v251 = vld [vmem:[%s207 + $0xa8] sm:%s200]
                %252 = vst [vmem:[%s208 + $0x54] sm:%s200] %v251
                %v253 = vld [vmem:[%s207 + $0xb0] sm:%s200]
                %254 = vst [vmem:[%s208 + $0x58] sm:%s200] %v253
                %v255 = vld [vmem:[%s207 + $0xb8] sm:%s200]
                %256 = vst [vmem:[%s208 + $0x5c] sm:%s200] %v255
                %v257 = vld [vmem:[%s207 + $0xc0] sm:%s200]
                %258 = vst [vmem:[%s208 + $0x60] sm:%s200] %v257
                %v259 = vld [vmem:[%s207 + $0xc8] sm:%s200]
                %260 = vst [vmem:[%s208 + $0x64] sm:%s200] %v259
                %v261 = vld [vmem:[%s207 + $0xd0] sm:%s200]
                %262 = vst [vmem:[%s208 + $0x68] sm:%s200] %v261
                %v263 = vld [vmem:[%s207 + $0xd8] sm:%s200]
                %264 = vst [vmem:[%s208 + $0x6c] sm:%s200] %v263
                %v265 = vld [vmem:[%s207 + $0xe0] sm:%s200]
                %266 = vst [vmem:[%s208 + $0x70] sm:%s200] %v265
                %v267 = vld [vmem:[%s207 + $0xe8] sm:%s200]
                %268 = vst [vmem:[%s208 + $0x74] sm:%s200] %v267
                %v269 = vld [vmem:[%s207 + $0xf0] sm:%s200]
                %270 = vst [vmem:[%s208 + $0x78] sm:%s200] %v269
                %v271 = vld [vmem:[%s207 + $0xf8] sm:%s200]
                %272 = vst [vmem:[%s208 + $0x7c] sm:%s200] %v271
              $region45: #{_lambda_.17} parent=39 // loop_footer
                %s206 = sadd.s32 1, %s202
              $region46: #{_lambda_.17} parent=39 // loop_footer_branch
                %201 = sbr.rel target = $region42
              $region47: #{_lambda_.17} parent=39 // loop_exit
                _
            $region40: #{_lambda_.17} parent=31 // pred_fallthru
              _
          $region32: #{_lambda_.17} parent=27 // pred_fallthru
            _
          %357 = vnop
        $region28: #{_lambda_.17} parent=23 // pred_fallthru
          _
      $region24: #{_lambda_.17} parent=5 // pred_fallthru
        _
      %p358 = scmp.le.s32.totalorder 1, %s9
      %p359 = scmp.lt.s32.totalorder %s9, 3
      %p360 = pnand %p358, %p359
      %p361 = pneg %p360
      // Predicated region
      $region66: #{_lambda_.17} parent=5 // pred_check
        _
      $region67: #{_lambda_.17} parent=5 // pred_check_branch
        %363 = sbr.rel (%p360) target = $region69
      $region68: #{_lambda_.17} parent=5 // pred_region
        %s364 = ssub.s32 %s9, 1
        %s365 = sand.u32 %s71, 1
        %s366 = sand.u32 %s71, 1
        %s367 = smul.addr %s366, 128
        %s368 = scalar_lea.vmem [#allocation3], %s367
        // Predicated region
        $region70: #{_lambda_.17} parent=68 // pred_check
          %p369 = pneg %p84
        $region71: #{_lambda_.17} parent=68 // pred_check_branch
          %371 = sbr.rel (%p369) target = $region73
        $region72: #{_lambda_.17} parent=68 // pred_region
          _
        $region73: #{_lambda_.17} parent=68 // pred_fallthru
          _
        %s372 = smul.u32 4, %s19
        %s373 = smul.u32 2, %s21
        %p374 = scmp.lt.s32.totalorder %s372, 3
        %s375 = scalar_select %p374, %s372, 3
        %p376 = scmp.lt.s32.totalorder %s373, 1
        %s377 = scalar_select %p376, %s373, 1
        %s378 = smul.addr %s375, 2
        %s379 = sadd.s32 %s377, %s378
        %s380 = smul.addr %s379, 4
        %s381 = scalar_lea.vmem %s0, %s380
        %p382 = pneg %p56
        %p383 = pneg %p53
        %s384 = sand.u32 %s71, 1
        %s385 = sand.u32 %s71, 1
        %s386 = smul.addr %s385, 128
        %s387 = scalar_lea.vmem [#allocation3], %s386
        %p388 = pneg %p84
        %p389 = pneg %p81
        %s390 = smul.u32 4, %s19
        %p391 = scmp.lt.s32.totalorder %s390, 3
        %s392 = scalar_select %p391, %s390, 3
        %s393 = smul.addr %s392, 8
        %s394 = scalar_lea.vmem %s2, %s393
        %p395 = pneg %p110
        %p396 = pneg %p107
        %p397 = pneg %p138
        %p398 = pneg %p135
        %s399 = sand.u32 %s125, 1
        %s400 = sand.u32 %s125, 1
        %s401 = smul.addr %s400, 16
        %s402 = scalar_lea.vmem [#allocation4], %s401
        %s403 = smul.u32 4, %s19
        %s404 = smul.u32 2, %s21
        %p405 = scmp.lt.s32.totalorder %s403, 3
        %s406 = scalar_select %p405, %s403, 3
        %p407 = scmp.lt.s32.totalorder %s404, 1
        %s408 = scalar_select %p407, %s404, 1
        %s409 = smul.addr %s406, 2
        %s410 = sadd.s32 %s408, %s409
        %s411 = smul.addr %s410, 4
        %s412 = scalar_lea.vmem %s0, %s411
        %s413 = smul.u32 4, %s19
        %s414 = smul.u32 2, %s21
        %s415 = smul.u32 32, %s21
        %s416 = smul.u32 4, %s19
        %p417 = scmp.lt.s32.totalorder %s416, 3
        %s418 = scalar_select %p417, %s416, 3
        %s419 = smul.addr %s418, 8
        %s420 = scalar_lea.vmem %s2, %s419
        %s421 = smul.u32 4, %s19
        %s422 = smul.u32 4, %s19
        %p423 = scmp.eq.s32.totalorder %s21, 0
        // Predicated region
        $region74: #{_lambda_.17} parent=68 // pred_check
          %p424 = pneg %p423
        $region75: #{_lambda_.17} parent=68 // pred_check_branch
          %426 = sbr.rel (%p424) target = $region77
        $region76: #{_lambda_.17} parent=68 // pred_region
          %427 = vst [vmem:[#allocation2] sm:$0xff] 0.0
          %428 = vst [vmem:[#allocation2 + $0x8] sm:$0xff] 0.0
          %429 = vst [vmem:[#allocation2 + $0x10] sm:$0xff] 0.0
          %430 = vst [vmem:[#allocation2 + $0x18] sm:$0xff] 0.0
        $region77: #{_lambda_.17} parent=68 // pred_fallthru
          _
        %v431 = vld [vmem:[#allocation2] sm:$0xff]
        %v432 = vld [vmem:[#allocation2 + $0x8] sm:$0xff]
        %v433 = vld [vmem:[#allocation2 + $0x10] sm:$0xff]
        %v434 = vld [vmem:[#allocation2 + $0x18] sm:$0xff]
        %v435 = vld [vmem:[%s412] sm:$0xff]
        %v436 = vld [vmem:[%s412 + $0x8] sm:$0xff]
        %v437 = vld [vmem:[%s412 + $0x10] sm:$0xff]
        %v438 = vld [vmem:[%s412 + $0x18] sm:$0xff]
        %v439 = vld [vmem:[%s368] sm:$0xf]
        %v440 = vld [vmem:[%s368 + $0x4] sm:$0xf]
        %v441 = vld [vmem:[%s368 + $0x8] sm:$0xf]
        %v442 = vld [vmem:[%s368 + $0xc] sm:$0xf]
        %v443 = vld [vmem:[%s368 + $0x10] sm:$0xf]
        %v444 = vld [vmem:[%s368 + $0x14] sm:$0xf]
        %v445 = vld [vmem:[%s368 + $0x18] sm:$0xf]
        %v446 = vld [vmem:[%s368 + $0x1c] sm:$0xf]
        %v447 = vld [vmem:[%s368 + $0x20] sm:$0xf]
        %v448 = vld [vmem:[%s368 + $0x24] sm:$0xf]
        %v449 = vld [vmem:[%s368 + $0x28] sm:$0xf]
        %v450 = vld [vmem:[%s368 + $0x2c] sm:$0xf]
        %v451 = vld [vmem:[%s368 + $0x30] sm:$0xf]
        %v452 = vld [vmem:[%s368 + $0x34] sm:$0xf]
        %v453 = vld [vmem:[%s368 + $0x38] sm:$0xf]
        %v454 = vld [vmem:[%s368 + $0x3c] sm:$0xf]
        %v455 = vld [vmem:[%s368 + $0x40] sm:$0xf]
        %v456 = vld [vmem:[%s368 + $0x44] sm:$0xf]
        %v457 = vld [vmem:[%s368 + $0x48] sm:$0xf]
        %v458 = vld [vmem:[%s368 + $0x4c] sm:$0xf]
        %v459 = vld [vmem:[%s368 + $0x50] sm:$0xf]
        %v460 = vld [vmem:[%s368 + $0x54] sm:$0xf]
        %v461 = vld [vmem:[%s368 + $0x58] sm:$0xf]
        %v462 = vld [vmem:[%s368 + $0x5c] sm:$0xf]
        %v463 = vld [vmem:[%s368 + $0x60] sm:$0xf]
        %v464 = vld [vmem:[%s368 + $0x64] sm:$0xf]
        %v465 = vld [vmem:[%s368 + $0x68] sm:$0xf]
        %v466 = vld [vmem:[%s368 + $0x6c] sm:$0xf]
        %v467 = vld [vmem:[%s368 + $0x70] sm:$0xf]
        %v468 = vld [vmem:[%s368 + $0x74] sm:$0xf]
        %v469 = vld [vmem:[%s368 + $0x78] sm:$0xf]
        %v470 = vld [vmem:[%s368 + $0x7c] sm:$0xf]
        %v475 = vunpack.c.l.b16 %v435
        %v476 = vunpack.c.h.b16 %v435
        %v477 = vunpack.c.l.b16 %v436
        %v478 = vunpack.c.h.b16 %v436
        %v479 = vunpack.c.l.b16 %v437
        %v480 = vunpack.c.h.b16 %v437
        %v481 = vunpack.c.l.b16 %v438
        %v482 = vunpack.c.h.b16 %v438
        %v483 = vpack.c.b16 %v477, %v475
        %v484 = vpack.c.b16 %v478, %v476
        %v485 = vpack.c.b16 %v481, %v479
        %v486 = vpack.c.b16 %v482, %v480
        %v523 = vunpack.c.l.b16 %v439
        %v524 = vunpack.c.l.b16 %v440
        %v525 = vunpack.c.l.b16 %v441
        %v526 = vunpack.c.l.b16 %v442
        %v527 = vunpack.c.l.b16 %v443
        %v528 = vunpack.c.l.b16 %v444
        %v529 = vunpack.c.l.b16 %v445
        %v530 = vunpack.c.l.b16 %v446
        %v531 = vunpack.c.l.b16 %v447
        %v532 = vunpack.c.l.b16 %v448
        %v533 = vunpack.c.l.b16 %v449
        %v534 = vunpack.c.l.b16 %v450
        %v535 = vunpack.c.l.b16 %v451
        %v536 = vunpack.c.l.b16 %v452
        %v537 = vunpack.c.l.b16 %v453
        %v538 = vunpack.c.l.b16 %v454
        %v539 = vunpack.c.l.b16 %v455
        %v540 = vunpack.c.l.b16 %v456
        %v541 = vunpack.c.l.b16 %v457
        %v542 = vunpack.c.l.b16 %v458
        %v543 = vunpack.c.l.b16 %v459
        %v544 = vunpack.c.l.b16 %v460
        %v545 = vunpack.c.l.b16 %v461
        %v546 = vunpack.c.l.b16 %v462
        %v547 = vunpack.c.l.b16 %v463
        %v548 = vunpack.c.l.b16 %v464
        %v549 = vunpack.c.l.b16 %v465
        %v550 = vunpack.c.l.b16 %v466
        %v551 = vunpack.c.l.b16 %v467
        %v552 = vunpack.c.l.b16 %v468
        %v553 = vunpack.c.l.b16 %v469
        %v554 = vunpack.c.l.b16 %v470
        %v555 = vpack.c.b16 %v524, %v523
        %v556 = vpack.c.b16 %v526, %v525
        %v557 = vpack.c.b16 %v528, %v527
        %v558 = vpack.c.b16 %v530, %v529
        %v559 = vpack.c.b16 %v532, %v531
        %v560 = vpack.c.b16 %v534, %v533
        %v561 = vpack.c.b16 %v536, %v535
        %v562 = vpack.c.b16 %v538, %v537
        %v563 = vpack.c.b16 %v540, %v539
        %v564 = vpack.c.b16 %v542, %v541
        %v565 = vpack.c.b16 %v544, %v543
        %v566 = vpack.c.b16 %v546, %v545
        %v567 = vpack.c.b16 %v548, %v547
        %v568 = vpack.c.b16 %v550, %v549
        %v569 = vpack.c.b16 %v552, %v551
        %v570 = vpack.c.b16 %v554, %v553
        %587 = vmatpush.bf16.msra.mxu0 %v562
        %588 = vmatpush.bf16.msra.mxu0 %v561
        %589 = vmatpush.bf16.msra.mxu0 %v560
        %590 = vmatpush.bf16.msra.mxu0 %v559
        %591 = vmatpush.bf16.msra.mxu0 %v558
        %592 = vmatpush.bf16.msra.mxu0 %v557
        %593 = vmatpush.bf16.msra.mxu0 %v556
        %594 = vmatpush.bf16.msra.mxu0 %v555
        %595 = vmatmul.bf16.gmra.mxu0 %v483
        %v596 = vpop.f32.mrf.mxu0
        %v597 = vadd.f32 0.0, %v596
        %v598 = vpop.f32.mrf.mxu0
        %v599 = vadd.f32 0.0, %v598
        %600 = vmatmul.bf16.gmra.mxu0 %v485
        %v601 = vpop.f32.mrf.mxu0
        %v602 = vadd.f32 0.0, %v601
        %v603 = vpop.f32.mrf.mxu0
        %v604 = vadd.f32 0.0, %v603
        %605 = vdwg.mxu0
        %606 = vmatpush.bf16.msra.mxu0 %v570
        %607 = vmatpush.bf16.msra.mxu0 %v569
        %608 = vmatpush.bf16.msra.mxu0 %v568
        %609 = vmatpush.bf16.msra.mxu0 %v567
        %610 = vmatpush.bf16.msra.mxu0 %v566
        %611 = vmatpush.bf16.msra.mxu0 %v565
        %612 = vmatpush.bf16.msra.mxu0 %v564
        %613 = vmatpush.bf16.msra.mxu0 %v563
        %614 = vmatmul.bf16.gmra.mxu0 %v484
        %v615 = vpop.f32.mrf.mxu0
        %v616 = vadd.f32 %v597, %v615
        %v617 = vpop.f32.mrf.mxu0
        %v618 = vadd.f32 %v599, %v617
        %619 = vmatmul.bf16.gmra.mxu0 %v486
        %v620 = vpop.f32.mrf.mxu0
        %v621 = vadd.f32 %v602, %v620
        %v622 = vpop.f32.mrf.mxu0
        %v623 = vadd.f32 %v604, %v622
        %624 = vdwg.mxu0
        %v625 = vadd.f32 %v431, %v616
        %v626 = vadd.f32 %v432, %v618
        %v627 = vadd.f32 %v433, %v621
        %v628 = vadd.f32 %v434, %v623
        %629 = vst [vmem:[#allocation2] sm:$0xff] %v625
        %630 = vst [vmem:[#allocation2 + $0x8] sm:$0xff] %v626
        %631 = vst [vmem:[#allocation2 + $0x10] sm:$0xff] %v627
        %632 = vst [vmem:[#allocation2 + $0x18] sm:$0xff] %v628
        // Predicated region
        $region78: #{_lambda_.17} parent=68 // pred_check
          %p633 = pneg %p423
        $region79: #{_lambda_.17} parent=68 // pred_check_branch
          %635 = sbr.rel (%p633) target = $region81
        $region80: #{_lambda_.17} parent=68 // pred_region
          %v636 = vld [vmem:[#allocation2] sm:$0xff]
          %v637 = vld [vmem:[#allocation2 + $0x8] sm:$0xff]
          %v638 = vld [vmem:[#allocation2 + $0x10] sm:$0xff]
          %v639 = vld [vmem:[#allocation2 + $0x18] sm:$0xff]
          %v640 = vld [vmem:[%s420] sm:$0xff]
          %v641 = vld [vmem:[%s420 + $0x8] sm:$0xff]
          %v642 = vld [vmem:[%s420 + $0x10] sm:$0xff]
          %v643 = vld [vmem:[%s420 + $0x18] sm:$0xff]
          %645 = vset.pattern.permute.xlu0 0
          %646 = vperm.xlu0 %645, %v640
          %v647 = vpop.permute.xlu0 %646
          %650 = vset.pattern.permute.xlu0 0
          %651 = vperm.xlu0 %650, %v641
          %v652 = vpop.permute.xlu0 %651
          %655 = vset.pattern.permute.xlu0 0
          %656 = vperm.xlu0 %655, %v642
          %v657 = vpop.permute.xlu0 %656
          %660 = vset.pattern.permute.xlu0 0
          %661 = vperm.xlu0 %660, %v643
          %v662 = vpop.permute.xlu0 %661
          %v664 = vadd.f32 %v636, %v647
          %v665 = vadd.f32 %v637, %v652
          %v666 = vadd.f32 %v638, %v657
          %v667 = vadd.f32 %v639, %v662
          %v668 = vpack.c.bf16 %v664, %v664
          %v669 = vpack.c.bf16 %v665, %v665
          %v670 = vpack.c.bf16 %v666, %v666
          %v671 = vpack.c.bf16 %v667, %v667
          %672 = vst [vmem:[%s402] sm:$0xf] %v668
          %673 = vst [vmem:[%s402 + $0x4] sm:$0xf] %v669
          %674 = vst [vmem:[%s402 + $0x8] sm:$0xf] %v670
          %675 = vst [vmem:[%s402 + $0xc] sm:$0xf] %v671
        $region81: #{_lambda_.17} parent=68 // pred_fallthru
          _
        %s676 = sand.u32 %s125, 1
        %s677 = sand.u32 %s125, 1
        %s678 = smul.addr %s677, 16
        %s679 = scalar_lea.vmem [#allocation4], %s678
        // Predicated region
        $region82: #{_lambda_.17} parent=68 // pred_check
          %p680 = pneg %p135
        $region83: #{_lambda_.17} parent=68 // pred_check_branch
          %682 = sbr.rel (%p680) target = $region85
        $region84: #{_lambda_.17} parent=68 // pred_region
          %s683 = smul.u32 4, %s19
          %s684 = smul.addr %s683, 2
          %s685 = sadd.s32 %s20, %s684
          %s686 = smul.addr %s685, 4
          %s687 = scalar_lea.vmem %s3, %s686
          // Predicated region
          $region86: #{_lambda_.17} parent=84 // pred_check
            _
          $region87: #{_lambda_.17} parent=84 // pred_check_branch
            %689 = sbr.rel (0) target = $region89
          $region88: #{_lambda_.17} parent=84 // pred_region
            // Predicated region
            $region90: #{_lambda_.17} parent=88 // pred_check
              _
            $region91: #{_lambda_.17} parent=88 // pred_check_branch
              %691 = sbr.rel target = $region93
            $region92: #{_lambda_.17} parent=88 // pred_region
              // Predicated region
              $region105: #{_lambda_.17} parent=92 // pred_check
                _
              $region106: #{_lambda_.17} parent=92 // pred_check_branch
                %713 = sbr.rel (0) target = $region108
              $region107: #{_lambda_.17} parent=92 // pred_region
                loop: start=0, step=1, limit=1
                $region109: #{_lambda_.17} parent=107 // loop_pre_header
                  _
                $region110: #{_lambda_.17} parent=107 // loop_header
                  %s715 = sphi 0, %s719
                  %p716 = scmp.ge.s32.totalorder %s715, 1
                  %s720 = sphi %s679, %s679
                  %s721 = sphi %s687, %s687
                $region111: #{_lambda_.17} parent=107 // loop_header_branch
                  %718 = sbr.rel (%p716) target = $region115
                $region112: #{_lambda_.17} parent=107 // loop_body
                  _
                $region113: #{_lambda_.17} parent=107 // loop_footer
                  %s719 = sadd.s32 1, %s715
                $region114: #{_lambda_.17} parent=107 // loop_footer_branch
                  %714 = sbr.rel target = $region110
                $region115: #{_lambda_.17} parent=107 // loop_exit
                  _
                %s723 = ssub.s32 16, 1
                loop: start=0, step=1, limit=1
                $region116: #{_lambda_.17} parent=107 // loop_pre_header
                  _
                $region117: #{_lambda_.17} parent=107 // loop_header
                  %s725 = sphi 0, %s729
                  %p726 = scmp.ge.s32.totalorder %s725, 1
                  %s730 = sphi %s679, %s679
                  %s731 = sphi %s687, %s687
                $region118: #{_lambda_.17} parent=107 // loop_header_branch
                  %728 = sbr.rel (%p726) target = $region122
                $region119: #{_lambda_.17} parent=107 // loop_body
                  %v732 = vld [vmem:[%s730] sm:%s723]
                  %733 = vst [vmem:[%s731] sm:%s723] %v732
                  %v734 = vld [vmem:[%s730 + $0x4] sm:%s723]
                  %735 = vst [vmem:[%s731 + $0x8] sm:%s723] %v734
                  %v736 = vld [vmem:[%s730 + $0x8] sm:%s723]
                  %737 = vst [vmem:[%s731 + $0x10] sm:%s723] %v736
                  %v738 = vld [vmem:[%s730 + $0xc] sm:%s723]
                  %739 = vst [vmem:[%s731 + $0x18] sm:%s723] %v738
                $region120: #{_lambda_.17} parent=107 // loop_footer
                  %s729 = sadd.s32 1, %s725
                $region121: #{_lambda_.17} parent=107 // loop_footer_branch
                  %724 = sbr.rel target = $region117
                $region122: #{_lambda_.17} parent=107 // loop_exit
                  _
              $region108: #{_lambda_.17} parent=92 // pred_fallthru
                _
            $region93: #{_lambda_.17} parent=88 // pred_fallthru
              _
            // Predicated region
            $region94: #{_lambda_.17} parent=88 // pred_check
              _
            $region95: #{_lambda_.17} parent=88 // pred_check_branch
              %693 = sbr.rel (0) target = $region97
            $region96: #{_lambda_.17} parent=88 // pred_region
              %s695 = ssub.s32 16, 1
              loop: start=0, step=1, limit=1
              $region98: #{_lambda_.17} parent=96 // loop_pre_header
                _
              $region99: #{_lambda_.17} parent=96 // loop_header
                %s697 = sphi 0, %s701
                %p698 = scmp.ge.s32.totalorder %s697, 1
                %s702 = sphi %s679, %s679
                %s703 = sphi %s687, %s687
              $region100: #{_lambda_.17} parent=96 // loop_header_branch
                %700 = sbr.rel (%p698) target = $region104
              $region101: #{_lambda_.17} parent=96 // loop_body
                %v704 = vld [vmem:[%s702] sm:%s695]
                %705 = vst [vmem:[%s703] sm:%s695] %v704
                %v706 = vld [vmem:[%s702 + $0x4] sm:%s695]
                %707 = vst [vmem:[%s703 + $0x8] sm:%s695] %v706
                %v708 = vld [vmem:[%s702 + $0x8] sm:%s695]
                %709 = vst [vmem:[%s703 + $0x10] sm:%s695] %v708
                %v710 = vld [vmem:[%s702 + $0xc] sm:%s695]
                %711 = vst [vmem:[%s703 + $0x18] sm:%s695] %v710
              $region102: #{_lambda_.17} parent=96 // loop_footer
                %s701 = sadd.s32 1, %s697
              $region103: #{_lambda_.17} parent=96 // loop_footer_branch
                %696 = sbr.rel target = $region99
              $region104: #{_lambda_.17} parent=96 // loop_exit
                _
            $region97: #{_lambda_.17} parent=88 // pred_fallthru
              _
          $region89: #{_lambda_.17} parent=84 // pred_fallthru
            _
          %740 = vnop
        $region85: #{_lambda_.17} parent=68 // pred_fallthru
          _
      $region69: #{_lambda_.17} parent=5 // pred_fallthru
        _
      %p741 = scmp.le.s32.totalorder 2, %s9
      // Predicated region
      $region123: #{_lambda_.17} parent=5 // pred_check
        %p742 = pneg %p741
      $region124: #{_lambda_.17} parent=5 // pred_check_branch
        %744 = sbr.rel (%p742) target = $region126
      $region125: #{_lambda_.17} parent=5 // pred_region
        %s745 = ssub.s32 %s9, 2
        // Predicated region
        $region127: #{_lambda_.17} parent=125 // pred_check
          %p746 = pneg %p141
        $region128: #{_lambda_.17} parent=125 // pred_check_branch
          %748 = sbr.rel (%p746) target = $region130
        $region129: #{_lambda_.17} parent=125 // pred_region
          %s749 = sand.u32 %s126, 1
          %s750 = sand.u32 %s126, 1
          %s751 = smul.addr %s750, 16
          %s752 = scalar_lea.vmem [#allocation4], %s751
        $region130: #{_lambda_.17} parent=125 // pred_fallthru
          _
      $region126: #{_lambda_.17} parent=5 // pred_fallthru
        _
    $region6: #{_lambda_.17} parent=1 // loop_footer
      %s13 = sadd.s32 1, %s9
    $region7: #{_lambda_.17} parent=1 // loop_footer_branch
      %8 = sbr.rel target = $region3
    $region8: #{_lambda_.17} parent=1 // loop_exit
      _

// kernel: _lambda_.18
$region0: #{_lambda_.18}
  #allocation0 [shape = 'u32[]', space=smem, size = 0x4, offset = 0x4, fixed_abs, tag = 'smem constant byte address 0x4 - core index']
  #allocation1 [shape = 'u32[72,128]{1,0:T(1,128)}', space=vmem, size = 0x9000, scoped, tag = 'internal scratch']
  %s0 = inlined_call_operand.vmem [shape: bf16[32,256], index: 0, kind: input, shape index: {}]
  %s1 = inlined_call_operand.vmem [shape: f32[32,1], index: 1, kind: input, shape index: {}]
  %s2 = inlined_call_operand.vmem [shape: f32[32,1], index: 2, kind: input, shape index: {}]
  %s3 = inlined_call_operand.vmem [shape: bf16[32,256], index: 3, kind: output, shape index: {}]
  %s4 = sld [smem:[#allocation0]]
  $region22: #{_lambda_.18} parent=0
    _
  %s6 = ssub.s32 1, %s4
  %s7 = scalar_select 0, %s6, %s4
  // Predicated region
  $region2: #{_lambda_.18} parent=0 // pred_check
    _
  $region3: #{_lambda_.18} parent=0 // pred_check_branch
    %9 = sbr.rel (0) target = $region5
  $region4: #{_lambda_.18} parent=0 // pred_region
    _
  $region5: #{_lambda_.18} parent=0 // pred_fallthru
    _
  // Predicated region
  $region6: #{_lambda_.18} parent=0 // pred_check
    _
  $region7: #{_lambda_.18} parent=0 // pred_check_branch
    %11 = sbr.rel (0) target = $region9
  $region8: #{_lambda_.18} parent=0 // pred_region
    _
  $region9: #{_lambda_.18} parent=0 // pred_fallthru
    _
  // Predicated region
  $region10: #{_lambda_.18} parent=0 // pred_check
    _
  $region11: #{_lambda_.18} parent=0 // pred_check_branch
    %13 = sbr.rel (0) target = $region13
  $region12: #{_lambda_.18} parent=0 // pred_region
    _
  $region13: #{_lambda_.18} parent=0 // pred_fallthru
    _
  %v14 = vld [vmem:[%s0] sm:$0xff]
  %v15 = vld [vmem:[%s0 + $0x8] sm:$0xff]
  %v16 = vld [vmem:[%s0 + $0x10] sm:$0xff]
  %v17 = vld [vmem:[%s0 + $0x18] sm:$0xff]
  %v18 = vunpack.c.l.bf16 %v14
  %v19 = vunpack.c.h.bf16 %v14
  %v20 = vunpack.c.l.bf16 %v15
  %v21 = vunpack.c.h.bf16 %v15
  %v22 = vunpack.c.l.bf16 %v16
  %v23 = vunpack.c.h.bf16 %v16
  %v24 = vunpack.c.l.bf16 %v17
  %v25 = vunpack.c.h.bf16 %v17
  %v26 = vadd.f32 %v18, %v19
  %27 = vadd.xlane.f32.xlu0 %v26
  %v28 = vpop.xlane.xlu0 %27
  %v29 = vadd.f32 %v20, %v21
  %30 = vadd.xlane.f32.xlu0 %v29
  %v31 = vpop.xlane.xlu0 %30
  %v32 = vadd.f32 %v22, %v23
  %33 = vadd.xlane.f32.xlu0 %v32
  %v34 = vpop.xlane.xlu0 %33
  %v35 = vadd.f32 %v24, %v25
  %36 = vadd.xlane.f32.xlu0 %v35
  %v37 = vpop.xlane.xlu0 %36
  %v38 = vmul.f32 %v18, %v18
  %v39 = vmul.f32 %v19, %v19
  %v40 = vmul.f32 %v20, %v20
  %v41 = vmul.f32 %v21, %v21
  %v42 = vmul.f32 %v22, %v22
  %v43 = vmul.f32 %v23, %v23
  %v44 = vmul.f32 %v24, %v24
  %v45 = vmul.f32 %v25, %v25
  %v46 = vadd.f32 %v38, %v39
  %47 = vadd.xlane.f32.xlu0 %v46
  %v48 = vpop.xlane.xlu0 %47
  %v49 = vadd.f32 %v40, %v41
  %50 = vadd.xlane.f32.xlu0 %v49
  %v51 = vpop.xlane.xlu0 %50
  %v52 = vadd.f32 %v42, %v43
  %53 = vadd.xlane.f32.xlu0 %v52
  %v54 = vpop.xlane.xlu0 %53
  %v55 = vadd.f32 %v44, %v45
  %56 = vadd.xlane.f32.xlu0 %v55
  %v57 = vpop.xlane.xlu0 %56
  %v58 = vmul.f32 %v28, 0.00390625
  %v59 = vmul.f32 %v31, 0.00390625
  %v60 = vmul.f32 %v34, 0.00390625
  %v61 = vmul.f32 %v37, 0.00390625
  %v62 = vmul.f32 %v48, 0.00390625
  %v63 = vmul.f32 %v51, 0.00390625
  %v64 = vmul.f32 %v54, 0.00390625
  %v65 = vmul.f32 %v57, 0.00390625
  %v66 = vmul.f32 %v58, %v58
  %v67 = vmul.f32 %v59, %v59
  %v68 = vmul.f32 %v60, %v60
  %v69 = vmul.f32 %v61, %v61
  %v70 = vsub.f32 %v62, %v66
  %v71 = vsub.f32 %v63, %v67
  %v72 = vsub.f32 %v64, %v68
  %v73 = vsub.f32 %v65, %v69
  %v74 = vmax.f32 %v70, 0.0
  %v75 = vmax.f32 %v71, 0.0
  %v76 = vmax.f32 %v72, 0.0
  %v77 = vmax.f32 %v73, 0.0
  %v78 = vsub.f32 %v18, %v58
  %v79 = vsub.f32 %v19, %v58
  %v80 = vsub.f32 %v20, %v59
  %v81 = vsub.f32 %v21, %v59
  %v82 = vsub.f32 %v22, %v60
  %v83 = vsub.f32 %v23, %v60
  %v84 = vsub.f32 %v24, %v61
  %v85 = vsub.f32 %v25, %v61
  %v86 = vadd.f32 %v74, 1e-05
  %v87 = vadd.f32 %v75, 1e-05
  %v88 = vadd.f32 %v76, 1e-05
  %v89 = vadd.f32 %v77, 1e-05
  %v90 = vrsqrt.pop %v86
  %v91 = vmul.f32 %v90, %v86
  %v92 = vmul.f32 %v91, %v90
  %v93 = vmul.f32 0.5, %v92
  %v94 = vsub.f32 1.5, %v93
  %v95 = vmul.f32 %v90, %v94
  %vm96 = vweird.f32 %v86
  %vm97 = vweird.f32 %v90
  %vm98 = vmor %vm96, %vm97
  %v99 = vsel %vm98, %v90, %v95
  %v100 = vrsqrt.pop %v87
  %v101 = vmul.f32 %v100, %v87
  %v102 = vmul.f32 %v101, %v100
  %v103 = vmul.f32 0.5, %v102
  %v104 = vsub.f32 1.5, %v103
  %v105 = vmul.f32 %v100, %v104
  %vm106 = vweird.f32 %v87
  %vm107 = vweird.f32 %v100
  %vm108 = vmor %vm106, %vm107
  %v109 = vsel %vm108, %v100, %v105
  %v110 = vrsqrt.pop %v88
  %v111 = vmul.f32 %v110, %v88
  %v112 = vmul.f32 %v111, %v110
  %v113 = vmul.f32 0.5, %v112
  %v114 = vsub.f32 1.5, %v113
  %v115 = vmul.f32 %v110, %v114
  %vm116 = vweird.f32 %v88
  %vm117 = vweird.f32 %v110
  %vm118 = vmor %vm116, %vm117
  %v119 = vsel %vm118, %v110, %v115
  %v120 = vrsqrt.pop %v89
  %v121 = vmul.f32 %v120, %v89
  %v122 = vmul.f32 %v121, %v120
  %v123 = vmul.f32 0.5, %v122
  %v124 = vsub.f32 1.5, %v123
  %v125 = vmul.f32 %v120, %v124
  %vm126 = vweird.f32 %v89
  %vm127 = vweird.f32 %v120
  %vm128 = vmor %vm126, %vm127
  %v129 = vsel %vm128, %v120, %v125
  %v130 = vmul.f32 %v78, %v99
  %v131 = vmul.f32 %v79, %v99
  %v132 = vmul.f32 %v80, %v109
  %v133 = vmul.f32 %v81, %v109
  %v134 = vmul.f32 %v82, %v119
  %v135 = vmul.f32 %v83, %v119
  %v136 = vmul.f32 %v84, %v129
  %v137 = vmul.f32 %v85, %v129
  %v138 = vld [vmem:[%s1] sm:$0xff]
  %v139 = vld [vmem:[%s1 + $0x8] sm:$0xff]
  %v140 = vld [vmem:[%s1 + $0x10] sm:$0xff]
  %v141 = vld [vmem:[%s1 + $0x18] sm:$0xff]
  %143 = vset.pattern.permute.xlu0 0
  %144 = vperm.xlu0 %143, %v138
  %v145 = vpop.permute.xlu0 %144
  %148 = vset.pattern.permute.xlu0 0
  %149 = vperm.xlu0 %148, %v139
  %v150 = vpop.permute.xlu0 %149
  %153 = vset.pattern.permute.xlu0 0
  %154 = vperm.xlu0 %153, %v140
  %v155 = vpop.permute.xlu0 %154
  %158 = vset.pattern.permute.xlu0 0
  %159 = vperm.xlu0 %158, %v141
  %v160 = vpop.permute.xlu0 %159
  %v162 = vmul.f32 %v130, %v145
  %v163 = vmul.f32 %v131, %v145
  %v164 = vmul.f32 %v132, %v150
  %v165 = vmul.f32 %v133, %v150
  %v166 = vmul.f32 %v134, %v155
  %v167 = vmul.f32 %v135, %v155
  %v168 = vmul.f32 %v136, %v160
  %v169 = vmul.f32 %v137, %v160
  %v170 = vld [vmem:[%s2] sm:$0xff]
  %v171 = vld [vmem:[%s2 + $0x8] sm:$0xff]
  %v172 = vld [vmem:[%s2 + $0x10] sm:$0xff]
  %v173 = vld [vmem:[%s2 + $0x18] sm:$0xff]
  %175 = vset.pattern.permute.xlu0 0
  %176 = vperm.xlu0 %175, %v170
  %v177 = vpop.permute.xlu0 %176
  %180 = vset.pattern.permute.xlu0 0
  %181 = vperm.xlu0 %180, %v171
  %v182 = vpop.permute.xlu0 %181
  %185 = vset.pattern.permute.xlu0 0
  %186 = vperm.xlu0 %185, %v172
  %v187 = vpop.permute.xlu0 %186
  %190 = vset.pattern.permute.xlu0 0
  %191 = vperm.xlu0 %190, %v173
  %v192 = vpop.permute.xlu0 %191
  %v194 = vadd.f32 %v162, %v177
  %v195 = vadd.f32 %v163, %v177
  %v196 = vadd.f32 %v164, %v182
  %v197 = vadd.f32 %v165, %v182
  %v198 = vadd.f32 %v166, %v187
  %v199 = vadd.f32 %v167, %v187
  %v200 = vadd.f32 %v168, %v192
  %v201 = vadd.f32 %v169, %v192
  %vm202 = vcmp.ge.f32.partialorder %v194, 0.0
  %vm203 = vcmp.ge.f32.partialorder %v195, 0.0
  %vm204 = vcmp.ge.f32.partialorder %v196, 0.0
  %vm205 = vcmp.ge.f32.partialorder %v197, 0.0
  %vm206 = vcmp.ge.f32.partialorder %v198, 0.0
  %vm207 = vcmp.ge.f32.partialorder %v199, 0.0
  %vm208 = vcmp.ge.f32.partialorder %v200, 0.0
  %vm209 = vcmp.ge.f32.partialorder %v201, 0.0
  %v210 = vmul.f32 %v194, 0.2
  %v211 = vmul.f32 %v195, 0.2
  %v212 = vmul.f32 %v196, 0.2
  %v213 = vmul.f32 %v197, 0.2
  %v214 = vmul.f32 %v198, 0.2
  %v215 = vmul.f32 %v199, 0.2
  %v216 = vmul.f32 %v200, 0.2
  %v217 = vmul.f32 %v201, 0.2
  %v218 = vsel %vm202, %v194, %v210
  %v219 = vsel %vm203, %v195, %v211
  %v220 = vsel %vm204, %v196, %v212
  %v221 = vsel %vm205, %v197, %v213
  %v222 = vsel %vm206, %v198, %v214
  %v223 = vsel %vm207, %v199, %v215
  %v224 = vsel %vm208, %v200, %v216
  %v225 = vsel %vm209, %v201, %v217
  %v226 = vpack.c.bf16 %v219, %v218
  %v227 = vpack.c.bf16 %v221, %v220
  %v228 = vpack.c.bf16 %v223, %v222
  %v229 = vpack.c.bf16 %v225, %v224
  %230 = vst [vmem:[%s3] sm:$0xff] %v226
  %231 = vst [vmem:[%s3 + $0x8] sm:$0xff] %v227
  %232 = vst [vmem:[%s3 + $0x10] sm:$0xff] %v228
  %233 = vst [vmem:[%s3 + $0x18] sm:$0xff] %v229
  // Predicated region
  $region14: #{_lambda_.18} parent=0 // pred_check
    _
  $region15: #{_lambda_.18} parent=0 // pred_check_branch
    %235 = sbr.rel (0) target = $region17
  $region16: #{_lambda_.18} parent=0 // pred_region
    _
  $region17: #{_lambda_.18} parent=0 // pred_fallthru
    _
  // Predicated region
  $region18: #{_lambda_.18} parent=0 // pred_check
    _
  $region19: #{_lambda_.18} parent=0 // pred_check_branch
    %237 = sbr.rel (0) target = $region21
  $region20: #{_lambda_.18} parent=0 // pred_region
    _
  $region21: #{_lambda_.18} parent=0 // pred_fallthru
    _

// kernel: _lambda_.19
$region0: #{_lambda_.19}
  #allocation0 [shape = 'u32[]', space=smem, size = 0x4, offset = 0x4, fixed_abs, tag = 'smem constant byte address 0x4 - core index']
  #allocation1 [shape = 'u32[72,128]{1,0:T(1,128)}', space=vmem, size = 0x9000, scoped, tag = 'internal scratch']
  #allocation2 [shape = 'f32[32,128]{1,0:T(8,128)}', space=vmem, size = 0x4000, scoped, tag = 'scratch operand']
  %s0 = inlined_call_operand.vmem [shape: bf16[32,384], index: 0, kind: input, shape index: {}]
  %s1 = inlined_call_operand.vmem [shape: bf16[384,256], index: 1, kind: input, shape index: {}]
  %s2 = inlined_call_operand.vmem [shape: f32[32,1], index: 2, kind: input, shape index: {}]
  %s3 = inlined_call_operand.vmem [shape: bf16[32,256], index: 3, kind: output, shape index: {}]
  %s4 = sld [smem:[#allocation0]]
  $region131: #{_lambda_.19} parent=0
    _
  %s6 = ssub.s32 1, %s4
  %s7 = scalar_select 0, %s6, %s4
  $region1: #{_lambda_.19} parent=0
    #allocation3 [shape = 'u8[196608]{0}', space=vmem, size = 0x30000, scoped, tag = 'input window, operand 1']
    #allocation4 [shape = 'u8[16384]{0}', space=vmem, size = 0x4000, scoped, tag = 'output window, operand 0']
    loop: start=0, step=1, limit=4
    $region2: #{_lambda_.19} parent=1 // loop_pre_header
      _
    $region3: #{_lambda_.19} parent=1 // loop_header
      %s9 = sphi 0, %s13
      %p10 = scmp.ge.s32.totalorder %s9, 4
      %s16 = sphi 0, %s35
      %s17 = sphi 0, %s31
      %s18 = sphi 0, %s27
      %s19 = sphi 0, %s16
      %s20 = sphi 0, %s17
      %s21 = sphi 0, %s18
      %s22 = sphi 0, %s19
      %s23 = sphi 0, %s20
      %s24 = sphi 0, %s21
      %s40 = sphi 0, %s42
      %s43 = sphi 0, %s40
      %s44 = sphi 0, %s43
      %s60 = sphi 0, %s44
      %s68 = sphi 0, %s70
      %s71 = sphi 0, %s68
      %s72 = sphi 0, %s71
      %s88 = sphi 0, %s72
      %s94 = sphi 0, %s96
      %s97 = sphi 0, %s94
      %s98 = sphi 0, %s97
      %s114 = sphi 0, %s98
      %s122 = sphi 0, %s124
      %s125 = sphi 0, %s122
      %s126 = sphi 0, %s125
      %s142 = sphi 0, %s126
    $region4: #{_lambda_.19} parent=1 // loop_header_branch
      %12 = sbr.rel (%p10) target = $region8
    $region5: #{_lambda_.19} parent=1 // loop_body
      %s14 = ssub.s32 %s9, 1
      %s15 = ssub.s32 %s9, 2
      %s25 = sadd.s32 1, %s18
      %p26 = scmp.ge.s32.totalorder %s25, 1
      %s27 = scalar_select %p26, 0, %s25
      %s28 = sadd.s32 1, %s17
      %s29 = scalar_select %p26, %s28, %s17
      %p30 = scmp.ge.s32.totalorder %s29, 2
      %s31 = scalar_select %p30, 0, %s29
      %s32 = sadd.s32 1, %s16
      %s33 = scalar_select %p30, %s32, %s16
      %p34 = scmp.ge.s32.totalorder %s33, 1
      %s35 = scalar_select %p34, 0, %s33
      %s36 = ssub.s32 %s16, %s35
      %s37 = ssub.s32 %s18, %s27
      %s38 = sor.u32 %s36, %s37
      %p39 = scmp.eq.s32.totalorder %s38, 0
      %s41 = sadd.s32 %s40, 1
      %s42 = scalar_select %p39, %s40, %s41
      %p45 = pneg %p39
      %p46 = scmp.eq.s32.totalorder %s9, 1
      %p47 = por %p45, %p46
      %p48 = scmp.ne.s32.totalorder %s40, %s43
      %p49 = scmp.eq.s32.totalorder %s9, 0
      %p50 = por %p48, %p49
      %p51 = scmp.ne.s32.totalorder %s40, %s43
      %p52 = scmp.eq.s32.totalorder %s14, 1
      %p53 = por %p51, %p52
      %p54 = scmp.ne.s32.totalorder %s43, %s44
      %p55 = scmp.eq.s32.totalorder %s14, 0
      %p56 = por %p54, %p55
      %p57 = scmp.ne.s32.totalorder %s43, %s44
      %p58 = scmp.eq.s32.totalorder %s15, 1
      %p59 = por %p57, %p58
      %p61 = scmp.ne.s32.totalorder %s44, %s60
      %p62 = scmp.eq.s32.totalorder %s15, 0
      %p63 = por %p61, %p62
      %s64 = ssub.s32 %s18, %s27
      %s65 = ssub.s32 %s17, %s31
      %s66 = sor.u32 %s64, %s65
      %p67 = scmp.eq.s32.totalorder %s66, 0
      %s69 = sadd.s32 %s68, 1
      %s70 = scalar_select %p67, %s68, %s69
      %p73 = pneg %p67
      %p74 = scmp.eq.s32.totalorder %s9, 1
      %p75 = por %p73, %p74
      %p76 = scmp.ne.s32.totalorder %s68, %s71
      %p77 = scmp.eq.s32.totalorder %s9, 0
      %p78 = por %p76, %p77
      %p79 = scmp.ne.s32.totalorder %s68, %s71
      %p80 = scmp.eq.s32.totalorder %s14, 1
      %p81 = por %p79, %p80
      %p82 = scmp.ne.s32.totalorder %s71, %s72
      %p83 = scmp.eq.s32.totalorder %s14, 0
      %p84 = por %p82, %p83
      %p85 = scmp.ne.s32.totalorder %s71, %s72
      %p86 = scmp.eq.s32.totalorder %s15, 1
      %p87 = por %p85, %p86
      %p89 = scmp.ne.s32.totalorder %s72, %s88
      %p90 = scmp.eq.s32.totalorder %s15, 0
      %p91 = por %p89, %p90
      %s92 = ssub.s32 %s16, %s35
      %p93 = scmp.eq.s32.totalorder %s92, 0
      %s95 = sadd.s32 %s94, 1
      %s96 = scalar_select %p93, %s94, %s95
      %p99 = pneg %p93
      %p100 = scmp.eq.s32.totalorder %s9, 1
      %p101 = por %p99, %p100
      %p102 = scmp.ne.s32.totalorder %s94, %s97
      %p103 = scmp.eq.s32.totalorder %s9, 0
      %p104 = por %p102, %p103
      %p105 = scmp.ne.s32.totalorder %s94, %s97
      %p106 = scmp.eq.s32.totalorder %s14, 1
      %p107 = por %p105, %p106
      %p108 = scmp.ne.s32.totalorder %s97, %s98
      %p109 = scmp.eq.s32.totalorder %s14, 0
      %p110 = por %p108, %p109
      %p111 = scmp.ne.s32.totalorder %s97, %s98
      %p112 = scmp.eq.s32.totalorder %s15, 1
      %p113 = por %p111, %p112
      %p115 = scmp.ne.s32.totalorder %s98, %s114
      %p116 = scmp.eq.s32.totalorder %s15, 0
      %p117 = por %p115, %p116
      %s118 = ssub.s32 %s16, %s35
      %s119 = ssub.s32 %s17, %s31
      %s120 = sor.u32 %s118, %s119
      %p121 = scmp.eq.s32.totalorder %s120, 0
      %s123 = sadd.s32 %s122, 1
      %s124 = scalar_select %p121, %s122, %s123
      %p127 = pneg %p121
      %p128 = scmp.eq.s32.totalorder %s9, 1
      %p129 = por %p127, %p128
      %p130 = scmp.ne.s32.totalorder %s122, %s125
      %p131 = scmp.eq.s32.totalorder %s9, 0
      %p132 = por %p130, %p131
      %p133 = scmp.ne.s32.totalorder %s122, %s125
      %p134 = scmp.eq.s32.totalorder %s14, 1
      %p135 = por %p133, %p134
      %p136 = scmp.ne.s32.totalorder %s125, %s126
      %p137 = scmp.eq.s32.totalorder %s14, 0
      %p138 = por %p136, %p137
      %p139 = scmp.ne.s32.totalorder %s125, %s126
      %p140 = scmp.eq.s32.totalorder %s15, 1
      %p141 = por %p139, %p140
      %p143 = scmp.ne.s32.totalorder %s126, %s142
      %p144 = scmp.eq.s32.totalorder %s15, 0
      %p145 = por %p143, %p144
      %p146 = scmp.le.s32.totalorder 1, %s9
      %p147 = scmp.lt.s32.totalorder %s9, 3
      %p148 = pnand %p146, %p147
      %p149 = pneg %p148
      // Predicated region
      $region9: #{_lambda_.19} parent=5 // pred_check
        _
      $region10: #{_lambda_.19} parent=5 // pred_check_branch
        %151 = sbr.rel (%p148) target = $region12
      $region11: #{_lambda_.19} parent=5 // pred_region
        %s152 = ssub.s32 %s9, 1
        // Predicated region
        $region13: #{_lambda_.19} parent=11 // pred_check
          %p153 = pneg %p56
        $region14: #{_lambda_.19} parent=11 // pred_check_branch
          %155 = sbr.rel (%p153) target = $region16
        $region15: #{_lambda_.19} parent=11 // pred_region
          %s156 = smul.u32 4, %s19
          %s157 = smul.u32 3, %s21
          %p158 = scmp.lt.s32.totalorder %s156, 3
          %s159 = scalar_select %p158, %s156, 3
          %p160 = scmp.lt.s32.totalorder %s157, 2
          %s161 = scalar_select %p160, %s157, 2
          %s162 = smul.addr %s159, 3
          %s163 = sadd.s32 %s161, %s162
          %s164 = smul.addr %s163, 4
          %s165 = scalar_lea.vmem %s0, %s164
          %s166 = smul.u32 4, %s19
          %s167 = smul.u32 3, %s21
        $region16: #{_lambda_.19} parent=11 // pred_fallthru
          _
        // Predicated region
        $region17: #{_lambda_.19} parent=11 // pred_check
          %p168 = pneg %p110
        $region18: #{_lambda_.19} parent=11 // pred_check_branch
          %170 = sbr.rel (%p168) target = $region20
        $region19: #{_lambda_.19} parent=11 // pred_region
          %s171 = smul.u32 4, %s19
          %p172 = scmp.lt.s32.totalorder %s171, 3
          %s173 = scalar_select %p172, %s171, 3
          %s174 = smul.addr %s173, 8
          %s175 = scalar_lea.vmem %s2, %s174
          %s176 = smul.u32 4, %s19
        $region20: #{_lambda_.19} parent=11 // pred_fallthru
          _
      $region12: #{_lambda_.19} parent=5 // pred_fallthru
        _
      %p177 = scmp.lt.s32.totalorder %s9, 2
      // Predicated region
      $region21: #{_lambda_.19} parent=5 // pred_check
        %p178 = pneg %p177
      $region22: #{_lambda_.19} parent=5 // pred_check_branch
        %180 = sbr.rel (%p178) target = $region24
      $region23: #{_lambda_.19} parent=5 // pred_region
        // Predicated region
        $region25: #{_lambda_.19} parent=23 // pred_check
          %p181 = pneg %p78
        $region26: #{_lambda_.19} parent=23 // pred_check_branch
          %183 = sbr.rel (%p181) target = $region28
        $region27: #{_lambda_.19} parent=23 // pred_region
          %s184 = sand.u32 %s68, 1
          %s185 = sand.u32 %s68, 1
          %s186 = smul.addr %s185, 192
          %s187 = scalar_lea.vmem [#allocation3], %s186
          %s188 = smul.u32 48, %s18
          %s189 = smul.addr %s188, 2
          %s190 = sadd.s32 %s17, %s189
          %s191 = smul.addr %s190, 4
          %s192 = scalar_lea.vmem %s1, %s191
          // Predicated region
          $region29: #{_lambda_.19} parent=27 // pred_check
            _
          $region30: #{_lambda_.19} parent=27 // pred_check_branch
            %194 = sbr.rel (0) target = $region32
          $region31: #{_lambda_.19} parent=27 // pred_region
            // Predicated region
            $region33: #{_lambda_.19} parent=31 // pred_check
              _
            $region34: #{_lambda_.19} parent=31 // pred_check_branch
              %196 = sbr.rel target = $region36
            $region35: #{_lambda_.19} parent=31 // pred_region
              // Predicated region
              $region48: #{_lambda_.19} parent=35 // pred_check
                _
              $region49: #{_lambda_.19} parent=35 // pred_check_branch
                %306 = sbr.rel (0) target = $region51
              $region50: #{_lambda_.19} parent=35 // pred_region
                loop: start=0, step=1, limit=1
                $region52: #{_lambda_.19} parent=50 // loop_pre_header
                  _
                $region53: #{_lambda_.19} parent=50 // loop_header
                  %s308 = sphi 0, %s312
                  %p309 = scmp.ge.s32.totalorder %s308, 1
                  %s313 = sphi %s192, %s192
                  %s314 = sphi %s187, %s187
                $region54: #{_lambda_.19} parent=50 // loop_header_branch
                  %311 = sbr.rel (%p309) target = $region58
                $region55: #{_lambda_.19} parent=50 // loop_body
                  _
                $region56: #{_lambda_.19} parent=50 // loop_footer
                  %s312 = sadd.s32 1, %s308
                $region57: #{_lambda_.19} parent=50 // loop_footer_branch
                  %307 = sbr.rel target = $region53
                $region58: #{_lambda_.19} parent=50 // loop_exit
                  _
                %s316 = ssub.s32 16, 1
                loop: start=0, step=1, limit=1
                $region59: #{_lambda_.19} parent=50 // loop_pre_header
                  _
                $region60: #{_lambda_.19} parent=50 // loop_header
                  %s318 = sphi 0, %s322
                  %p319 = scmp.ge.s32.totalorder %s318, 1
                  %s323 = sphi %s192, %s192
                  %s324 = sphi %s187, %s187
                $region61: #{_lambda_.19} parent=50 // loop_header_branch
                  %321 = sbr.rel (%p319) target = $region65
                $region62: #{_lambda_.19} parent=50 // loop_body
                  %v325 = vld [vmem:[%s323] sm:%s316]
                  %326 = vst [vmem:[%s324] sm:%s316] %v325
                  %v327 = vld [vmem:[%s323 + $0x8] sm:%s316]
                  %328 = vst [vmem:[%s324 + $0x4] sm:%s316] %v327
                  %v329 = vld [vmem:[%s323 + $0x10] sm:%s316]
                  %330 = vst [vmem:[%s324 + $0x8] sm:%s316] %v329
                  %v331 = vld [vmem:[%s323 + $0x18] sm:%s316]
                  %332 = vst [vmem:[%s324 + $0xc] sm:%s316] %v331
                  %v333 = vld [vmem:[%s323 + $0x20] sm:%s316]
                  %334 = vst [vmem:[%s324 + $0x10] sm:%s316] %v333
                  %v335 = vld [vmem:[%s323 + $0x28] sm:%s316]
                  %336 = vst [vmem:[%s324 + $0x14] sm:%s316] %v335
                  %v337 = vld [vmem:[%s323 + $0x30] sm:%s316]
                  %338 = vst [vmem:[%s324 + $0x18] sm:%s316] %v337
                  %v339 = vld [vmem:[%s323 + $0x38] sm:%s316]
                  %340 = vst [vmem:[%s324 + $0x1c] sm:%s316] %v339
                  %v341 = vld [vmem:[%s323 + $0x40] sm:%s316]
                  %342 = vst [vmem:[%s324 + $0x20] sm:%s316] %v341
                  %v343 = vld [vmem:[%s323 + $0x48] sm:%s316]
                  %344 = vst [vmem:[%s324 + $0x24] sm:%s316] %v343
                  %v345 = vld [vmem:[%s323 + $0x50] sm:%s316]
                  %346 = vst [vmem:[%s324 + $0x28] sm:%s316] %v345
                  %v347 = vld [vmem:[%s323 + $0x58] sm:%s316]
                  %348 = vst [vmem:[%s324 + $0x2c] sm:%s316] %v347
                  %v349 = vld [vmem:[%s323 + $0x60] sm:%s316]
                  %350 = vst [vmem:[%s324 + $0x30] sm:%s316] %v349
                  %v351 = vld [vmem:[%s323 + $0x68] sm:%s316]
                  %352 = vst [vmem:[%s324 + $0x34] sm:%s316] %v351
                  %v353 = vld [vmem:[%s323 + $0x70] sm:%s316]
                  %354 = vst [vmem:[%s324 + $0x38] sm:%s316] %v353
                  %v355 = vld [vmem:[%s323 + $0x78] sm:%s316]
                  %356 = vst [vmem:[%s324 + $0x3c] sm:%s316] %v355
                  %v357 = vld [vmem:[%s323 + $0x80] sm:%s316]
                  %358 = vst [vmem:[%s324 + $0x40] sm:%s316] %v357
                  %v359 = vld [vmem:[%s323 + $0x88] sm:%s316]
                  %360 = vst [vmem:[%s324 + $0x44] sm:%s316] %v359
                  %v361 = vld [vmem:[%s323 + $0x90] sm:%s316]
                  %362 = vst [vmem:[%s324 + $0x48] sm:%s316] %v361
                  %v363 = vld [vmem:[%s323 + $0x98] sm:%s316]
                  %364 = vst [vmem:[%s324 + $0x4c] sm:%s316] %v363
                  %v365 = vld [vmem:[%s323 + $0xa0] sm:%s316]
                  %366 = vst [vmem:[%s324 + $0x50] sm:%s316] %v365
                  %v367 = vld [vmem:[%s323 + $0xa8] sm:%s316]
                  %368 = vst [vmem:[%s324 + $0x54] sm:%s316] %v367
                  %v369 = vld [vmem:[%s323 + $0xb0] sm:%s316]
                  %370 = vst [vmem:[%s324 + $0x58] sm:%s316] %v369
                  %v371 = vld [vmem:[%s323 + $0xb8] sm:%s316]
                  %372 = vst [vmem:[%s324 + $0x5c] sm:%s316] %v371
                  %v373 = vld [vmem:[%s323 + $0xc0] sm:%s316]
                  %374 = vst [vmem:[%s324 + $0x60] sm:%s316] %v373
                  %v375 = vld [vmem:[%s323 + $0xc8] sm:%s316]
                  %376 = vst [vmem:[%s324 + $0x64] sm:%s316] %v375
                  %v377 = vld [vmem:[%s323 + $0xd0] sm:%s316]
                  %378 = vst [vmem:[%s324 + $0x68] sm:%s316] %v377
                  %v379 = vld [vmem:[%s323 + $0xd8] sm:%s316]
                  %380 = vst [vmem:[%s324 + $0x6c] sm:%s316] %v379
                  %v381 = vld [vmem:[%s323 + $0xe0] sm:%s316]
                  %382 = vst [vmem:[%s324 + $0x70] sm:%s316] %v381
                  %v383 = vld [vmem:[%s323 + $0xe8] sm:%s316]
                  %384 = vst [vmem:[%s324 + $0x74] sm:%s316] %v383
                  %v385 = vld [vmem:[%s323 + $0xf0] sm:%s316]
                  %386 = vst [vmem:[%s324 + $0x78] sm:%s316] %v385
                  %v387 = vld [vmem:[%s323 + $0xf8] sm:%s316]
                  %388 = vst [vmem:[%s324 + $0x7c] sm:%s316] %v387
                  %v389 = vld [vmem:[%s323 + $0x100] sm:%s316]
                  %390 = vst [vmem:[%s324 + $0x80] sm:%s316] %v389
                  %v391 = vld [vmem:[%s323 + $0x108] sm:%s316]
                  %392 = vst [vmem:[%s324 + $0x84] sm:%s316] %v391
                  %v393 = vld [vmem:[%s323 + $0x110] sm:%s316]
                  %394 = vst [vmem:[%s324 + $0x88] sm:%s316] %v393
                  %v395 = vld [vmem:[%s323 + $0x118] sm:%s316]
                  %396 = vst [vmem:[%s324 + $0x8c] sm:%s316] %v395
                  %v397 = vld [vmem:[%s323 + $0x120] sm:%s316]
                  %398 = vst [vmem:[%s324 + $0x90] sm:%s316] %v397
                  %v399 = vld [vmem:[%s323 + $0x128] sm:%s316]
                  %400 = vst [vmem:[%s324 + $0x94] sm:%s316] %v399
                  %v401 = vld [vmem:[%s323 + $0x130] sm:%s316]
                  %402 = vst [vmem:[%s324 + $0x98] sm:%s316] %v401
                  %v403 = vld [vmem:[%s323 + $0x138] sm:%s316]
                  %404 = vst [vmem:[%s324 + $0x9c] sm:%s316] %v403
                  %v405 = vld [vmem:[%s323 + $0x140] sm:%s316]
                  %406 = vst [vmem:[%s324 + $0xa0] sm:%s316] %v405
                  %v407 = vld [vmem:[%s323 + $0x148] sm:%s316]
                  %408 = vst [vmem:[%s324 + $0xa4] sm:%s316] %v407
                  %v409 = vld [vmem:[%s323 + $0x150] sm:%s316]
                  %410 = vst [vmem:[%s324 + $0xa8] sm:%s316] %v409
                  %v411 = vld [vmem:[%s323 + $0x158] sm:%s316]
                  %412 = vst [vmem:[%s324 + $0xac] sm:%s316] %v411
                  %v413 = vld [vmem:[%s323 + $0x160] sm:%s316]
                  %414 = vst [vmem:[%s324 + $0xb0] sm:%s316] %v413
                  %v415 = vld [vmem:[%s323 + $0x168] sm:%s316]
                  %416 = vst [vmem:[%s324 + $0xb4] sm:%s316] %v415
                  %v417 = vld [vmem:[%s323 + $0x170] sm:%s316]
                  %418 = vst [vmem:[%s324 + $0xb8] sm:%s316] %v417
                  %v419 = vld [vmem:[%s323 + $0x178] sm:%s316]
                  %420 = vst [vmem:[%s324 + $0xbc] sm:%s316] %v419
                $region63: #{_lambda_.19} parent=50 // loop_footer
                  %s322 = sadd.s32 1, %s318
                $region64: #{_lambda_.19} parent=50 // loop_footer_branch
                  %317 = sbr.rel target = $region60
                $region65: #{_lambda_.19} parent=50 // loop_exit
                  _
              $region51: #{_lambda_.19} parent=35 // pred_fallthru
                _
            $region36: #{_lambda_.19} parent=31 // pred_fallthru
              _
            // Predicated region
            $region37: #{_lambda_.19} parent=31 // pred_check
              _
            $region38: #{_lambda_.19} parent=31 // pred_check_branch
              %198 = sbr.rel (0) target = $region40
            $region39: #{_lambda_.19} parent=31 // pred_region
              %s200 = ssub.s32 16, 1
              loop: start=0, step=1, limit=1
              $region41: #{_lambda_.19} parent=39 // loop_pre_header
                _
              $region42: #{_lambda_.19} parent=39 // loop_header
                %s202 = sphi 0, %s206
                %p203 = scmp.ge.s32.totalorder %s202, 1
                %s207 = sphi %s192, %s192
                %s208 = sphi %s187, %s187
              $region43: #{_lambda_.19} parent=39 // loop_header_branch
                %205 = sbr.rel (%p203) target = $region47
              $region44: #{_lambda_.19} parent=39 // loop_body
                %v209 = vld [vmem:[%s207] sm:%s200]
                %210 = vst [vmem:[%s208] sm:%s200] %v209
                %v211 = vld [vmem:[%s207 + $0x8] sm:%s200]
                %212 = vst [vmem:[%s208 + $0x4] sm:%s200] %v211
                %v213 = vld [vmem:[%s207 + $0x10] sm:%s200]
                %214 = vst [vmem:[%s208 + $0x8] sm:%s200] %v213
                %v215 = vld [vmem:[%s207 + $0x18] sm:%s200]
                %216 = vst [vmem:[%s208 + $0xc] sm:%s200] %v215
                %v217 = vld [vmem:[%s207 + $0x20] sm:%s200]
                %218 = vst [vmem:[%s208 + $0x10] sm:%s200] %v217
                %v219 = vld [vmem:[%s207 + $0x28] sm:%s200]
                %220 = vst [vmem:[%s208 + $0x14] sm:%s200] %v219
                %v221 = vld [vmem:[%s207 + $0x30] sm:%s200]
                %222 = vst [vmem:[%s208 + $0x18] sm:%s200] %v221
                %v223 = vld [vmem:[%s207 + $0x38] sm:%s200]
                %224 = vst [vmem:[%s208 + $0x1c] sm:%s200] %v223
                %v225 = vld [vmem:[%s207 + $0x40] sm:%s200]
                %226 = vst [vmem:[%s208 + $0x20] sm:%s200] %v225
                %v227 = vld [vmem:[%s207 + $0x48] sm:%s200]
                %228 = vst [vmem:[%s208 + $0x24] sm:%s200] %v227
                %v229 = vld [vmem:[%s207 + $0x50] sm:%s200]
                %230 = vst [vmem:[%s208 + $0x28] sm:%s200] %v229
                %v231 = vld [vmem:[%s207 + $0x58] sm:%s200]
                %232 = vst [vmem:[%s208 + $0x2c] sm:%s200] %v231
                %v233 = vld [vmem:[%s207 + $0x60] sm:%s200]
                %234 = vst [vmem:[%s208 + $0x30] sm:%s200] %v233
                %v235 = vld [vmem:[%s207 + $0x68] sm:%s200]
                %236 = vst [vmem:[%s208 + $0x34] sm:%s200] %v235
                %v237 = vld [vmem:[%s207 + $0x70] sm:%s200]
                %238 = vst [vmem:[%s208 + $0x38] sm:%s200] %v237
                %v239 = vld [vmem:[%s207 + $0x78] sm:%s200]
                %240 = vst [vmem:[%s208 + $0x3c] sm:%s200] %v239
                %v241 = vld [vmem:[%s207 + $0x80] sm:%s200]
                %242 = vst [vmem:[%s208 + $0x40] sm:%s200] %v241
                %v243 = vld [vmem:[%s207 + $0x88] sm:%s200]
                %244 = vst [vmem:[%s208 + $0x44] sm:%s200] %v243
                %v245 = vld [vmem:[%s207 + $0x90] sm:%s200]
                %246 = vst [vmem:[%s208 + $0x48] sm:%s200] %v245
                %v247 = vld [vmem:[%s207 + $0x98] sm:%s200]
                %248 = vst [vmem:[%s208 + $0x4c] sm:%s200] %v247
                %v249 = vld [vmem:[%s207 + $0xa0] sm:%s200]
                %250 = vst [vmem:[%s208 + $0x50] sm:%s200] %v249
                %v251 = vld [vmem:[%s207 + $0xa8] sm:%s200]
                %252 = vst [vmem:[%s208 + $0x54] sm:%s200] %v251
                %v253 = vld [vmem:[%s207 + $0xb0] sm:%s200]
                %254 = vst [vmem:[%s208 + $0x58] sm:%s200] %v253
                %v255 = vld [vmem:[%s207 + $0xb8] sm:%s200]
                %256 = vst [vmem:[%s208 + $0x5c] sm:%s200] %v255
                %v257 = vld [vmem:[%s207 + $0xc0] sm:%s200]
                %258 = vst [vmem:[%s208 + $0x60] sm:%s200] %v257
                %v259 = vld [vmem:[%s207 + $0xc8] sm:%s200]
                %260 = vst [vmem:[%s208 + $0x64] sm:%s200] %v259
                %v261 = vld [vmem:[%s207 + $0xd0] sm:%s200]
                %262 = vst [vmem:[%s208 + $0x68] sm:%s200] %v261
                %v263 = vld [vmem:[%s207 + $0xd8] sm:%s200]
                %264 = vst [vmem:[%s208 + $0x6c] sm:%s200] %v263
                %v265 = vld [vmem:[%s207 + $0xe0] sm:%s200]
                %266 = vst [vmem:[%s208 + $0x70] sm:%s200] %v265
                %v267 = vld [vmem:[%s207 + $0xe8] sm:%s200]
                %268 = vst [vmem:[%s208 + $0x74] sm:%s200] %v267
                %v269 = vld [vmem:[%s207 + $0xf0] sm:%s200]
                %270 = vst [vmem:[%s208 + $0x78] sm:%s200] %v269
                %v271 = vld [vmem:[%s207 + $0xf8] sm:%s200]
                %272 = vst [vmem:[%s208 + $0x7c] sm:%s200] %v271
                %v273 = vld [vmem:[%s207 + $0x100] sm:%s200]
                %274 = vst [vmem:[%s208 + $0x80] sm:%s200] %v273
                %v275 = vld [vmem:[%s207 + $0x108] sm:%s200]
                %276 = vst [vmem:[%s208 + $0x84] sm:%s200] %v275
                %v277 = vld [vmem:[%s207 + $0x110] sm:%s200]
                %278 = vst [vmem:[%s208 + $0x88] sm:%s200] %v277
                %v279 = vld [vmem:[%s207 + $0x118] sm:%s200]
                %280 = vst [vmem:[%s208 + $0x8c] sm:%s200] %v279
                %v281 = vld [vmem:[%s207 + $0x120] sm:%s200]
                %282 = vst [vmem:[%s208 + $0x90] sm:%s200] %v281
                %v283 = vld [vmem:[%s207 + $0x128] sm:%s200]
                %284 = vst [vmem:[%s208 + $0x94] sm:%s200] %v283
                %v285 = vld [vmem:[%s207 + $0x130] sm:%s200]
                %286 = vst [vmem:[%s208 + $0x98] sm:%s200] %v285
                %v287 = vld [vmem:[%s207 + $0x138] sm:%s200]
                %288 = vst [vmem:[%s208 + $0x9c] sm:%s200] %v287
                %v289 = vld [vmem:[%s207 + $0x140] sm:%s200]
                %290 = vst [vmem:[%s208 + $0xa0] sm:%s200] %v289
                %v291 = vld [vmem:[%s207 + $0x148] sm:%s200]
                %292 = vst [vmem:[%s208 + $0xa4] sm:%s200] %v291
                %v293 = vld [vmem:[%s207 + $0x150] sm:%s200]
                %294 = vst [vmem:[%s208 + $0xa8] sm:%s200] %v293
                %v295 = vld [vmem:[%s207 + $0x158] sm:%s200]
                %296 = vst [vmem:[%s208 + $0xac] sm:%s200] %v295
                %v297 = vld [vmem:[%s207 + $0x160] sm:%s200]
                %298 = vst [vmem:[%s208 + $0xb0] sm:%s200] %v297
                %v299 = vld [vmem:[%s207 + $0x168] sm:%s200]
                %300 = vst [vmem:[%s208 + $0xb4] sm:%s200] %v299
                %v301 = vld [vmem:[%s207 + $0x170] sm:%s200]
                %302 = vst [vmem:[%s208 + $0xb8] sm:%s200] %v301
                %v303 = vld [vmem:[%s207 + $0x178] sm:%s200]
                %304 = vst [vmem:[%s208 + $0xbc] sm:%s200] %v303
              $region45: #{_lambda_.19} parent=39 // loop_footer
                %s206 = sadd.s32 1, %s202
              $region46: #{_lambda_.19} parent=39 // loop_footer_branch
                %201 = sbr.rel target = $region42
              $region47: #{_lambda_.19} parent=39 // loop_exit
                _
            $region40: #{_lambda_.19} parent=31 // pred_fallthru
              _
          $region32: #{_lambda_.19} parent=27 // pred_fallthru
            _
          %421 = vnop
        $region28: #{_lambda_.19} parent=23 // pred_fallthru
          _
      $region24: #{_lambda_.19} parent=5 // pred_fallthru
        _
      %p422 = scmp.le.s32.totalorder 1, %s9
      %p423 = scmp.lt.s32.totalorder %s9, 3
      %p424 = pnand %p422, %p423
      %p425 = pneg %p424
      // Predicated region
      $region66: #{_lambda_.19} parent=5 // pred_check
        _
      $region67: #{_lambda_.19} parent=5 // pred_check_branch
        %427 = sbr.rel (%p424) target = $region69
      $region68: #{_lambda_.19} parent=5 // pred_region
        %s428 = ssub.s32 %s9, 1
        %s429 = sand.u32 %s71, 1
        %s430 = sand.u32 %s71, 1
        %s431 = smul.addr %s430, 192
        %s432 = scalar_lea.vmem [#allocation3], %s431
        // Predicated region
        $region70: #{_lambda_.19} parent=68 // pred_check
          %p433 = pneg %p84
        $region71: #{_lambda_.19} parent=68 // pred_check_branch
          %435 = sbr.rel (%p433) target = $region73
        $region72: #{_lambda_.19} parent=68 // pred_region
          _
        $region73: #{_lambda_.19} parent=68 // pred_fallthru
          _
        %s436 = smul.u32 4, %s19
        %s437 = smul.u32 3, %s21
        %p438 = scmp.lt.s32.totalorder %s436, 3
        %s439 = scalar_select %p438, %s436, 3
        %p440 = scmp.lt.s32.totalorder %s437, 2
        %s441 = scalar_select %p440, %s437, 2
        %s442 = smul.addr %s439, 3
        %s443 = sadd.s32 %s441, %s442
        %s444 = smul.addr %s443, 4
        %s445 = scalar_lea.vmem %s0, %s444
        %p446 = pneg %p56
        %p447 = pneg %p53
        %s448 = sand.u32 %s71, 1
        %s449 = sand.u32 %s71, 1
        %s450 = smul.addr %s449, 192
        %s451 = scalar_lea.vmem [#allocation3], %s450
        %p452 = pneg %p84
        %p453 = pneg %p81
        %s454 = smul.u32 4, %s19
        %p455 = scmp.lt.s32.totalorder %s454, 3
        %s456 = scalar_select %p455, %s454, 3
        %s457 = smul.addr %s456, 8
        %s458 = scalar_lea.vmem %s2, %s457
        %p459 = pneg %p110
        %p460 = pneg %p107
        %p461 = pneg %p138
        %p462 = pneg %p135
        %s463 = sand.u32 %s125, 1
        %s464 = sand.u32 %s125, 1
        %s465 = smul.addr %s464, 16
        %s466 = scalar_lea.vmem [#allocation4], %s465
        %s467 = smul.u32 4, %s19
        %s468 = smul.u32 3, %s21
        %p469 = scmp.lt.s32.totalorder %s467, 3
        %s470 = scalar_select %p469, %s467, 3
        %p471 = scmp.lt.s32.totalorder %s468, 2
        %s472 = scalar_select %p471, %s468, 2
        %s473 = smul.addr %s470, 3
        %s474 = sadd.s32 %s472, %s473
        %s475 = smul.addr %s474, 4
        %s476 = scalar_lea.vmem %s0, %s475
        %s477 = smul.u32 4, %s19
        %s478 = smul.u32 3, %s21
        %s479 = smul.u32 48, %s21
        %s480 = smul.u32 4, %s19
        %p481 = scmp.lt.s32.totalorder %s480, 3
        %s482 = scalar_select %p481, %s480, 3
        %s483 = smul.addr %s482, 8
        %s484 = scalar_lea.vmem %s2, %s483
        %s485 = smul.u32 4, %s19
        %s486 = smul.u32 4, %s19
        %p487 = scmp.eq.s32.totalorder %s21, 0
        // Predicated region
        $region74: #{_lambda_.19} parent=68 // pred_check
          %p488 = pneg %p487
        $region75: #{_lambda_.19} parent=68 // pred_check_branch
          %490 = sbr.rel (%p488) target = $region77
        $region76: #{_lambda_.19} parent=68 // pred_region
          %491 = vst [vmem:[#allocation2] sm:$0xff] 0.0
          %492 = vst [vmem:[#allocation2 + $0x8] sm:$0xff] 0.0
          %493 = vst [vmem:[#allocation2 + $0x10] sm:$0xff] 0.0
          %494 = vst [vmem:[#allocation2 + $0x18] sm:$0xff] 0.0
        $region77: #{_lambda_.19} parent=68 // pred_fallthru
          _
        %v495 = vld [vmem:[#allocation2] sm:$0xff]
        %v496 = vld [vmem:[#allocation2 + $0x8] sm:$0xff]
        %v497 = vld [vmem:[#allocation2 + $0x10] sm:$0xff]
        %v498 = vld [vmem:[#allocation2 + $0x18] sm:$0xff]
        %v499 = vld [vmem:[%s476] sm:$0xff]
        %v500 = vld [vmem:[%s476 + $0x8] sm:$0xf]
        %v501 = vld [vmem:[%s476 + $0xc] sm:$0xff]
        %v502 = vld [vmem:[%s476 + $0x14] sm:$0xf]
        %v503 = vld [vmem:[%s476 + $0x18] sm:$0xff]
        %v504 = vld [vmem:[%s476 + $0x20] sm:$0xf]
        %v505 = vld [vmem:[%s476 + $0x24] sm:$0xff]
        %v506 = vld [vmem:[%s476 + $0x2c] sm:$0xf]
        %v507 = vld [vmem:[%s432] sm:$0xf]
        %v508 = vld [vmem:[%s432 + $0x4] sm:$0xf]
        %v509 = vld [vmem:[%s432 + $0x8] sm:$0xf]
        %v510 = vld [vmem:[%s432 + $0xc] sm:$0xf]
        %v511 = vld [vmem:[%s432 + $0x10] sm:$0xf]
        %v512 = vld [vmem:[%s432 + $0x14] sm:$0xf]
        %v513 = vld [vmem:[%s432 + $0x18] sm:$0xf]
        %v514 = vld [vmem:[%s432 + $0x1c] sm:$0xf]
        %v515 = vld [vmem:[%s432 + $0x20] sm:$0xf]
        %v516 = vld [vmem:[%s432 + $0x24] sm:$0xf]
        %v517 = vld [vmem:[%s432 + $0x28] sm:$0xf]
        %v518 = vld [vmem:[%s432 + $0x2c] sm:$0xf]
        %v519 = vld [vmem:[%s432 + $0x30] sm:$0xf]
        %v520 = vld [vmem:[%s432 + $0x34] sm:$0xf]
        %v521 = vld [vmem:[%s432 + $0x38] sm:$0xf]
        %v522 = vld [vmem:[%s432 + $0x3c] sm:$0xf]
        %v523 = vld [vmem:[%s432 + $0x40] sm:$0xf]
        %v524 = vld [vmem:[%s432 + $0x44] sm:$0xf]
        %v525 = vld [vmem:[%s432 + $0x48] sm:$0xf]
        %v526 = vld [vmem:[%s432 + $0x4c] sm:$0xf]
        %v527 = vld [vmem:[%s432 + $0x50] sm:$0xf]
        %v528 = vld [vmem:[%s432 + $0x54] sm:$0xf]
        %v529 = vld [vmem:[%s432 + $0x58] sm:$0xf]
        %v530 = vld [vmem:[%s432 + $0x5c] sm:$0xf]
        %v531 = vld [vmem:[%s432 + $0x60] sm:$0xf]
        %v532 = vld [vmem:[%s432 + $0x64] sm:$0xf]
        %v533 = vld [vmem:[%s432 + $0x68] sm:$0xf]
        %v534 = vld [vmem:[%s432 + $0x6c] sm:$0xf]
        %v535 = vld [vmem:[%s432 + $0x70] sm:$0xf]
        %v536 = vld [vmem:[%s432 + $0x74] sm:$0xf]
        %v537 = vld [vmem:[%s432 + $0x78] sm:$0xf]
        %v538 = vld [vmem:[%s432 + $0x7c] sm:$0xf]
        %v539 = vld [vmem:[%s432 + $0x80] sm:$0xf]
        %v540 = vld [vmem:[%s432 + $0x84] sm:$0xf]
        %v541 = vld [vmem:[%s432 + $0x88] sm:$0xf]
        %v542 = vld [vmem:[%s432 + $0x8c] sm:$0xf]
        %v543 = vld [vmem:[%s432 + $0x90] sm:$0xf]
        %v544 = vld [vmem:[%s432 + $0x94] sm:$0xf]
        %v545 = vld [vmem:[%s432 + $0x98] sm:$0xf]
        %v546 = vld [vmem:[%s432 + $0x9c] sm:$0xf]
        %v547 = vld [vmem:[%s432 + $0xa0] sm:$0xf]
        %v548 = vld [vmem:[%s432 + $0xa4] sm:$0xf]
        %v549 = vld [vmem:[%s432 + $0xa8] sm:$0xf]
        %v550 = vld [vmem:[%s432 + $0xac] sm:$0xf]
        %v551 = vld [vmem:[%s432 + $0xb0] sm:$0xf]
        %v552 = vld [vmem:[%s432 + $0xb4] sm:$0xf]
        %v553 = vld [vmem:[%s432 + $0xb8] sm:$0xf]
        %v554 = vld [vmem:[%s432 + $0xbc] sm:$0xf]
        %v563 = vunpack.c.l.b16 %v499
        %v564 = vunpack.c.h.b16 %v499
        %v565 = vunpack.c.l.b16 %v500
        %v566 = vunpack.c.l.b16 %v501
        %v567 = vunpack.c.h.b16 %v501
        %v568 = vunpack.c.l.b16 %v502
        %v569 = vunpack.c.l.b16 %v503
        %v570 = vunpack.c.h.b16 %v503
        %v571 = vunpack.c.l.b16 %v504
        %v572 = vunpack.c.l.b16 %v505
        %v573 = vunpack.c.h.b16 %v505
        %v574 = vunpack.c.l.b16 %v506
        %v575 = vpack.c.b16 %v566, %v563
        %v576 = vpack.c.b16 %v567, %v564
        %v577 = vpack.c.b16 %v568, %v565
        %v578 = vpack.c.b16 %v572, %v569
        %v579 = vpack.c.b16 %v573, %v570
        %v580 = vpack.c.b16 %v574, %v571
        %v635 = vunpack.c.l.b16 %v507
        %v636 = vunpack.c.l.b16 %v508
        %v637 = vunpack.c.l.b16 %v509
        %v638 = vunpack.c.l.b16 %v510
        %v639 = vunpack.c.l.b16 %v511
        %v640 = vunpack.c.l.b16 %v512
        %v641 = vunpack.c.l.b16 %v513
        %v642 = vunpack.c.l.b16 %v514
        %v643 = vunpack.c.l.b16 %v515
        %v644 = vunpack.c.l.b16 %v516
        %v645 = vunpack.c.l.b16 %v517
        %v646 = vunpack.c.l.b16 %v518
        %v647 = vunpack.c.l.b16 %v519
        %v648 = vunpack.c.l.b16 %v520
        %v649 = vunpack.c.l.b16 %v521
        %v650 = vunpack.c.l.b16 %v522
        %v651 = vunpack.c.l.b16 %v523
        %v652 = vunpack.c.l.b16 %v524
        %v653 = vunpack.c.l.b16 %v525
        %v654 = vunpack.c.l.b16 %v526
        %v655 = vunpack.c.l.b16 %v527
        %v656 = vunpack.c.l.b16 %v528
        %v657 = vunpack.c.l.b16 %v529
        %v658 = vunpack.c.l.b16 %v530
        %v659 = vunpack.c.l.b16 %v531
        %v660 = vunpack.c.l.b16 %v532
        %v661 = vunpack.c.l.b16 %v533
        %v662 = vunpack.c.l.b16 %v534
        %v663 = vunpack.c.l.b16 %v535
        %v664 = vunpack.c.l.b16 %v536
        %v665 = vunpack.c.l.b16 %v537
        %v666 = vunpack.c.l.b16 %v538
        %v667 = vunpack.c.l.b16 %v539
        %v668 = vunpack.c.l.b16 %v540
        %v669 = vunpack.c.l.b16 %v541
        %v670 = vunpack.c.l.b16 %v542
        %v671 = vunpack.c.l.b16 %v543
        %v672 = vunpack.c.l.b16 %v544
        %v673 = vunpack.c.l.b16 %v545
        %v674 = vunpack.c.l.b16 %v546
        %v675 = vunpack.c.l.b16 %v547
        %v676 = vunpack.c.l.b16 %v548
        %v677 = vunpack.c.l.b16 %v549
        %v678 = vunpack.c.l.b16 %v550
        %v679 = vunpack.c.l.b16 %v551
        %v680 = vunpack.c.l.b16 %v552
        %v681 = vunpack.c.l.b16 %v553
        %v682 = vunpack.c.l.b16 %v554
        %v683 = vpack.c.b16 %v636, %v635
        %v684 = vpack.c.b16 %v638, %v637
        %v685 = vpack.c.b16 %v640, %v639
        %v686 = vpack.c.b16 %v642, %v641
        %v687 = vpack.c.b16 %v644, %v643
        %v688 = vpack.c.b16 %v646, %v645
        %v689 = vpack.c.b16 %v648, %v647
        %v690 = vpack.c.b16 %v650, %v649
        %v691 = vpack.c.b16 %v652, %v651
        %v692 = vpack.c.b16 %v654, %v653
        %v693 = vpack.c.b16 %v656, %v655
        %v694 = vpack.c.b16 %v658, %v657
        %v695 = vpack.c.b16 %v660, %v659
        %v696 = vpack.c.b16 %v662, %v661
        %v697 = vpack.c.b16 %v664, %v663
        %v698 = vpack.c.b16 %v666, %v665
        %v699 = vpack.c.b16 %v668, %v667
        %v700 = vpack.c.b16 %v670, %v669
        %v701 = vpack.c.b16 %v672, %v671
        %v702 = vpack.c.b16 %v674, %v673
        %v703 = vpack.c.b16 %v676, %v675
        %v704 = vpack.c.b16 %v678, %v677
        %v705 = vpack.c.b16 %v680, %v679
        %v706 = vpack.c.b16 %v682, %v681
        %731 = vmatpush.bf16.msra.mxu0 %v690
        %732 = vmatpush.bf16.msra.mxu0 %v689
        %733 = vmatpush.bf16.msra.mxu0 %v688
        %734 = vmatpush.bf16.msra.mxu0 %v687
        %735 = vmatpush.bf16.msra.mxu0 %v686
        %736 = vmatpush.bf16.msra.mxu0 %v685
        %737 = vmatpush.bf16.msra.mxu0 %v684
        %738 = vmatpush.bf16.msra.mxu0 %v683
        %739 = vmatmul.bf16.gmra.mxu0 %v575
        %v740 = vpop.f32.mrf.mxu0
        %v741 = vadd.f32 0.0, %v740
        %v742 = vpop.f32.mrf.mxu0
        %v743 = vadd.f32 0.0, %v742
        %744 = vmatmul.bf16.gmra.mxu0 %v578
        %v745 = vpop.f32.mrf.mxu0
        %v746 = vadd.f32 0.0, %v745
        %v747 = vpop.f32.mrf.mxu0
        %v748 = vadd.f32 0.0, %v747
        %749 = vdwg.mxu0
        %750 = vmatpush.bf16.msra.mxu0 %v698
        %751 = vmatpush.bf16.msra.mxu0 %v697
        %752 = vmatpush.bf16.msra.mxu0 %v696
        %753 = vmatpush.bf16.msra.mxu0 %v695
        %754 = vmatpush.bf16.msra.mxu0 %v694
        %755 = vmatpush.bf16.msra.mxu0 %v693
        %756 = vmatpush.bf16.msra.mxu0 %v692
        %757 = vmatpush.bf16.msra.mxu0 %v691
        %758 = vmatmul.bf16.gmra.mxu0 %v576
        %v759 = vpop.f32.mrf.mxu0
        %v760 = vadd.f32 %v741, %v759
        %v761 = vpop.f32.mrf.mxu0
        %v762 = vadd.f32 %v743, %v761
        %763 = vmatmul.bf16.gmra.mxu0 %v579
        %v764 = vpop.f32.mrf.mxu0
        %v765 = vadd.f32 %v746, %v764
        %v766 = vpop.f32.mrf.mxu0
        %v767 = vadd.f32 %v748, %v766
        %768 = vdwg.mxu0
        %769 = vmatpush.bf16.msra.mxu0 %v706
        %770 = vmatpush.bf16.msra.mxu0 %v705
        %771 = vmatpush.bf16.msra.mxu0 %v704
        %772 = vmatpush.bf16.msra.mxu0 %v703
        %773 = vmatpush.bf16.msra.mxu0 %v702
        %774 = vmatpush.bf16.msra.mxu0 %v701
        %775 = vmatpush.bf16.msra.mxu0 %v700
        %776 = vmatpush.bf16.msra.mxu0 %v699
        %777 = vmatmul.bf16.gmra.mxu0 %v577
        %v778 = vpop.f32.mrf.mxu0
        %v779 = vadd.f32 %v760, %v778
        %v780 = vpop.f32.mrf.mxu0
        %v781 = vadd.f32 %v762, %v780
        %782 = vmatmul.bf16.gmra.mxu0 %v580
        %v783 = vpop.f32.mrf.mxu0
        %v784 = vadd.f32 %v765, %v783
        %v785 = vpop.f32.mrf.mxu0
        %v786 = vadd.f32 %v767, %v785
        %787 = vdwg.mxu0
        %v788 = vadd.f32 %v495, %v779
        %v789 = vadd.f32 %v496, %v781
        %v790 = vadd.f32 %v497, %v784
        %v791 = vadd.f32 %v498, %v786
        %792 = vst [vmem:[#allocation2] sm:$0xff] %v788
        %793 = vst [vmem:[#allocation2 + $0x8] sm:$0xff] %v789
        %794 = vst [vmem:[#allocation2 + $0x10] sm:$0xff] %v790
        %795 = vst [vmem:[#allocation2 + $0x18] sm:$0xff] %v791
        // Predicated region
        $region78: #{_lambda_.19} parent=68 // pred_check
          %p796 = pneg %p487
        $region79: #{_lambda_.19} parent=68 // pred_check_branch
          %798 = sbr.rel (%p796) target = $region81
        $region80: #{_lambda_.19} parent=68 // pred_region
          %v799 = vld [vmem:[#allocation2] sm:$0xff]
          %v800 = vld [vmem:[#allocation2 + $0x8] sm:$0xff]
          %v801 = vld [vmem:[#allocation2 + $0x10] sm:$0xff]
          %v802 = vld [vmem:[#allocation2 + $0x18] sm:$0xff]
          %v803 = vld [vmem:[%s484] sm:$0xff]
          %v804 = vld [vmem:[%s484 + $0x8] sm:$0xff]
          %v805 = vld [vmem:[%s484 + $0x10] sm:$0xff]
          %v806 = vld [vmem:[%s484 + $0x18] sm:$0xff]
          %808 = vset.pattern.permute.xlu0 0
          %809 = vperm.xlu0 %808, %v803
          %v810 = vpop.permute.xlu0 %809
          %813 = vset.pattern.permute.xlu0 0
          %814 = vperm.xlu0 %813, %v804
          %v815 = vpop.permute.xlu0 %814
          %818 = vset.pattern.permute.xlu0 0
          %819 = vperm.xlu0 %818, %v805
          %v820 = vpop.permute.xlu0 %819
          %823 = vset.pattern.permute.xlu0 0
          %824 = vperm.xlu0 %823, %v806
          %v825 = vpop.permute.xlu0 %824
          %v827 = vadd.f32 %v799, %v810
          %v828 = vadd.f32 %v800, %v815
          %v829 = vadd.f32 %v801, %v820
          %v830 = vadd.f32 %v802, %v825
          %v831 = vpack.c.bf16 %v827, %v827
          %v832 = vpack.c.bf16 %v828, %v828
          %v833 = vpack.c.bf16 %v829, %v829
          %v834 = vpack.c.bf16 %v830, %v830
          %835 = vst [vmem:[%s466] sm:$0xf] %v831
          %836 = vst [vmem:[%s466 + $0x4] sm:$0xf] %v832
          %837 = vst [vmem:[%s466 + $0x8] sm:$0xf] %v833
          %838 = vst [vmem:[%s466 + $0xc] sm:$0xf] %v834
        $region81: #{_lambda_.19} parent=68 // pred_fallthru
          _
        %s839 = sand.u32 %s125, 1
        %s840 = sand.u32 %s125, 1
        %s841 = smul.addr %s840, 16
        %s842 = scalar_lea.vmem [#allocation4], %s841
        // Predicated region
        $region82: #{_lambda_.19} parent=68 // pred_check
          %p843 = pneg %p135
        $region83: #{_lambda_.19} parent=68 // pred_check_branch
          %845 = sbr.rel (%p843) target = $region85
        $region84: #{_lambda_.19} parent=68 // pred_region
          %s846 = smul.u32 4, %s19
          %s847 = smul.addr %s846, 2
          %s848 = sadd.s32 %s20, %s847
          %s849 = smul.addr %s848, 4
          %s850 = scalar_lea.vmem %s3, %s849
          // Predicated region
          $region86: #{_lambda_.19} parent=84 // pred_check
            _
          $region87: #{_lambda_.19} parent=84 // pred_check_branch
            %852 = sbr.rel (0) target = $region89
          $region88: #{_lambda_.19} parent=84 // pred_region
            // Predicated region
            $region90: #{_lambda_.19} parent=88 // pred_check
              _
            $region91: #{_lambda_.19} parent=88 // pred_check_branch
              %854 = sbr.rel target = $region93
            $region92: #{_lambda_.19} parent=88 // pred_region
              // Predicated region
              $region105: #{_lambda_.19} parent=92 // pred_check
                _
              $region106: #{_lambda_.19} parent=92 // pred_check_branch
                %876 = sbr.rel (0) target = $region108
              $region107: #{_lambda_.19} parent=92 // pred_region
                loop: start=0, step=1, limit=1
                $region109: #{_lambda_.19} parent=107 // loop_pre_header
                  _
                $region110: #{_lambda_.19} parent=107 // loop_header
                  %s878 = sphi 0, %s882
                  %p879 = scmp.ge.s32.totalorder %s878, 1
                  %s883 = sphi %s842, %s842
                  %s884 = sphi %s850, %s850
                $region111: #{_lambda_.19} parent=107 // loop_header_branch
                  %881 = sbr.rel (%p879) target = $region115
                $region112: #{_lambda_.19} parent=107 // loop_body
                  _
                $region113: #{_lambda_.19} parent=107 // loop_footer
                  %s882 = sadd.s32 1, %s878
                $region114: #{_lambda_.19} parent=107 // loop_footer_branch
                  %877 = sbr.rel target = $region110
                $region115: #{_lambda_.19} parent=107 // loop_exit
                  _
                %s886 = ssub.s32 16, 1
                loop: start=0, step=1, limit=1
                $region116: #{_lambda_.19} parent=107 // loop_pre_header
                  _
                $region117: #{_lambda_.19} parent=107 // loop_header
                  %s888 = sphi 0, %s892
                  %p889 = scmp.ge.s32.totalorder %s888, 1
                  %s893 = sphi %s842, %s842
                  %s894 = sphi %s850, %s850
                $region118: #{_lambda_.19} parent=107 // loop_header_branch
                  %891 = sbr.rel (%p889) target = $region122
                $region119: #{_lambda_.19} parent=107 // loop_body
                  %v895 = vld [vmem:[%s893] sm:%s886]
                  %896 = vst [vmem:[%s894] sm:%s886] %v895
                  %v897 = vld [vmem:[%s893 + $0x4] sm:%s886]
                  %898 = vst [vmem:[%s894 + $0x8] sm:%s886] %v897
                  %v899 = vld [vmem:[%s893 + $0x8] sm:%s886]
                  %900 = vst [vmem:[%s894 + $0x10] sm:%s886] %v899
                  %v901 = vld [vmem:[%s893 + $0xc] sm:%s886]
                  %902 = vst [vmem:[%s894 + $0x18] sm:%s886] %v901
                $region120: #{_lambda_.19} parent=107 // loop_footer
                  %s892 = sadd.s32 1, %s888
                $region121: #{_lambda_.19} parent=107 // loop_footer_branch
                  %887 = sbr.rel target = $region117
                $region122: #{_lambda_.19} parent=107 // loop_exit
                  _
              $region108: #{_lambda_.19} parent=92 // pred_fallthru
                _
            $region93: #{_lambda_.19} parent=88 // pred_fallthru
              _
            // Predicated region
            $region94: #{_lambda_.19} parent=88 // pred_check
              _
            $region95: #{_lambda_.19} parent=88 // pred_check_branch
              %856 = sbr.rel (0) target = $region97
            $region96: #{_lambda_.19} parent=88 // pred_region
              %s858 = ssub.s32 16, 1
              loop: start=0, step=1, limit=1
              $region98: #{_lambda_.19} parent=96 // loop_pre_header
                _
              $region99: #{_lambda_.19} parent=96 // loop_header
                %s860 = sphi 0, %s864
                %p861 = scmp.ge.s32.totalorder %s860, 1
                %s865 = sphi %s842, %s842
                %s866 = sphi %s850, %s850
              $region100: #{_lambda_.19} parent=96 // loop_header_branch
                %863 = sbr.rel (%p861) target = $region104
              $region101: #{_lambda_.19} parent=96 // loop_body
                %v867 = vld [vmem:[%s865] sm:%s858]
                %868 = vst [vmem:[%s866] sm:%s858] %v867
                %v869 = vld [vmem:[%s865 + $0x4] sm:%s858]
                %870 = vst [vmem:[%s866 + $0x8] sm:%s858] %v869
                %v871 = vld [vmem:[%s865 + $0x8] sm:%s858]
                %872 = vst [vmem:[%s866 + $0x10] sm:%s858] %v871
                %v873 = vld [vmem:[%s865 + $0xc] sm:%s858]
                %874 = vst [vmem:[%s866 + $0x18] sm:%s858] %v873
              $region102: #{_lambda_.19} parent=96 // loop_footer
                %s864 = sadd.s32 1, %s860
              $region103: #{_lambda_.19} parent=96 // loop_footer_branch
                %859 = sbr.rel target = $region99
              $region104: #{_lambda_.19} parent=96 // loop_exit
                _
            $region97: #{_lambda_.19} parent=88 // pred_fallthru
              _
          $region89: #{_lambda_.19} parent=84 // pred_fallthru
            _
          %903 = vnop
        $region85: #{_lambda_.19} parent=68 // pred_fallthru
          _
      $region69: #{_lambda_.19} parent=5 // pred_fallthru
        _
      %p904 = scmp.le.s32.totalorder 2, %s9
      // Predicated region
      $region123: #{_lambda_.19} parent=5 // pred_check
        %p905 = pneg %p904
      $region124: #{_lambda_.19} parent=5 // pred_check_branch
        %907 = sbr.rel (%p905) target = $region126
      $region125: #{_lambda_.19} parent=5 // pred_region
        %s908 = ssub.s32 %s9, 2
        // Predicated region
        $region127: #{_lambda_.19} parent=125 // pred_check
          %p909 = pneg %p141
        $region128: #{_lambda_.19} parent=125 // pred_check_branch
          %911 = sbr.rel (%p909) target = $region130
        $region129: #{_lambda_.19} parent=125 // pred_region
          %s912 = sand.u32 %s126, 1
          %s913 = sand.u32 %s126, 1
          %s914 = smul.addr %s913, 16
          %s915 = scalar_lea.vmem [#allocation4], %s914
        $region130: #{_lambda_.19} parent=125 // pred_fallthru
          _
      $region126: #{_lambda_.19} parent=5 // pred_fallthru
        _
    $region6: #{_lambda_.19} parent=1 // loop_footer
      %s13 = sadd.s32 1, %s9
    $region7: #{_lambda_.19} parent=1 // loop_footer_branch
      %8 = sbr.rel target = $region3
    $region8: #{_lambda_.19} parent=1 // loop_exit
      _

// kernel: _lambda_.21
$region0: #{_lambda_.21}
  #allocation0 [shape = 'u32[]', space=smem, size = 0x4, offset = 0x4, fixed_abs, tag = 'smem constant byte address 0x4 - core index']
  #allocation1 [shape = 'u32[72,128]{1,0:T(1,128)}', space=vmem, size = 0x9000, scoped, tag = 'internal scratch']
  #allocation2 [shape = 'f32[32,128]{1,0:T(8,128)}', space=vmem, size = 0x4000, scoped, tag = 'scratch operand']
  %s0 = inlined_call_operand.vmem [shape: bf16[32,128], index: 0, kind: input, shape index: {}]
  %s1 = inlined_call_operand.vmem [shape: bf16[128,256], index: 1, kind: input, shape index: {}]
  %s2 = inlined_call_operand.vmem [shape: f32[32,1], index: 2, kind: input, shape index: {}]
  %s3 = inlined_call_operand.vmem [shape: bf16[32,256], index: 3, kind: output, shape index: {}]
  %s4 = sld [smem:[#allocation0]]
  $region131: #{_lambda_.21} parent=0
    _
  %s6 = ssub.s32 1, %s4
  %s7 = scalar_select 0, %s6, %s4
  $region1: #{_lambda_.21} parent=0
    #allocation3 [shape = 'u8[65536]{0}', space=vmem, size = 0x10000, scoped, tag = 'input window, operand 1']
    #allocation4 [shape = 'u8[16384]{0}', space=vmem, size = 0x4000, scoped, tag = 'output window, operand 0']
    loop: start=0, step=1, limit=4
    $region2: #{_lambda_.21} parent=1 // loop_pre_header
      _
    $region3: #{_lambda_.21} parent=1 // loop_header
      %s9 = sphi 0, %s13
      %p10 = scmp.ge.s32.totalorder %s9, 4
      %s16 = sphi 0, %s35
      %s17 = sphi 0, %s31
      %s18 = sphi 0, %s27
      %s19 = sphi 0, %s16
      %s20 = sphi 0, %s17
      %s21 = sphi 0, %s18
      %s22 = sphi 0, %s19
      %s23 = sphi 0, %s20
      %s24 = sphi 0, %s21
      %s40 = sphi 0, %s42
      %s43 = sphi 0, %s40
      %s44 = sphi 0, %s43
      %s60 = sphi 0, %s44
      %s68 = sphi 0, %s70
      %s71 = sphi 0, %s68
      %s72 = sphi 0, %s71
      %s88 = sphi 0, %s72
      %s94 = sphi 0, %s96
      %s97 = sphi 0, %s94
      %s98 = sphi 0, %s97
      %s114 = sphi 0, %s98
      %s122 = sphi 0, %s124
      %s125 = sphi 0, %s122
      %s126 = sphi 0, %s125
      %s142 = sphi 0, %s126
    $region4: #{_lambda_.21} parent=1 // loop_header_branch
      %12 = sbr.rel (%p10) target = $region8
    $region5: #{_lambda_.21} parent=1 // loop_body
      %s14 = ssub.s32 %s9, 1
      %s15 = ssub.s32 %s9, 2
      %s25 = sadd.s32 1, %s18
      %p26 = scmp.ge.s32.totalorder %s25, 1
      %s27 = scalar_select %p26, 0, %s25
      %s28 = sadd.s32 1, %s17
      %s29 = scalar_select %p26, %s28, %s17
      %p30 = scmp.ge.s32.totalorder %s29, 2
      %s31 = scalar_select %p30, 0, %s29
      %s32 = sadd.s32 1, %s16
      %s33 = scalar_select %p30, %s32, %s16
      %p34 = scmp.ge.s32.totalorder %s33, 1
      %s35 = scalar_select %p34, 0, %s33
      %s36 = ssub.s32 %s16, %s35
      %s37 = ssub.s32 %s18, %s27
      %s38 = sor.u32 %s36, %s37
      %p39 = scmp.eq.s32.totalorder %s38, 0
      %s41 = sadd.s32 %s40, 1
      %s42 = scalar_select %p39, %s40, %s41
      %p45 = pneg %p39
      %p46 = scmp.eq.s32.totalorder %s9, 1
      %p47 = por %p45, %p46
      %p48 = scmp.ne.s32.totalorder %s40, %s43
      %p49 = scmp.eq.s32.totalorder %s9, 0
      %p50 = por %p48, %p49
      %p51 = scmp.ne.s32.totalorder %s40, %s43
      %p52 = scmp.eq.s32.totalorder %s14, 1
      %p53 = por %p51, %p52
      %p54 = scmp.ne.s32.totalorder %s43, %s44
      %p55 = scmp.eq.s32.totalorder %s14, 0
      %p56 = por %p54, %p55
      %p57 = scmp.ne.s32.totalorder %s43, %s44
      %p58 = scmp.eq.s32.totalorder %s15, 1
      %p59 = por %p57, %p58
      %p61 = scmp.ne.s32.totalorder %s44, %s60
      %p62 = scmp.eq.s32.totalorder %s15, 0
      %p63 = por %p61, %p62
      %s64 = ssub.s32 %s18, %s27
      %s65 = ssub.s32 %s17, %s31
      %s66 = sor.u32 %s64, %s65
      %p67 = scmp.eq.s32.totalorder %s66, 0
      %s69 = sadd.s32 %s68, 1
      %s70 = scalar_select %p67, %s68, %s69
      %p73 = pneg %p67
      %p74 = scmp.eq.s32.totalorder %s9, 1
      %p75 = por %p73, %p74
      %p76 = scmp.ne.s32.totalorder %s68, %s71
      %p77 = scmp.eq.s32.totalorder %s9, 0
      %p78 = por %p76, %p77
      %p79 = scmp.ne.s32.totalorder %s68, %s71
      %p80 = scmp.eq.s32.totalorder %s14, 1
      %p81 = por %p79, %p80
      %p82 = scmp.ne.s32.totalorder %s71, %s72
      %p83 = scmp.eq.s32.totalorder %s14, 0
      %p84 = por %p82, %p83
      %p85 = scmp.ne.s32.totalorder %s71, %s72
      %p86 = scmp.eq.s32.totalorder %s15, 1
      %p87 = por %p85, %p86
      %p89 = scmp.ne.s32.totalorder %s72, %s88
      %p90 = scmp.eq.s32.totalorder %s15, 0
      %p91 = por %p89, %p90
      %s92 = ssub.s32 %s16, %s35
      %p93 = scmp.eq.s32.totalorder %s92, 0
      %s95 = sadd.s32 %s94, 1
      %s96 = scalar_select %p93, %s94, %s95
      %p99 = pneg %p93
      %p100 = scmp.eq.s32.totalorder %s9, 1
      %p101 = por %p99, %p100
      %p102 = scmp.ne.s32.totalorder %s94, %s97
      %p103 = scmp.eq.s32.totalorder %s9, 0
      %p104 = por %p102, %p103
      %p105 = scmp.ne.s32.totalorder %s94, %s97
      %p106 = scmp.eq.s32.totalorder %s14, 1
      %p107 = por %p105, %p106
      %p108 = scmp.ne.s32.totalorder %s97, %s98
      %p109 = scmp.eq.s32.totalorder %s14, 0
      %p110 = por %p108, %p109
      %p111 = scmp.ne.s32.totalorder %s97, %s98
      %p112 = scmp.eq.s32.totalorder %s15, 1
      %p113 = por %p111, %p112
      %p115 = scmp.ne.s32.totalorder %s98, %s114
      %p116 = scmp.eq.s32.totalorder %s15, 0
      %p117 = por %p115, %p116
      %s118 = ssub.s32 %s16, %s35
      %s119 = ssub.s32 %s17, %s31
      %s120 = sor.u32 %s118, %s119
      %p121 = scmp.eq.s32.totalorder %s120, 0
      %s123 = sadd.s32 %s122, 1
      %s124 = scalar_select %p121, %s122, %s123
      %p127 = pneg %p121
      %p128 = scmp.eq.s32.totalorder %s9, 1
      %p129 = por %p127, %p128
      %p130 = scmp.ne.s32.totalorder %s122, %s125
      %p131 = scmp.eq.s32.totalorder %s9, 0
      %p132 = por %p130, %p131
      %p133 = scmp.ne.s32.totalorder %s122, %s125
      %p134 = scmp.eq.s32.totalorder %s14, 1
      %p135 = por %p133, %p134
      %p136 = scmp.ne.s32.totalorder %s125, %s126
      %p137 = scmp.eq.s32.totalorder %s14, 0
      %p138 = por %p136, %p137
      %p139 = scmp.ne.s32.totalorder %s125, %s126
      %p140 = scmp.eq.s32.totalorder %s15, 1
      %p141 = por %p139, %p140
      %p143 = scmp.ne.s32.totalorder %s126, %s142
      %p144 = scmp.eq.s32.totalorder %s15, 0
      %p145 = por %p143, %p144
      %p146 = scmp.le.s32.totalorder 1, %s9
      %p147 = scmp.lt.s32.totalorder %s9, 3
      %p148 = pnand %p146, %p147
      %p149 = pneg %p148
      // Predicated region
      $region9: #{_lambda_.21} parent=5 // pred_check
        _
      $region10: #{_lambda_.21} parent=5 // pred_check_branch
        %151 = sbr.rel (%p148) target = $region12
      $region11: #{_lambda_.21} parent=5 // pred_region
        %s152 = ssub.s32 %s9, 1
        // Predicated region
        $region13: #{_lambda_.21} parent=11 // pred_check
          %p153 = pneg %p56
        $region14: #{_lambda_.21} parent=11 // pred_check_branch
          %155 = sbr.rel (%p153) target = $region16
        $region15: #{_lambda_.21} parent=11 // pred_region
          %s156 = smul.u32 4, %s19
          %p157 = scmp.lt.s32.totalorder %s156, 3
          %s158 = scalar_select %p157, %s156, 3
          %p159 = scmp.lt.s32.totalorder %s21, 0
          %s160 = scalar_select %p159, %s21, 0
          %s161 = sadd.s32 %s160, %s158
          %s162 = smul.addr %s161, 4
          %s163 = scalar_lea.vmem %s0, %s162
          %s164 = smul.u32 4, %s19
        $region16: #{_lambda_.21} parent=11 // pred_fallthru
          _
        // Predicated region
        $region17: #{_lambda_.21} parent=11 // pred_check
          %p165 = pneg %p110
        $region18: #{_lambda_.21} parent=11 // pred_check_branch
          %167 = sbr.rel (%p165) target = $region20
        $region19: #{_lambda_.21} parent=11 // pred_region
          %s168 = smul.u32 4, %s19
          %p169 = scmp.lt.s32.totalorder %s168, 3
          %s170 = scalar_select %p169, %s168, 3
          %s171 = smul.addr %s170, 8
          %s172 = scalar_lea.vmem %s2, %s171
          %s173 = smul.u32 4, %s19
        $region20: #{_lambda_.21} parent=11 // pred_fallthru
          _
      $region12: #{_lambda_.21} parent=5 // pred_fallthru
        _
      %p174 = scmp.lt.s32.totalorder %s9, 2
      // Predicated region
      $region21: #{_lambda_.21} parent=5 // pred_check
        %p175 = pneg %p174
      $region22: #{_lambda_.21} parent=5 // pred_check_branch
        %177 = sbr.rel (%p175) target = $region24
      $region23: #{_lambda_.21} parent=5 // pred_region
        // Predicated region
        $region25: #{_lambda_.21} parent=23 // pred_check
          %p178 = pneg %p78
        $region26: #{_lambda_.21} parent=23 // pred_check_branch
          %180 = sbr.rel (%p178) target = $region28
        $region27: #{_lambda_.21} parent=23 // pred_region
          %s181 = sand.u32 %s68, 1
          %s182 = sand.u32 %s68, 1
          %s183 = smul.addr %s182, 64
          %s184 = scalar_lea.vmem [#allocation3], %s183
          %s185 = smul.u32 16, %s18
          %s186 = smul.addr %s185, 2
          %s187 = sadd.s32 %s17, %s186
          %s188 = smul.addr %s187, 4
          %s189 = scalar_lea.vmem %s1, %s188
          // Predicated region
          $region29: #{_lambda_.21} parent=27 // pred_check
            _
          $region30: #{_lambda_.21} parent=27 // pred_check_branch
            %191 = sbr.rel (0) target = $region32
          $region31: #{_lambda_.21} parent=27 // pred_region
            // Predicated region
            $region33: #{_lambda_.21} parent=31 // pred_check
              _
            $region34: #{_lambda_.21} parent=31 // pred_check_branch
              %193 = sbr.rel target = $region36
            $region35: #{_lambda_.21} parent=31 // pred_region
              // Predicated region
              $region48: #{_lambda_.21} parent=35 // pred_check
                _
              $region49: #{_lambda_.21} parent=35 // pred_check_branch
                %239 = sbr.rel (0) target = $region51
              $region50: #{_lambda_.21} parent=35 // pred_region
                loop: start=0, step=1, limit=1
                $region52: #{_lambda_.21} parent=50 // loop_pre_header
                  _
                $region53: #{_lambda_.21} parent=50 // loop_header
                  %s241 = sphi 0, %s245
                  %p242 = scmp.ge.s32.totalorder %s241, 1
                  %s246 = sphi %s189, %s189
                  %s247 = sphi %s184, %s184
                $region54: #{_lambda_.21} parent=50 // loop_header_branch
                  %244 = sbr.rel (%p242) target = $region58
                $region55: #{_lambda_.21} parent=50 // loop_body
                  _
                $region56: #{_lambda_.21} parent=50 // loop_footer
                  %s245 = sadd.s32 1, %s241
                $region57: #{_lambda_.21} parent=50 // loop_footer_branch
                  %240 = sbr.rel target = $region53
                $region58: #{_lambda_.21} parent=50 // loop_exit
                  _
                %s249 = ssub.s32 16, 1
                loop: start=0, step=1, limit=1
                $region59: #{_lambda_.21} parent=50 // loop_pre_header
                  _
                $region60: #{_lambda_.21} parent=50 // loop_header
                  %s251 = sphi 0, %s255
                  %p252 = scmp.ge.s32.totalorder %s251, 1
                  %s256 = sphi %s189, %s189
                  %s257 = sphi %s184, %s184
                $region61: #{_lambda_.21} parent=50 // loop_header_branch
                  %254 = sbr.rel (%p252) target = $region65
                $region62: #{_lambda_.21} parent=50 // loop_body
                  %v258 = vld [vmem:[%s256] sm:%s249]
                  %259 = vst [vmem:[%s257] sm:%s249] %v258
                  %v260 = vld [vmem:[%s256 + $0x8] sm:%s249]
                  %261 = vst [vmem:[%s257 + $0x4] sm:%s249] %v260
                  %v262 = vld [vmem:[%s256 + $0x10] sm:%s249]
                  %263 = vst [vmem:[%s257 + $0x8] sm:%s249] %v262
                  %v264 = vld [vmem:[%s256 + $0x18] sm:%s249]
                  %265 = vst [vmem:[%s257 + $0xc] sm:%s249] %v264
                  %v266 = vld [vmem:[%s256 + $0x20] sm:%s249]
                  %267 = vst [vmem:[%s257 + $0x10] sm:%s249] %v266
                  %v268 = vld [vmem:[%s256 + $0x28] sm:%s249]
                  %269 = vst [vmem:[%s257 + $0x14] sm:%s249] %v268
                  %v270 = vld [vmem:[%s256 + $0x30] sm:%s249]
                  %271 = vst [vmem:[%s257 + $0x18] sm:%s249] %v270
                  %v272 = vld [vmem:[%s256 + $0x38] sm:%s249]
                  %273 = vst [vmem:[%s257 + $0x1c] sm:%s249] %v272
                  %v274 = vld [vmem:[%s256 + $0x40] sm:%s249]
                  %275 = vst [vmem:[%s257 + $0x20] sm:%s249] %v274
                  %v276 = vld [vmem:[%s256 + $0x48] sm:%s249]
                  %277 = vst [vmem:[%s257 + $0x24] sm:%s249] %v276
                  %v278 = vld [vmem:[%s256 + $0x50] sm:%s249]
                  %279 = vst [vmem:[%s257 + $0x28] sm:%s249] %v278
                  %v280 = vld [vmem:[%s256 + $0x58] sm:%s249]
                  %281 = vst [vmem:[%s257 + $0x2c] sm:%s249] %v280
                  %v282 = vld [vmem:[%s256 + $0x60] sm:%s249]
                  %283 = vst [vmem:[%s257 + $0x30] sm:%s249] %v282
                  %v284 = vld [vmem:[%s256 + $0x68] sm:%s249]
                  %285 = vst [vmem:[%s257 + $0x34] sm:%s249] %v284
                  %v286 = vld [vmem:[%s256 + $0x70] sm:%s249]
                  %287 = vst [vmem:[%s257 + $0x38] sm:%s249] %v286
                  %v288 = vld [vmem:[%s256 + $0x78] sm:%s249]
                  %289 = vst [vmem:[%s257 + $0x3c] sm:%s249] %v288
                $region63: #{_lambda_.21} parent=50 // loop_footer
                  %s255 = sadd.s32 1, %s251
                $region64: #{_lambda_.21} parent=50 // loop_footer_branch
                  %250 = sbr.rel target = $region60
                $region65: #{_lambda_.21} parent=50 // loop_exit
                  _
              $region51: #{_lambda_.21} parent=35 // pred_fallthru
                _
            $region36: #{_lambda_.21} parent=31 // pred_fallthru
              _
            // Predicated region
            $region37: #{_lambda_.21} parent=31 // pred_check
              _
            $region38: #{_lambda_.21} parent=31 // pred_check_branch
              %195 = sbr.rel (0) target = $region40
            $region39: #{_lambda_.21} parent=31 // pred_region
              %s197 = ssub.s32 16, 1
              loop: start=0, step=1, limit=1
              $region41: #{_lambda_.21} parent=39 // loop_pre_header
                _
              $region42: #{_lambda_.21} parent=39 // loop_header
                %s199 = sphi 0, %s203
                %p200 = scmp.ge.s32.totalorder %s199, 1
                %s204 = sphi %s189, %s189
                %s205 = sphi %s184, %s184
              $region43: #{_lambda_.21} parent=39 // loop_header_branch
                %202 = sbr.rel (%p200) target = $region47
              $region44: #{_lambda_.21} parent=39 // loop_body
                %v206 = vld [vmem:[%s204] sm:%s197]
                %207 = vst [vmem:[%s205] sm:%s197] %v206
                %v208 = vld [vmem:[%s204 + $0x8] sm:%s197]
                %209 = vst [vmem:[%s205 + $0x4] sm:%s197] %v208
                %v210 = vld [vmem:[%s204 + $0x10] sm:%s197]
                %211 = vst [vmem:[%s205 + $0x8] sm:%s197] %v210
                %v212 = vld [vmem:[%s204 + $0x18] sm:%s197]
                %213 = vst [vmem:[%s205 + $0xc] sm:%s197] %v212
                %v214 = vld [vmem:[%s204 + $0x20] sm:%s197]
                %215 = vst [vmem:[%s205 + $0x10] sm:%s197] %v214
                %v216 = vld [vmem:[%s204 + $0x28] sm:%s197]
                %217 = vst [vmem:[%s205 + $0x14] sm:%s197] %v216
                %v218 = vld [vmem:[%s204 + $0x30] sm:%s197]
                %219 = vst [vmem:[%s205 + $0x18] sm:%s197] %v218
                %v220 = vld [vmem:[%s204 + $0x38] sm:%s197]
                %221 = vst [vmem:[%s205 + $0x1c] sm:%s197] %v220
                %v222 = vld [vmem:[%s204 + $0x40] sm:%s197]
                %223 = vst [vmem:[%s205 + $0x20] sm:%s197] %v222
                %v224 = vld [vmem:[%s204 + $0x48] sm:%s197]
                %225 = vst [vmem:[%s205 + $0x24] sm:%s197] %v224
                %v226 = vld [vmem:[%s204 + $0x50] sm:%s197]
                %227 = vst [vmem:[%s205 + $0x28] sm:%s197] %v226
                %v228 = vld [vmem:[%s204 + $0x58] sm:%s197]
                %229 = vst [vmem:[%s205 + $0x2c] sm:%s197] %v228
                %v230 = vld [vmem:[%s204 + $0x60] sm:%s197]
                %231 = vst [vmem:[%s205 + $0x30] sm:%s197] %v230
                %v232 = vld [vmem:[%s204 + $0x68] sm:%s197]
                %233 = vst [vmem:[%s205 + $0x34] sm:%s197] %v232
                %v234 = vld [vmem:[%s204 + $0x70] sm:%s197]
                %235 = vst [vmem:[%s205 + $0x38] sm:%s197] %v234
                %v236 = vld [vmem:[%s204 + $0x78] sm:%s197]
                %237 = vst [vmem:[%s205 + $0x3c] sm:%s197] %v236
              $region45: #{_lambda_.21} parent=39 // loop_footer
                %s203 = sadd.s32 1, %s199
              $region46: #{_lambda_.21} parent=39 // loop_footer_branch
                %198 = sbr.rel target = $region42
              $region47: #{_lambda_.21} parent=39 // loop_exit
                _
            $region40: #{_lambda_.21} parent=31 // pred_fallthru
              _
          $region32: #{_lambda_.21} parent=27 // pred_fallthru
            _
          %290 = vnop
        $region28: #{_lambda_.21} parent=23 // pred_fallthru
          _
      $region24: #{_lambda_.21} parent=5 // pred_fallthru
        _
      %p291 = scmp.le.s32.totalorder 1, %s9
      %p292 = scmp.lt.s32.totalorder %s9, 3
      %p293 = pnand %p291, %p292
      %p294 = pneg %p293
      // Predicated region
      $region66: #{_lambda_.21} parent=5 // pred_check
        _
      $region67: #{_lambda_.21} parent=5 // pred_check_branch
        %296 = sbr.rel (%p293) target = $region69
      $region68: #{_lambda_.21} parent=5 // pred_region
        %s297 = ssub.s32 %s9, 1
        %s298 = sand.u32 %s71, 1
        %s299 = sand.u32 %s71, 1
        %s300 = smul.addr %s299, 64
        %s301 = scalar_lea.vmem [#allocation3], %s300
        // Predicated region
        $region70: #{_lambda_.21} parent=68 // pred_check
          %p302 = pneg %p84
        $region71: #{_lambda_.21} parent=68 // pred_check_branch
          %304 = sbr.rel (%p302) target = $region73
        $region72: #{_lambda_.21} parent=68 // pred_region
          _
        $region73: #{_lambda_.21} parent=68 // pred_fallthru
          _
        %s305 = smul.u32 4, %s19
        %p306 = scmp.lt.s32.totalorder %s305, 3
        %s307 = scalar_select %p306, %s305, 3
        %p308 = scmp.lt.s32.totalorder %s21, 0
        %s309 = scalar_select %p308, %s21, 0
        %s310 = sadd.s32 %s309, %s307
        %s311 = smul.addr %s310, 4
        %s312 = scalar_lea.vmem %s0, %s311
        %p313 = pneg %p56
        %p314 = pneg %p53
        %s315 = sand.u32 %s71, 1
        %s316 = sand.u32 %s71, 1
        %s317 = smul.addr %s316, 64
        %s318 = scalar_lea.vmem [#allocation3], %s317
        %p319 = pneg %p84
        %p320 = pneg %p81
        %s321 = smul.u32 4, %s19
        %p322 = scmp.lt.s32.totalorder %s321, 3
        %s323 = scalar_select %p322, %s321, 3
        %s324 = smul.addr %s323, 8
        %s325 = scalar_lea.vmem %s2, %s324
        %p326 = pneg %p110
        %p327 = pneg %p107
        %p328 = pneg %p138
        %p329 = pneg %p135
        %s330 = sand.u32 %s125, 1
        %s331 = sand.u32 %s125, 1
        %s332 = smul.addr %s331, 16
        %s333 = scalar_lea.vmem [#allocation4], %s332
        %s334 = smul.u32 4, %s19
        %p335 = scmp.lt.s32.totalorder %s334, 3
        %s336 = scalar_select %p335, %s334, 3
        %p337 = scmp.lt.s32.totalorder %s21, 0
        %s338 = scalar_select %p337, %s21, 0
        %s339 = sadd.s32 %s338, %s336
        %s340 = smul.addr %s339, 4
        %s341 = scalar_lea.vmem %s0, %s340
        %s342 = smul.u32 4, %s19
        %s343 = smul.u32 16, %s21
        %s344 = smul.u32 4, %s19
        %p345 = scmp.lt.s32.totalorder %s344, 3
        %s346 = scalar_select %p345, %s344, 3
        %s347 = smul.addr %s346, 8
        %s348 = scalar_lea.vmem %s2, %s347
        %s349 = smul.u32 4, %s19
        %s350 = smul.u32 4, %s19
        %p351 = scmp.eq.s32.totalorder %s21, 0
        // Predicated region
        $region74: #{_lambda_.21} parent=68 // pred_check
          %p352 = pneg %p351
        $region75: #{_lambda_.21} parent=68 // pred_check_branch
          %354 = sbr.rel (%p352) target = $region77
        $region76: #{_lambda_.21} parent=68 // pred_region
          %355 = vst [vmem:[#allocation2] sm:$0xff] 0.0
          %356 = vst [vmem:[#allocation2 + $0x8] sm:$0xff] 0.0
          %357 = vst [vmem:[#allocation2 + $0x10] sm:$0xff] 0.0
          %358 = vst [vmem:[#allocation2 + $0x18] sm:$0xff] 0.0
        $region77: #{_lambda_.21} parent=68 // pred_fallthru
          _
        %v359 = vld [vmem:[#allocation2] sm:$0xff]
        %v360 = vld [vmem:[#allocation2 + $0x8] sm:$0xff]
        %v361 = vld [vmem:[#allocation2 + $0x10] sm:$0xff]
        %v362 = vld [vmem:[#allocation2 + $0x18] sm:$0xff]
        %v363 = vld [vmem:[%s341] sm:$0xf]
        %v364 = vld [vmem:[%s341 + $0x4] sm:$0xf]
        %v365 = vld [vmem:[%s341 + $0x8] sm:$0xf]
        %v366 = vld [vmem:[%s341 + $0xc] sm:$0xf]
        %v367 = vld [vmem:[%s301] sm:$0xf]
        %v368 = vld [vmem:[%s301 + $0x4] sm:$0xf]
        %v369 = vld [vmem:[%s301 + $0x8] sm:$0xf]
        %v370 = vld [vmem:[%s301 + $0xc] sm:$0xf]
        %v371 = vld [vmem:[%s301 + $0x10] sm:$0xf]
        %v372 = vld [vmem:[%s301 + $0x14] sm:$0xf]
        %v373 = vld [vmem:[%s301 + $0x18] sm:$0xf]
        %v374 = vld [vmem:[%s301 + $0x1c] sm:$0xf]
        %v375 = vld [vmem:[%s301 + $0x20] sm:$0xf]
        %v376 = vld [vmem:[%s301 + $0x24] sm:$0xf]
        %v377 = vld [vmem:[%s301 + $0x28] sm:$0xf]
        %v378 = vld [vmem:[%s301 + $0x2c] sm:$0xf]
        %v379 = vld [vmem:[%s301 + $0x30] sm:$0xf]
        %v380 = vld [vmem:[%s301 + $0x34] sm:$0xf]
        %v381 = vld [vmem:[%s301 + $0x38] sm:$0xf]
        %v382 = vld [vmem:[%s301 + $0x3c] sm:$0xf]
        %v387 = vunpack.c.l.b16 %v363
        %v388 = vunpack.c.l.b16 %v364
        %v389 = vunpack.c.l.b16 %v365
        %v390 = vunpack.c.l.b16 %v366
        %v391 = vpack.c.b16 %v388, %v387
        %v392 = vpack.c.b16 %v390, %v389
        %v411 = vunpack.c.l.b16 %v367
        %v412 = vunpack.c.l.b16 %v368
        %v413 = vunpack.c.l.b16 %v369
        %v414 = vunpack.c.l.b16 %v370
        %v415 = vunpack.c.l.b16 %v371
        %v416 = vunpack.c.l.b16 %v372
        %v417 = vunpack.c.l.b16 %v373
        %v418 = vunpack.c.l.b16 %v374
        %v419 = vunpack.c.l.b16 %v375
        %v420 = vunpack.c.l.b16 %v376
        %v421 = vunpack.c.l.b16 %v377
        %v422 = vunpack.c.l.b16 %v378
        %v423 = vunpack.c.l.b16 %v379
        %v424 = vunpack.c.l.b16 %v380
        %v425 = vunpack.c.l.b16 %v381
        %v426 = vunpack.c.l.b16 %v382
        %v427 = vpack.c.b16 %v412, %v411
        %v428 = vpack.c.b16 %v414, %v413
        %v429 = vpack.c.b16 %v416, %v415
        %v430 = vpack.c.b16 %v418, %v417
        %v431 = vpack.c.b16 %v420, %v419
        %v432 = vpack.c.b16 %v422, %v421
        %v433 = vpack.c.b16 %v424, %v423
        %v434 = vpack.c.b16 %v426, %v425
        %443 = vmatpush.bf16.msra.mxu0 %v434
        %444 = vmatpush.bf16.msra.mxu0 %v433
        %445 = vmatpush.bf16.msra.mxu0 %v432
        %446 = vmatpush.bf16.msra.mxu0 %v431
        %447 = vmatpush.bf16.msra.mxu0 %v430
        %448 = vmatpush.bf16.msra.mxu0 %v429
        %449 = vmatpush.bf16.msra.mxu0 %v428
        %450 = vmatpush.bf16.msra.mxu0 %v427
        %451 = vmatmul.bf16.gmra.mxu0 %v391
        %v452 = vpop.f32.mrf.mxu0
        %v453 = vadd.f32 0.0, %v452
        %v454 = vpop.f32.mrf.mxu0
        %v455 = vadd.f32 0.0, %v454
        %456 = vmatmul.bf16.gmra.mxu0 %v392
        %v457 = vpop.f32.mrf.mxu0
        %v458 = vadd.f32 0.0, %v457
        %v459 = vpop.f32.mrf.mxu0
        %v460 = vadd.f32 0.0, %v459
        %461 = vdwg.mxu0
        %v462 = vadd.f32 %v359, %v453
        %v463 = vadd.f32 %v360, %v455
        %v464 = vadd.f32 %v361, %v458
        %v465 = vadd.f32 %v362, %v460
        %466 = vst [vmem:[#allocation2] sm:$0xff] %v462
        %467 = vst [vmem:[#allocation2 + $0x8] sm:$0xff] %v463
        %468 = vst [vmem:[#allocation2 + $0x10] sm:$0xff] %v464
        %469 = vst [vmem:[#allocation2 + $0x18] sm:$0xff] %v465
        // Predicated region
        $region78: #{_lambda_.21} parent=68 // pred_check
          %p470 = pneg %p351
        $region79: #{_lambda_.21} parent=68 // pred_check_branch
          %472 = sbr.rel (%p470) target = $region81
        $region80: #{_lambda_.21} parent=68 // pred_region
          %v473 = vld [vmem:[#allocation2] sm:$0xff]
          %v474 = vld [vmem:[#allocation2 + $0x8] sm:$0xff]
          %v475 = vld [vmem:[#allocation2 + $0x10] sm:$0xff]
          %v476 = vld [vmem:[#allocation2 + $0x18] sm:$0xff]
          %v477 = vld [vmem:[%s348] sm:$0xff]
          %v478 = vld [vmem:[%s348 + $0x8] sm:$0xff]
          %v479 = vld [vmem:[%s348 + $0x10] sm:$0xff]
          %v480 = vld [vmem:[%s348 + $0x18] sm:$0xff]
          %482 = vset.pattern.permute.xlu0 0
          %483 = vperm.xlu0 %482, %v477
          %v484 = vpop.permute.xlu0 %483
          %487 = vset.pattern.permute.xlu0 0
          %488 = vperm.xlu0 %487, %v478
          %v489 = vpop.permute.xlu0 %488
          %492 = vset.pattern.permute.xlu0 0
          %493 = vperm.xlu0 %492, %v479
          %v494 = vpop.permute.xlu0 %493
          %497 = vset.pattern.permute.xlu0 0
          %498 = vperm.xlu0 %497, %v480
          %v499 = vpop.permute.xlu0 %498
          %v501 = vadd.f32 %v473, %v484
          %v502 = vadd.f32 %v474, %v489
          %v503 = vadd.f32 %v475, %v494
          %v504 = vadd.f32 %v476, %v499
          %vm505 = vcmp.ge.f32.partialorder %v501, 0.0
          %vm506 = vcmp.ge.f32.partialorder %v502, 0.0
          %vm507 = vcmp.ge.f32.partialorder %v503, 0.0
          %vm508 = vcmp.ge.f32.partialorder %v504, 0.0
          %v509 = vmul.f32 %v501, 0.2
          %v510 = vmul.f32 %v502, 0.2
          %v511 = vmul.f32 %v503, 0.2
          %v512 = vmul.f32 %v504, 0.2
          %v513 = vsel %vm505, %v501, %v509
          %v514 = vsel %vm506, %v502, %v510
          %v515 = vsel %vm507, %v503, %v511
          %v516 = vsel %vm508, %v504, %v512
          %v517 = vpack.c.bf16 %v513, %v513
          %v518 = vpack.c.bf16 %v514, %v514
          %v519 = vpack.c.bf16 %v515, %v515
          %v520 = vpack.c.bf16 %v516, %v516
          %521 = vst [vmem:[%s333] sm:$0xf] %v517
          %522 = vst [vmem:[%s333 + $0x4] sm:$0xf] %v518
          %523 = vst [vmem:[%s333 + $0x8] sm:$0xf] %v519
          %524 = vst [vmem:[%s333 + $0xc] sm:$0xf] %v520
        $region81: #{_lambda_.21} parent=68 // pred_fallthru
          _
        %s525 = sand.u32 %s125, 1
        %s526 = sand.u32 %s125, 1
        %s527 = smul.addr %s526, 16
        %s528 = scalar_lea.vmem [#allocation4], %s527
        // Predicated region
        $region82: #{_lambda_.21} parent=68 // pred_check
          %p529 = pneg %p135
        $region83: #{_lambda_.21} parent=68 // pred_check_branch
          %531 = sbr.rel (%p529) target = $region85
        $region84: #{_lambda_.21} parent=68 // pred_region
          %s532 = smul.u32 4, %s19
          %s533 = smul.addr %s532, 2
          %s534 = sadd.s32 %s20, %s533
          %s535 = smul.addr %s534, 4
          %s536 = scalar_lea.vmem %s3, %s535
          // Predicated region
          $region86: #{_lambda_.21} parent=84 // pred_check
            _
          $region87: #{_lambda_.21} parent=84 // pred_check_branch
            %538 = sbr.rel (0) target = $region89
          $region88: #{_lambda_.21} parent=84 // pred_region
            // Predicated region
            $region90: #{_lambda_.21} parent=88 // pred_check
              _
            $region91: #{_lambda_.21} parent=88 // pred_check_branch
              %540 = sbr.rel target = $region93
            $region92: #{_lambda_.21} parent=88 // pred_region
              // Predicated region
              $region105: #{_lambda_.21} parent=92 // pred_check
                _
              $region106: #{_lambda_.21} parent=92 // pred_check_branch
                %562 = sbr.rel (0) target = $region108
              $region107: #{_lambda_.21} parent=92 // pred_region
                loop: start=0, step=1, limit=1
                $region109: #{_lambda_.21} parent=107 // loop_pre_header
                  _
                $region110: #{_lambda_.21} parent=107 // loop_header
                  %s564 = sphi 0, %s568
                  %p565 = scmp.ge.s32.totalorder %s564, 1
                  %s569 = sphi %s528, %s528
                  %s570 = sphi %s536, %s536
                $region111: #{_lambda_.21} parent=107 // loop_header_branch
                  %567 = sbr.rel (%p565) target = $region115
                $region112: #{_lambda_.21} parent=107 // loop_body
                  _
                $region113: #{_lambda_.21} parent=107 // loop_footer
                  %s568 = sadd.s32 1, %s564
                $region114: #{_lambda_.21} parent=107 // loop_footer_branch
                  %563 = sbr.rel target = $region110
                $region115: #{_lambda_.21} parent=107 // loop_exit
                  _
                %s572 = ssub.s32 16, 1
                loop: start=0, step=1, limit=1
                $region116: #{_lambda_.21} parent=107 // loop_pre_header
                  _
                $region117: #{_lambda_.21} parent=107 // loop_header
                  %s574 = sphi 0, %s578
                  %p575 = scmp.ge.s32.totalorder %s574, 1
                  %s579 = sphi %s528, %s528
                  %s580 = sphi %s536, %s536
                $region118: #{_lambda_.21} parent=107 // loop_header_branch
                  %577 = sbr.rel (%p575) target = $region122
                $region119: #{_lambda_.21} parent=107 // loop_body
                  %v581 = vld [vmem:[%s579] sm:%s572]
                  %582 = vst [vmem:[%s580] sm:%s572] %v581
                  %v583 = vld [vmem:[%s579 + $0x4] sm:%s572]
                  %584 = vst [vmem:[%s580 + $0x8] sm:%s572] %v583
                  %v585 = vld [vmem:[%s579 + $0x8] sm:%s572]
                  %586 = vst [vmem:[%s580 + $0x10] sm:%s572] %v585
                  %v587 = vld [vmem:[%s579 + $0xc] sm:%s572]
                  %588 = vst [vmem:[%s580 + $0x18] sm:%s572] %v587
                $region120: #{_lambda_.21} parent=107 // loop_footer
                  %s578 = sadd.s32 1, %s574
                $region121: #{_lambda_.21} parent=107 // loop_footer_branch
                  %573 = sbr.rel target = $region117
                $region122: #{_lambda_.21} parent=107 // loop_exit
                  _
              $region108: #{_lambda_.21} parent=92 // pred_fallthru
                _
            $region93: #{_lambda_.21} parent=88 // pred_fallthru
              _
            // Predicated region
            $region94: #{_lambda_.21} parent=88 // pred_check
              _
            $region95: #{_lambda_.21} parent=88 // pred_check_branch
              %542 = sbr.rel (0) target = $region97
            $region96: #{_lambda_.21} parent=88 // pred_region
              %s544 = ssub.s32 16, 1
              loop: start=0, step=1, limit=1
              $region98: #{_lambda_.21} parent=96 // loop_pre_header
                _
              $region99: #{_lambda_.21} parent=96 // loop_header
                %s546 = sphi 0, %s550
                %p547 = scmp.ge.s32.totalorder %s546, 1
                %s551 = sphi %s528, %s528
                %s552 = sphi %s536, %s536
              $region100: #{_lambda_.21} parent=96 // loop_header_branch
                %549 = sbr.rel (%p547) target = $region104
              $region101: #{_lambda_.21} parent=96 // loop_body
                %v553 = vld [vmem:[%s551] sm:%s544]
                %554 = vst [vmem:[%s552] sm:%s544] %v553
                %v555 = vld [vmem:[%s551 + $0x4] sm:%s544]
                %556 = vst [vmem:[%s552 + $0x8] sm:%s544] %v555
                %v557 = vld [vmem:[%s551 + $0x8] sm:%s544]
                %558 = vst [vmem:[%s552 + $0x10] sm:%s544] %v557
                %v559 = vld [vmem:[%s551 + $0xc] sm:%s544]
                %560 = vst [vmem:[%s552 + $0x18] sm:%s544] %v559
              $region102: #{_lambda_.21} parent=96 // loop_footer
                %s550 = sadd.s32 1, %s546
              $region103: #{_lambda_.21} parent=96 // loop_footer_branch
                %545 = sbr.rel target = $region99
              $region104: #{_lambda_.21} parent=96 // loop_exit
                _
            $region97: #{_lambda_.21} parent=88 // pred_fallthru
              _
          $region89: #{_lambda_.21} parent=84 // pred_fallthru
            _
          %589 = vnop
        $region85: #{_lambda_.21} parent=68 // pred_fallthru
          _
      $region69: #{_lambda_.21} parent=5 // pred_fallthru
        _
      %p590 = scmp.le.s32.totalorder 2, %s9
      // Predicated region
      $region123: #{_lambda_.21} parent=5 // pred_check
        %p591 = pneg %p590
      $region124: #{_lambda_.21} parent=5 // pred_check_branch
        %593 = sbr.rel (%p591) target = $region126
      $region125: #{_lambda_.21} parent=5 // pred_region
        %s594 = ssub.s32 %s9, 2
        // Predicated region
        $region127: #{_lambda_.21} parent=125 // pred_check
          %p595 = pneg %p141
        $region128: #{_lambda_.21} parent=125 // pred_check_branch
          %597 = sbr.rel (%p595) target = $region130
        $region129: #{_lambda_.21} parent=125 // pred_region
          %s598 = sand.u32 %s126, 1
          %s599 = sand.u32 %s126, 1
          %s600 = smul.addr %s599, 16
          %s601 = scalar_lea.vmem [#allocation4], %s600
        $region130: #{_lambda_.21} parent=125 // pred_fallthru
          _
      $region126: #{_lambda_.21} parent=5 // pred_fallthru
        _
    $region6: #{_lambda_.21} parent=1 // loop_footer
      %s13 = sadd.s32 1, %s9
    $region7: #{_lambda_.21} parent=1 // loop_footer_branch
      %8 = sbr.rel target = $region3
    $region8: #{_lambda_.21} parent=1 // loop_exit
      _

// kernel: _lambda_.22
$region0: #{_lambda_.22}
  #allocation0 [shape = 'u32[]', space=smem, size = 0x4, offset = 0x4, fixed_abs, tag = 'smem constant byte address 0x4 - core index']
  #allocation1 [shape = 'u32[72,128]{1,0:T(1,128)}', space=vmem, size = 0x9000, scoped, tag = 'internal scratch']
  #allocation2 [shape = 'f32[16,128]{1,0:T(8,128)}', space=vmem, size = 0x2000, scoped, tag = 'scratch operand']
  %s0 = inlined_call_operand.vmem [shape: bf16[16,128], index: 0, kind: input, shape index: {}]
  %s1 = inlined_call_operand.vmem [shape: bf16[128,256], index: 1, kind: input, shape index: {}]
  %s2 = inlined_call_operand.vmem [shape: f32[16,1], index: 2, kind: input, shape index: {}]
  %s3 = inlined_call_operand.vmem [shape: bf16[16,256], index: 3, kind: output, shape index: {}]
  %s4 = sld [smem:[#allocation0]]
  $region131: #{_lambda_.22} parent=0
    _
  %s6 = ssub.s32 1, %s4
  %s7 = scalar_select 0, %s6, %s4
  $region1: #{_lambda_.22} parent=0
    #allocation3 [shape = 'u8[65536]{0}', space=vmem, size = 0x10000, scoped, tag = 'input window, operand 1']
    #allocation4 [shape = 'u8[8192]{0}', space=vmem, size = 0x2000, scoped, tag = 'output window, operand 0']
    loop: start=0, step=1, limit=4
    $region2: #{_lambda_.22} parent=1 // loop_pre_header
      _
    $region3: #{_lambda_.22} parent=1 // loop_header
      %s9 = sphi 0, %s13
      %p10 = scmp.ge.s32.totalorder %s9, 4
      %s16 = sphi 0, %s35
      %s17 = sphi 0, %s31
      %s18 = sphi 0, %s27
      %s19 = sphi 0, %s16
      %s20 = sphi 0, %s17
      %s21 = sphi 0, %s18
      %s22 = sphi 0, %s19
      %s23 = sphi 0, %s20
      %s24 = sphi 0, %s21
      %s40 = sphi 0, %s42
      %s43 = sphi 0, %s40
      %s44 = sphi 0, %s43
      %s60 = sphi 0, %s44
      %s68 = sphi 0, %s70
      %s71 = sphi 0, %s68
      %s72 = sphi 0, %s71
      %s88 = sphi 0, %s72
      %s94 = sphi 0, %s96
      %s97 = sphi 0, %s94
      %s98 = sphi 0, %s97
      %s114 = sphi 0, %s98
      %s122 = sphi 0, %s124
      %s125 = sphi 0, %s122
      %s126 = sphi 0, %s125
      %s142 = sphi 0, %s126
    $region4: #{_lambda_.22} parent=1 // loop_header_branch
      %12 = sbr.rel (%p10) target = $region8
    $region5: #{_lambda_.22} parent=1 // loop_body
      %s14 = ssub.s32 %s9, 1
      %s15 = ssub.s32 %s9, 2
      %s25 = sadd.s32 1, %s18
      %p26 = scmp.ge.s32.totalorder %s25, 1
      %s27 = scalar_select %p26, 0, %s25
      %s28 = sadd.s32 1, %s17
      %s29 = scalar_select %p26, %s28, %s17
      %p30 = scmp.ge.s32.totalorder %s29, 2
      %s31 = scalar_select %p30, 0, %s29
      %s32 = sadd.s32 1, %s16
      %s33 = scalar_select %p30, %s32, %s16
      %p34 = scmp.ge.s32.totalorder %s33, 1
      %s35 = scalar_select %p34, 0, %s33
      %s36 = ssub.s32 %s16, %s35
      %s37 = ssub.s32 %s18, %s27
      %s38 = sor.u32 %s36, %s37
      %p39 = scmp.eq.s32.totalorder %s38, 0
      %s41 = sadd.s32 %s40, 1
      %s42 = scalar_select %p39, %s40, %s41
      %p45 = pneg %p39
      %p46 = scmp.eq.s32.totalorder %s9, 1
      %p47 = por %p45, %p46
      %p48 = scmp.ne.s32.totalorder %s40, %s43
      %p49 = scmp.eq.s32.totalorder %s9, 0
      %p50 = por %p48, %p49
      %p51 = scmp.ne.s32.totalorder %s40, %s43
      %p52 = scmp.eq.s32.totalorder %s14, 1
      %p53 = por %p51, %p52
      %p54 = scmp.ne.s32.totalorder %s43, %s44
      %p55 = scmp.eq.s32.totalorder %s14, 0
      %p56 = por %p54, %p55
      %p57 = scmp.ne.s32.totalorder %s43, %s44
      %p58 = scmp.eq.s32.totalorder %s15, 1
      %p59 = por %p57, %p58
      %p61 = scmp.ne.s32.totalorder %s44, %s60
      %p62 = scmp.eq.s32.totalorder %s15, 0
      %p63 = por %p61, %p62
      %s64 = ssub.s32 %s18, %s27
      %s65 = ssub.s32 %s17, %s31
      %s66 = sor.u32 %s64, %s65
      %p67 = scmp.eq.s32.totalorder %s66, 0
      %s69 = sadd.s32 %s68, 1
      %s70 = scalar_select %p67, %s68, %s69
      %p73 = pneg %p67
      %p74 = scmp.eq.s32.totalorder %s9, 1
      %p75 = por %p73, %p74
      %p76 = scmp.ne.s32.totalorder %s68, %s71
      %p77 = scmp.eq.s32.totalorder %s9, 0
      %p78 = por %p76, %p77
      %p79 = scmp.ne.s32.totalorder %s68, %s71
      %p80 = scmp.eq.s32.totalorder %s14, 1
      %p81 = por %p79, %p80
      %p82 = scmp.ne.s32.totalorder %s71, %s72
      %p83 = scmp.eq.s32.totalorder %s14, 0
      %p84 = por %p82, %p83
      %p85 = scmp.ne.s32.totalorder %s71, %s72
      %p86 = scmp.eq.s32.totalorder %s15, 1
      %p87 = por %p85, %p86
      %p89 = scmp.ne.s32.totalorder %s72, %s88
      %p90 = scmp.eq.s32.totalorder %s15, 0
      %p91 = por %p89, %p90
      %s92 = ssub.s32 %s16, %s35
      %p93 = scmp.eq.s32.totalorder %s92, 0
      %s95 = sadd.s32 %s94, 1
      %s96 = scalar_select %p93, %s94, %s95
      %p99 = pneg %p93
      %p100 = scmp.eq.s32.totalorder %s9, 1
      %p101 = por %p99, %p100
      %p102 = scmp.ne.s32.totalorder %s94, %s97
      %p103 = scmp.eq.s32.totalorder %s9, 0
      %p104 = por %p102, %p103
      %p105 = scmp.ne.s32.totalorder %s94, %s97
      %p106 = scmp.eq.s32.totalorder %s14, 1
      %p107 = por %p105, %p106
      %p108 = scmp.ne.s32.totalorder %s97, %s98
      %p109 = scmp.eq.s32.totalorder %s14, 0
      %p110 = por %p108, %p109
      %p111 = scmp.ne.s32.totalorder %s97, %s98
      %p112 = scmp.eq.s32.totalorder %s15, 1
      %p113 = por %p111, %p112
      %p115 = scmp.ne.s32.totalorder %s98, %s114
      %p116 = scmp.eq.s32.totalorder %s15, 0
      %p117 = por %p115, %p116
      %s118 = ssub.s32 %s16, %s35
      %s119 = ssub.s32 %s17, %s31
      %s120 = sor.u32 %s118, %s119
      %p121 = scmp.eq.s32.totalorder %s120, 0
      %s123 = sadd.s32 %s122, 1
      %s124 = scalar_select %p121, %s122, %s123
      %p127 = pneg %p121
      %p128 = scmp.eq.s32.totalorder %s9, 1
      %p129 = por %p127, %p128
      %p130 = scmp.ne.s32.totalorder %s122, %s125
      %p131 = scmp.eq.s32.totalorder %s9, 0
      %p132 = por %p130, %p131
      %p133 = scmp.ne.s32.totalorder %s122, %s125
      %p134 = scmp.eq.s32.totalorder %s14, 1
      %p135 = por %p133, %p134
      %p136 = scmp.ne.s32.totalorder %s125, %s126
      %p137 = scmp.eq.s32.totalorder %s14, 0
      %p138 = por %p136, %p137
      %p139 = scmp.ne.s32.totalorder %s125, %s126
      %p140 = scmp.eq.s32.totalorder %s15, 1
      %p141 = por %p139, %p140
      %p143 = scmp.ne.s32.totalorder %s126, %s142
      %p144 = scmp.eq.s32.totalorder %s15, 0
      %p145 = por %p143, %p144
      %p146 = scmp.le.s32.totalorder 1, %s9
      %p147 = scmp.lt.s32.totalorder %s9, 3
      %p148 = pnand %p146, %p147
      %p149 = pneg %p148
      // Predicated region
      $region9: #{_lambda_.22} parent=5 // pred_check
        _
      $region10: #{_lambda_.22} parent=5 // pred_check_branch
        %151 = sbr.rel (%p148) target = $region12
      $region11: #{_lambda_.22} parent=5 // pred_region
        %s152 = ssub.s32 %s9, 1
        // Predicated region
        $region13: #{_lambda_.22} parent=11 // pred_check
          %p153 = pneg %p56
        $region14: #{_lambda_.22} parent=11 // pred_check_branch
          %155 = sbr.rel (%p153) target = $region16
        $region15: #{_lambda_.22} parent=11 // pred_region
          %s156 = smul.u32 2, %s19
          %p157 = scmp.lt.s32.totalorder %s156, 1
          %s158 = scalar_select %p157, %s156, 1
          %p159 = scmp.lt.s32.totalorder %s21, 0
          %s160 = scalar_select %p159, %s21, 0
          %s161 = sadd.s32 %s160, %s158
          %s162 = smul.addr %s161, 4
          %s163 = scalar_lea.vmem %s0, %s162
          %s164 = smul.u32 2, %s19
        $region16: #{_lambda_.22} parent=11 // pred_fallthru
          _
        // Predicated region
        $region17: #{_lambda_.22} parent=11 // pred_check
          %p165 = pneg %p110
        $region18: #{_lambda_.22} parent=11 // pred_check_branch
          %167 = sbr.rel (%p165) target = $region20
        $region19: #{_lambda_.22} parent=11 // pred_region
          %s168 = smul.u32 2, %s19
          %p169 = scmp.lt.s32.totalorder %s168, 1
          %s170 = scalar_select %p169, %s168, 1
          %s171 = smul.addr %s170, 8
          %s172 = scalar_lea.vmem %s2, %s171
          %s173 = smul.u32 2, %s19
        $region20: #{_lambda_.22} parent=11 // pred_fallthru
          _
      $region12: #{_lambda_.22} parent=5 // pred_fallthru
        _
      %p174 = scmp.lt.s32.totalorder %s9, 2
      // Predicated region
      $region21: #{_lambda_.22} parent=5 // pred_check
        %p175 = pneg %p174
      $region22: #{_lambda_.22} parent=5 // pred_check_branch
        %177 = sbr.rel (%p175) target = $region24
      $region23: #{_lambda_.22} parent=5 // pred_region
        // Predicated region
        $region25: #{_lambda_.22} parent=23 // pred_check
          %p178 = pneg %p78
        $region26: #{_lambda_.22} parent=23 // pred_check_branch
          %180 = sbr.rel (%p178) target = $region28
        $region27: #{_lambda_.22} parent=23 // pred_region
          %s181 = sand.u32 %s68, 1
          %s182 = sand.u32 %s68, 1
          %s183 = smul.addr %s182, 64
          %s184 = scalar_lea.vmem [#allocation3], %s183
          %s185 = smul.u32 16, %s18
          %s186 = smul.addr %s185, 2
          %s187 = sadd.s32 %s17, %s186
          %s188 = smul.addr %s187, 4
          %s189 = scalar_lea.vmem %s1, %s188
          // Predicated region
          $region29: #{_lambda_.22} parent=27 // pred_check
            _
          $region30: #{_lambda_.22} parent=27 // pred_check_branch
            %191 = sbr.rel (0) target = $region32
          $region31: #{_lambda_.22} parent=27 // pred_region
            // Predicated region
            $region33: #{_lambda_.22} parent=31 // pred_check
              _
            $region34: #{_lambda_.22} parent=31 // pred_check_branch
              %193 = sbr.rel target = $region36
            $region35: #{_lambda_.22} parent=31 // pred_region
              // Predicated region
              $region48: #{_lambda_.22} parent=35 // pred_check
                _
              $region49: #{_lambda_.22} parent=35 // pred_check_branch
                %239 = sbr.rel (0) target = $region51
              $region50: #{_lambda_.22} parent=35 // pred_region
                loop: start=0, step=1, limit=1
                $region52: #{_lambda_.22} parent=50 // loop_pre_header
                  _
                $region53: #{_lambda_.22} parent=50 // loop_header
                  %s241 = sphi 0, %s245
                  %p242 = scmp.ge.s32.totalorder %s241, 1
                  %s246 = sphi %s189, %s189
                  %s247 = sphi %s184, %s184
                $region54: #{_lambda_.22} parent=50 // loop_header_branch
                  %244 = sbr.rel (%p242) target = $region58
                $region55: #{_lambda_.22} parent=50 // loop_body
                  _
                $region56: #{_lambda_.22} parent=50 // loop_footer
                  %s245 = sadd.s32 1, %s241
                $region57: #{_lambda_.22} parent=50 // loop_footer_branch
                  %240 = sbr.rel target = $region53
                $region58: #{_lambda_.22} parent=50 // loop_exit
                  _
                %s249 = ssub.s32 16, 1
                loop: start=0, step=1, limit=1
                $region59: #{_lambda_.22} parent=50 // loop_pre_header
                  _
                $region60: #{_lambda_.22} parent=50 // loop_header
                  %s251 = sphi 0, %s255
                  %p252 = scmp.ge.s32.totalorder %s251, 1
                  %s256 = sphi %s189, %s189
                  %s257 = sphi %s184, %s184
                $region61: #{_lambda_.22} parent=50 // loop_header_branch
                  %254 = sbr.rel (%p252) target = $region65
                $region62: #{_lambda_.22} parent=50 // loop_body
                  %v258 = vld [vmem:[%s256] sm:%s249]
                  %259 = vst [vmem:[%s257] sm:%s249] %v258
                  %v260 = vld [vmem:[%s256 + $0x8] sm:%s249]
                  %261 = vst [vmem:[%s257 + $0x4] sm:%s249] %v260
                  %v262 = vld [vmem:[%s256 + $0x10] sm:%s249]
                  %263 = vst [vmem:[%s257 + $0x8] sm:%s249] %v262
                  %v264 = vld [vmem:[%s256 + $0x18] sm:%s249]
                  %265 = vst [vmem:[%s257 + $0xc] sm:%s249] %v264
                  %v266 = vld [vmem:[%s256 + $0x20] sm:%s249]
                  %267 = vst [vmem:[%s257 + $0x10] sm:%s249] %v266
                  %v268 = vld [vmem:[%s256 + $0x28] sm:%s249]
                  %269 = vst [vmem:[%s257 + $0x14] sm:%s249] %v268
                  %v270 = vld [vmem:[%s256 + $0x30] sm:%s249]
                  %271 = vst [vmem:[%s257 + $0x18] sm:%s249] %v270
                  %v272 = vld [vmem:[%s256 + $0x38] sm:%s249]
                  %273 = vst [vmem:[%s257 + $0x1c] sm:%s249] %v272
                  %v274 = vld [vmem:[%s256 + $0x40] sm:%s249]
                  %275 = vst [vmem:[%s257 + $0x20] sm:%s249] %v274
                  %v276 = vld [vmem:[%s256 + $0x48] sm:%s249]
                  %277 = vst [vmem:[%s257 + $0x24] sm:%s249] %v276
                  %v278 = vld [vmem:[%s256 + $0x50] sm:%s249]
                  %279 = vst [vmem:[%s257 + $0x28] sm:%s249] %v278
                  %v280 = vld [vmem:[%s256 + $0x58] sm:%s249]
                  %281 = vst [vmem:[%s257 + $0x2c] sm:%s249] %v280
                  %v282 = vld [vmem:[%s256 + $0x60] sm:%s249]
                  %283 = vst [vmem:[%s257 + $0x30] sm:%s249] %v282
                  %v284 = vld [vmem:[%s256 + $0x68] sm:%s249]
                  %285 = vst [vmem:[%s257 + $0x34] sm:%s249] %v284
                  %v286 = vld [vmem:[%s256 + $0x70] sm:%s249]
                  %287 = vst [vmem:[%s257 + $0x38] sm:%s249] %v286
                  %v288 = vld [vmem:[%s256 + $0x78] sm:%s249]
                  %289 = vst [vmem:[%s257 + $0x3c] sm:%s249] %v288
                $region63: #{_lambda_.22} parent=50 // loop_footer
                  %s255 = sadd.s32 1, %s251
                $region64: #{_lambda_.22} parent=50 // loop_footer_branch
                  %250 = sbr.rel target = $region60
                $region65: #{_lambda_.22} parent=50 // loop_exit
                  _
              $region51: #{_lambda_.22} parent=35 // pred_fallthru
                _
            $region36: #{_lambda_.22} parent=31 // pred_fallthru
              _
            // Predicated region
            $region37: #{_lambda_.22} parent=31 // pred_check
              _
            $region38: #{_lambda_.22} parent=31 // pred_check_branch
              %195 = sbr.rel (0) target = $region40
            $region39: #{_lambda_.22} parent=31 // pred_region
              %s197 = ssub.s32 16, 1
              loop: start=0, step=1, limit=1
              $region41: #{_lambda_.22} parent=39 // loop_pre_header
                _
              $region42: #{_lambda_.22} parent=39 // loop_header
                %s199 = sphi 0, %s203
                %p200 = scmp.ge.s32.totalorder %s199, 1
                %s204 = sphi %s189, %s189
                %s205 = sphi %s184, %s184
              $region43: #{_lambda_.22} parent=39 // loop_header_branch
                %202 = sbr.rel (%p200) target = $region47
              $region44: #{_lambda_.22} parent=39 // loop_body
                %v206 = vld [vmem:[%s204] sm:%s197]
                %207 = vst [vmem:[%s205] sm:%s197] %v206
                %v208 = vld [vmem:[%s204 + $0x8] sm:%s197]
                %209 = vst [vmem:[%s205 + $0x4] sm:%s197] %v208
                %v210 = vld [vmem:[%s204 + $0x10] sm:%s197]
                %211 = vst [vmem:[%s205 + $0x8] sm:%s197] %v210
                %v212 = vld [vmem:[%s204 + $0x18] sm:%s197]
                %213 = vst [vmem:[%s205 + $0xc] sm:%s197] %v212
                %v214 = vld [vmem:[%s204 + $0x20] sm:%s197]
                %215 = vst [vmem:[%s205 + $0x10] sm:%s197] %v214
                %v216 = vld [vmem:[%s204 + $0x28] sm:%s197]
                %217 = vst [vmem:[%s205 + $0x14] sm:%s197] %v216
                %v218 = vld [vmem:[%s204 + $0x30] sm:%s197]
                %219 = vst [vmem:[%s205 + $0x18] sm:%s197] %v218
                %v220 = vld [vmem:[%s204 + $0x38] sm:%s197]
                %221 = vst [vmem:[%s205 + $0x1c] sm:%s197] %v220
                %v222 = vld [vmem:[%s204 + $0x40] sm:%s197]
                %223 = vst [vmem:[%s205 + $0x20] sm:%s197] %v222
                %v224 = vld [vmem:[%s204 + $0x48] sm:%s197]
                %225 = vst [vmem:[%s205 + $0x24] sm:%s197] %v224
                %v226 = vld [vmem:[%s204 + $0x50] sm:%s197]
                %227 = vst [vmem:[%s205 + $0x28] sm:%s197] %v226
                %v228 = vld [vmem:[%s204 + $0x58] sm:%s197]
                %229 = vst [vmem:[%s205 + $0x2c] sm:%s197] %v228
                %v230 = vld [vmem:[%s204 + $0x60] sm:%s197]
                %231 = vst [vmem:[%s205 + $0x30] sm:%s197] %v230
                %v232 = vld [vmem:[%s204 + $0x68] sm:%s197]
                %233 = vst [vmem:[%s205 + $0x34] sm:%s197] %v232
                %v234 = vld [vmem:[%s204 + $0x70] sm:%s197]
                %235 = vst [vmem:[%s205 + $0x38] sm:%s197] %v234
                %v236 = vld [vmem:[%s204 + $0x78] sm:%s197]
                %237 = vst [vmem:[%s205 + $0x3c] sm:%s197] %v236
              $region45: #{_lambda_.22} parent=39 // loop_footer
                %s203 = sadd.s32 1, %s199
              $region46: #{_lambda_.22} parent=39 // loop_footer_branch
                %198 = sbr.rel target = $region42
              $region47: #{_lambda_.22} parent=39 // loop_exit
                _
            $region40: #{_lambda_.22} parent=31 // pred_fallthru
              _
          $region32: #{_lambda_.22} parent=27 // pred_fallthru
            _
          %290 = vnop
        $region28: #{_lambda_.22} parent=23 // pred_fallthru
          _
      $region24: #{_lambda_.22} parent=5 // pred_fallthru
        _
      %p291 = scmp.le.s32.totalorder 1, %s9
      %p292 = scmp.lt.s32.totalorder %s9, 3
      %p293 = pnand %p291, %p292
      %p294 = pneg %p293
      // Predicated region
      $region66: #{_lambda_.22} parent=5 // pred_check
        _
      $region67: #{_lambda_.22} parent=5 // pred_check_branch
        %296 = sbr.rel (%p293) target = $region69
      $region68: #{_lambda_.22} parent=5 // pred_region
        %s297 = ssub.s32 %s9, 1
        %s298 = sand.u32 %s71, 1
        %s299 = sand.u32 %s71, 1
        %s300 = smul.addr %s299, 64
        %s301 = scalar_lea.vmem [#allocation3], %s300
        // Predicated region
        $region70: #{_lambda_.22} parent=68 // pred_check
          %p302 = pneg %p84
        $region71: #{_lambda_.22} parent=68 // pred_check_branch
          %304 = sbr.rel (%p302) target = $region73
        $region72: #{_lambda_.22} parent=68 // pred_region
          _
        $region73: #{_lambda_.22} parent=68 // pred_fallthru
          _
        %s305 = smul.u32 2, %s19
        %p306 = scmp.lt.s32.totalorder %s305, 1
        %s307 = scalar_select %p306, %s305, 1
        %p308 = scmp.lt.s32.totalorder %s21, 0
        %s309 = scalar_select %p308, %s21, 0
        %s310 = sadd.s32 %s309, %s307
        %s311 = smul.addr %s310, 4
        %s312 = scalar_lea.vmem %s0, %s311
        %p313 = pneg %p56
        %p314 = pneg %p53
        %s315 = sand.u32 %s71, 1
        %s316 = sand.u32 %s71, 1
        %s317 = smul.addr %s316, 64
        %s318 = scalar_lea.vmem [#allocation3], %s317
        %p319 = pneg %p84
        %p320 = pneg %p81
        %s321 = smul.u32 2, %s19
        %p322 = scmp.lt.s32.totalorder %s321, 1
        %s323 = scalar_select %p322, %s321, 1
        %s324 = smul.addr %s323, 8
        %s325 = scalar_lea.vmem %s2, %s324
        %p326 = pneg %p110
        %p327 = pneg %p107
        %p328 = pneg %p138
        %p329 = pneg %p135
        %s330 = sand.u32 %s125, 1
        %s331 = sand.u32 %s125, 1
        %s332 = smul.addr %s331, 8
        %s333 = scalar_lea.vmem [#allocation4], %s332
        %s334 = smul.u32 2, %s19
        %p335 = scmp.lt.s32.totalorder %s334, 1
        %s336 = scalar_select %p335, %s334, 1
        %p337 = scmp.lt.s32.totalorder %s21, 0
        %s338 = scalar_select %p337, %s21, 0
        %s339 = sadd.s32 %s338, %s336
        %s340 = smul.addr %s339, 4
        %s341 = scalar_lea.vmem %s0, %s340
        %s342 = smul.u32 2, %s19
        %s343 = smul.u32 16, %s21
        %s344 = smul.u32 2, %s19
        %p345 = scmp.lt.s32.totalorder %s344, 1
        %s346 = scalar_select %p345, %s344, 1
        %s347 = smul.addr %s346, 8
        %s348 = scalar_lea.vmem %s2, %s347
        %s349 = smul.u32 2, %s19
        %s350 = smul.u32 2, %s19
        %p351 = scmp.eq.s32.totalorder %s21, 0
        // Predicated region
        $region74: #{_lambda_.22} parent=68 // pred_check
          %p352 = pneg %p351
        $region75: #{_lambda_.22} parent=68 // pred_check_branch
          %354 = sbr.rel (%p352) target = $region77
        $region76: #{_lambda_.22} parent=68 // pred_region
          %355 = vst [vmem:[#allocation2] sm:$0xff] 0.0
          %356 = vst [vmem:[#allocation2 + $0x8] sm:$0xff] 0.0
        $region77: #{_lambda_.22} parent=68 // pred_fallthru
          _
        %v357 = vld [vmem:[#allocation2] sm:$0xff]
        %v358 = vld [vmem:[#allocation2 + $0x8] sm:$0xff]
        %v359 = vld [vmem:[%s341] sm:$0xf]
        %v360 = vld [vmem:[%s341 + $0x4] sm:$0xf]
        %v361 = vld [vmem:[%s301] sm:$0xf]
        %v362 = vld [vmem:[%s301 + $0x4] sm:$0xf]
        %v363 = vld [vmem:[%s301 + $0x8] sm:$0xf]
        %v364 = vld [vmem:[%s301 + $0xc] sm:$0xf]
        %v365 = vld [vmem:[%s301 + $0x10] sm:$0xf]
        %v366 = vld [vmem:[%s301 + $0x14] sm:$0xf]
        %v367 = vld [vmem:[%s301 + $0x18] sm:$0xf]
        %v368 = vld [vmem:[%s301 + $0x1c] sm:$0xf]
        %v369 = vld [vmem:[%s301 + $0x20] sm:$0xf]
        %v370 = vld [vmem:[%s301 + $0x24] sm:$0xf]
        %v371 = vld [vmem:[%s301 + $0x28] sm:$0xf]
        %v372 = vld [vmem:[%s301 + $0x2c] sm:$0xf]
        %v373 = vld [vmem:[%s301 + $0x30] sm:$0xf]
        %v374 = vld [vmem:[%s301 + $0x34] sm:$0xf]
        %v375 = vld [vmem:[%s301 + $0x38] sm:$0xf]
        %v376 = vld [vmem:[%s301 + $0x3c] sm:$0xf]
        %v379 = vunpack.c.l.b16 %v359
        %v380 = vunpack.c.l.b16 %v360
        %v381 = vpack.c.b16 %v380, %v379
        %v399 = vunpack.c.l.b16 %v361
        %v400 = vunpack.c.l.b16 %v362
        %v401 = vunpack.c.l.b16 %v363
        %v402 = vunpack.c.l.b16 %v364
        %v403 = vunpack.c.l.b16 %v365
        %v404 = vunpack.c.l.b16 %v366
        %v405 = vunpack.c.l.b16 %v367
        %v406 = vunpack.c.l.b16 %v368
        %v407 = vunpack.c.l.b16 %v369
        %v408 = vunpack.c.l.b16 %v370
        %v409 = vunpack.c.l.b16 %v371
        %v410 = vunpack.c.l.b16 %v372
        %v411 = vunpack.c.l.b16 %v373
        %v412 = vunpack.c.l.b16 %v374
        %v413 = vunpack.c.l.b16 %v375
        %v414 = vunpack.c.l.b16 %v376
        %v415 = vpack.c.b16 %v400, %v399
        %v416 = vpack.c.b16 %v402, %v401
        %v417 = vpack.c.b16 %v404, %v403
        %v418 = vpack.c.b16 %v406, %v405
        %v419 = vpack.c.b16 %v408, %v407
        %v420 = vpack.c.b16 %v410, %v409
        %v421 = vpack.c.b16 %v412, %v411
        %v422 = vpack.c.b16 %v414, %v413
        %431 = vmatpush.bf16.msra.mxu0 %v422
        %432 = vmatpush.bf16.msra.mxu0 %v421
        %433 = vmatpush.bf16.msra.mxu0 %v420
        %434 = vmatpush.bf16.msra.mxu0 %v419
        %435 = vmatpush.bf16.msra.mxu0 %v418
        %436 = vmatpush.bf16.msra.mxu0 %v417
        %437 = vmatpush.bf16.msra.mxu0 %v416
        %438 = vmatpush.bf16.msra.mxu0 %v415
        %439 = vmatmul.bf16.gmra.mxu0 %v381
        %v440 = vpop.f32.mrf.mxu0
        %v441 = vadd.f32 0.0, %v440
        %v442 = vpop.f32.mrf.mxu0
        %v443 = vadd.f32 0.0, %v442
        %444 = vdwg.mxu0
        %v445 = vadd.f32 %v357, %v441
        %v446 = vadd.f32 %v358, %v443
        %447 = vst [vmem:[#allocation2] sm:$0xff] %v445
        %448 = vst [vmem:[#allocation2 + $0x8] sm:$0xff] %v446
        // Predicated region
        $region78: #{_lambda_.22} parent=68 // pred_check
          %p449 = pneg %p351
        $region79: #{_lambda_.22} parent=68 // pred_check_branch
          %451 = sbr.rel (%p449) target = $region81
        $region80: #{_lambda_.22} parent=68 // pred_region
          %v452 = vld [vmem:[#allocation2] sm:$0xff]
          %v453 = vld [vmem:[#allocation2 + $0x8] sm:$0xff]
          %v454 = vld [vmem:[%s348] sm:$0xff]
          %v455 = vld [vmem:[%s348 + $0x8] sm:$0xff]
          %457 = vset.pattern.permute.xlu0 0
          %458 = vperm.xlu0 %457, %v454
          %v459 = vpop.permute.xlu0 %458
          %462 = vset.pattern.permute.xlu0 0
          %463 = vperm.xlu0 %462, %v455
          %v464 = vpop.permute.xlu0 %463
          %v466 = vadd.f32 %v452, %v459
          %v467 = vadd.f32 %v453, %v464
          %v468 = vpack.c.bf16 %v466, %v466
          %v469 = vpack.c.bf16 %v467, %v467
          %470 = vst [vmem:[%s333] sm:$0xf] %v468
          %471 = vst [vmem:[%s333 + $0x4] sm:$0xf] %v469
        $region81: #{_lambda_.22} parent=68 // pred_fallthru
          _
        %s472 = sand.u32 %s125, 1
        %s473 = sand.u32 %s125, 1
        %s474 = smul.addr %s473, 8
        %s475 = scalar_lea.vmem [#allocation4], %s474
        // Predicated region
        $region82: #{_lambda_.22} parent=68 // pred_check
          %p476 = pneg %p135
        $region83: #{_lambda_.22} parent=68 // pred_check_branch
          %478 = sbr.rel (%p476) target = $region85
        $region84: #{_lambda_.22} parent=68 // pred_region
          %s479 = smul.u32 2, %s19
          %s480 = smul.addr %s479, 2
          %s481 = sadd.s32 %s20, %s480
          %s482 = smul.addr %s481, 4
          %s483 = scalar_lea.vmem %s3, %s482
          // Predicated region
          $region86: #{_lambda_.22} parent=84 // pred_check
            _
          $region87: #{_lambda_.22} parent=84 // pred_check_branch
            %485 = sbr.rel (0) target = $region89
          $region88: #{_lambda_.22} parent=84 // pred_region
            // Predicated region
            $region90: #{_lambda_.22} parent=88 // pred_check
              _
            $region91: #{_lambda_.22} parent=88 // pred_check_branch
              %487 = sbr.rel target = $region93
            $region92: #{_lambda_.22} parent=88 // pred_region
              // Predicated region
              $region105: #{_lambda_.22} parent=92 // pred_check
                _
              $region106: #{_lambda_.22} parent=92 // pred_check_branch
                %505 = sbr.rel (0) target = $region108
              $region107: #{_lambda_.22} parent=92 // pred_region
                loop: start=0, step=1, limit=1
                $region109: #{_lambda_.22} parent=107 // loop_pre_header
                  _
                $region110: #{_lambda_.22} parent=107 // loop_header
                  %s507 = sphi 0, %s511
                  %p508 = scmp.ge.s32.totalorder %s507, 1
                  %s512 = sphi %s475, %s475
                  %s513 = sphi %s483, %s483
                $region111: #{_lambda_.22} parent=107 // loop_header_branch
                  %510 = sbr.rel (%p508) target = $region115
                $region112: #{_lambda_.22} parent=107 // loop_body
                  _
                $region113: #{_lambda_.22} parent=107 // loop_footer
                  %s511 = sadd.s32 1, %s507
                $region114: #{_lambda_.22} parent=107 // loop_footer_branch
                  %506 = sbr.rel target = $region110
                $region115: #{_lambda_.22} parent=107 // loop_exit
                  _
                %s515 = ssub.s32 16, 1
                loop: start=0, step=1, limit=1
                $region116: #{_lambda_.22} parent=107 // loop_pre_header
                  _
                $region117: #{_lambda_.22} parent=107 // loop_header
                  %s517 = sphi 0, %s521
                  %p518 = scmp.ge.s32.totalorder %s517, 1
                  %s522 = sphi %s475, %s475
                  %s523 = sphi %s483, %s483
                $region118: #{_lambda_.22} parent=107 // loop_header_branch
                  %520 = sbr.rel (%p518) target = $region122
                $region119: #{_lambda_.22} parent=107 // loop_body
                  %v524 = vld [vmem:[%s522] sm:%s515]
                  %525 = vst [vmem:[%s523] sm:%s515] %v524
                  %v526 = vld [vmem:[%s522 + $0x4] sm:%s515]
                  %527 = vst [vmem:[%s523 + $0x8] sm:%s515] %v526
                $region120: #{_lambda_.22} parent=107 // loop_footer
                  %s521 = sadd.s32 1, %s517
                $region121: #{_lambda_.22} parent=107 // loop_footer_branch
                  %516 = sbr.rel target = $region117
                $region122: #{_lambda_.22} parent=107 // loop_exit
                  _
              $region108: #{_lambda_.22} parent=92 // pred_fallthru
                _
            $region93: #{_lambda_.22} parent=88 // pred_fallthru
              _
            // Predicated region
            $region94: #{_lambda_.22} parent=88 // pred_check
              _
            $region95: #{_lambda_.22} parent=88 // pred_check_branch
              %489 = sbr.rel (0) target = $region97
            $region96: #{_lambda_.22} parent=88 // pred_region
              %s491 = ssub.s32 16, 1
              loop: start=0, step=1, limit=1
              $region98: #{_lambda_.22} parent=96 // loop_pre_header
                _
              $region99: #{_lambda_.22} parent=96 // loop_header
                %s493 = sphi 0, %s497
                %p494 = scmp.ge.s32.totalorder %s493, 1
                %s498 = sphi %s475, %s475
                %s499 = sphi %s483, %s483
              $region100: #{_lambda_.22} parent=96 // loop_header_branch
                %496 = sbr.rel (%p494) target = $region104
              $region101: #{_lambda_.22} parent=96 // loop_body
                %v500 = vld [vmem:[%s498] sm:%s491]
                %501 = vst [vmem:[%s499] sm:%s491] %v500
                %v502 = vld [vmem:[%s498 + $0x4] sm:%s491]
                %503 = vst [vmem:[%s499 + $0x8] sm:%s491] %v502
              $region102: #{_lambda_.22} parent=96 // loop_footer
                %s497 = sadd.s32 1, %s493
              $region103: #{_lambda_.22} parent=96 // loop_footer_branch
                %492 = sbr.rel target = $region99
              $region104: #{_lambda_.22} parent=96 // loop_exit
                _
            $region97: #{_lambda_.22} parent=88 // pred_fallthru
              _
          $region89: #{_lambda_.22} parent=84 // pred_fallthru
            _
          %528 = vnop
        $region85: #{_lambda_.22} parent=68 // pred_fallthru
          _
      $region69: #{_lambda_.22} parent=5 // pred_fallthru
        _
      %p529 = scmp.le.s32.totalorder 2, %s9
      // Predicated region
      $region123: #{_lambda_.22} parent=5 // pred_check
        %p530 = pneg %p529
      $region124: #{_lambda_.22} parent=5 // pred_check_branch
        %532 = sbr.rel (%p530) target = $region126
      $region125: #{_lambda_.22} parent=5 // pred_region
        %s533 = ssub.s32 %s9, 2
        // Predicated region
        $region127: #{_lambda_.22} parent=125 // pred_check
          %p534 = pneg %p141
        $region128: #{_lambda_.22} parent=125 // pred_check_branch
          %536 = sbr.rel (%p534) target = $region130
        $region129: #{_lambda_.22} parent=125 // pred_region
          %s537 = sand.u32 %s126, 1
          %s538 = sand.u32 %s126, 1
          %s539 = smul.addr %s538, 8
          %s540 = scalar_lea.vmem [#allocation4], %s539
        $region130: #{_lambda_.22} parent=125 // pred_fallthru
          _
      $region126: #{_lambda_.22} parent=5 // pred_fallthru
        _
    $region6: #{_lambda_.22} parent=1 // loop_footer
      %s13 = sadd.s32 1, %s9
    $region7: #{_lambda_.22} parent=1 // loop_footer_branch
      %8 = sbr.rel target = $region3
    $region8: #{_lambda_.22} parent=1 // loop_exit
      _

// kernel: _lambda_.24
$region0: #{_lambda_.24}
  #allocation0 [shape = 'u32[]', space=smem, size = 0x4, offset = 0x4, fixed_abs, tag = 'smem constant byte address 0x4 - core index']
  #allocation1 [shape = 'u32[72,128]{1,0:T(1,128)}', space=vmem, size = 0x9000, scoped, tag = 'internal scratch']
  %s0 = inlined_call_operand.vmem [shape: bf16[16,256], index: 0, kind: input, shape index: {}]
  %s1 = inlined_call_operand.vmem [shape: f32[16,1], index: 1, kind: input, shape index: {}]
  %s2 = inlined_call_operand.vmem [shape: f32[16,1], index: 2, kind: input, shape index: {}]
  %s3 = inlined_call_operand.vmem [shape: bf16[16,256], index: 3, kind: output, shape index: {}]
  %s4 = sld [smem:[#allocation0]]
  $region22: #{_lambda_.24} parent=0
    _
  %s6 = ssub.s32 1, %s4
  %s7 = scalar_select 0, %s6, %s4
  // Predicated region
  $region2: #{_lambda_.24} parent=0 // pred_check
    _
  $region3: #{_lambda_.24} parent=0 // pred_check_branch
    %9 = sbr.rel (0) target = $region5
  $region4: #{_lambda_.24} parent=0 // pred_region
    _
  $region5: #{_lambda_.24} parent=0 // pred_fallthru
    _
  // Predicated region
  $region6: #{_lambda_.24} parent=0 // pred_check
    _
  $region7: #{_lambda_.24} parent=0 // pred_check_branch
    %11 = sbr.rel (0) target = $region9
  $region8: #{_lambda_.24} parent=0 // pred_region
    _
  $region9: #{_lambda_.24} parent=0 // pred_fallthru
    _
  // Predicated region
  $region10: #{_lambda_.24} parent=0 // pred_check
    _
  $region11: #{_lambda_.24} parent=0 // pred_check_branch
    %13 = sbr.rel (0) target = $region13
  $region12: #{_lambda_.24} parent=0 // pred_region
    _
  $region13: #{_lambda_.24} parent=0 // pred_fallthru
    _
  %v14 = vld [vmem:[%s0] sm:$0xff]
  %v15 = vld [vmem:[%s0 + $0x8] sm:$0xff]
  %v16 = vunpack.c.l.bf16 %v14
  %v17 = vunpack.c.h.bf16 %v14
  %v18 = vunpack.c.l.bf16 %v15
  %v19 = vunpack.c.h.bf16 %v15
  %v20 = vadd.f32 %v16, %v17
  %21 = vadd.xlane.f32.xlu0 %v20
  %v22 = vpop.xlane.xlu0 %21
  %v23 = vadd.f32 %v18, %v19
  %24 = vadd.xlane.f32.xlu0 %v23
  %v25 = vpop.xlane.xlu0 %24
  %v26 = vmul.f32 %v16, %v16
  %v27 = vmul.f32 %v17, %v17
  %v28 = vmul.f32 %v18, %v18
  %v29 = vmul.f32 %v19, %v19
  %v30 = vadd.f32 %v26, %v27
  %31 = vadd.xlane.f32.xlu0 %v30
  %v32 = vpop.xlane.xlu0 %31
  %v33 = vadd.f32 %v28, %v29
  %34 = vadd.xlane.f32.xlu0 %v33
  %v35 = vpop.xlane.xlu0 %34
  %v36 = vmul.f32 %v22, 0.00390625
  %v37 = vmul.f32 %v25, 0.00390625
  %v38 = vmul.f32 %v32, 0.00390625
  %v39 = vmul.f32 %v35, 0.00390625
  %v40 = vmul.f32 %v36, %v36
  %v41 = vmul.f32 %v37, %v37
  %v42 = vsub.f32 %v38, %v40
  %v43 = vsub.f32 %v39, %v41
  %v44 = vmax.f32 %v42, 0.0
  %v45 = vmax.f32 %v43, 0.0
  %v46 = vsub.f32 %v16, %v36
  %v47 = vsub.f32 %v17, %v36
  %v48 = vsub.f32 %v18, %v37
  %v49 = vsub.f32 %v19, %v37
  %v50 = vadd.f32 %v44, 1e-05
  %v51 = vadd.f32 %v45, 1e-05
  %v52 = vrsqrt.pop %v50
  %v53 = vmul.f32 %v52, %v50
  %v54 = vmul.f32 %v53, %v52
  %v55 = vmul.f32 0.5, %v54
  %v56 = vsub.f32 1.5, %v55
  %v57 = vmul.f32 %v52, %v56
  %vm58 = vweird.f32 %v50
  %vm59 = vweird.f32 %v52
  %vm60 = vmor %vm58, %vm59
  %v61 = vsel %vm60, %v52, %v57
  %v62 = vrsqrt.pop %v51
  %v63 = vmul.f32 %v62, %v51
  %v64 = vmul.f32 %v63, %v62
  %v65 = vmul.f32 0.5, %v64
  %v66 = vsub.f32 1.5, %v65
  %v67 = vmul.f32 %v62, %v66
  %vm68 = vweird.f32 %v51
  %vm69 = vweird.f32 %v62
  %vm70 = vmor %vm68, %vm69
  %v71 = vsel %vm70, %v62, %v67
  %v72 = vmul.f32 %v46, %v61
  %v73 = vmul.f32 %v47, %v61
  %v74 = vmul.f32 %v48, %v71
  %v75 = vmul.f32 %v49, %v71
  %v76 = vld [vmem:[%s1] sm:$0xff]
  %v77 = vld [vmem:[%s1 + $0x8] sm:$0xff]
  %79 = vset.pattern.permute.xlu0 0
  %80 = vperm.xlu0 %79, %v76
  %v81 = vpop.permute.xlu0 %80
  %84 = vset.pattern.permute.xlu0 0
  %85 = vperm.xlu0 %84, %v77
  %v86 = vpop.permute.xlu0 %85
  %v88 = vmul.f32 %v72, %v81
  %v89 = vmul.f32 %v73, %v81
  %v90 = vmul.f32 %v74, %v86
  %v91 = vmul.f32 %v75, %v86
  %v92 = vld [vmem:[%s2] sm:$0xff]
  %v93 = vld [vmem:[%s2 + $0x8] sm:$0xff]
  %95 = vset.pattern.permute.xlu0 0
  %96 = vperm.xlu0 %95, %v92
  %v97 = vpop.permute.xlu0 %96
  %100 = vset.pattern.permute.xlu0 0
  %101 = vperm.xlu0 %100, %v93
  %v102 = vpop.permute.xlu0 %101
  %v104 = vadd.f32 %v88, %v97
  %v105 = vadd.f32 %v89, %v97
  %v106 = vadd.f32 %v90, %v102
  %v107 = vadd.f32 %v91, %v102
  %vm108 = vcmp.ge.f32.partialorder %v104, 0.0
  %vm109 = vcmp.ge.f32.partialorder %v105, 0.0
  %vm110 = vcmp.ge.f32.partialorder %v106, 0.0
  %vm111 = vcmp.ge.f32.partialorder %v107, 0.0
  %v112 = vmul.f32 %v104, 0.2
  %v113 = vmul.f32 %v105, 0.2
  %v114 = vmul.f32 %v106, 0.2
  %v115 = vmul.f32 %v107, 0.2
  %v116 = vsel %vm108, %v104, %v112
  %v117 = vsel %vm109, %v105, %v113
  %v118 = vsel %vm110, %v106, %v114
  %v119 = vsel %vm111, %v107, %v115
  %v120 = vpack.c.bf16 %v117, %v116
  %v121 = vpack.c.bf16 %v119, %v118
  %122 = vst [vmem:[%s3] sm:$0xff] %v120
  %123 = vst [vmem:[%s3 + $0x8] sm:$0xff] %v121
  // Predicated region
  $region14: #{_lambda_.24} parent=0 // pred_check
    _
  $region15: #{_lambda_.24} parent=0 // pred_check_branch
    %125 = sbr.rel (0) target = $region17
  $region16: #{_lambda_.24} parent=0 // pred_region
    _
  $region17: #{_lambda_.24} parent=0 // pred_fallthru
    _
  // Predicated region
  $region18: #{_lambda_.24} parent=0 // pred_check
    _
  $region19: #{_lambda_.24} parent=0 // pred_check_branch
    %127 = sbr.rel (0) target = $region21
  $region20: #{_lambda_.24} parent=0 // pred_region
    _
  $region21: #{_lambda_.24} parent=0 // pred_fallthru
    _

// kernel: _lambda_.25
$region0: #{_lambda_.25}
  #allocation0 [shape = 'u32[]', space=smem, size = 0x4, offset = 0x4, fixed_abs, tag = 'smem constant byte address 0x4 - core index']
  #allocation1 [shape = 'u32[72,128]{1,0:T(1,128)}', space=vmem, size = 0x9000, scoped, tag = 'internal scratch']
  #allocation2 [shape = 'f32[16,128]{1,0:T(8,128)}', space=vmem, size = 0x2000, scoped, tag = 'scratch operand']
  %s0 = inlined_call_operand.vmem [shape: bf16[16,256], index: 0, kind: input, shape index: {}]
  %s1 = inlined_call_operand.vmem [shape: bf16[256,256], index: 1, kind: input, shape index: {}]
  %s2 = inlined_call_operand.vmem [shape: f32[16,1], index: 2, kind: input, shape index: {}]
  %s3 = inlined_call_operand.vmem [shape: bf16[16,256], index: 3, kind: output, shape index: {}]
  %s4 = sld [smem:[#allocation0]]
  $region131: #{_lambda_.25} parent=0
    _
  %s6 = ssub.s32 1, %s4
  %s7 = scalar_select 0, %s6, %s4
  $region1: #{_lambda_.25} parent=0
    #allocation3 [shape = 'u8[131072]{0}', space=vmem, size = 0x20000, scoped, tag = 'input window, operand 1']
    #allocation4 [shape = 'u8[8192]{0}', space=vmem, size = 0x2000, scoped, tag = 'output window, operand 0']
    loop: start=0, step=1, limit=4
    $region2: #{_lambda_.25} parent=1 // loop_pre_header
      _
    $region3: #{_lambda_.25} parent=1 // loop_header
      %s9 = sphi 0, %s13
      %p10 = scmp.ge.s32.totalorder %s9, 4
      %s16 = sphi 0, %s35
      %s17 = sphi 0, %s31
      %s18 = sphi 0, %s27
      %s19 = sphi 0, %s16
      %s20 = sphi 0, %s17
      %s21 = sphi 0, %s18
      %s22 = sphi 0, %s19
      %s23 = sphi 0, %s20
      %s24 = sphi 0, %s21
      %s40 = sphi 0, %s42
      %s43 = sphi 0, %s40
      %s44 = sphi 0, %s43
      %s60 = sphi 0, %s44
      %s68 = sphi 0, %s70
      %s71 = sphi 0, %s68
      %s72 = sphi 0, %s71
      %s88 = sphi 0, %s72
      %s94 = sphi 0, %s96
      %s97 = sphi 0, %s94
      %s98 = sphi 0, %s97
      %s114 = sphi 0, %s98
      %s122 = sphi 0, %s124
      %s125 = sphi 0, %s122
      %s126 = sphi 0, %s125
      %s142 = sphi 0, %s126
    $region4: #{_lambda_.25} parent=1 // loop_header_branch
      %12 = sbr.rel (%p10) target = $region8
    $region5: #{_lambda_.25} parent=1 // loop_body
      %s14 = ssub.s32 %s9, 1
      %s15 = ssub.s32 %s9, 2
      %s25 = sadd.s32 1, %s18
      %p26 = scmp.ge.s32.totalorder %s25, 1
      %s27 = scalar_select %p26, 0, %s25
      %s28 = sadd.s32 1, %s17
      %s29 = scalar_select %p26, %s28, %s17
      %p30 = scmp.ge.s32.totalorder %s29, 2
      %s31 = scalar_select %p30, 0, %s29
      %s32 = sadd.s32 1, %s16
      %s33 = scalar_select %p30, %s32, %s16
      %p34 = scmp.ge.s32.totalorder %s33, 1
      %s35 = scalar_select %p34, 0, %s33
      %s36 = ssub.s32 %s16, %s35
      %s37 = ssub.s32 %s18, %s27
      %s38 = sor.u32 %s36, %s37
      %p39 = scmp.eq.s32.totalorder %s38, 0
      %s41 = sadd.s32 %s40, 1
      %s42 = scalar_select %p39, %s40, %s41
      %p45 = pneg %p39
      %p46 = scmp.eq.s32.totalorder %s9, 1
      %p47 = por %p45, %p46
      %p48 = scmp.ne.s32.totalorder %s40, %s43
      %p49 = scmp.eq.s32.totalorder %s9, 0
      %p50 = por %p48, %p49
      %p51 = scmp.ne.s32.totalorder %s40, %s43
      %p52 = scmp.eq.s32.totalorder %s14, 1
      %p53 = por %p51, %p52
      %p54 = scmp.ne.s32.totalorder %s43, %s44
      %p55 = scmp.eq.s32.totalorder %s14, 0
      %p56 = por %p54, %p55
      %p57 = scmp.ne.s32.totalorder %s43, %s44
      %p58 = scmp.eq.s32.totalorder %s15, 1
      %p59 = por %p57, %p58
      %p61 = scmp.ne.s32.totalorder %s44, %s60
      %p62 = scmp.eq.s32.totalorder %s15, 0
      %p63 = por %p61, %p62
      %s64 = ssub.s32 %s18, %s27
      %s65 = ssub.s32 %s17, %s31
      %s66 = sor.u32 %s64, %s65
      %p67 = scmp.eq.s32.totalorder %s66, 0
      %s69 = sadd.s32 %s68, 1
      %s70 = scalar_select %p67, %s68, %s69
      %p73 = pneg %p67
      %p74 = scmp.eq.s32.totalorder %s9, 1
      %p75 = por %p73, %p74
      %p76 = scmp.ne.s32.totalorder %s68, %s71
      %p77 = scmp.eq.s32.totalorder %s9, 0
      %p78 = por %p76, %p77
      %p79 = scmp.ne.s32.totalorder %s68, %s71
      %p80 = scmp.eq.s32.totalorder %s14, 1
      %p81 = por %p79, %p80
      %p82 = scmp.ne.s32.totalorder %s71, %s72
      %p83 = scmp.eq.s32.totalorder %s14, 0
      %p84 = por %p82, %p83
      %p85 = scmp.ne.s32.totalorder %s71, %s72
      %p86 = scmp.eq.s32.totalorder %s15, 1
      %p87 = por %p85, %p86
      %p89 = scmp.ne.s32.totalorder %s72, %s88
      %p90 = scmp.eq.s32.totalorder %s15, 0
      %p91 = por %p89, %p90
      %s92 = ssub.s32 %s16, %s35
      %p93 = scmp.eq.s32.totalorder %s92, 0
      %s95 = sadd.s32 %s94, 1
      %s96 = scalar_select %p93, %s94, %s95
      %p99 = pneg %p93
      %p100 = scmp.eq.s32.totalorder %s9, 1
      %p101 = por %p99, %p100
      %p102 = scmp.ne.s32.totalorder %s94, %s97
      %p103 = scmp.eq.s32.totalorder %s9, 0
      %p104 = por %p102, %p103
      %p105 = scmp.ne.s32.totalorder %s94, %s97
      %p106 = scmp.eq.s32.totalorder %s14, 1
      %p107 = por %p105, %p106
      %p108 = scmp.ne.s32.totalorder %s97, %s98
      %p109 = scmp.eq.s32.totalorder %s14, 0
      %p110 = por %p108, %p109
      %p111 = scmp.ne.s32.totalorder %s97, %s98
      %p112 = scmp.eq.s32.totalorder %s15, 1
      %p113 = por %p111, %p112
      %p115 = scmp.ne.s32.totalorder %s98, %s114
      %p116 = scmp.eq.s32.totalorder %s15, 0
      %p117 = por %p115, %p116
      %s118 = ssub.s32 %s16, %s35
      %s119 = ssub.s32 %s17, %s31
      %s120 = sor.u32 %s118, %s119
      %p121 = scmp.eq.s32.totalorder %s120, 0
      %s123 = sadd.s32 %s122, 1
      %s124 = scalar_select %p121, %s122, %s123
      %p127 = pneg %p121
      %p128 = scmp.eq.s32.totalorder %s9, 1
      %p129 = por %p127, %p128
      %p130 = scmp.ne.s32.totalorder %s122, %s125
      %p131 = scmp.eq.s32.totalorder %s9, 0
      %p132 = por %p130, %p131
      %p133 = scmp.ne.s32.totalorder %s122, %s125
      %p134 = scmp.eq.s32.totalorder %s14, 1
      %p135 = por %p133, %p134
      %p136 = scmp.ne.s32.totalorder %s125, %s126
      %p137 = scmp.eq.s32.totalorder %s14, 0
      %p138 = por %p136, %p137
      %p139 = scmp.ne.s32.totalorder %s125, %s126
      %p140 = scmp.eq.s32.totalorder %s15, 1
      %p141 = por %p139, %p140
      %p143 = scmp.ne.s32.totalorder %s126, %s142
      %p144 = scmp.eq.s32.totalorder %s15, 0
      %p145 = por %p143, %p144
      %p146 = scmp.le.s32.totalorder 1, %s9
      %p147 = scmp.lt.s32.totalorder %s9, 3
      %p148 = pnand %p146, %p147
      %p149 = pneg %p148
      // Predicated region
      $region9: #{_lambda_.25} parent=5 // pred_check
        _
      $region10: #{_lambda_.25} parent=5 // pred_check_branch
        %151 = sbr.rel (%p148) target = $region12
      $region11: #{_lambda_.25} parent=5 // pred_region
        %s152 = ssub.s32 %s9, 1
        // Predicated region
        $region13: #{_lambda_.25} parent=11 // pred_check
          %p153 = pneg %p56
        $region14: #{_lambda_.25} parent=11 // pred_check_branch
          %155 = sbr.rel (%p153) target = $region16
        $region15: #{_lambda_.25} parent=11 // pred_region
          %s156 = smul.u32 2, %s19
          %s157 = smul.u32 2, %s21
          %p158 = scmp.lt.s32.totalorder %s156, 1
          %s159 = scalar_select %p158, %s156, 1
          %p160 = scmp.lt.s32.totalorder %s157, 1
          %s161 = scalar_select %p160, %s157, 1
          %s162 = smul.addr %s159, 2
          %s163 = sadd.s32 %s161, %s162
          %s164 = smul.addr %s163, 4
          %s165 = scalar_lea.vmem %s0, %s164
          %s166 = smul.u32 2, %s19
          %s167 = smul.u32 2, %s21
        $region16: #{_lambda_.25} parent=11 // pred_fallthru
          _
        // Predicated region
        $region17: #{_lambda_.25} parent=11 // pred_check
          %p168 = pneg %p110
        $region18: #{_lambda_.25} parent=11 // pred_check_branch
          %170 = sbr.rel (%p168) target = $region20
        $region19: #{_lambda_.25} parent=11 // pred_region
          %s171 = smul.u32 2, %s19
          %p172 = scmp.lt.s32.totalorder %s171, 1
          %s173 = scalar_select %p172, %s171, 1
          %s174 = smul.addr %s173, 8
          %s175 = scalar_lea.vmem %s2, %s174
          %s176 = smul.u32 2, %s19
        $region20: #{_lambda_.25} parent=11 // pred_fallthru
          _
      $region12: #{_lambda_.25} parent=5 // pred_fallthru
        _
      %p177 = scmp.lt.s32.totalorder %s9, 2
      // Predicated region
      $region21: #{_lambda_.25} parent=5 // pred_check
        %p178 = pneg %p177
      $region22: #{_lambda_.25} parent=5 // pred_check_branch
        %180 = sbr.rel (%p178) target = $region24
      $region23: #{_lambda_.25} parent=5 // pred_region
        // Predicated region
        $region25: #{_lambda_.25} parent=23 // pred_check
          %p181 = pneg %p78
        $region26: #{_lambda_.25} parent=23 // pred_check_branch
          %183 = sbr.rel (%p181) target = $region28
        $region27: #{_lambda_.25} parent=23 // pred_region
          %s184 = sand.u32 %s68, 1
          %s185 = sand.u32 %s68, 1
          %s186 = smul.addr %s185, 128
          %s187 = scalar_lea.vmem [#allocation3], %s186
          %s188 = smul.u32 32, %s18
          %s189 = smul.addr %s188, 2
          %s190 = sadd.s32 %s17, %s189
          %s191 = smul.addr %s190, 4
          %s192 = scalar_lea.vmem %s1, %s191
          // Predicated region
          $region29: #{_lambda_.25} parent=27 // pred_check
            _
          $region30: #{_lambda_.25} parent=27 // pred_check_branch
            %194 = sbr.rel (0) target = $region32
          $region31: #{_lambda_.25} parent=27 // pred_region
            // Predicated region
            $region33: #{_lambda_.25} parent=31 // pred_check
              _
            $region34: #{_lambda_.25} parent=31 // pred_check_branch
              %196 = sbr.rel target = $region36
            $region35: #{_lambda_.25} parent=31 // pred_region
              // Predicated region
              $region48: #{_lambda_.25} parent=35 // pred_check
                _
              $region49: #{_lambda_.25} parent=35 // pred_check_branch
                %274 = sbr.rel (0) target = $region51
              $region50: #{_lambda_.25} parent=35 // pred_region
                loop: start=0, step=1, limit=1
                $region52: #{_lambda_.25} parent=50 // loop_pre_header
                  _
                $region53: #{_lambda_.25} parent=50 // loop_header
                  %s276 = sphi 0, %s280
                  %p277 = scmp.ge.s32.totalorder %s276, 1
                  %s281 = sphi %s192, %s192
                  %s282 = sphi %s187, %s187
                $region54: #{_lambda_.25} parent=50 // loop_header_branch
                  %279 = sbr.rel (%p277) target = $region58
                $region55: #{_lambda_.25} parent=50 // loop_body
                  _
                $region56: #{_lambda_.25} parent=50 // loop_footer
                  %s280 = sadd.s32 1, %s276
                $region57: #{_lambda_.25} parent=50 // loop_footer_branch
                  %275 = sbr.rel target = $region53
                $region58: #{_lambda_.25} parent=50 // loop_exit
                  _
                %s284 = ssub.s32 16, 1
                loop: start=0, step=1, limit=1
                $region59: #{_lambda_.25} parent=50 // loop_pre_header
                  _
                $region60: #{_lambda_.25} parent=50 // loop_header
                  %s286 = sphi 0, %s290
                  %p287 = scmp.ge.s32.totalorder %s286, 1
                  %s291 = sphi %s192, %s192
                  %s292 = sphi %s187, %s187
                $region61: #{_lambda_.25} parent=50 // loop_header_branch
                  %289 = sbr.rel (%p287) target = $region65
                $region62: #{_lambda_.25} parent=50 // loop_body
                  %v293 = vld [vmem:[%s291] sm:%s284]
                  %294 = vst [vmem:[%s292] sm:%s284] %v293
                  %v295 = vld [vmem:[%s291 + $0x8] sm:%s284]
                  %296 = vst [vmem:[%s292 + $0x4] sm:%s284] %v295
                  %v297 = vld [vmem:[%s291 + $0x10] sm:%s284]
                  %298 = vst [vmem:[%s292 + $0x8] sm:%s284] %v297
                  %v299 = vld [vmem:[%s291 + $0x18] sm:%s284]
                  %300 = vst [vmem:[%s292 + $0xc] sm:%s284] %v299
                  %v301 = vld [vmem:[%s291 + $0x20] sm:%s284]
                  %302 = vst [vmem:[%s292 + $0x10] sm:%s284] %v301
                  %v303 = vld [vmem:[%s291 + $0x28] sm:%s284]
                  %304 = vst [vmem:[%s292 + $0x14] sm:%s284] %v303
                  %v305 = vld [vmem:[%s291 + $0x30] sm:%s284]
                  %306 = vst [vmem:[%s292 + $0x18] sm:%s284] %v305
                  %v307 = vld [vmem:[%s291 + $0x38] sm:%s284]
                  %308 = vst [vmem:[%s292 + $0x1c] sm:%s284] %v307
                  %v309 = vld [vmem:[%s291 + $0x40] sm:%s284]
                  %310 = vst [vmem:[%s292 + $0x20] sm:%s284] %v309
                  %v311 = vld [vmem:[%s291 + $0x48] sm:%s284]
                  %312 = vst [vmem:[%s292 + $0x24] sm:%s284] %v311
                  %v313 = vld [vmem:[%s291 + $0x50] sm:%s284]
                  %314 = vst [vmem:[%s292 + $0x28] sm:%s284] %v313
                  %v315 = vld [vmem:[%s291 + $0x58] sm:%s284]
                  %316 = vst [vmem:[%s292 + $0x2c] sm:%s284] %v315
                  %v317 = vld [vmem:[%s291 + $0x60] sm:%s284]
                  %318 = vst [vmem:[%s292 + $0x30] sm:%s284] %v317
                  %v319 = vld [vmem:[%s291 + $0x68] sm:%s284]
                  %320 = vst [vmem:[%s292 + $0x34] sm:%s284] %v319
                  %v321 = vld [vmem:[%s291 + $0x70] sm:%s284]
                  %322 = vst [vmem:[%s292 + $0x38] sm:%s284] %v321
                  %v323 = vld [vmem:[%s291 + $0x78] sm:%s284]
                  %324 = vst [vmem:[%s292 + $0x3c] sm:%s284] %v323
                  %v325 = vld [vmem:[%s291 + $0x80] sm:%s284]
                  %326 = vst [vmem:[%s292 + $0x40] sm:%s284] %v325
                  %v327 = vld [vmem:[%s291 + $0x88] sm:%s284]
                  %328 = vst [vmem:[%s292 + $0x44] sm:%s284] %v327
                  %v329 = vld [vmem:[%s291 + $0x90] sm:%s284]
                  %330 = vst [vmem:[%s292 + $0x48] sm:%s284] %v329
                  %v331 = vld [vmem:[%s291 + $0x98] sm:%s284]
                  %332 = vst [vmem:[%s292 + $0x4c] sm:%s284] %v331
                  %v333 = vld [vmem:[%s291 + $0xa0] sm:%s284]
                  %334 = vst [vmem:[%s292 + $0x50] sm:%s284] %v333
                  %v335 = vld [vmem:[%s291 + $0xa8] sm:%s284]
                  %336 = vst [vmem:[%s292 + $0x54] sm:%s284] %v335
                  %v337 = vld [vmem:[%s291 + $0xb0] sm:%s284]
                  %338 = vst [vmem:[%s292 + $0x58] sm:%s284] %v337
                  %v339 = vld [vmem:[%s291 + $0xb8] sm:%s284]
                  %340 = vst [vmem:[%s292 + $0x5c] sm:%s284] %v339
                  %v341 = vld [vmem:[%s291 + $0xc0] sm:%s284]
                  %342 = vst [vmem:[%s292 + $0x60] sm:%s284] %v341
                  %v343 = vld [vmem:[%s291 + $0xc8] sm:%s284]
                  %344 = vst [vmem:[%s292 + $0x64] sm:%s284] %v343
                  %v345 = vld [vmem:[%s291 + $0xd0] sm:%s284]
                  %346 = vst [vmem:[%s292 + $0x68] sm:%s284] %v345
                  %v347 = vld [vmem:[%s291 + $0xd8] sm:%s284]
                  %348 = vst [vmem:[%s292 + $0x6c] sm:%s284] %v347
                  %v349 = vld [vmem:[%s291 + $0xe0] sm:%s284]
                  %350 = vst [vmem:[%s292 + $0x70] sm:%s284] %v349
                  %v351 = vld [vmem:[%s291 + $0xe8] sm:%s284]
                  %352 = vst [vmem:[%s292 + $0x74] sm:%s284] %v351
                  %v353 = vld [vmem:[%s291 + $0xf0] sm:%s284]
                  %354 = vst [vmem:[%s292 + $0x78] sm:%s284] %v353
                  %v355 = vld [vmem:[%s291 + $0xf8] sm:%s284]
                  %356 = vst [vmem:[%s292 + $0x7c] sm:%s284] %v355
                $region63: #{_lambda_.25} parent=50 // loop_footer
                  %s290 = sadd.s32 1, %s286
                $region64: #{_lambda_.25} parent=50 // loop_footer_branch
                  %285 = sbr.rel target = $region60
                $region65: #{_lambda_.25} parent=50 // loop_exit
                  _
              $region51: #{_lambda_.25} parent=35 // pred_fallthru
                _
            $region36: #{_lambda_.25} parent=31 // pred_fallthru
              _
            // Predicated region
            $region37: #{_lambda_.25} parent=31 // pred_check
              _
            $region38: #{_lambda_.25} parent=31 // pred_check_branch
              %198 = sbr.rel (0) target = $region40
            $region39: #{_lambda_.25} parent=31 // pred_region
              %s200 = ssub.s32 16, 1
              loop: start=0, step=1, limit=1
              $region41: #{_lambda_.25} parent=39 // loop_pre_header
                _
              $region42: #{_lambda_.25} parent=39 // loop_header
                %s202 = sphi 0, %s206
                %p203 = scmp.ge.s32.totalorder %s202, 1
                %s207 = sphi %s192, %s192
                %s208 = sphi %s187, %s187
              $region43: #{_lambda_.25} parent=39 // loop_header_branch
                %205 = sbr.rel (%p203) target = $region47
              $region44: #{_lambda_.25} parent=39 // loop_body
                %v209 = vld [vmem:[%s207] sm:%s200]
                %210 = vst [vmem:[%s208] sm:%s200] %v209
                %v211 = vld [vmem:[%s207 + $0x8] sm:%s200]
                %212 = vst [vmem:[%s208 + $0x4] sm:%s200] %v211
                %v213 = vld [vmem:[%s207 + $0x10] sm:%s200]
                %214 = vst [vmem:[%s208 + $0x8] sm:%s200] %v213
                %v215 = vld [vmem:[%s207 + $0x18] sm:%s200]
                %216 = vst [vmem:[%s208 + $0xc] sm:%s200] %v215
                %v217 = vld [vmem:[%s207 + $0x20] sm:%s200]
                %218 = vst [vmem:[%s208 + $0x10] sm:%s200] %v217
                %v219 = vld [vmem:[%s207 + $0x28] sm:%s200]
                %220 = vst [vmem:[%s208 + $0x14] sm:%s200] %v219
                %v221 = vld [vmem:[%s207 + $0x30] sm:%s200]
                %222 = vst [vmem:[%s208 + $0x18] sm:%s200] %v221
                %v223 = vld [vmem:[%s207 + $0x38] sm:%s200]
                %224 = vst [vmem:[%s208 + $0x1c] sm:%s200] %v223
                %v225 = vld [vmem:[%s207 + $0x40] sm:%s200]
                %226 = vst [vmem:[%s208 + $0x20] sm:%s200] %v225
                %v227 = vld [vmem:[%s207 + $0x48] sm:%s200]
                %228 = vst [vmem:[%s208 + $0x24] sm:%s200] %v227
                %v229 = vld [vmem:[%s207 + $0x50] sm:%s200]
                %230 = vst [vmem:[%s208 + $0x28] sm:%s200] %v229
                %v231 = vld [vmem:[%s207 + $0x58] sm:%s200]
                %232 = vst [vmem:[%s208 + $0x2c] sm:%s200] %v231
                %v233 = vld [vmem:[%s207 + $0x60] sm:%s200]
                %234 = vst [vmem:[%s208 + $0x30] sm:%s200] %v233
                %v235 = vld [vmem:[%s207 + $0x68] sm:%s200]
                %236 = vst [vmem:[%s208 + $0x34] sm:%s200] %v235
                %v237 = vld [vmem:[%s207 + $0x70] sm:%s200]
                %238 = vst [vmem:[%s208 + $0x38] sm:%s200] %v237
                %v239 = vld [vmem:[%s207 + $0x78] sm:%s200]
                %240 = vst [vmem:[%s208 + $0x3c] sm:%s200] %v239
                %v241 = vld [vmem:[%s207 + $0x80] sm:%s200]
                %242 = vst [vmem:[%s208 + $0x40] sm:%s200] %v241
                %v243 = vld [vmem:[%s207 + $0x88] sm:%s200]
                %244 = vst [vmem:[%s208 + $0x44] sm:%s200] %v243
                %v245 = vld [vmem:[%s207 + $0x90] sm:%s200]
                %246 = vst [vmem:[%s208 + $0x48] sm:%s200] %v245
                %v247 = vld [vmem:[%s207 + $0x98] sm:%s200]
                %248 = vst [vmem:[%s208 + $0x4c] sm:%s200] %v247
                %v249 = vld [vmem:[%s207 + $0xa0] sm:%s200]
                %250 = vst [vmem:[%s208 + $0x50] sm:%s200] %v249
                %v251 = vld [vmem:[%s207 + $0xa8] sm:%s200]
                %252 = vst [vmem:[%s208 + $0x54] sm:%s200] %v251
                %v253 = vld [vmem:[%s207 + $0xb0] sm:%s200]
                %254 = vst [vmem:[%s208 + $0x58] sm:%s200] %v253
                %v255 = vld [vmem:[%s207 + $0xb8] sm:%s200]
                %256 = vst [vmem:[%s208 + $0x5c] sm:%s200] %v255
                %v257 = vld [vmem:[%s207 + $0xc0] sm:%s200]
                %258 = vst [vmem:[%s208 + $0x60] sm:%s200] %v257
                %v259 = vld [vmem:[%s207 + $0xc8] sm:%s200]
                %260 = vst [vmem:[%s208 + $0x64] sm:%s200] %v259
                %v261 = vld [vmem:[%s207 + $0xd0] sm:%s200]
                %262 = vst [vmem:[%s208 + $0x68] sm:%s200] %v261
                %v263 = vld [vmem:[%s207 + $0xd8] sm:%s200]
                %264 = vst [vmem:[%s208 + $0x6c] sm:%s200] %v263
                %v265 = vld [vmem:[%s207 + $0xe0] sm:%s200]
                %266 = vst [vmem:[%s208 + $0x70] sm:%s200] %v265
                %v267 = vld [vmem:[%s207 + $0xe8] sm:%s200]
                %268 = vst [vmem:[%s208 + $0x74] sm:%s200] %v267
                %v269 = vld [vmem:[%s207 + $0xf0] sm:%s200]
                %270 = vst [vmem:[%s208 + $0x78] sm:%s200] %v269
                %v271 = vld [vmem:[%s207 + $0xf8] sm:%s200]
                %272 = vst [vmem:[%s208 + $0x7c] sm:%s200] %v271
              $region45: #{_lambda_.25} parent=39 // loop_footer
                %s206 = sadd.s32 1, %s202
              $region46: #{_lambda_.25} parent=39 // loop_footer_branch
                %201 = sbr.rel target = $region42
              $region47: #{_lambda_.25} parent=39 // loop_exit
                _
            $region40: #{_lambda_.25} parent=31 // pred_fallthru
              _
          $region32: #{_lambda_.25} parent=27 // pred_fallthru
            _
          %357 = vnop
        $region28: #{_lambda_.25} parent=23 // pred_fallthru
          _
      $region24: #{_lambda_.25} parent=5 // pred_fallthru
        _
      %p358 = scmp.le.s32.totalorder 1, %s9
      %p359 = scmp.lt.s32.totalorder %s9, 3
      %p360 = pnand %p358, %p359
      %p361 = pneg %p360
      // Predicated region
      $region66: #{_lambda_.25} parent=5 // pred_check
        _
      $region67: #{_lambda_.25} parent=5 // pred_check_branch
        %363 = sbr.rel (%p360) target = $region69
      $region68: #{_lambda_.25} parent=5 // pred_region
        %s364 = ssub.s32 %s9, 1
        %s365 = sand.u32 %s71, 1
        %s366 = sand.u32 %s71, 1
        %s367 = smul.addr %s366, 128
        %s368 = scalar_lea.vmem [#allocation3], %s367
        // Predicated region
        $region70: #{_lambda_.25} parent=68 // pred_check
          %p369 = pneg %p84
        $region71: #{_lambda_.25} parent=68 // pred_check_branch
          %371 = sbr.rel (%p369) target = $region73
        $region72: #{_lambda_.25} parent=68 // pred_region
          _
        $region73: #{_lambda_.25} parent=68 // pred_fallthru
          _
        %s372 = smul.u32 2, %s19
        %s373 = smul.u32 2, %s21
        %p374 = scmp.lt.s32.totalorder %s372, 1
        %s375 = scalar_select %p374, %s372, 1
        %p376 = scmp.lt.s32.totalorder %s373, 1
        %s377 = scalar_select %p376, %s373, 1
        %s378 = smul.addr %s375, 2
        %s379 = sadd.s32 %s377, %s378
        %s380 = smul.addr %s379, 4
        %s381 = scalar_lea.vmem %s0, %s380
        %p382 = pneg %p56
        %p383 = pneg %p53
        %s384 = sand.u32 %s71, 1
        %s385 = sand.u32 %s71, 1
        %s386 = smul.addr %s385, 128
        %s387 = scalar_lea.vmem [#allocation3], %s386
        %p388 = pneg %p84
        %p389 = pneg %p81
        %s390 = smul.u32 2, %s19
        %p391 = scmp.lt.s32.totalorder %s390, 1
        %s392 = scalar_select %p391, %s390, 1
        %s393 = smul.addr %s392, 8
        %s394 = scalar_lea.vmem %s2, %s393
        %p395 = pneg %p110
        %p396 = pneg %p107
        %p397 = pneg %p138
        %p398 = pneg %p135
        %s399 = sand.u32 %s125, 1
        %s400 = sand.u32 %s125, 1
        %s401 = smul.addr %s400, 8
        %s402 = scalar_lea.vmem [#allocation4], %s401
        %s403 = smul.u32 2, %s19
        %s404 = smul.u32 2, %s21
        %p405 = scmp.lt.s32.totalorder %s403, 1
        %s406 = scalar_select %p405, %s403, 1
        %p407 = scmp.lt.s32.totalorder %s404, 1
        %s408 = scalar_select %p407, %s404, 1
        %s409 = smul.addr %s406, 2
        %s410 = sadd.s32 %s408, %s409
        %s411 = smul.addr %s410, 4
        %s412 = scalar_lea.vmem %s0, %s411
        %s413 = smul.u32 2, %s19
        %s414 = smul.u32 2, %s21
        %s415 = smul.u32 32, %s21
        %s416 = smul.u32 2, %s19
        %p417 = scmp.lt.s32.totalorder %s416, 1
        %s418 = scalar_select %p417, %s416, 1
        %s419 = smul.addr %s418, 8
        %s420 = scalar_lea.vmem %s2, %s419
        %s421 = smul.u32 2, %s19
        %s422 = smul.u32 2, %s19
        %p423 = scmp.eq.s32.totalorder %s21, 0
        // Predicated region
        $region74: #{_lambda_.25} parent=68 // pred_check
          %p424 = pneg %p423
        $region75: #{_lambda_.25} parent=68 // pred_check_branch
          %426 = sbr.rel (%p424) target = $region77
        $region76: #{_lambda_.25} parent=68 // pred_region
          %427 = vst [vmem:[#allocation2] sm:$0xff] 0.0
          %428 = vst [vmem:[#allocation2 + $0x8] sm:$0xff] 0.0
        $region77: #{_lambda_.25} parent=68 // pred_fallthru
          _
        %v429 = vld [vmem:[#allocation2] sm:$0xff]
        %v430 = vld [vmem:[#allocation2 + $0x8] sm:$0xff]
        %v431 = vld [vmem:[%s412] sm:$0xff]
        %v432 = vld [vmem:[%s412 + $0x8] sm:$0xff]
        %v433 = vld [vmem:[%s368] sm:$0xf]
        %v434 = vld [vmem:[%s368 + $0x4] sm:$0xf]
        %v435 = vld [vmem:[%s368 + $0x8] sm:$0xf]
        %v436 = vld [vmem:[%s368 + $0xc] sm:$0xf]
        %v437 = vld [vmem:[%s368 + $0x10] sm:$0xf]
        %v438 = vld [vmem:[%s368 + $0x14] sm:$0xf]
        %v439 = vld [vmem:[%s368 + $0x18] sm:$0xf]
        %v440 = vld [vmem:[%s368 + $0x1c] sm:$0xf]
        %v441 = vld [vmem:[%s368 + $0x20] sm:$0xf]
        %v442 = vld [vmem:[%s368 + $0x24] sm:$0xf]
        %v443 = vld [vmem:[%s368 + $0x28] sm:$0xf]
        %v444 = vld [vmem:[%s368 + $0x2c] sm:$0xf]
        %v445 = vld [vmem:[%s368 + $0x30] sm:$0xf]
        %v446 = vld [vmem:[%s368 + $0x34] sm:$0xf]
        %v447 = vld [vmem:[%s368 + $0x38] sm:$0xf]
        %v448 = vld [vmem:[%s368 + $0x3c] sm:$0xf]
        %v449 = vld [vmem:[%s368 + $0x40] sm:$0xf]
        %v450 = vld [vmem:[%s368 + $0x44] sm:$0xf]
        %v451 = vld [vmem:[%s368 + $0x48] sm:$0xf]
        %v452 = vld [vmem:[%s368 + $0x4c] sm:$0xf]
        %v453 = vld [vmem:[%s368 + $0x50] sm:$0xf]
        %v454 = vld [vmem:[%s368 + $0x54] sm:$0xf]
        %v455 = vld [vmem:[%s368 + $0x58] sm:$0xf]
        %v456 = vld [vmem:[%s368 + $0x5c] sm:$0xf]
        %v457 = vld [vmem:[%s368 + $0x60] sm:$0xf]
        %v458 = vld [vmem:[%s368 + $0x64] sm:$0xf]
        %v459 = vld [vmem:[%s368 + $0x68] sm:$0xf]
        %v460 = vld [vmem:[%s368 + $0x6c] sm:$0xf]
        %v461 = vld [vmem:[%s368 + $0x70] sm:$0xf]
        %v462 = vld [vmem:[%s368 + $0x74] sm:$0xf]
        %v463 = vld [vmem:[%s368 + $0x78] sm:$0xf]
        %v464 = vld [vmem:[%s368 + $0x7c] sm:$0xf]
        %v467 = vunpack.c.l.b16 %v431
        %v468 = vunpack.c.h.b16 %v431
        %v469 = vunpack.c.l.b16 %v432
        %v470 = vunpack.c.h.b16 %v432
        %v471 = vpack.c.b16 %v469, %v467
        %v472 = vpack.c.b16 %v470, %v468
        %v507 = vunpack.c.l.b16 %v433
        %v508 = vunpack.c.l.b16 %v434
        %v509 = vunpack.c.l.b16 %v435
        %v510 = vunpack.c.l.b16 %v436
        %v511 = vunpack.c.l.b16 %v437
        %v512 = vunpack.c.l.b16 %v438
        %v513 = vunpack.c.l.b16 %v439
        %v514 = vunpack.c.l.b16 %v440
        %v515 = vunpack.c.l.b16 %v441
        %v516 = vunpack.c.l.b16 %v442
        %v517 = vunpack.c.l.b16 %v443
        %v518 = vunpack.c.l.b16 %v444
        %v519 = vunpack.c.l.b16 %v445
        %v520 = vunpack.c.l.b16 %v446
        %v521 = vunpack.c.l.b16 %v447
        %v522 = vunpack.c.l.b16 %v448
        %v523 = vunpack.c.l.b16 %v449
        %v524 = vunpack.c.l.b16 %v450
        %v525 = vunpack.c.l.b16 %v451
        %v526 = vunpack.c.l.b16 %v452
        %v527 = vunpack.c.l.b16 %v453
        %v528 = vunpack.c.l.b16 %v454
        %v529 = vunpack.c.l.b16 %v455
        %v530 = vunpack.c.l.b16 %v456
        %v531 = vunpack.c.l.b16 %v457
        %v532 = vunpack.c.l.b16 %v458
        %v533 = vunpack.c.l.b16 %v459
        %v534 = vunpack.c.l.b16 %v460
        %v535 = vunpack.c.l.b16 %v461
        %v536 = vunpack.c.l.b16 %v462
        %v537 = vunpack.c.l.b16 %v463
        %v538 = vunpack.c.l.b16 %v464
        %v539 = vpack.c.b16 %v508, %v507
        %v540 = vpack.c.b16 %v510, %v509
        %v541 = vpack.c.b16 %v512, %v511
        %v542 = vpack.c.b16 %v514, %v513
        %v543 = vpack.c.b16 %v516, %v515
        %v544 = vpack.c.b16 %v518, %v517
        %v545 = vpack.c.b16 %v520, %v519
        %v546 = vpack.c.b16 %v522, %v521
        %v547 = vpack.c.b16 %v524, %v523
        %v548 = vpack.c.b16 %v526, %v525
        %v549 = vpack.c.b16 %v528, %v527
        %v550 = vpack.c.b16 %v530, %v529
        %v551 = vpack.c.b16 %v532, %v531
        %v552 = vpack.c.b16 %v534, %v533
        %v553 = vpack.c.b16 %v536, %v535
        %v554 = vpack.c.b16 %v538, %v537
        %571 = vmatpush.bf16.msra.mxu0 %v546
        %572 = vmatpush.bf16.msra.mxu0 %v545
        %573 = vmatpush.bf16.msra.mxu0 %v544
        %574 = vmatpush.bf16.msra.mxu0 %v543
        %575 = vmatpush.bf16.msra.mxu0 %v542
        %576 = vmatpush.bf16.msra.mxu0 %v541
        %577 = vmatpush.bf16.msra.mxu0 %v540
        %578 = vmatpush.bf16.msra.mxu0 %v539
        %579 = vmatmul.bf16.gmra.mxu0 %v471
        %v580 = vpop.f32.mrf.mxu0
        %v581 = vadd.f32 0.0, %v580
        %v582 = vpop.f32.mrf.mxu0
        %v583 = vadd.f32 0.0, %v582
        %584 = vdwg.mxu0
        %585 = vmatpush.bf16.msra.mxu0 %v554
        %586 = vmatpush.bf16.msra.mxu0 %v553
        %587 = vmatpush.bf16.msra.mxu0 %v552
        %588 = vmatpush.bf16.msra.mxu0 %v551
        %589 = vmatpush.bf16.msra.mxu0 %v550
        %590 = vmatpush.bf16.msra.mxu0 %v549
        %591 = vmatpush.bf16.msra.mxu0 %v548
        %592 = vmatpush.bf16.msra.mxu0 %v547
        %593 = vmatmul.bf16.gmra.mxu0 %v472
        %v594 = vpop.f32.mrf.mxu0
        %v595 = vadd.f32 %v581, %v594
        %v596 = vpop.f32.mrf.mxu0
        %v597 = vadd.f32 %v583, %v596
        %598 = vdwg.mxu0
        %v599 = vadd.f32 %v429, %v595
        %v600 = vadd.f32 %v430, %v597
        %601 = vst [vmem:[#allocation2] sm:$0xff] %v599
        %602 = vst [vmem:[#allocation2 + $0x8] sm:$0xff] %v600
        // Predicated region
        $region78: #{_lambda_.25} parent=68 // pred_check
          %p603 = pneg %p423
        $region79: #{_lambda_.25} parent=68 // pred_check_branch
          %605 = sbr.rel (%p603) target = $region81
        $region80: #{_lambda_.25} parent=68 // pred_region
          %v606 = vld [vmem:[#allocation2] sm:$0xff]
          %v607 = vld [vmem:[#allocation2 + $0x8] sm:$0xff]
          %v608 = vld [vmem:[%s420] sm:$0xff]
          %v609 = vld [vmem:[%s420 + $0x8] sm:$0xff]
          %611 = vset.pattern.permute.xlu0 0
          %612 = vperm.xlu0 %611, %v608
          %v613 = vpop.permute.xlu0 %612
          %616 = vset.pattern.permute.xlu0 0
          %617 = vperm.xlu0 %616, %v609
          %v618 = vpop.permute.xlu0 %617
          %v620 = vadd.f32 %v606, %v613
          %v621 = vadd.f32 %v607, %v618
          %v622 = vpack.c.bf16 %v620, %v620
          %v623 = vpack.c.bf16 %v621, %v621
          %624 = vst [vmem:[%s402] sm:$0xf] %v622
          %625 = vst [vmem:[%s402 + $0x4] sm:$0xf] %v623
        $region81: #{_lambda_.25} parent=68 // pred_fallthru
          _
        %s626 = sand.u32 %s125, 1
        %s627 = sand.u32 %s125, 1
        %s628 = smul.addr %s627, 8
        %s629 = scalar_lea.vmem [#allocation4], %s628
        // Predicated region
        $region82: #{_lambda_.25} parent=68 // pred_check
          %p630 = pneg %p135
        $region83: #{_lambda_.25} parent=68 // pred_check_branch
          %632 = sbr.rel (%p630) target = $region85
        $region84: #{_lambda_.25} parent=68 // pred_region
          %s633 = smul.u32 2, %s19
          %s634 = smul.addr %s633, 2
          %s635 = sadd.s32 %s20, %s634
          %s636 = smul.addr %s635, 4
          %s637 = scalar_lea.vmem %s3, %s636
          // Predicated region
          $region86: #{_lambda_.25} parent=84 // pred_check
            _
          $region87: #{_lambda_.25} parent=84 // pred_check_branch
            %639 = sbr.rel (0) target = $region89
          $region88: #{_lambda_.25} parent=84 // pred_region
            // Predicated region
            $region90: #{_lambda_.25} parent=88 // pred_check
              _
            $region91: #{_lambda_.25} parent=88 // pred_check_branch
              %641 = sbr.rel target = $region93
            $region92: #{_lambda_.25} parent=88 // pred_region
              // Predicated region
              $region105: #{_lambda_.25} parent=92 // pred_check
                _
              $region106: #{_lambda_.25} parent=92 // pred_check_branch
                %659 = sbr.rel (0) target = $region108
              $region107: #{_lambda_.25} parent=92 // pred_region
                loop: start=0, step=1, limit=1
                $region109: #{_lambda_.25} parent=107 // loop_pre_header
                  _
                $region110: #{_lambda_.25} parent=107 // loop_header
                  %s661 = sphi 0, %s665
                  %p662 = scmp.ge.s32.totalorder %s661, 1
                  %s666 = sphi %s629, %s629
                  %s667 = sphi %s637, %s637
                $region111: #{_lambda_.25} parent=107 // loop_header_branch
                  %664 = sbr.rel (%p662) target = $region115
                $region112: #{_lambda_.25} parent=107 // loop_body
                  _
                $region113: #{_lambda_.25} parent=107 // loop_footer
                  %s665 = sadd.s32 1, %s661
                $region114: #{_lambda_.25} parent=107 // loop_footer_branch
                  %660 = sbr.rel target = $region110
                $region115: #{_lambda_.25} parent=107 // loop_exit
                  _
                %s669 = ssub.s32 16, 1
                loop: start=0, step=1, limit=1
                $region116: #{_lambda_.25} parent=107 // loop_pre_header
                  _
                $region117: #{_lambda_.25} parent=107 // loop_header
                  %s671 = sphi 0, %s675
                  %p672 = scmp.ge.s32.totalorder %s671, 1
                  %s676 = sphi %s629, %s629
                  %s677 = sphi %s637, %s637
                $region118: #{_lambda_.25} parent=107 // loop_header_branch
                  %674 = sbr.rel (%p672) target = $region122
                $region119: #{_lambda_.25} parent=107 // loop_body
                  %v678 = vld [vmem:[%s676] sm:%s669]
                  %679 = vst [vmem:[%s677] sm:%s669] %v678
                  %v680 = vld [vmem:[%s676 + $0x4] sm:%s669]
                  %681 = vst [vmem:[%s677 + $0x8] sm:%s669] %v680
                $region120: #{_lambda_.25} parent=107 // loop_footer
                  %s675 = sadd.s32 1, %s671
                $region121: #{_lambda_.25} parent=107 // loop_footer_branch
                  %670 = sbr.rel target = $region117
                $region122: #{_lambda_.25} parent=107 // loop_exit
                  _
              $region108: #{_lambda_.25} parent=92 // pred_fallthru
                _
            $region93: #{_lambda_.25} parent=88 // pred_fallthru
              _
            // Predicated region
            $region94: #{_lambda_.25} parent=88 // pred_check
              _
            $region95: #{_lambda_.25} parent=88 // pred_check_branch
              %643 = sbr.rel (0) target = $region97
            $region96: #{_lambda_.25} parent=88 // pred_region
              %s645 = ssub.s32 16, 1
              loop: start=0, step=1, limit=1
              $region98: #{_lambda_.25} parent=96 // loop_pre_header
                _
              $region99: #{_lambda_.25} parent=96 // loop_header
                %s647 = sphi 0, %s651
                %p648 = scmp.ge.s32.totalorder %s647, 1
                %s652 = sphi %s629, %s629
                %s653 = sphi %s637, %s637
              $region100: #{_lambda_.25} parent=96 // loop_header_branch
                %650 = sbr.rel (%p648) target = $region104
              $region101: #{_lambda_.25} parent=96 // loop_body
                %v654 = vld [vmem:[%s652] sm:%s645]
                %655 = vst [vmem:[%s653] sm:%s645] %v654
                %v656 = vld [vmem:[%s652 + $0x4] sm:%s645]
                %657 = vst [vmem:[%s653 + $0x8] sm:%s645] %v656
              $region102: #{_lambda_.25} parent=96 // loop_footer
                %s651 = sadd.s32 1, %s647
              $region103: #{_lambda_.25} parent=96 // loop_footer_branch
                %646 = sbr.rel target = $region99
              $region104: #{_lambda_.25} parent=96 // loop_exit
                _
            $region97: #{_lambda_.25} parent=88 // pred_fallthru
              _
          $region89: #{_lambda_.25} parent=84 // pred_fallthru
            _
          %682 = vnop
        $region85: #{_lambda_.25} parent=68 // pred_fallthru
          _
      $region69: #{_lambda_.25} parent=5 // pred_fallthru
        _
      %p683 = scmp.le.s32.totalorder 2, %s9
      // Predicated region
      $region123: #{_lambda_.25} parent=5 // pred_check
        %p684 = pneg %p683
      $region124: #{_lambda_.25} parent=5 // pred_check_branch
        %686 = sbr.rel (%p684) target = $region126
      $region125: #{_lambda_.25} parent=5 // pred_region
        %s687 = ssub.s32 %s9, 2
        // Predicated region
        $region127: #{_lambda_.25} parent=125 // pred_check
          %p688 = pneg %p141
        $region128: #{_lambda_.25} parent=125 // pred_check_branch
          %690 = sbr.rel (%p688) target = $region130
        $region129: #{_lambda_.25} parent=125 // pred_region
          %s691 = sand.u32 %s126, 1
          %s692 = sand.u32 %s126, 1
          %s693 = smul.addr %s692, 8
          %s694 = scalar_lea.vmem [#allocation4], %s693
        $region130: #{_lambda_.25} parent=125 // pred_fallthru
          _
      $region126: #{_lambda_.25} parent=5 // pred_fallthru
        _
    $region6: #{_lambda_.25} parent=1 // loop_footer
      %s13 = sadd.s32 1, %s9
    $region7: #{_lambda_.25} parent=1 // loop_footer_branch
      %8 = sbr.rel target = $region3
    $region8: #{_lambda_.25} parent=1 // loop_exit
      _

// kernel: _lambda_.27
$region0: #{_lambda_.27}
  #allocation0 [shape = 'u32[]', space=smem, size = 0x4, offset = 0x4, fixed_abs, tag = 'smem constant byte address 0x4 - core index']
  #allocation1 [shape = 'u32[72,128]{1,0:T(1,128)}', space=vmem, size = 0x9000, scoped, tag = 'internal scratch']
  #allocation2 [shape = 'f32[16,512]{1,0:T(8,128)}', space=vmem, size = 0x8000, scoped, tag = 'scratch operand']
  %s0 = inlined_call_operand.vmem [shape: bf16[16,256], index: 0, kind: input, shape index: {}]
  %s1 = inlined_call_operand.vmem [shape: bf16[256,1024], index: 1, kind: input, shape index: {}]
  %s2 = inlined_call_operand.vmem [shape: f32[16,1], index: 2, kind: input, shape index: {}]
  %s3 = inlined_call_operand.vmem [shape: bf16[16,1024], index: 3, kind: output, shape index: {}]
  %s4 = sld [smem:[#allocation0]]
  $region95: #{_lambda_.27} parent=0
    _
  %s6 = ssub.s32 1, %s4
  %s7 = scalar_select 0, %s6, %s4
  $region1: #{_lambda_.27} parent=0
    #allocation3 [shape = 'u8[524288]{0}', space=vmem, size = 0x80000, scoped, tag = 'input window, operand 1']
    #allocation4 [shape = 'u8[32768]{0}', space=vmem, size = 0x8000, scoped, tag = 'output window, operand 0']
    loop: start=0, step=1, limit=4
    $region2: #{_lambda_.27} parent=1 // loop_pre_header
      _
    $region3: #{_lambda_.27} parent=1 // loop_header
      %s9 = sphi 0, %s13
      %p10 = scmp.ge.s32.totalorder %s9, 4
      %s16 = sphi 0, %s35
      %s17 = sphi 0, %s31
      %s18 = sphi 0, %s27
      %s19 = sphi 0, %s16
      %s20 = sphi 0, %s17
      %s21 = sphi 0, %s18
      %s22 = sphi 0, %s19
      %s23 = sphi 0, %s20
      %s24 = sphi 0, %s21
      %s40 = sphi 0, %s42
      %s43 = sphi 0, %s40
      %s44 = sphi 0, %s43
      %s60 = sphi 0, %s44
      %s68 = sphi 0, %s70
      %s71 = sphi 0, %s68
      %s72 = sphi 0, %s71
      %s88 = sphi 0, %s72
      %s94 = sphi 0, %s96
      %s97 = sphi 0, %s94
      %s98 = sphi 0, %s97
      %s114 = sphi 0, %s98
      %s122 = sphi 0, %s124
      %s125 = sphi 0, %s122
      %s126 = sphi 0, %s125
      %s142 = sphi 0, %s126
    $region4: #{_lambda_.27} parent=1 // loop_header_branch
      %12 = sbr.rel (%p10) target = $region8
    $region5: #{_lambda_.27} parent=1 // loop_body
      %s14 = ssub.s32 %s9, 1
      %s15 = ssub.s32 %s9, 2
      %s25 = sadd.s32 1, %s18
      %p26 = scmp.ge.s32.totalorder %s25, 1
      %s27 = scalar_select %p26, 0, %s25
      %s28 = sadd.s32 1, %s17
      %s29 = scalar_select %p26, %s28, %s17
      %p30 = scmp.ge.s32.totalorder %s29, 2
      %s31 = scalar_select %p30, 0, %s29
      %s32 = sadd.s32 1, %s16
      %s33 = scalar_select %p30, %s32, %s16
      %p34 = scmp.ge.s32.totalorder %s33, 1
      %s35 = scalar_select %p34, 0, %s33
      %s36 = ssub.s32 %s16, %s35
      %s37 = ssub.s32 %s18, %s27
      %s38 = sor.u32 %s36, %s37
      %p39 = scmp.eq.s32.totalorder %s38, 0
      %s41 = sadd.s32 %s40, 1
      %s42 = scalar_select %p39, %s40, %s41
      %p45 = pneg %p39
      %p46 = scmp.eq.s32.totalorder %s9, 1
      %p47 = por %p45, %p46
      %p48 = scmp.ne.s32.totalorder %s40, %s43
      %p49 = scmp.eq.s32.totalorder %s9, 0
      %p50 = por %p48, %p49
      %p51 = scmp.ne.s32.totalorder %s40, %s43
      %p52 = scmp.eq.s32.totalorder %s14, 1
      %p53 = por %p51, %p52
      %p54 = scmp.ne.s32.totalorder %s43, %s44
      %p55 = scmp.eq.s32.totalorder %s14, 0
      %p56 = por %p54, %p55
      %p57 = scmp.ne.s32.totalorder %s43, %s44
      %p58 = scmp.eq.s32.totalorder %s15, 1
      %p59 = por %p57, %p58
      %p61 = scmp.ne.s32.totalorder %s44, %s60
      %p62 = scmp.eq.s32.totalorder %s15, 0
      %p63 = por %p61, %p62
      %s64 = ssub.s32 %s18, %s27
      %s65 = ssub.s32 %s17, %s31
      %s66 = sor.u32 %s64, %s65
      %p67 = scmp.eq.s32.totalorder %s66, 0
      %s69 = sadd.s32 %s68, 1
      %s70 = scalar_select %p67, %s68, %s69
      %p73 = pneg %p67
      %p74 = scmp.eq.s32.totalorder %s9, 1
      %p75 = por %p73, %p74
      %p76 = scmp.ne.s32.totalorder %s68, %s71
      %p77 = scmp.eq.s32.totalorder %s9, 0
      %p78 = por %p76, %p77
      %p79 = scmp.ne.s32.totalorder %s68, %s71
      %p80 = scmp.eq.s32.totalorder %s14, 1
      %p81 = por %p79, %p80
      %p82 = scmp.ne.s32.totalorder %s71, %s72
      %p83 = scmp.eq.s32.totalorder %s14, 0
      %p84 = por %p82, %p83
      %p85 = scmp.ne.s32.totalorder %s71, %s72
      %p86 = scmp.eq.s32.totalorder %s15, 1
      %p87 = por %p85, %p86
      %p89 = scmp.ne.s32.totalorder %s72, %s88
      %p90 = scmp.eq.s32.totalorder %s15, 0
      %p91 = por %p89, %p90
      %s92 = ssub.s32 %s16, %s35
      %p93 = scmp.eq.s32.totalorder %s92, 0
      %s95 = sadd.s32 %s94, 1
      %s96 = scalar_select %p93, %s94, %s95
      %p99 = pneg %p93
      %p100 = scmp.eq.s32.totalorder %s9, 1
      %p101 = por %p99, %p100
      %p102 = scmp.ne.s32.totalorder %s94, %s97
      %p103 = scmp.eq.s32.totalorder %s9, 0
      %p104 = por %p102, %p103
      %p105 = scmp.ne.s32.totalorder %s94, %s97
      %p106 = scmp.eq.s32.totalorder %s14, 1
      %p107 = por %p105, %p106
      %p108 = scmp.ne.s32.totalorder %s97, %s98
      %p109 = scmp.eq.s32.totalorder %s14, 0
      %p110 = por %p108, %p109
      %p111 = scmp.ne.s32.totalorder %s97, %s98
      %p112 = scmp.eq.s32.totalorder %s15, 1
      %p113 = por %p111, %p112
      %p115 = scmp.ne.s32.totalorder %s98, %s114
      %p116 = scmp.eq.s32.totalorder %s15, 0
      %p117 = por %p115, %p116
      %s118 = ssub.s32 %s16, %s35
      %s119 = ssub.s32 %s17, %s31
      %s120 = sor.u32 %s118, %s119
      %p121 = scmp.eq.s32.totalorder %s120, 0
      %s123 = sadd.s32 %s122, 1
      %s124 = scalar_select %p121, %s122, %s123
      %p127 = pneg %p121
      %p128 = scmp.eq.s32.totalorder %s9, 1
      %p129 = por %p127, %p128
      %p130 = scmp.ne.s32.totalorder %s122, %s125
      %p131 = scmp.eq.s32.totalorder %s9, 0
      %p132 = por %p130, %p131
      %p133 = scmp.ne.s32.totalorder %s122, %s125
      %p134 = scmp.eq.s32.totalorder %s14, 1
      %p135 = por %p133, %p134
      %p136 = scmp.ne.s32.totalorder %s125, %s126
      %p137 = scmp.eq.s32.totalorder %s14, 0
      %p138 = por %p136, %p137
      %p139 = scmp.ne.s32.totalorder %s125, %s126
      %p140 = scmp.eq.s32.totalorder %s15, 1
      %p141 = por %p139, %p140
      %p143 = scmp.ne.s32.totalorder %s126, %s142
      %p144 = scmp.eq.s32.totalorder %s15, 0
      %p145 = por %p143, %p144
      %p146 = scmp.le.s32.totalorder 1, %s9
      %p147 = scmp.lt.s32.totalorder %s9, 3
      %p148 = pnand %p146, %p147
      %p149 = pneg %p148
      // Predicated region
      $region9: #{_lambda_.27} parent=5 // pred_check
        _
      $region10: #{_lambda_.27} parent=5 // pred_check_branch
        %151 = sbr.rel (%p148) target = $region12
      $region11: #{_lambda_.27} parent=5 // pred_region
        %s152 = ssub.s32 %s9, 1
        // Predicated region
        $region13: #{_lambda_.27} parent=11 // pred_check
          %p153 = pneg %p56
        $region14: #{_lambda_.27} parent=11 // pred_check_branch
          %155 = sbr.rel (%p153) target = $region16
        $region15: #{_lambda_.27} parent=11 // pred_region
          %s156 = smul.u32 2, %s19
          %s157 = smul.u32 2, %s21
          %p158 = scmp.lt.s32.totalorder %s156, 1
          %s159 = scalar_select %p158, %s156, 1
          %p160 = scmp.lt.s32.totalorder %s157, 1
          %s161 = scalar_select %p160, %s157, 1
          %s162 = smul.addr %s159, 2
          %s163 = sadd.s32 %s161, %s162
          %s164 = smul.addr %s163, 4
          %s165 = scalar_lea.vmem %s0, %s164
          %s166 = smul.u32 2, %s19
          %s167 = smul.u32 2, %s21
        $region16: #{_lambda_.27} parent=11 // pred_fallthru
          _
        // Predicated region
        $region17: #{_lambda_.27} parent=11 // pred_check
          %p168 = pneg %p110
        $region18: #{_lambda_.27} parent=11 // pred_check_branch
          %170 = sbr.rel (%p168) target = $region20
        $region19: #{_lambda_.27} parent=11 // pred_region
          %s171 = smul.u32 2, %s19
          %p172 = scmp.lt.s32.totalorder %s171, 1
          %s173 = scalar_select %p172, %s171, 1
          %s174 = smul.addr %s173, 8
          %s175 = scalar_lea.vmem %s2, %s174
          %s176 = smul.u32 2, %s19
        $region20: #{_lambda_.27} parent=11 // pred_fallthru
          _
      $region12: #{_lambda_.27} parent=5 // pred_fallthru
        _
      %p177 = scmp.lt.s32.totalorder %s9, 2
      // Predicated region
      $region21: #{_lambda_.27} parent=5 // pred_check
        %p178 = pneg %p177
      $region22: #{_lambda_.27} parent=5 // pred_check_branch
        %180 = sbr.rel (%p178) target = $region24
      $region23: #{_lambda_.27} parent=5 // pred_region
        // Predicated region
        $region25: #{_lambda_.27} parent=23 // pred_check
          %p181 = pneg %p78
        $region26: #{_lambda_.27} parent=23 // pred_check_branch
          %183 = sbr.rel (%p181) target = $region28
        $region27: #{_lambda_.27} parent=23 // pred_region
          %s184 = sand.u32 %s68, 1
          %s185 = sand.u32 %s68, 1
          %s186 = smul.addr %s185, 512
          %s187 = scalar_lea.vmem [#allocation3], %s186
          %s188 = smul.u32 32, %s18
          %s189 = smul.u32 4, %s17
          %s190 = smul.addr %s188, 8
          %s191 = sadd.s32 %s189, %s190
          %s192 = smul.addr %s191, 4
          %s193 = scalar_lea.vmem %s1, %s192
          // Predicated region
          $region29: #{_lambda_.27} parent=27 // pred_check
            _
          $region30: #{_lambda_.27} parent=27 // pred_check_branch
            %195 = sbr.rel (0) target = $region32
          $region31: #{_lambda_.27} parent=27 // pred_region
            // Predicated region
            $region33: #{_lambda_.27} parent=31 // pred_check
              _
            $region34: #{_lambda_.27} parent=31 // pred_check_branch
              %197 = sbr.rel (0) target = $region36
            $region35: #{_lambda_.27} parent=31 // pred_region
              loop: start=0, step=1, limit=1
              $region37: #{_lambda_.27} parent=35 // loop_pre_header
                _
              $region38: #{_lambda_.27} parent=35 // loop_header
                %s199 = sphi 0, %s203
                %p200 = scmp.ge.s32.totalorder %s199, 1
                %s204 = sphi %s193, %s193
                %s205 = sphi %s187, %s187
              $region39: #{_lambda_.27} parent=35 // loop_header_branch
                %202 = sbr.rel (%p200) target = $region43
              $region40: #{_lambda_.27} parent=35 // loop_body
                %v206 = vld [vmem:[%s204] sm:$0xff]
                %207 = vst [vmem:[%s205] sm:$0xff] %v206
                %v208 = vld [vmem:[%s204 + $0x8] sm:$0xff]
                %209 = vst [vmem:[%s205 + $0x8] sm:$0xff] %v208
                %v210 = vld [vmem:[%s204 + $0x20] sm:$0xff]
                %211 = vst [vmem:[%s205 + $0x10] sm:$0xff] %v210
                %v212 = vld [vmem:[%s204 + $0x28] sm:$0xff]
                %213 = vst [vmem:[%s205 + $0x18] sm:$0xff] %v212
                %v214 = vld [vmem:[%s204 + $0x40] sm:$0xff]
                %215 = vst [vmem:[%s205 + $0x20] sm:$0xff] %v214
                %v216 = vld [vmem:[%s204 + $0x48] sm:$0xff]
                %217 = vst [vmem:[%s205 + $0x28] sm:$0xff] %v216
                %v218 = vld [vmem:[%s204 + $0x60] sm:$0xff]
                %219 = vst [vmem:[%s205 + $0x30] sm:$0xff] %v218
                %v220 = vld [vmem:[%s204 + $0x68] sm:$0xff]
                %221 = vst [vmem:[%s205 + $0x38] sm:$0xff] %v220
                %v222 = vld [vmem:[%s204 + $0x80] sm:$0xff]
                %223 = vst [vmem:[%s205 + $0x40] sm:$0xff] %v222
                %v224 = vld [vmem:[%s204 + $0x88] sm:$0xff]
                %225 = vst [vmem:[%s205 + $0x48] sm:$0xff] %v224
                %v226 = vld [vmem:[%s204 + $0xa0] sm:$0xff]
                %227 = vst [vmem:[%s205 + $0x50] sm:$0xff] %v226
                %v228 = vld [vmem:[%s204 + $0xa8] sm:$0xff]
                %229 = vst [vmem:[%s205 + $0x58] sm:$0xff] %v228
                %v230 = vld [vmem:[%s204 + $0xc0] sm:$0xff]
                %231 = vst [vmem:[%s205 + $0x60] sm:$0xff] %v230
                %v232 = vld [vmem:[%s204 + $0xc8] sm:$0xff]
                %233 = vst [vmem:[%s205 + $0x68] sm:$0xff] %v232
                %v234 = vld [vmem:[%s204 + $0xe0] sm:$0xff]
                %235 = vst [vmem:[%s205 + $0x70] sm:$0xff] %v234
                %v236 = vld [vmem:[%s204 + $0xe8] sm:$0xff]
                %237 = vst [vmem:[%s205 + $0x78] sm:$0xff] %v236
                %v238 = vld [vmem:[%s204 + $0x100] sm:$0xff]
                %239 = vst [vmem:[%s205 + $0x80] sm:$0xff] %v238
                %v240 = vld [vmem:[%s204 + $0x108] sm:$0xff]
                %241 = vst [vmem:[%s205 + $0x88] sm:$0xff] %v240
                %v242 = vld [vmem:[%s204 + $0x120] sm:$0xff]
                %243 = vst [vmem:[%s205 + $0x90] sm:$0xff] %v242
                %v244 = vld [vmem:[%s204 + $0x128] sm:$0xff]
                %245 = vst [vmem:[%s205 + $0x98] sm:$0xff] %v244
                %v246 = vld [vmem:[%s204 + $0x140] sm:$0xff]
                %247 = vst [vmem:[%s205 + $0xa0] sm:$0xff] %v246
                %v248 = vld [vmem:[%s204 + $0x148] sm:$0xff]
                %249 = vst [vmem:[%s205 + $0xa8] sm:$0xff] %v248
                %v250 = vld [vmem:[%s204 + $0x160] sm:$0xff]
                %251 = vst [vmem:[%s205 + $0xb0] sm:$0xff] %v250
                %v252 = vld [vmem:[%s204 + $0x168] sm:$0xff]
                %253 = vst [vmem:[%s205 + $0xb8] sm:$0xff] %v252
                %v254 = vld [vmem:[%s204 + $0x180] sm:$0xff]
                %255 = vst [vmem:[%s205 + $0xc0] sm:$0xff] %v254
                %v256 = vld [vmem:[%s204 + $0x188] sm:$0xff]
                %257 = vst [vmem:[%s205 + $0xc8] sm:$0xff] %v256
                %v258 = vld [vmem:[%s204 + $0x1a0] sm:$0xff]
                %259 = vst [vmem:[%s205 + $0xd0] sm:$0xff] %v258
                %v260 = vld [vmem:[%s204 + $0x1a8] sm:$0xff]
                %261 = vst [vmem:[%s205 + $0xd8] sm:$0xff] %v260
                %v262 = vld [vmem:[%s204 + $0x1c0] sm:$0xff]
                %263 = vst [vmem:[%s205 + $0xe0] sm:$0xff] %v262
                %v264 = vld [vmem:[%s204 + $0x1c8] sm:$0xff]
                %265 = vst [vmem:[%s205 + $0xe8] sm:$0xff] %v264
                %v266 = vld [vmem:[%s204 + $0x1e0] sm:$0xff]
                %267 = vst [vmem:[%s205 + $0xf0] sm:$0xff] %v266
                %v268 = vld [vmem:[%s204 + $0x1e8] sm:$0xff]
                %269 = vst [vmem:[%s205 + $0xf8] sm:$0xff] %v268
                %v270 = vld [vmem:[%s204 + $0x200] sm:$0xff]
                %271 = vst [vmem:[%s205 + $0x100] sm:$0xff] %v270
                %v272 = vld [vmem:[%s204 + $0x208] sm:$0xff]
                %273 = vst [vmem:[%s205 + $0x108] sm:$0xff] %v272
                %v274 = vld [vmem:[%s204 + $0x220] sm:$0xff]
                %275 = vst [vmem:[%s205 + $0x110] sm:$0xff] %v274
                %v276 = vld [vmem:[%s204 + $0x228] sm:$0xff]
                %277 = vst [vmem:[%s205 + $0x118] sm:$0xff] %v276
                %v278 = vld [vmem:[%s204 + $0x240] sm:$0xff]
                %279 = vst [vmem:[%s205 + $0x120] sm:$0xff] %v278
                %v280 = vld [vmem:[%s204 + $0x248] sm:$0xff]
                %281 = vst [vmem:[%s205 + $0x128] sm:$0xff] %v280
                %v282 = vld [vmem:[%s204 + $0x260] sm:$0xff]
                %283 = vst [vmem:[%s205 + $0x130] sm:$0xff] %v282
                %v284 = vld [vmem:[%s204 + $0x268] sm:$0xff]
                %285 = vst [vmem:[%s205 + $0x138] sm:$0xff] %v284
                %v286 = vld [vmem:[%s204 + $0x280] sm:$0xff]
                %287 = vst [vmem:[%s205 + $0x140] sm:$0xff] %v286
                %v288 = vld [vmem:[%s204 + $0x288] sm:$0xff]
                %289 = vst [vmem:[%s205 + $0x148] sm:$0xff] %v288
                %v290 = vld [vmem:[%s204 + $0x2a0] sm:$0xff]
                %291 = vst [vmem:[%s205 + $0x150] sm:$0xff] %v290
                %v292 = vld [vmem:[%s204 + $0x2a8] sm:$0xff]
                %293 = vst [vmem:[%s205 + $0x158] sm:$0xff] %v292
                %v294 = vld [vmem:[%s204 + $0x2c0] sm:$0xff]
                %295 = vst [vmem:[%s205 + $0x160] sm:$0xff] %v294
                %v296 = vld [vmem:[%s204 + $0x2c8] sm:$0xff]
                %297 = vst [vmem:[%s205 + $0x168] sm:$0xff] %v296
                %v298 = vld [vmem:[%s204 + $0x2e0] sm:$0xff]
                %299 = vst [vmem:[%s205 + $0x170] sm:$0xff] %v298
                %v300 = vld [vmem:[%s204 + $0x2e8] sm:$0xff]
                %301 = vst [vmem:[%s205 + $0x178] sm:$0xff] %v300
                %v302 = vld [vmem:[%s204 + $0x300] sm:$0xff]
                %303 = vst [vmem:[%s205 + $0x180] sm:$0xff] %v302
                %v304 = vld [vmem:[%s204 + $0x308] sm:$0xff]
                %305 = vst [vmem:[%s205 + $0x188] sm:$0xff] %v304
                %v306 = vld [vmem:[%s204 + $0x320] sm:$0xff]
                %307 = vst [vmem:[%s205 + $0x190] sm:$0xff] %v306
                %v308 = vld [vmem:[%s204 + $0x328] sm:$0xff]
                %309 = vst [vmem:[%s205 + $0x198] sm:$0xff] %v308
                %v310 = vld [vmem:[%s204 + $0x340] sm:$0xff]
                %311 = vst [vmem:[%s205 + $0x1a0] sm:$0xff] %v310
                %v312 = vld [vmem:[%s204 + $0x348] sm:$0xff]
                %313 = vst [vmem:[%s205 + $0x1a8] sm:$0xff] %v312
                %v314 = vld [vmem:[%s204 + $0x360] sm:$0xff]
                %315 = vst [vmem:[%s205 + $0x1b0] sm:$0xff] %v314
                %v316 = vld [vmem:[%s204 + $0x368] sm:$0xff]
                %317 = vst [vmem:[%s205 + $0x1b8] sm:$0xff] %v316
                %v318 = vld [vmem:[%s204 + $0x380] sm:$0xff]
                %319 = vst [vmem:[%s205 + $0x1c0] sm:$0xff] %v318
                %v320 = vld [vmem:[%s204 + $0x388] sm:$0xff]
                %321 = vst [vmem:[%s205 + $0x1c8] sm:$0xff] %v320
                %v322 = vld [vmem:[%s204 + $0x3a0] sm:$0xff]
                %323 = vst [vmem:[%s205 + $0x1d0] sm:$0xff] %v322
                %v324 = vld [vmem:[%s204 + $0x3a8] sm:$0xff]
                %325 = vst [vmem:[%s205 + $0x1d8] sm:$0xff] %v324
                %v326 = vld [vmem:[%s204 + $0x3c0] sm:$0xff]
                %327 = vst [vmem:[%s205 + $0x1e0] sm:$0xff] %v326
                %v328 = vld [vmem:[%s204 + $0x3c8] sm:$0xff]
                %329 = vst [vmem:[%s205 + $0x1e8] sm:$0xff] %v328
                %v330 = vld [vmem:[%s204 + $0x3e0] sm:$0xff]
                %331 = vst [vmem:[%s205 + $0x1f0] sm:$0xff] %v330
                %v332 = vld [vmem:[%s204 + $0x3e8] sm:$0xff]
                %333 = vst [vmem:[%s205 + $0x1f8] sm:$0xff] %v332
              $region41: #{_lambda_.27} parent=35 // loop_footer
                %s203 = sadd.s32 1, %s199
              $region42: #{_lambda_.27} parent=35 // loop_footer_branch
                %198 = sbr.rel target = $region38
              $region43: #{_lambda_.27} parent=35 // loop_exit
                _
            $region36: #{_lambda_.27} parent=31 // pred_fallthru
              _
            // Predicated region
            $region44: #{_lambda_.27} parent=31 // pred_check
              _
            $region45: #{_lambda_.27} parent=31 // pred_check_branch
              %335 = sbr.rel target = $region47
            $region46: #{_lambda_.27} parent=31 // pred_region
              _
            $region47: #{_lambda_.27} parent=31 // pred_fallthru
              _
          $region32: #{_lambda_.27} parent=27 // pred_fallthru
            _
          %336 = vnop
        $region28: #{_lambda_.27} parent=23 // pred_fallthru
          _
      $region24: #{_lambda_.27} parent=5 // pred_fallthru
        _
      %p337 = scmp.le.s32.totalorder 1, %s9
      %p338 = scmp.lt.s32.totalorder %s9, 3
      %p339 = pnand %p337, %p338
      %p340 = pneg %p339
      // Predicated region
      $region48: #{_lambda_.27} parent=5 // pred_check
        _
      $region49: #{_lambda_.27} parent=5 // pred_check_branch
        %342 = sbr.rel (%p339) target = $region51
      $region50: #{_lambda_.27} parent=5 // pred_region
        %s343 = ssub.s32 %s9, 1
        %s344 = sand.u32 %s71, 1
        %s345 = sand.u32 %s71, 1
        %s346 = smul.addr %s345, 512
        %s347 = scalar_lea.vmem [#allocation3], %s346
        // Predicated region
        $region52: #{_lambda_.27} parent=50 // pred_check
          %p348 = pneg %p84
        $region53: #{_lambda_.27} parent=50 // pred_check_branch
          %350 = sbr.rel (%p348) target = $region55
        $region54: #{_lambda_.27} parent=50 // pred_region
          _
        $region55: #{_lambda_.27} parent=50 // pred_fallthru
          _
        %s351 = smul.u32 2, %s19
        %s352 = smul.u32 2, %s21
        %p353 = scmp.lt.s32.totalorder %s351, 1
        %s354 = scalar_select %p353, %s351, 1
        %p355 = scmp.lt.s32.totalorder %s352, 1
        %s356 = scalar_select %p355, %s352, 1
        %s357 = smul.addr %s354, 2
        %s358 = sadd.s32 %s356, %s357
        %s359 = smul.addr %s358, 4
        %s360 = scalar_lea.vmem %s0, %s359
        %p361 = pneg %p56
        %p362 = pneg %p53
        %s363 = sand.u32 %s71, 1
        %s364 = sand.u32 %s71, 1
        %s365 = smul.addr %s364, 512
        %s366 = scalar_lea.vmem [#allocation3], %s365
        %p367 = pneg %p84
        %p368 = pneg %p81
        %s369 = smul.u32 2, %s19
        %p370 = scmp.lt.s32.totalorder %s369, 1
        %s371 = scalar_select %p370, %s369, 1
        %s372 = smul.addr %s371, 8
        %s373 = scalar_lea.vmem %s2, %s372
        %p374 = pneg %p110
        %p375 = pneg %p107
        %p376 = pneg %p138
        %p377 = pneg %p135
        %s378 = sand.u32 %s125, 1
        %s379 = sand.u32 %s125, 1
        %s380 = smul.addr %s379, 32
        %s381 = scalar_lea.vmem [#allocation4], %s380
        %s382 = smul.u32 2, %s19
        %s383 = smul.u32 2, %s21
        %p384 = scmp.lt.s32.totalorder %s382, 1
        %s385 = scalar_select %p384, %s382, 1
        %p386 = scmp.lt.s32.totalorder %s383, 1
        %s387 = scalar_select %p386, %s383, 1
        %s388 = smul.addr %s385, 2
        %s389 = sadd.s32 %s387, %s388
        %s390 = smul.addr %s389, 4
        %s391 = scalar_lea.vmem %s0, %s390
        %s392 = smul.u32 2, %s19
        %s393 = smul.u32 2, %s21
        %s394 = smul.u32 32, %s21
        %s395 = smul.u32 4, %s20
        %s396 = smul.u32 2, %s19
        %p397 = scmp.lt.s32.totalorder %s396, 1
        %s398 = scalar_select %p397, %s396, 1
        %s399 = smul.addr %s398, 8
        %s400 = scalar_lea.vmem %s2, %s399
        %s401 = smul.u32 2, %s19
        %s402 = smul.u32 2, %s19
        %s403 = smul.u32 4, %s20
        %p404 = scmp.eq.s32.totalorder %s21, 0
        // Predicated region
        $region56: #{_lambda_.27} parent=50 // pred_check
          %p405 = pneg %p404
        $region57: #{_lambda_.27} parent=50 // pred_check_branch
          %407 = sbr.rel (%p405) target = $region59
        $region58: #{_lambda_.27} parent=50 // pred_region
          %408 = vst [vmem:[#allocation2] sm:$0xff] 0.0
          %409 = vst [vmem:[#allocation2 + $0x8] sm:$0xff] 0.0
          %410 = vst [vmem:[#allocation2 + $0x10] sm:$0xff] 0.0
          %411 = vst [vmem:[#allocation2 + $0x18] sm:$0xff] 0.0
          %412 = vst [vmem:[#allocation2 + $0x20] sm:$0xff] 0.0
          %413 = vst [vmem:[#allocation2 + $0x28] sm:$0xff] 0.0
          %414 = vst [vmem:[#allocation2 + $0x30] sm:$0xff] 0.0
          %415 = vst [vmem:[#allocation2 + $0x38] sm:$0xff] 0.0
        $region59: #{_lambda_.27} parent=50 // pred_fallthru
          _
        %v416 = vld [vmem:[#allocation2] sm:$0xff]
        %v417 = vld [vmem:[#allocation2 + $0x8] sm:$0xff]
        %v418 = vld [vmem:[#allocation2 + $0x10] sm:$0xff]
        %v419 = vld [vmem:[#allocation2 + $0x18] sm:$0xff]
        %v420 = vld [vmem:[#allocation2 + $0x20] sm:$0xff]
        %v421 = vld [vmem:[#allocation2 + $0x28] sm:$0xff]
        %v422 = vld [vmem:[#allocation2 + $0x30] sm:$0xff]
        %v423 = vld [vmem:[#allocation2 + $0x38] sm:$0xff]
        %v424 = vld [vmem:[%s391] sm:$0xff]
        %v425 = vld [vmem:[%s391 + $0x8] sm:$0xff]
        %v426 = vld [vmem:[%s347] sm:$0xff]
        %v427 = vld [vmem:[%s347 + $0x8] sm:$0xff]
        %v428 = vld [vmem:[%s347 + $0x10] sm:$0xff]
        %v429 = vld [vmem:[%s347 + $0x18] sm:$0xff]
        %v430 = vld [vmem:[%s347 + $0x20] sm:$0xff]
        %v431 = vld [vmem:[%s347 + $0x28] sm:$0xff]
        %v432 = vld [vmem:[%s347 + $0x30] sm:$0xff]
        %v433 = vld [vmem:[%s347 + $0x38] sm:$0xff]
        %v434 = vld [vmem:[%s347 + $0x40] sm:$0xff]
        %v435 = vld [vmem:[%s347 + $0x48] sm:$0xff]
        %v436 = vld [vmem:[%s347 + $0x50] sm:$0xff]
        %v437 = vld [vmem:[%s347 + $0x58] sm:$0xff]
        %v438 = vld [vmem:[%s347 + $0x60] sm:$0xff]
        %v439 = vld [vmem:[%s347 + $0x68] sm:$0xff]
        %v440 = vld [vmem:[%s347 + $0x70] sm:$0xff]
        %v441 = vld [vmem:[%s347 + $0x78] sm:$0xff]
        %v442 = vld [vmem:[%s347 + $0x80] sm:$0xff]
        %v443 = vld [vmem:[%s347 + $0x88] sm:$0xff]
        %v444 = vld [vmem:[%s347 + $0x90] sm:$0xff]
        %v445 = vld [vmem:[%s347 + $0x98] sm:$0xff]
        %v446 = vld [vmem:[%s347 + $0xa0] sm:$0xff]
        %v447 = vld [vmem:[%s347 + $0xa8] sm:$0xff]
        %v448 = vld [vmem:[%s347 + $0xb0] sm:$0xff]
        %v449 = vld [vmem:[%s347 + $0xb8] sm:$0xff]
        %v450 = vld [vmem:[%s347 + $0xc0] sm:$0xff]
        %v451 = vld [vmem:[%s347 + $0xc8] sm:$0xff]
        %v452 = vld [vmem:[%s347 + $0xd0] sm:$0xff]
        %v453 = vld [vmem:[%s347 + $0xd8] sm:$0xff]
        %v454 = vld [vmem:[%s347 + $0xe0] sm:$0xff]
        %v455 = vld [vmem:[%s347 + $0xe8] sm:$0xff]
        %v456 = vld [vmem:[%s347 + $0xf0] sm:$0xff]
        %v457 = vld [vmem:[%s347 + $0xf8] sm:$0xff]
        %v458 = vld [vmem:[%s347 + $0x100] sm:$0xff]
        %v459 = vld [vmem:[%s347 + $0x108] sm:$0xff]
        %v460 = vld [vmem:[%s347 + $0x110] sm:$0xff]
        %v461 = vld [vmem:[%s347 + $0x118] sm:$0xff]
        %v462 = vld [vmem:[%s347 + $0x120] sm:$0xff]
        %v463 = vld [vmem:[%s347 + $0x128] sm:$0xff]
        %v464 = vld [vmem:[%s347 + $0x130] sm:$0xff]
        %v465 = vld [vmem:[%s347 + $0x138] sm:$0xff]
        %v466 = vld [vmem:[%s347 + $0x140] sm:$0xff]
        %v467 = vld [vmem:[%s347 + $0x148] sm:$0xff]
        %v468 = vld [vmem:[%s347 + $0x150] sm:$0xff]
        %v469 = vld [vmem:[%s347 + $0x158] sm:$0xff]
        %v470 = vld [vmem:[%s347 + $0x160] sm:$0xff]
        %v471 = vld [vmem:[%s347 + $0x168] sm:$0xff]
        %v472 = vld [vmem:[%s347 + $0x170] sm:$0xff]
        %v473 = vld [vmem:[%s347 + $0x178] sm:$0xff]
        %v474 = vld [vmem:[%s347 + $0x180] sm:$0xff]
        %v475 = vld [vmem:[%s347 + $0x188] sm:$0xff]
        %v476 = vld [vmem:[%s347 + $0x190] sm:$0xff]
        %v477 = vld [vmem:[%s347 + $0x198] sm:$0xff]
        %v478 = vld [vmem:[%s347 + $0x1a0] sm:$0xff]
        %v479 = vld [vmem:[%s347 + $0x1a8] sm:$0xff]
        %v480 = vld [vmem:[%s347 + $0x1b0] sm:$0xff]
        %v481 = vld [vmem:[%s347 + $0x1b8] sm:$0xff]
        %v482 = vld [vmem:[%s347 + $0x1c0] sm:$0xff]
        %v483 = vld [vmem:[%s347 + $0x1c8] sm:$0xff]
        %v484 = vld [vmem:[%s347 + $0x1d0] sm:$0xff]
        %v485 = vld [vmem:[%s347 + $0x1d8] sm:$0xff]
        %v486 = vld [vmem:[%s347 + $0x1e0] sm:$0xff]
        %v487 = vld [vmem:[%s347 + $0x1e8] sm:$0xff]
        %v488 = vld [vmem:[%s347 + $0x1f0] sm:$0xff]
        %v489 = vld [vmem:[%s347 + $0x1f8] sm:$0xff]
        %v492 = vunpack.c.l.b16 %v424
        %v493 = vunpack.c.h.b16 %v424
        %v494 = vunpack.c.l.b16 %v425
        %v495 = vunpack.c.h.b16 %v425
        %v496 = vpack.c.b16 %v494, %v492
        %v497 = vpack.c.b16 %v495, %v493
        %v564 = vunpack.c.l.b16 %v426
        %v565 = vunpack.c.h.b16 %v426
        %v566 = vunpack.c.l.b16 %v427
        %v567 = vunpack.c.h.b16 %v427
        %v568 = vunpack.c.l.b16 %v428
        %v569 = vunpack.c.h.b16 %v428
        %v570 = vunpack.c.l.b16 %v429
        %v571 = vunpack.c.h.b16 %v429
        %v572 = vunpack.c.l.b16 %v430
        %v573 = vunpack.c.h.b16 %v430
        %v574 = vunpack.c.l.b16 %v431
        %v575 = vunpack.c.h.b16 %v431
        %v576 = vunpack.c.l.b16 %v432
        %v577 = vunpack.c.h.b16 %v432
        %v578 = vunpack.c.l.b16 %v433
        %v579 = vunpack.c.h.b16 %v433
        %v580 = vunpack.c.l.b16 %v434
        %v581 = vunpack.c.h.b16 %v434
        %v582 = vunpack.c.l.b16 %v435
        %v583 = vunpack.c.h.b16 %v435
        %v584 = vunpack.c.l.b16 %v436
        %v585 = vunpack.c.h.b16 %v436
        %v586 = vunpack.c.l.b16 %v437
        %v587 = vunpack.c.h.b16 %v437
        %v588 = vunpack.c.l.b16 %v438
        %v589 = vunpack.c.h.b16 %v438
        %v590 = vunpack.c.l.b16 %v439
        %v591 = vunpack.c.h.b16 %v439
        %v592 = vunpack.c.l.b16 %v440
        %v593 = vunpack.c.h.b16 %v440
        %v594 = vunpack.c.l.b16 %v441
        %v595 = vunpack.c.h.b16 %v441
        %v596 = vunpack.c.l.b16 %v442
        %v597 = vunpack.c.h.b16 %v442
        %v598 = vunpack.c.l.b16 %v443
        %v599 = vunpack.c.h.b16 %v443
        %v600 = vunpack.c.l.b16 %v444
        %v601 = vunpack.c.h.b16 %v444
        %v602 = vunpack.c.l.b16 %v445
        %v603 = vunpack.c.h.b16 %v445
        %v604 = vunpack.c.l.b16 %v446
        %v605 = vunpack.c.h.b16 %v446
        %v606 = vunpack.c.l.b16 %v447
        %v607 = vunpack.c.h.b16 %v447
        %v608 = vunpack.c.l.b16 %v448
        %v609 = vunpack.c.h.b16 %v448
        %v610 = vunpack.c.l.b16 %v449
        %v611 = vunpack.c.h.b16 %v449
        %v612 = vunpack.c.l.b16 %v450
        %v613 = vunpack.c.h.b16 %v450
        %v614 = vunpack.c.l.b16 %v451
        %v615 = vunpack.c.h.b16 %v451
        %v616 = vunpack.c.l.b16 %v452
        %v617 = vunpack.c.h.b16 %v452
        %v618 = vunpack.c.l.b16 %v453
        %v619 = vunpack.c.h.b16 %v453
        %v620 = vunpack.c.l.b16 %v454
        %v621 = vunpack.c.h.b16 %v454
        %v622 = vunpack.c.l.b16 %v455
        %v623 = vunpack.c.h.b16 %v455
        %v624 = vunpack.c.l.b16 %v456
        %v625 = vunpack.c.h.b16 %v456
        %v626 = vunpack.c.l.b16 %v457
        %v627 = vunpack.c.h.b16 %v457
        %v628 = vunpack.c.l.b16 %v458
        %v629 = vunpack.c.h.b16 %v458
        %v630 = vunpack.c.l.b16 %v459
        %v631 = vunpack.c.h.b16 %v459
        %v632 = vunpack.c.l.b16 %v460
        %v633 = vunpack.c.h.b16 %v460
        %v634 = vunpack.c.l.b16 %v461
        %v635 = vunpack.c.h.b16 %v461
        %v636 = vunpack.c.l.b16 %v462
        %v637 = vunpack.c.h.b16 %v462
        %v638 = vunpack.c.l.b16 %v463
        %v639 = vunpack.c.h.b16 %v463
        %v640 = vunpack.c.l.b16 %v464
        %v641 = vunpack.c.h.b16 %v464
        %v642 = vunpack.c.l.b16 %v465
        %v643 = vunpack.c.h.b16 %v465
        %v644 = vunpack.c.l.b16 %v466
        %v645 = vunpack.c.h.b16 %v466
        %v646 = vunpack.c.l.b16 %v467
        %v647 = vunpack.c.h.b16 %v467
        %v648 = vunpack.c.l.b16 %v468
        %v649 = vunpack.c.h.b16 %v468
        %v650 = vunpack.c.l.b16 %v469
        %v651 = vunpack.c.h.b16 %v469
        %v652 = vunpack.c.l.b16 %v470
        %v653 = vunpack.c.h.b16 %v470
        %v654 = vunpack.c.l.b16 %v471
        %v655 = vunpack.c.h.b16 %v471
        %v656 = vunpack.c.l.b16 %v472
        %v657 = vunpack.c.h.b16 %v472
        %v658 = vunpack.c.l.b16 %v473
        %v659 = vunpack.c.h.b16 %v473
        %v660 = vunpack.c.l.b16 %v474
        %v661 = vunpack.c.h.b16 %v474
        %v662 = vunpack.c.l.b16 %v475
        %v663 = vunpack.c.h.b16 %v475
        %v664 = vunpack.c.l.b16 %v476
        %v665 = vunpack.c.h.b16 %v476
        %v666 = vunpack.c.l.b16 %v477
        %v667 = vunpack.c.h.b16 %v477
        %v668 = vunpack.c.l.b16 %v478
        %v669 = vunpack.c.h.b16 %v478
        %v670 = vunpack.c.l.b16 %v479
        %v671 = vunpack.c.h.b16 %v479
        %v672 = vunpack.c.l.b16 %v480
        %v673 = vunpack.c.h.b16 %v480
        %v674 = vunpack.c.l.b16 %v481
        %v675 = vunpack.c.h.b16 %v481
        %v676 = vunpack.c.l.b16 %v482
        %v677 = vunpack.c.h.b16 %v482
        %v678 = vunpack.c.l.b16 %v483
        %v679 = vunpack.c.h.b16 %v483
        %v680 = vunpack.c.l.b16 %v484
        %v681 = vunpack.c.h.b16 %v484
        %v682 = vunpack.c.l.b16 %v485
        %v683 = vunpack.c.h.b16 %v485
        %v684 = vunpack.c.l.b16 %v486
        %v685 = vunpack.c.h.b16 %v486
        %v686 = vunpack.c.l.b16 %v487
        %v687 = vunpack.c.h.b16 %v487
        %v688 = vunpack.c.l.b16 %v488
        %v689 = vunpack.c.h.b16 %v488
        %v690 = vunpack.c.l.b16 %v489
        %v691 = vunpack.c.h.b16 %v489
        %v692 = vpack.c.b16 %v568, %v564
        %v693 = vpack.c.b16 %v569, %v565
        %v694 = vpack.c.b16 %v570, %v566
        %v695 = vpack.c.b16 %v571, %v567
        %v696 = vpack.c.b16 %v576, %v572
        %v697 = vpack.c.b16 %v577, %v573
        %v698 = vpack.c.b16 %v578, %v574
        %v699 = vpack.c.b16 %v579, %v575
        %v700 = vpack.c.b16 %v584, %v580
        %v701 = vpack.c.b16 %v585, %v581
        %v702 = vpack.c.b16 %v586, %v582
        %v703 = vpack.c.b16 %v587, %v583
        %v704 = vpack.c.b16 %v592, %v588
        %v705 = vpack.c.b16 %v593, %v589
        %v706 = vpack.c.b16 %v594, %v590
        %v707 = vpack.c.b16 %v595, %v591
        %v708 = vpack.c.b16 %v600, %v596
        %v709 = vpack.c.b16 %v601, %v597
        %v710 = vpack.c.b16 %v602, %v598
        %v711 = vpack.c.b16 %v603, %v599
        %v712 = vpack.c.b16 %v608, %v604
        %v713 = vpack.c.b16 %v609, %v605
        %v714 = vpack.c.b16 %v610, %v606
        %v715 = vpack.c.b16 %v611, %v607
        %v716 = vpack.c.b16 %v616, %v612
        %v717 = vpack.c.b16 %v617, %v613
        %v718 = vpack.c.b16 %v618, %v614
        %v719 = vpack.c.b16 %v619, %v615
        %v720 = vpack.c.b16 %v624, %v620
        %v721 = vpack.c.b16 %v625, %v621
        %v722 = vpack.c.b16 %v626, %v622
        %v723 = vpack.c.b16 %v627, %v623
        %v724 = vpack.c.b16 %v632, %v628
        %v725 = vpack.c.b16 %v633, %v629
        %v726 = vpack.c.b16 %v634, %v630
        %v727 = vpack.c.b16 %v635, %v631
        %v728 = vpack.c.b16 %v640, %v636
        %v729 = vpack.c.b16 %v641, %v637
        %v730 = vpack.c.b16 %v642, %v638
        %v731 = vpack.c.b16 %v643, %v639
        %v732 = vpack.c.b16 %v648, %v644
        %v733 = vpack.c.b16 %v649, %v645
        %v734 = vpack.c.b16 %v650, %v646
        %v735 = vpack.c.b16 %v651, %v647
        %v736 = vpack.c.b16 %v656, %v652
        %v737 = vpack.c.b16 %v657, %v653
        %v738 = vpack.c.b16 %v658, %v654
        %v739 = vpack.c.b16 %v659, %v655
        %v740 = vpack.c.b16 %v664, %v660
        %v741 = vpack.c.b16 %v665, %v661
        %v742 = vpack.c.b16 %v666, %v662
        %v743 = vpack.c.b16 %v667, %v663
        %v744 = vpack.c.b16 %v672, %v668
        %v745 = vpack.c.b16 %v673, %v669
        %v746 = vpack.c.b16 %v674, %v670
        %v747 = vpack.c.b16 %v675, %v671
        %v748 = vpack.c.b16 %v680, %v676
        %v749 = vpack.c.b16 %v681, %v677
        %v750 = vpack.c.b16 %v682, %v678
        %v751 = vpack.c.b16 %v683, %v679
        %v752 = vpack.c.b16 %v688, %v684
        %v753 = vpack.c.b16 %v689, %v685
        %v754 = vpack.c.b16 %v690, %v686
        %v755 = vpack.c.b16 %v691, %v687
        %820 = vmatpush.bf16.msra.mxu0 %v720
        %821 = vmatpush.bf16.msra.mxu0 %v716
        %822 = vmatpush.bf16.msra.mxu0 %v712
        %823 = vmatpush.bf16.msra.mxu0 %v708
        %824 = vmatpush.bf16.msra.mxu0 %v704
        %825 = vmatpush.bf16.msra.mxu0 %v700
        %826 = vmatpush.bf16.msra.mxu0 %v696
        %827 = vmatpush.bf16.msra.mxu0 %v692
        %828 = vmatmul.bf16.gmra.mxu0 %v496
        %v829 = vpop.f32.mrf.mxu0
        %v830 = vadd.f32 0.0, %v829
        %v831 = vpop.f32.mrf.mxu0
        %v832 = vadd.f32 0.0, %v831
        %833 = vdwg.mxu0
        %834 = vmatpush.bf16.msra.mxu0 %v752
        %835 = vmatpush.bf16.msra.mxu0 %v748
        %836 = vmatpush.bf16.msra.mxu0 %v744
        %837 = vmatpush.bf16.msra.mxu0 %v740
        %838 = vmatpush.bf16.msra.mxu0 %v736
        %839 = vmatpush.bf16.msra.mxu0 %v732
        %840 = vmatpush.bf16.msra.mxu0 %v728
        %841 = vmatpush.bf16.msra.mxu0 %v724
        %842 = vmatmul.bf16.gmra.mxu0 %v497
        %v843 = vpop.f32.mrf.mxu0
        %v844 = vadd.f32 %v830, %v843
        %v845 = vpop.f32.mrf.mxu0
        %v846 = vadd.f32 %v832, %v845
        %847 = vdwg.mxu0
        %848 = vmatpush.bf16.msra.mxu0 %v721
        %849 = vmatpush.bf16.msra.mxu0 %v717
        %850 = vmatpush.bf16.msra.mxu0 %v713
        %851 = vmatpush.bf16.msra.mxu0 %v709
        %852 = vmatpush.bf16.msra.mxu0 %v705
        %853 = vmatpush.bf16.msra.mxu0 %v701
        %854 = vmatpush.bf16.msra.mxu0 %v697
        %855 = vmatpush.bf16.msra.mxu0 %v693
        %856 = vmatmul.bf16.gmra.mxu0 %v496
        %v857 = vpop.f32.mrf.mxu0
        %v858 = vadd.f32 0.0, %v857
        %v859 = vpop.f32.mrf.mxu0
        %v860 = vadd.f32 0.0, %v859
        %861 = vdwg.mxu0
        %862 = vmatpush.bf16.msra.mxu0 %v753
        %863 = vmatpush.bf16.msra.mxu0 %v749
        %864 = vmatpush.bf16.msra.mxu0 %v745
        %865 = vmatpush.bf16.msra.mxu0 %v741
        %866 = vmatpush.bf16.msra.mxu0 %v737
        %867 = vmatpush.bf16.msra.mxu0 %v733
        %868 = vmatpush.bf16.msra.mxu0 %v729
        %869 = vmatpush.bf16.msra.mxu0 %v725
        %870 = vmatmul.bf16.gmra.mxu0 %v497
        %v871 = vpop.f32.mrf.mxu0
        %v872 = vadd.f32 %v858, %v871
        %v873 = vpop.f32.mrf.mxu0
        %v874 = vadd.f32 %v860, %v873
        %875 = vdwg.mxu0
        %876 = vmatpush.bf16.msra.mxu0 %v722
        %877 = vmatpush.bf16.msra.mxu0 %v718
        %878 = vmatpush.bf16.msra.mxu0 %v714
        %879 = vmatpush.bf16.msra.mxu0 %v710
        %880 = vmatpush.bf16.msra.mxu0 %v706
        %881 = vmatpush.bf16.msra.mxu0 %v702
        %882 = vmatpush.bf16.msra.mxu0 %v698
        %883 = vmatpush.bf16.msra.mxu0 %v694
        %884 = vmatmul.bf16.gmra.mxu0 %v496
        %v885 = vpop.f32.mrf.mxu0
        %v886 = vadd.f32 0.0, %v885
        %v887 = vpop.f32.mrf.mxu0
        %v888 = vadd.f32 0.0, %v887
        %889 = vdwg.mxu0
        %890 = vmatpush.bf16.msra.mxu0 %v754
        %891 = vmatpush.bf16.msra.mxu0 %v750
        %892 = vmatpush.bf16.msra.mxu0 %v746
        %893 = vmatpush.bf16.msra.mxu0 %v742
        %894 = vmatpush.bf16.msra.mxu0 %v738
        %895 = vmatpush.bf16.msra.mxu0 %v734
        %896 = vmatpush.bf16.msra.mxu0 %v730
        %897 = vmatpush.bf16.msra.mxu0 %v726
        %898 = vmatmul.bf16.gmra.mxu0 %v497
        %v899 = vpop.f32.mrf.mxu0
        %v900 = vadd.f32 %v886, %v899
        %v901 = vpop.f32.mrf.mxu0
        %v902 = vadd.f32 %v888, %v901
        %903 = vdwg.mxu0
        %904 = vmatpush.bf16.msra.mxu0 %v723
        %905 = vmatpush.bf16.msra.mxu0 %v719
        %906 = vmatpush.bf16.msra.mxu0 %v715
        %907 = vmatpush.bf16.msra.mxu0 %v711
        %908 = vmatpush.bf16.msra.mxu0 %v707
        %909 = vmatpush.bf16.msra.mxu0 %v703
        %910 = vmatpush.bf16.msra.mxu0 %v699
        %911 = vmatpush.bf16.msra.mxu0 %v695
        %912 = vmatmul.bf16.gmra.mxu0 %v496
        %v913 = vpop.f32.mrf.mxu0
        %v914 = vadd.f32 0.0, %v913
        %v915 = vpop.f32.mrf.mxu0
        %v916 = vadd.f32 0.0, %v915
        %917 = vdwg.mxu0
        %918 = vmatpush.bf16.msra.mxu0 %v755
        %919 = vmatpush.bf16.msra.mxu0 %v751
        %920 = vmatpush.bf16.msra.mxu0 %v747
        %921 = vmatpush.bf16.msra.mxu0 %v743
        %922 = vmatpush.bf16.msra.mxu0 %v739
        %923 = vmatpush.bf16.msra.mxu0 %v735
        %924 = vmatpush.bf16.msra.mxu0 %v731
        %925 = vmatpush.bf16.msra.mxu0 %v727
        %926 = vmatmul.bf16.gmra.mxu0 %v497
        %v927 = vpop.f32.mrf.mxu0
        %v928 = vadd.f32 %v914, %v927
        %v929 = vpop.f32.mrf.mxu0
        %v930 = vadd.f32 %v916, %v929
        %931 = vdwg.mxu0
        %v932 = vadd.f32 %v416, %v844
        %v933 = vadd.f32 %v417, %v872
        %v934 = vadd.f32 %v418, %v900
        %v935 = vadd.f32 %v419, %v928
        %v936 = vadd.f32 %v420, %v846
        %v937 = vadd.f32 %v421, %v874
        %v938 = vadd.f32 %v422, %v902
        %v939 = vadd.f32 %v423, %v930
        %940 = vst [vmem:[#allocation2] sm:$0xff] %v932
        %941 = vst [vmem:[#allocation2 + $0x8] sm:$0xff] %v933
        %942 = vst [vmem:[#allocation2 + $0x10] sm:$0xff] %v934
        %943 = vst [vmem:[#allocation2 + $0x18] sm:$0xff] %v935
        %944 = vst [vmem:[#allocation2 + $0x20] sm:$0xff] %v936
        %945 = vst [vmem:[#allocation2 + $0x28] sm:$0xff] %v937
        %946 = vst [vmem:[#allocation2 + $0x30] sm:$0xff] %v938
        %947 = vst [vmem:[#allocation2 + $0x38] sm:$0xff] %v939
        // Predicated region
        $region60: #{_lambda_.27} parent=50 // pred_check
          %p948 = pneg %p404
        $region61: #{_lambda_.27} parent=50 // pred_check_branch
          %950 = sbr.rel (%p948) target = $region63
        $region62: #{_lambda_.27} parent=50 // pred_region
          %v951 = vld [vmem:[#allocation2] sm:$0xff]
          %v952 = vld [vmem:[#allocation2 + $0x8] sm:$0xff]
          %v953 = vld [vmem:[#allocation2 + $0x10] sm:$0xff]
          %v954 = vld [vmem:[#allocation2 + $0x18] sm:$0xff]
          %v955 = vld [vmem:[#allocation2 + $0x20] sm:$0xff]
          %v956 = vld [vmem:[#allocation2 + $0x28] sm:$0xff]
          %v957 = vld [vmem:[#allocation2 + $0x30] sm:$0xff]
          %v958 = vld [vmem:[#allocation2 + $0x38] sm:$0xff]
          %v959 = vld [vmem:[%s400] sm:$0xff]
          %v960 = vld [vmem:[%s400 + $0x8] sm:$0xff]
          %962 = vset.pattern.permute.xlu0 0
          %963 = vperm.xlu0 %962, %v959
          %v964 = vpop.permute.xlu0 %963
          %967 = vset.pattern.permute.xlu0 0
          %968 = vperm.xlu0 %967, %v960
          %v969 = vpop.permute.xlu0 %968
          %v971 = vadd.f32 %v951, %v964
          %v972 = vadd.f32 %v952, %v964
          %v973 = vadd.f32 %v953, %v964
          %v974 = vadd.f32 %v954, %v964
          %v975 = vadd.f32 %v955, %v969
          %v976 = vadd.f32 %v956, %v969
          %v977 = vadd.f32 %v957, %v969
          %v978 = vadd.f32 %v958, %v969
          %v979 = vpack.c.bf16 %v972, %v971
          %v980 = vpack.c.bf16 %v974, %v973
          %v981 = vpack.c.bf16 %v976, %v975
          %v982 = vpack.c.bf16 %v978, %v977
          %983 = vst [vmem:[%s381] sm:$0xff] %v979
          %984 = vst [vmem:[%s381 + $0x8] sm:$0xff] %v980
          %985 = vst [vmem:[%s381 + $0x10] sm:$0xff] %v981
          %986 = vst [vmem:[%s381 + $0x18] sm:$0xff] %v982
        $region63: #{_lambda_.27} parent=50 // pred_fallthru
          _
        %s987 = sand.u32 %s125, 1
        %s988 = sand.u32 %s125, 1
        %s989 = smul.addr %s988, 32
        %s990 = scalar_lea.vmem [#allocation4], %s989
        // Predicated region
        $region64: #{_lambda_.27} parent=50 // pred_check
          %p991 = pneg %p135
        $region65: #{_lambda_.27} parent=50 // pred_check_branch
          %993 = sbr.rel (%p991) target = $region67
        $region66: #{_lambda_.27} parent=50 // pred_region
          %s994 = smul.u32 2, %s19
          %s995 = smul.u32 4, %s20
          %s996 = smul.addr %s994, 8
          %s997 = sadd.s32 %s995, %s996
          %s998 = smul.addr %s997, 4
          %s999 = scalar_lea.vmem %s3, %s998
          // Predicated region
          $region68: #{_lambda_.27} parent=66 // pred_check
            _
          $region69: #{_lambda_.27} parent=66 // pred_check_branch
            %1001 = sbr.rel (0) target = $region71
          $region70: #{_lambda_.27} parent=66 // pred_region
            // Predicated region
            $region72: #{_lambda_.27} parent=70 // pred_check
              _
            $region73: #{_lambda_.27} parent=70 // pred_check_branch
              %1003 = sbr.rel (0) target = $region75
            $region74: #{_lambda_.27} parent=70 // pred_region
              loop: start=0, step=1, limit=1
              $region76: #{_lambda_.27} parent=74 // loop_pre_header
                _
              $region77: #{_lambda_.27} parent=74 // loop_header
                %s1005 = sphi 0, %s1009
                %p1006 = scmp.ge.s32.totalorder %s1005, 1
                %s1010 = sphi %s990, %s990
                %s1011 = sphi %s999, %s999
              $region78: #{_lambda_.27} parent=74 // loop_header_branch
                %1008 = sbr.rel (%p1006) target = $region82
              $region79: #{_lambda_.27} parent=74 // loop_body
                %v1012 = vld [vmem:[%s1010] sm:$0xff]
                %1013 = vst [vmem:[%s1011] sm:$0xff] %v1012
                %v1014 = vld [vmem:[%s1010 + $0x8] sm:$0xff]
                %1015 = vst [vmem:[%s1011 + $0x8] sm:$0xff] %v1014
                %v1016 = vld [vmem:[%s1010 + $0x10] sm:$0xff]
                %1017 = vst [vmem:[%s1011 + $0x20] sm:$0xff] %v1016
                %v1018 = vld [vmem:[%s1010 + $0x18] sm:$0xff]
                %1019 = vst [vmem:[%s1011 + $0x28] sm:$0xff] %v1018
              $region80: #{_lambda_.27} parent=74 // loop_footer
                %s1009 = sadd.s32 1, %s1005
              $region81: #{_lambda_.27} parent=74 // loop_footer_branch
                %1004 = sbr.rel target = $region77
              $region82: #{_lambda_.27} parent=74 // loop_exit
                _
            $region75: #{_lambda_.27} parent=70 // pred_fallthru
              _
            // Predicated region
            $region83: #{_lambda_.27} parent=70 // pred_check
              _
            $region84: #{_lambda_.27} parent=70 // pred_check_branch
              %1021 = sbr.rel target = $region86
            $region85: #{_lambda_.27} parent=70 // pred_region
              _
            $region86: #{_lambda_.27} parent=70 // pred_fallthru
              _
          $region71: #{_lambda_.27} parent=66 // pred_fallthru
            _
          %1022 = vnop
        $region67: #{_lambda_.27} parent=50 // pred_fallthru
          _
      $region51: #{_lambda_.27} parent=5 // pred_fallthru
        _
      %p1023 = scmp.le.s32.totalorder 2, %s9
      // Predicated region
      $region87: #{_lambda_.27} parent=5 // pred_check
        %p1024 = pneg %p1023
      $region88: #{_lambda_.27} parent=5 // pred_check_branch
        %1026 = sbr.rel (%p1024) target = $region90
      $region89: #{_lambda_.27} parent=5 // pred_region
        %s1027 = ssub.s32 %s9, 2
        // Predicated region
        $region91: #{_lambda_.27} parent=89 // pred_check
          %p1028 = pneg %p141
        $region92: #{_lambda_.27} parent=89 // pred_check_branch
          %1030 = sbr.rel (%p1028) target = $region94
        $region93: #{_lambda_.27} parent=89 // pred_region
          %s1031 = sand.u32 %s126, 1
          %s1032 = sand.u32 %s126, 1
          %s1033 = smul.addr %s1032, 32
          %s1034 = scalar_lea.vmem [#allocation4], %s1033
        $region94: #{_lambda_.27} parent=89 // pred_fallthru
          _
      $region90: #{_lambda_.27} parent=5 // pred_fallthru
        _
    $region6: #{_lambda_.27} parent=1 // loop_footer
      %s13 = sadd.s32 1, %s9
    $region7: #{_lambda_.27} parent=1 // loop_footer_branch
      %8 = sbr.rel target = $region3
    $region8: #{_lambda_.27} parent=1 // loop_exit
      _

// kernel: _lambda_.29
$region0: #{_lambda_.29}
  #allocation0 [shape = 'u32[]', space=smem, size = 0x4, offset = 0x4, fixed_abs, tag = 'smem constant byte address 0x4 - core index']
  #allocation1 [shape = 'u32[72,128]{1,0:T(1,128)}', space=vmem, size = 0x9000, scoped, tag = 'internal scratch']
  #allocation2 [shape = 'f32[16,512]{1,0:T(8,128)}', space=vmem, size = 0x8000, scoped, tag = 'scratch operand']
  %s0 = inlined_call_operand.vmem [shape: bf16[16,256], index: 0, kind: input, shape index: {}]
  %s1 = inlined_call_operand.vmem [shape: bf16[256,1024], index: 1, kind: input, shape index: {}]
  %s2 = inlined_call_operand.vmem [shape: f32[16,1], index: 2, kind: input, shape index: {}]
  %s3 = inlined_call_operand.vmem [shape: bf16[16,1024], index: 3, kind: output, shape index: {}]
  %s4 = sld [smem:[#allocation0]]
  $region95: #{_lambda_.29} parent=0
    _
  %s6 = ssub.s32 1, %s4
  %s7 = scalar_select 0, %s6, %s4
  $region1: #{_lambda_.29} parent=0
    #allocation3 [shape = 'u8[524288]{0}', space=vmem, size = 0x80000, scoped, tag = 'input window, operand 1']
    #allocation4 [shape = 'u8[32768]{0}', space=vmem, size = 0x8000, scoped, tag = 'output window, operand 0']
    loop: start=0, step=1, limit=4
    $region2: #{_lambda_.29} parent=1 // loop_pre_header
      _
    $region3: #{_lambda_.29} parent=1 // loop_header
      %s9 = sphi 0, %s13
      %p10 = scmp.ge.s32.totalorder %s9, 4
      %s16 = sphi 0, %s35
      %s17 = sphi 0, %s31
      %s18 = sphi 0, %s27
      %s19 = sphi 0, %s16
      %s20 = sphi 0, %s17
      %s21 = sphi 0, %s18
      %s22 = sphi 0, %s19
      %s23 = sphi 0, %s20
      %s24 = sphi 0, %s21
      %s40 = sphi 0, %s42
      %s43 = sphi 0, %s40
      %s44 = sphi 0, %s43
      %s60 = sphi 0, %s44
      %s68 = sphi 0, %s70
      %s71 = sphi 0, %s68
      %s72 = sphi 0, %s71
      %s88 = sphi 0, %s72
      %s94 = sphi 0, %s96
      %s97 = sphi 0, %s94
      %s98 = sphi 0, %s97
      %s114 = sphi 0, %s98
      %s122 = sphi 0, %s124
      %s125 = sphi 0, %s122
      %s126 = sphi 0, %s125
      %s142 = sphi 0, %s126
    $region4: #{_lambda_.29} parent=1 // loop_header_branch
      %12 = sbr.rel (%p10) target = $region8
    $region5: #{_lambda_.29} parent=1 // loop_body
      %s14 = ssub.s32 %s9, 1
      %s15 = ssub.s32 %s9, 2
      %s25 = sadd.s32 1, %s18
      %p26 = scmp.ge.s32.totalorder %s25, 1
      %s27 = scalar_select %p26, 0, %s25
      %s28 = sadd.s32 1, %s17
      %s29 = scalar_select %p26, %s28, %s17
      %p30 = scmp.ge.s32.totalorder %s29, 2
      %s31 = scalar_select %p30, 0, %s29
      %s32 = sadd.s32 1, %s16
      %s33 = scalar_select %p30, %s32, %s16
      %p34 = scmp.ge.s32.totalorder %s33, 1
      %s35 = scalar_select %p34, 0, %s33
      %s36 = ssub.s32 %s16, %s35
      %s37 = ssub.s32 %s18, %s27
      %s38 = sor.u32 %s36, %s37
      %p39 = scmp.eq.s32.totalorder %s38, 0
      %s41 = sadd.s32 %s40, 1
      %s42 = scalar_select %p39, %s40, %s41
      %p45 = pneg %p39
      %p46 = scmp.eq.s32.totalorder %s9, 1
      %p47 = por %p45, %p46
      %p48 = scmp.ne.s32.totalorder %s40, %s43
      %p49 = scmp.eq.s32.totalorder %s9, 0
      %p50 = por %p48, %p49
      %p51 = scmp.ne.s32.totalorder %s40, %s43
      %p52 = scmp.eq.s32.totalorder %s14, 1
      %p53 = por %p51, %p52
      %p54 = scmp.ne.s32.totalorder %s43, %s44
      %p55 = scmp.eq.s32.totalorder %s14, 0
      %p56 = por %p54, %p55
      %p57 = scmp.ne.s32.totalorder %s43, %s44
      %p58 = scmp.eq.s32.totalorder %s15, 1
      %p59 = por %p57, %p58
      %p61 = scmp.ne.s32.totalorder %s44, %s60
      %p62 = scmp.eq.s32.totalorder %s15, 0
      %p63 = por %p61, %p62
      %s64 = ssub.s32 %s18, %s27
      %s65 = ssub.s32 %s17, %s31
      %s66 = sor.u32 %s64, %s65
      %p67 = scmp.eq.s32.totalorder %s66, 0
      %s69 = sadd.s32 %s68, 1
      %s70 = scalar_select %p67, %s68, %s69
      %p73 = pneg %p67
      %p74 = scmp.eq.s32.totalorder %s9, 1
      %p75 = por %p73, %p74
      %p76 = scmp.ne.s32.totalorder %s68, %s71
      %p77 = scmp.eq.s32.totalorder %s9, 0
      %p78 = por %p76, %p77
      %p79 = scmp.ne.s32.totalorder %s68, %s71
      %p80 = scmp.eq.s32.totalorder %s14, 1
      %p81 = por %p79, %p80
      %p82 = scmp.ne.s32.totalorder %s71, %s72
      %p83 = scmp.eq.s32.totalorder %s14, 0
      %p84 = por %p82, %p83
      %p85 = scmp.ne.s32.totalorder %s71, %s72
      %p86 = scmp.eq.s32.totalorder %s15, 1
      %p87 = por %p85, %p86
      %p89 = scmp.ne.s32.totalorder %s72, %s88
      %p90 = scmp.eq.s32.totalorder %s15, 0
      %p91 = por %p89, %p90
      %s92 = ssub.s32 %s16, %s35
      %p93 = scmp.eq.s32.totalorder %s92, 0
      %s95 = sadd.s32 %s94, 1
      %s96 = scalar_select %p93, %s94, %s95
      %p99 = pneg %p93
      %p100 = scmp.eq.s32.totalorder %s9, 1
      %p101 = por %p99, %p100
      %p102 = scmp.ne.s32.totalorder %s94, %s97
      %p103 = scmp.eq.s32.totalorder %s9, 0
      %p104 = por %p102, %p103
      %p105 = scmp.ne.s32.totalorder %s94, %s97
      %p106 = scmp.eq.s32.totalorder %s14, 1
      %p107 = por %p105, %p106
      %p108 = scmp.ne.s32.totalorder %s97, %s98
      %p109 = scmp.eq.s32.totalorder %s14, 0
      %p110 = por %p108, %p109
      %p111 = scmp.ne.s32.totalorder %s97, %s98
      %p112 = scmp.eq.s32.totalorder %s15, 1
      %p113 = por %p111, %p112
      %p115 = scmp.ne.s32.totalorder %s98, %s114
      %p116 = scmp.eq.s32.totalorder %s15, 0
      %p117 = por %p115, %p116
      %s118 = ssub.s32 %s16, %s35
      %s119 = ssub.s32 %s17, %s31
      %s120 = sor.u32 %s118, %s119
      %p121 = scmp.eq.s32.totalorder %s120, 0
      %s123 = sadd.s32 %s122, 1
      %s124 = scalar_select %p121, %s122, %s123
      %p127 = pneg %p121
      %p128 = scmp.eq.s32.totalorder %s9, 1
      %p129 = por %p127, %p128
      %p130 = scmp.ne.s32.totalorder %s122, %s125
      %p131 = scmp.eq.s32.totalorder %s9, 0
      %p132 = por %p130, %p131
      %p133 = scmp.ne.s32.totalorder %s122, %s125
      %p134 = scmp.eq.s32.totalorder %s14, 1
      %p135 = por %p133, %p134
      %p136 = scmp.ne.s32.totalorder %s125, %s126
      %p137 = scmp.eq.s32.totalorder %s14, 0
      %p138 = por %p136, %p137
      %p139 = scmp.ne.s32.totalorder %s125, %s126
      %p140 = scmp.eq.s32.totalorder %s15, 1
      %p141 = por %p139, %p140
      %p143 = scmp.ne.s32.totalorder %s126, %s142
      %p144 = scmp.eq.s32.totalorder %s15, 0
      %p145 = por %p143, %p144
      %p146 = scmp.le.s32.totalorder 1, %s9
      %p147 = scmp.lt.s32.totalorder %s9, 3
      %p148 = pnand %p146, %p147
      %p149 = pneg %p148
      // Predicated region
      $region9: #{_lambda_.29} parent=5 // pred_check
        _
      $region10: #{_lambda_.29} parent=5 // pred_check_branch
        %151 = sbr.rel (%p148) target = $region12
      $region11: #{_lambda_.29} parent=5 // pred_region
        %s152 = ssub.s32 %s9, 1
        // Predicated region
        $region13: #{_lambda_.29} parent=11 // pred_check
          %p153 = pneg %p56
        $region14: #{_lambda_.29} parent=11 // pred_check_branch
          %155 = sbr.rel (%p153) target = $region16
        $region15: #{_lambda_.29} parent=11 // pred_region
          %s156 = smul.u32 2, %s19
          %s157 = smul.u32 2, %s21
          %p158 = scmp.lt.s32.totalorder %s156, 1
          %s159 = scalar_select %p158, %s156, 1
          %p160 = scmp.lt.s32.totalorder %s157, 1
          %s161 = scalar_select %p160, %s157, 1
          %s162 = smul.addr %s159, 2
          %s163 = sadd.s32 %s161, %s162
          %s164 = smul.addr %s163, 4
          %s165 = scalar_lea.vmem %s0, %s164
          %s166 = smul.u32 2, %s19
          %s167 = smul.u32 2, %s21
        $region16: #{_lambda_.29} parent=11 // pred_fallthru
          _
        // Predicated region
        $region17: #{_lambda_.29} parent=11 // pred_check
          %p168 = pneg %p110
        $region18: #{_lambda_.29} parent=11 // pred_check_branch
          %170 = sbr.rel (%p168) target = $region20
        $region19: #{_lambda_.29} parent=11 // pred_region
          %s171 = smul.u32 2, %s19
          %p172 = scmp.lt.s32.totalorder %s171, 1
          %s173 = scalar_select %p172, %s171, 1
          %s174 = smul.addr %s173, 8
          %s175 = scalar_lea.vmem %s2, %s174
          %s176 = smul.u32 2, %s19
        $region20: #{_lambda_.29} parent=11 // pred_fallthru
          _
      $region12: #{_lambda_.29} parent=5 // pred_fallthru
        _
      %p177 = scmp.lt.s32.totalorder %s9, 2
      // Predicated region
      $region21: #{_lambda_.29} parent=5 // pred_check
        %p178 = pneg %p177
      $region22: #{_lambda_.29} parent=5 // pred_check_branch
        %180 = sbr.rel (%p178) target = $region24
      $region23: #{_lambda_.29} parent=5 // pred_region
        // Predicated region
        $region25: #{_lambda_.29} parent=23 // pred_check
          %p181 = pneg %p78
        $region26: #{_lambda_.29} parent=23 // pred_check_branch
          %183 = sbr.rel (%p181) target = $region28
        $region27: #{_lambda_.29} parent=23 // pred_region
          %s184 = sand.u32 %s68, 1
          %s185 = sand.u32 %s68, 1
          %s186 = smul.addr %s185, 512
          %s187 = scalar_lea.vmem [#allocation3], %s186
          %s188 = smul.u32 32, %s18
          %s189 = smul.u32 4, %s17
          %s190 = smul.addr %s188, 8
          %s191 = sadd.s32 %s189, %s190
          %s192 = smul.addr %s191, 4
          %s193 = scalar_lea.vmem %s1, %s192
          // Predicated region
          $region29: #{_lambda_.29} parent=27 // pred_check
            _
          $region30: #{_lambda_.29} parent=27 // pred_check_branch
            %195 = sbr.rel (0) target = $region32
          $region31: #{_lambda_.29} parent=27 // pred_region
            // Predicated region
            $region33: #{_lambda_.29} parent=31 // pred_check
              _
            $region34: #{_lambda_.29} parent=31 // pred_check_branch
              %197 = sbr.rel (0) target = $region36
            $region35: #{_lambda_.29} parent=31 // pred_region
              loop: start=0, step=1, limit=1
              $region37: #{_lambda_.29} parent=35 // loop_pre_header
                _
              $region38: #{_lambda_.29} parent=35 // loop_header
                %s199 = sphi 0, %s203
                %p200 = scmp.ge.s32.totalorder %s199, 1
                %s204 = sphi %s193, %s193
                %s205 = sphi %s187, %s187
              $region39: #{_lambda_.29} parent=35 // loop_header_branch
                %202 = sbr.rel (%p200) target = $region43
              $region40: #{_lambda_.29} parent=35 // loop_body
                %v206 = vld [vmem:[%s204] sm:$0xff]
                %207 = vst [vmem:[%s205] sm:$0xff] %v206
                %v208 = vld [vmem:[%s204 + $0x8] sm:$0xff]
                %209 = vst [vmem:[%s205 + $0x8] sm:$0xff] %v208
                %v210 = vld [vmem:[%s204 + $0x20] sm:$0xff]
                %211 = vst [vmem:[%s205 + $0x10] sm:$0xff] %v210
                %v212 = vld [vmem:[%s204 + $0x28] sm:$0xff]
                %213 = vst [vmem:[%s205 + $0x18] sm:$0xff] %v212
                %v214 = vld [vmem:[%s204 + $0x40] sm:$0xff]
                %215 = vst [vmem:[%s205 + $0x20] sm:$0xff] %v214
                %v216 = vld [vmem:[%s204 + $0x48] sm:$0xff]
                %217 = vst [vmem:[%s205 + $0x28] sm:$0xff] %v216
                %v218 = vld [vmem:[%s204 + $0x60] sm:$0xff]
                %219 = vst [vmem:[%s205 + $0x30] sm:$0xff] %v218
                %v220 = vld [vmem:[%s204 + $0x68] sm:$0xff]
                %221 = vst [vmem:[%s205 + $0x38] sm:$0xff] %v220
                %v222 = vld [vmem:[%s204 + $0x80] sm:$0xff]
                %223 = vst [vmem:[%s205 + $0x40] sm:$0xff] %v222
                %v224 = vld [vmem:[%s204 + $0x88] sm:$0xff]
                %225 = vst [vmem:[%s205 + $0x48] sm:$0xff] %v224
                %v226 = vld [vmem:[%s204 + $0xa0] sm:$0xff]
                %227 = vst [vmem:[%s205 + $0x50] sm:$0xff] %v226
                %v228 = vld [vmem:[%s204 + $0xa8] sm:$0xff]
                %229 = vst [vmem:[%s205 + $0x58] sm:$0xff] %v228
                %v230 = vld [vmem:[%s204 + $0xc0] sm:$0xff]
                %231 = vst [vmem:[%s205 + $0x60] sm:$0xff] %v230
                %v232 = vld [vmem:[%s204 + $0xc8] sm:$0xff]
                %233 = vst [vmem:[%s205 + $0x68] sm:$0xff] %v232
                %v234 = vld [vmem:[%s204 + $0xe0] sm:$0xff]
                %235 = vst [vmem:[%s205 + $0x70] sm:$0xff] %v234
                %v236 = vld [vmem:[%s204 + $0xe8] sm:$0xff]
                %237 = vst [vmem:[%s205 + $0x78] sm:$0xff] %v236
                %v238 = vld [vmem:[%s204 + $0x100] sm:$0xff]
                %239 = vst [vmem:[%s205 + $0x80] sm:$0xff] %v238
                %v240 = vld [vmem:[%s204 + $0x108] sm:$0xff]
                %241 = vst [vmem:[%s205 + $0x88] sm:$0xff] %v240
                %v242 = vld [vmem:[%s204 + $0x120] sm:$0xff]
                %243 = vst [vmem:[%s205 + $0x90] sm:$0xff] %v242
                %v244 = vld [vmem:[%s204 + $0x128] sm:$0xff]
                %245 = vst [vmem:[%s205 + $0x98] sm:$0xff] %v244
                %v246 = vld [vmem:[%s204 + $0x140] sm:$0xff]
                %247 = vst [vmem:[%s205 + $0xa0] sm:$0xff] %v246
                %v248 = vld [vmem:[%s204 + $0x148] sm:$0xff]
                %249 = vst [vmem:[%s205 + $0xa8] sm:$0xff] %v248
                %v250 = vld [vmem:[%s204 + $0x160] sm:$0xff]
                %251 = vst [vmem:[%s205 + $0xb0] sm:$0xff] %v250
                %v252 = vld [vmem:[%s204 + $0x168] sm:$0xff]
                %253 = vst [vmem:[%s205 + $0xb8] sm:$0xff] %v252
                %v254 = vld [vmem:[%s204 + $0x180] sm:$0xff]
                %255 = vst [vmem:[%s205 + $0xc0] sm:$0xff] %v254
                %v256 = vld [vmem:[%s204 + $0x188] sm:$0xff]
                %257 = vst [vmem:[%s205 + $0xc8] sm:$0xff] %v256
                %v258 = vld [vmem:[%s204 + $0x1a0] sm:$0xff]
                %259 = vst [vmem:[%s205 + $0xd0] sm:$0xff] %v258
                %v260 = vld [vmem:[%s204 + $0x1a8] sm:$0xff]
                %261 = vst [vmem:[%s205 + $0xd8] sm:$0xff] %v260
                %v262 = vld [vmem:[%s204 + $0x1c0] sm:$0xff]
                %263 = vst [vmem:[%s205 + $0xe0] sm:$0xff] %v262
                %v264 = vld [vmem:[%s204 + $0x1c8] sm:$0xff]
                %265 = vst [vmem:[%s205 + $0xe8] sm:$0xff] %v264
                %v266 = vld [vmem:[%s204 + $0x1e0] sm:$0xff]
                %267 = vst [vmem:[%s205 + $0xf0] sm:$0xff] %v266
                %v268 = vld [vmem:[%s204 + $0x1e8] sm:$0xff]
                %269 = vst [vmem:[%s205 + $0xf8] sm:$0xff] %v268
                %v270 = vld [vmem:[%s204 + $0x200] sm:$0xff]
                %271 = vst [vmem:[%s205 + $0x100] sm:$0xff] %v270
                %v272 = vld [vmem:[%s204 + $0x208] sm:$0xff]
                %273 = vst [vmem:[%s205 + $0x108] sm:$0xff] %v272
                %v274 = vld [vmem:[%s204 + $0x220] sm:$0xff]
                %275 = vst [vmem:[%s205 + $0x110] sm:$0xff] %v274
                %v276 = vld [vmem:[%s204 + $0x228] sm:$0xff]
                %277 = vst [vmem:[%s205 + $0x118] sm:$0xff] %v276
                %v278 = vld [vmem:[%s204 + $0x240] sm:$0xff]
                %279 = vst [vmem:[%s205 + $0x120] sm:$0xff] %v278
                %v280 = vld [vmem:[%s204 + $0x248] sm:$0xff]
                %281 = vst [vmem:[%s205 + $0x128] sm:$0xff] %v280
                %v282 = vld [vmem:[%s204 + $0x260] sm:$0xff]
                %283 = vst [vmem:[%s205 + $0x130] sm:$0xff] %v282
                %v284 = vld [vmem:[%s204 + $0x268] sm:$0xff]
                %285 = vst [vmem:[%s205 + $0x138] sm:$0xff] %v284
                %v286 = vld [vmem:[%s204 + $0x280] sm:$0xff]
                %287 = vst [vmem:[%s205 + $0x140] sm:$0xff] %v286
                %v288 = vld [vmem:[%s204 + $0x288] sm:$0xff]
                %289 = vst [vmem:[%s205 + $0x148] sm:$0xff] %v288
                %v290 = vld [vmem:[%s204 + $0x2a0] sm:$0xff]
                %291 = vst [vmem:[%s205 + $0x150] sm:$0xff] %v290
                %v292 = vld [vmem:[%s204 + $0x2a8] sm:$0xff]
                %293 = vst [vmem:[%s205 + $0x158] sm:$0xff] %v292
                %v294 = vld [vmem:[%s204 + $0x2c0] sm:$0xff]
                %295 = vst [vmem:[%s205 + $0x160] sm:$0xff] %v294
                %v296 = vld [vmem:[%s204 + $0x2c8] sm:$0xff]
                %297 = vst [vmem:[%s205 + $0x168] sm:$0xff] %v296
                %v298 = vld [vmem:[%s204 + $0x2e0] sm:$0xff]
                %299 = vst [vmem:[%s205 + $0x170] sm:$0xff] %v298
                %v300 = vld [vmem:[%s204 + $0x2e8] sm:$0xff]
                %301 = vst [vmem:[%s205 + $0x178] sm:$0xff] %v300
                %v302 = vld [vmem:[%s204 + $0x300] sm:$0xff]
                %303 = vst [vmem:[%s205 + $0x180] sm:$0xff] %v302
                %v304 = vld [vmem:[%s204 + $0x308] sm:$0xff]
                %305 = vst [vmem:[%s205 + $0x188] sm:$0xff] %v304
                %v306 = vld [vmem:[%s204 + $0x320] sm:$0xff]
                %307 = vst [vmem:[%s205 + $0x190] sm:$0xff] %v306
                %v308 = vld [vmem:[%s204 + $0x328] sm:$0xff]
                %309 = vst [vmem:[%s205 + $0x198] sm:$0xff] %v308
                %v310 = vld [vmem:[%s204 + $0x340] sm:$0xff]
                %311 = vst [vmem:[%s205 + $0x1a0] sm:$0xff] %v310
                %v312 = vld [vmem:[%s204 + $0x348] sm:$0xff]
                %313 = vst [vmem:[%s205 + $0x1a8] sm:$0xff] %v312
                %v314 = vld [vmem:[%s204 + $0x360] sm:$0xff]
                %315 = vst [vmem:[%s205 + $0x1b0] sm:$0xff] %v314
                %v316 = vld [vmem:[%s204 + $0x368] sm:$0xff]
                %317 = vst [vmem:[%s205 + $0x1b8] sm:$0xff] %v316
                %v318 = vld [vmem:[%s204 + $0x380] sm:$0xff]
                %319 = vst [vmem:[%s205 + $0x1c0] sm:$0xff] %v318
                %v320 = vld [vmem:[%s204 + $0x388] sm:$0xff]
                %321 = vst [vmem:[%s205 + $0x1c8] sm:$0xff] %v320
                %v322 = vld [vmem:[%s204 + $0x3a0] sm:$0xff]
                %323 = vst [vmem:[%s205 + $0x1d0] sm:$0xff] %v322
                %v324 = vld [vmem:[%s204 + $0x3a8] sm:$0xff]
                %325 = vst [vmem:[%s205 + $0x1d8] sm:$0xff] %v324
                %v326 = vld [vmem:[%s204 + $0x3c0] sm:$0xff]
                %327 = vst [vmem:[%s205 + $0x1e0] sm:$0xff] %v326
                %v328 = vld [vmem:[%s204 + $0x3c8] sm:$0xff]
                %329 = vst [vmem:[%s205 + $0x1e8] sm:$0xff] %v328
                %v330 = vld [vmem:[%s204 + $0x3e0] sm:$0xff]
                %331 = vst [vmem:[%s205 + $0x1f0] sm:$0xff] %v330
                %v332 = vld [vmem:[%s204 + $0x3e8] sm:$0xff]
                %333 = vst [vmem:[%s205 + $0x1f8] sm:$0xff] %v332
              $region41: #{_lambda_.29} parent=35 // loop_footer
                %s203 = sadd.s32 1, %s199
              $region42: #{_lambda_.29} parent=35 // loop_footer_branch
                %198 = sbr.rel target = $region38
              $region43: #{_lambda_.29} parent=35 // loop_exit
                _
            $region36: #{_lambda_.29} parent=31 // pred_fallthru
              _
            // Predicated region
            $region44: #{_lambda_.29} parent=31 // pred_check
              _
            $region45: #{_lambda_.29} parent=31 // pred_check_branch
              %335 = sbr.rel target = $region47
            $region46: #{_lambda_.29} parent=31 // pred_region
              _
            $region47: #{_lambda_.29} parent=31 // pred_fallthru
              _
          $region32: #{_lambda_.29} parent=27 // pred_fallthru
            _
          %336 = vnop
        $region28: #{_lambda_.29} parent=23 // pred_fallthru
          _
      $region24: #{_lambda_.29} parent=5 // pred_fallthru
        _
      %p337 = scmp.le.s32.totalorder 1, %s9
      %p338 = scmp.lt.s32.totalorder %s9, 3
      %p339 = pnand %p337, %p338
      %p340 = pneg %p339
      // Predicated region
      $region48: #{_lambda_.29} parent=5 // pred_check
        _
      $region49: #{_lambda_.29} parent=5 // pred_check_branch
        %342 = sbr.rel (%p339) target = $region51
      $region50: #{_lambda_.29} parent=5 // pred_region
        %s343 = ssub.s32 %s9, 1
        %s344 = sand.u32 %s71, 1
        %s345 = sand.u32 %s71, 1
        %s346 = smul.addr %s345, 512
        %s347 = scalar_lea.vmem [#allocation3], %s346
        // Predicated region
        $region52: #{_lambda_.29} parent=50 // pred_check
          %p348 = pneg %p84
        $region53: #{_lambda_.29} parent=50 // pred_check_branch
          %350 = sbr.rel (%p348) target = $region55
        $region54: #{_lambda_.29} parent=50 // pred_region
          _
        $region55: #{_lambda_.29} parent=50 // pred_fallthru
          _
        %s351 = smul.u32 2, %s19
        %s352 = smul.u32 2, %s21
        %p353 = scmp.lt.s32.totalorder %s351, 1
        %s354 = scalar_select %p353, %s351, 1
        %p355 = scmp.lt.s32.totalorder %s352, 1
        %s356 = scalar_select %p355, %s352, 1
        %s357 = smul.addr %s354, 2
        %s358 = sadd.s32 %s356, %s357
        %s359 = smul.addr %s358, 4
        %s360 = scalar_lea.vmem %s0, %s359
        %p361 = pneg %p56
        %p362 = pneg %p53
        %s363 = sand.u32 %s71, 1
        %s364 = sand.u32 %s71, 1
        %s365 = smul.addr %s364, 512
        %s366 = scalar_lea.vmem [#allocation3], %s365
        %p367 = pneg %p84
        %p368 = pneg %p81
        %s369 = smul.u32 2, %s19
        %p370 = scmp.lt.s32.totalorder %s369, 1
        %s371 = scalar_select %p370, %s369, 1
        %s372 = smul.addr %s371, 8
        %s373 = scalar_lea.vmem %s2, %s372
        %p374 = pneg %p110
        %p375 = pneg %p107
        %p376 = pneg %p138
        %p377 = pneg %p135
        %s378 = sand.u32 %s125, 1
        %s379 = sand.u32 %s125, 1
        %s380 = smul.addr %s379, 32
        %s381 = scalar_lea.vmem [#allocation4], %s380
        %s382 = smul.u32 2, %s19
        %s383 = smul.u32 2, %s21
        %p384 = scmp.lt.s32.totalorder %s382, 1
        %s385 = scalar_select %p384, %s382, 1
        %p386 = scmp.lt.s32.totalorder %s383, 1
        %s387 = scalar_select %p386, %s383, 1
        %s388 = smul.addr %s385, 2
        %s389 = sadd.s32 %s387, %s388
        %s390 = smul.addr %s389, 4
        %s391 = scalar_lea.vmem %s0, %s390
        %s392 = smul.u32 2, %s19
        %s393 = smul.u32 2, %s21
        %s394 = smul.u32 32, %s21
        %s395 = smul.u32 4, %s20
        %s396 = smul.u32 2, %s19
        %p397 = scmp.lt.s32.totalorder %s396, 1
        %s398 = scalar_select %p397, %s396, 1
        %s399 = smul.addr %s398, 8
        %s400 = scalar_lea.vmem %s2, %s399
        %s401 = smul.u32 2, %s19
        %s402 = smul.u32 2, %s19
        %s403 = smul.u32 4, %s20
        %p404 = scmp.eq.s32.totalorder %s21, 0
        // Predicated region
        $region56: #{_lambda_.29} parent=50 // pred_check
          %p405 = pneg %p404
        $region57: #{_lambda_.29} parent=50 // pred_check_branch
          %407 = sbr.rel (%p405) target = $region59
        $region58: #{_lambda_.29} parent=50 // pred_region
          %408 = vst [vmem:[#allocation2] sm:$0xff] 0.0
          %409 = vst [vmem:[#allocation2 + $0x8] sm:$0xff] 0.0
          %410 = vst [vmem:[#allocation2 + $0x10] sm:$0xff] 0.0
          %411 = vst [vmem:[#allocation2 + $0x18] sm:$0xff] 0.0
          %412 = vst [vmem:[#allocation2 + $0x20] sm:$0xff] 0.0
          %413 = vst [vmem:[#allocation2 + $0x28] sm:$0xff] 0.0
          %414 = vst [vmem:[#allocation2 + $0x30] sm:$0xff] 0.0
          %415 = vst [vmem:[#allocation2 + $0x38] sm:$0xff] 0.0
        $region59: #{_lambda_.29} parent=50 // pred_fallthru
          _
        %v416 = vld [vmem:[#allocation2] sm:$0xff]
        %v417 = vld [vmem:[#allocation2 + $0x8] sm:$0xff]
        %v418 = vld [vmem:[#allocation2 + $0x10] sm:$0xff]
        %v419 = vld [vmem:[#allocation2 + $0x18] sm:$0xff]
        %v420 = vld [vmem:[#allocation2 + $0x20] sm:$0xff]
        %v421 = vld [vmem:[#allocation2 + $0x28] sm:$0xff]
        %v422 = vld [vmem:[#allocation2 + $0x30] sm:$0xff]
        %v423 = vld [vmem:[#allocation2 + $0x38] sm:$0xff]
        %v424 = vld [vmem:[%s391] sm:$0xff]
        %v425 = vld [vmem:[%s391 + $0x8] sm:$0xff]
        %v426 = vld [vmem:[%s347] sm:$0xff]
        %v427 = vld [vmem:[%s347 + $0x8] sm:$0xff]
        %v428 = vld [vmem:[%s347 + $0x10] sm:$0xff]
        %v429 = vld [vmem:[%s347 + $0x18] sm:$0xff]
        %v430 = vld [vmem:[%s347 + $0x20] sm:$0xff]
        %v431 = vld [vmem:[%s347 + $0x28] sm:$0xff]
        %v432 = vld [vmem:[%s347 + $0x30] sm:$0xff]
        %v433 = vld [vmem:[%s347 + $0x38] sm:$0xff]
        %v434 = vld [vmem:[%s347 + $0x40] sm:$0xff]
        %v435 = vld [vmem:[%s347 + $0x48] sm:$0xff]
        %v436 = vld [vmem:[%s347 + $0x50] sm:$0xff]
        %v437 = vld [vmem:[%s347 + $0x58] sm:$0xff]
        %v438 = vld [vmem:[%s347 + $0x60] sm:$0xff]
        %v439 = vld [vmem:[%s347 + $0x68] sm:$0xff]
        %v440 = vld [vmem:[%s347 + $0x70] sm:$0xff]
        %v441 = vld [vmem:[%s347 + $0x78] sm:$0xff]
        %v442 = vld [vmem:[%s347 + $0x80] sm:$0xff]
        %v443 = vld [vmem:[%s347 + $0x88] sm:$0xff]
        %v444 = vld [vmem:[%s347 + $0x90] sm:$0xff]
        %v445 = vld [vmem:[%s347 + $0x98] sm:$0xff]
        %v446 = vld [vmem:[%s347 + $0xa0] sm:$0xff]
        %v447 = vld [vmem:[%s347 + $0xa8] sm:$0xff]
        %v448 = vld [vmem:[%s347 + $0xb0] sm:$0xff]
        %v449 = vld [vmem:[%s347 + $0xb8] sm:$0xff]
        %v450 = vld [vmem:[%s347 + $0xc0] sm:$0xff]
        %v451 = vld [vmem:[%s347 + $0xc8] sm:$0xff]
        %v452 = vld [vmem:[%s347 + $0xd0] sm:$0xff]
        %v453 = vld [vmem:[%s347 + $0xd8] sm:$0xff]
        %v454 = vld [vmem:[%s347 + $0xe0] sm:$0xff]
        %v455 = vld [vmem:[%s347 + $0xe8] sm:$0xff]
        %v456 = vld [vmem:[%s347 + $0xf0] sm:$0xff]
        %v457 = vld [vmem:[%s347 + $0xf8] sm:$0xff]
        %v458 = vld [vmem:[%s347 + $0x100] sm:$0xff]
        %v459 = vld [vmem:[%s347 + $0x108] sm:$0xff]
        %v460 = vld [vmem:[%s347 + $0x110] sm:$0xff]
        %v461 = vld [vmem:[%s347 + $0x118] sm:$0xff]
        %v462 = vld [vmem:[%s347 + $0x120] sm:$0xff]
        %v463 = vld [vmem:[%s347 + $0x128] sm:$0xff]
        %v464 = vld [vmem:[%s347 + $0x130] sm:$0xff]
        %v465 = vld [vmem:[%s347 + $0x138] sm:$0xff]
        %v466 = vld [vmem:[%s347 + $0x140] sm:$0xff]
        %v467 = vld [vmem:[%s347 + $0x148] sm:$0xff]
        %v468 = vld [vmem:[%s347 + $0x150] sm:$0xff]
        %v469 = vld [vmem:[%s347 + $0x158] sm:$0xff]
        %v470 = vld [vmem:[%s347 + $0x160] sm:$0xff]
        %v471 = vld [vmem:[%s347 + $0x168] sm:$0xff]
        %v472 = vld [vmem:[%s347 + $0x170] sm:$0xff]
        %v473 = vld [vmem:[%s347 + $0x178] sm:$0xff]
        %v474 = vld [vmem:[%s347 + $0x180] sm:$0xff]
        %v475 = vld [vmem:[%s347 + $0x188] sm:$0xff]
        %v476 = vld [vmem:[%s347 + $0x190] sm:$0xff]
        %v477 = vld [vmem:[%s347 + $0x198] sm:$0xff]
        %v478 = vld [vmem:[%s347 + $0x1a0] sm:$0xff]
        %v479 = vld [vmem:[%s347 + $0x1a8] sm:$0xff]
        %v480 = vld [vmem:[%s347 + $0x1b0] sm:$0xff]
        %v481 = vld [vmem:[%s347 + $0x1b8] sm:$0xff]
        %v482 = vld [vmem:[%s347 + $0x1c0] sm:$0xff]
        %v483 = vld [vmem:[%s347 + $0x1c8] sm:$0xff]
        %v484 = vld [vmem:[%s347 + $0x1d0] sm:$0xff]
        %v485 = vld [vmem:[%s347 + $0x1d8] sm:$0xff]
        %v486 = vld [vmem:[%s347 + $0x1e0] sm:$0xff]
        %v487 = vld [vmem:[%s347 + $0x1e8] sm:$0xff]
        %v488 = vld [vmem:[%s347 + $0x1f0] sm:$0xff]
        %v489 = vld [vmem:[%s347 + $0x1f8] sm:$0xff]
        %v492 = vunpack.c.l.b16 %v424
        %v493 = vunpack.c.h.b16 %v424
        %v494 = vunpack.c.l.b16 %v425
        %v495 = vunpack.c.h.b16 %v425
        %v496 = vpack.c.b16 %v494, %v492
        %v497 = vpack.c.b16 %v495, %v493
        %v564 = vunpack.c.l.b16 %v426
        %v565 = vunpack.c.h.b16 %v426
        %v566 = vunpack.c.l.b16 %v427
        %v567 = vunpack.c.h.b16 %v427
        %v568 = vunpack.c.l.b16 %v428
        %v569 = vunpack.c.h.b16 %v428
        %v570 = vunpack.c.l.b16 %v429
        %v571 = vunpack.c.h.b16 %v429
        %v572 = vunpack.c.l.b16 %v430
        %v573 = vunpack.c.h.b16 %v430
        %v574 = vunpack.c.l.b16 %v431
        %v575 = vunpack.c.h.b16 %v431
        %v576 = vunpack.c.l.b16 %v432
        %v577 = vunpack.c.h.b16 %v432
        %v578 = vunpack.c.l.b16 %v433
        %v579 = vunpack.c.h.b16 %v433
        %v580 = vunpack.c.l.b16 %v434
        %v581 = vunpack.c.h.b16 %v434
        %v582 = vunpack.c.l.b16 %v435
        %v583 = vunpack.c.h.b16 %v435
        %v584 = vunpack.c.l.b16 %v436
        %v585 = vunpack.c.h.b16 %v436
        %v586 = vunpack.c.l.b16 %v437
        %v587 = vunpack.c.h.b16 %v437
        %v588 = vunpack.c.l.b16 %v438
        %v589 = vunpack.c.h.b16 %v438
        %v590 = vunpack.c.l.b16 %v439
        %v591 = vunpack.c.h.b16 %v439
        %v592 = vunpack.c.l.b16 %v440
        %v593 = vunpack.c.h.b16 %v440
        %v594 = vunpack.c.l.b16 %v441
        %v595 = vunpack.c.h.b16 %v441
        %v596 = vunpack.c.l.b16 %v442
        %v597 = vunpack.c.h.b16 %v442
        %v598 = vunpack.c.l.b16 %v443
        %v599 = vunpack.c.h.b16 %v443
        %v600 = vunpack.c.l.b16 %v444
        %v601 = vunpack.c.h.b16 %v444
        %v602 = vunpack.c.l.b16 %v445
        %v603 = vunpack.c.h.b16 %v445
        %v604 = vunpack.c.l.b16 %v446
        %v605 = vunpack.c.h.b16 %v446
        %v606 = vunpack.c.l.b16 %v447
        %v607 = vunpack.c.h.b16 %v447
        %v608 = vunpack.c.l.b16 %v448
        %v609 = vunpack.c.h.b16 %v448
        %v610 = vunpack.c.l.b16 %v449
        %v611 = vunpack.c.h.b16 %v449
        %v612 = vunpack.c.l.b16 %v450
        %v613 = vunpack.c.h.b16 %v450
        %v614 = vunpack.c.l.b16 %v451
        %v615 = vunpack.c.h.b16 %v451
        %v616 = vunpack.c.l.b16 %v452
        %v617 = vunpack.c.h.b16 %v452
        %v618 = vunpack.c.l.b16 %v453
        %v619 = vunpack.c.h.b16 %v453
        %v620 = vunpack.c.l.b16 %v454
        %v621 = vunpack.c.h.b16 %v454
        %v622 = vunpack.c.l.b16 %v455
        %v623 = vunpack.c.h.b16 %v455
        %v624 = vunpack.c.l.b16 %v456
        %v625 = vunpack.c.h.b16 %v456
        %v626 = vunpack.c.l.b16 %v457
        %v627 = vunpack.c.h.b16 %v457
        %v628 = vunpack.c.l.b16 %v458
        %v629 = vunpack.c.h.b16 %v458
        %v630 = vunpack.c.l.b16 %v459
        %v631 = vunpack.c.h.b16 %v459
        %v632 = vunpack.c.l.b16 %v460
        %v633 = vunpack.c.h.b16 %v460
        %v634 = vunpack.c.l.b16 %v461
        %v635 = vunpack.c.h.b16 %v461
        %v636 = vunpack.c.l.b16 %v462
        %v637 = vunpack.c.h.b16 %v462
        %v638 = vunpack.c.l.b16 %v463
        %v639 = vunpack.c.h.b16 %v463
        %v640 = vunpack.c.l.b16 %v464
        %v641 = vunpack.c.h.b16 %v464
        %v642 = vunpack.c.l.b16 %v465
        %v643 = vunpack.c.h.b16 %v465
        %v644 = vunpack.c.l.b16 %v466
        %v645 = vunpack.c.h.b16 %v466
        %v646 = vunpack.c.l.b16 %v467
        %v647 = vunpack.c.h.b16 %v467
        %v648 = vunpack.c.l.b16 %v468
        %v649 = vunpack.c.h.b16 %v468
        %v650 = vunpack.c.l.b16 %v469
        %v651 = vunpack.c.h.b16 %v469
        %v652 = vunpack.c.l.b16 %v470
        %v653 = vunpack.c.h.b16 %v470
        %v654 = vunpack.c.l.b16 %v471
        %v655 = vunpack.c.h.b16 %v471
        %v656 = vunpack.c.l.b16 %v472
        %v657 = vunpack.c.h.b16 %v472
        %v658 = vunpack.c.l.b16 %v473
        %v659 = vunpack.c.h.b16 %v473
        %v660 = vunpack.c.l.b16 %v474
        %v661 = vunpack.c.h.b16 %v474
        %v662 = vunpack.c.l.b16 %v475
        %v663 = vunpack.c.h.b16 %v475
        %v664 = vunpack.c.l.b16 %v476
        %v665 = vunpack.c.h.b16 %v476
        %v666 = vunpack.c.l.b16 %v477
        %v667 = vunpack.c.h.b16 %v477
        %v668 = vunpack.c.l.b16 %v478
        %v669 = vunpack.c.h.b16 %v478
        %v670 = vunpack.c.l.b16 %v479
        %v671 = vunpack.c.h.b16 %v479
        %v672 = vunpack.c.l.b16 %v480
        %v673 = vunpack.c.h.b16 %v480
        %v674 = vunpack.c.l.b16 %v481
        %v675 = vunpack.c.h.b16 %v481
        %v676 = vunpack.c.l.b16 %v482
        %v677 = vunpack.c.h.b16 %v482
        %v678 = vunpack.c.l.b16 %v483
        %v679 = vunpack.c.h.b16 %v483
        %v680 = vunpack.c.l.b16 %v484
        %v681 = vunpack.c.h.b16 %v484
        %v682 = vunpack.c.l.b16 %v485
        %v683 = vunpack.c.h.b16 %v485
        %v684 = vunpack.c.l.b16 %v486
        %v685 = vunpack.c.h.b16 %v486
        %v686 = vunpack.c.l.b16 %v487
        %v687 = vunpack.c.h.b16 %v487
        %v688 = vunpack.c.l.b16 %v488
        %v689 = vunpack.c.h.b16 %v488
        %v690 = vunpack.c.l.b16 %v489
        %v691 = vunpack.c.h.b16 %v489
        %v692 = vpack.c.b16 %v568, %v564
        %v693 = vpack.c.b16 %v569, %v565
        %v694 = vpack.c.b16 %v570, %v566
        %v695 = vpack.c.b16 %v571, %v567
        %v696 = vpack.c.b16 %v576, %v572
        %v697 = vpack.c.b16 %v577, %v573
        %v698 = vpack.c.b16 %v578, %v574
        %v699 = vpack.c.b16 %v579, %v575
        %v700 = vpack.c.b16 %v584, %v580
        %v701 = vpack.c.b16 %v585, %v581
        %v702 = vpack.c.b16 %v586, %v582
        %v703 = vpack.c.b16 %v587, %v583
        %v704 = vpack.c.b16 %v592, %v588
        %v705 = vpack.c.b16 %v593, %v589
        %v706 = vpack.c.b16 %v594, %v590
        %v707 = vpack.c.b16 %v595, %v591
        %v708 = vpack.c.b16 %v600, %v596
        %v709 = vpack.c.b16 %v601, %v597
        %v710 = vpack.c.b16 %v602, %v598
        %v711 = vpack.c.b16 %v603, %v599
        %v712 = vpack.c.b16 %v608, %v604
        %v713 = vpack.c.b16 %v609, %v605
        %v714 = vpack.c.b16 %v610, %v606
        %v715 = vpack.c.b16 %v611, %v607
        %v716 = vpack.c.b16 %v616, %v612
        %v717 = vpack.c.b16 %v617, %v613
        %v718 = vpack.c.b16 %v618, %v614
        %v719 = vpack.c.b16 %v619, %v615
        %v720 = vpack.c.b16 %v624, %v620
        %v721 = vpack.c.b16 %v625, %v621
        %v722 = vpack.c.b16 %v626, %v622
        %v723 = vpack.c.b16 %v627, %v623
        %v724 = vpack.c.b16 %v632, %v628
        %v725 = vpack.c.b16 %v633, %v629
        %v726 = vpack.c.b16 %v634, %v630
        %v727 = vpack.c.b16 %v635, %v631
        %v728 = vpack.c.b16 %v640, %v636
        %v729 = vpack.c.b16 %v641, %v637
        %v730 = vpack.c.b16 %v642, %v638
        %v731 = vpack.c.b16 %v643, %v639
        %v732 = vpack.c.b16 %v648, %v644
        %v733 = vpack.c.b16 %v649, %v645
        %v734 = vpack.c.b16 %v650, %v646
        %v735 = vpack.c.b16 %v651, %v647
        %v736 = vpack.c.b16 %v656, %v652
        %v737 = vpack.c.b16 %v657, %v653
        %v738 = vpack.c.b16 %v658, %v654
        %v739 = vpack.c.b16 %v659, %v655
        %v740 = vpack.c.b16 %v664, %v660
        %v741 = vpack.c.b16 %v665, %v661
        %v742 = vpack.c.b16 %v666, %v662
        %v743 = vpack.c.b16 %v667, %v663
        %v744 = vpack.c.b16 %v672, %v668
        %v745 = vpack.c.b16 %v673, %v669
        %v746 = vpack.c.b16 %v674, %v670
        %v747 = vpack.c.b16 %v675, %v671
        %v748 = vpack.c.b16 %v680, %v676
        %v749 = vpack.c.b16 %v681, %v677
        %v750 = vpack.c.b16 %v682, %v678
        %v751 = vpack.c.b16 %v683, %v679
        %v752 = vpack.c.b16 %v688, %v684
        %v753 = vpack.c.b16 %v689, %v685
        %v754 = vpack.c.b16 %v690, %v686
        %v755 = vpack.c.b16 %v691, %v687
        %820 = vmatpush.bf16.msra.mxu0 %v720
        %821 = vmatpush.bf16.msra.mxu0 %v716
        %822 = vmatpush.bf16.msra.mxu0 %v712
        %823 = vmatpush.bf16.msra.mxu0 %v708
        %824 = vmatpush.bf16.msra.mxu0 %v704
        %825 = vmatpush.bf16.msra.mxu0 %v700
        %826 = vmatpush.bf16.msra.mxu0 %v696
        %827 = vmatpush.bf16.msra.mxu0 %v692
        %828 = vmatmul.bf16.gmra.mxu0 %v496
        %v829 = vpop.f32.mrf.mxu0
        %v830 = vadd.f32 0.0, %v829
        %v831 = vpop.f32.mrf.mxu0
        %v832 = vadd.f32 0.0, %v831
        %833 = vdwg.mxu0
        %834 = vmatpush.bf16.msra.mxu0 %v752
        %835 = vmatpush.bf16.msra.mxu0 %v748
        %836 = vmatpush.bf16.msra.mxu0 %v744
        %837 = vmatpush.bf16.msra.mxu0 %v740
        %838 = vmatpush.bf16.msra.mxu0 %v736
        %839 = vmatpush.bf16.msra.mxu0 %v732
        %840 = vmatpush.bf16.msra.mxu0 %v728
        %841 = vmatpush.bf16.msra.mxu0 %v724
        %842 = vmatmul.bf16.gmra.mxu0 %v497
        %v843 = vpop.f32.mrf.mxu0
        %v844 = vadd.f32 %v830, %v843
        %v845 = vpop.f32.mrf.mxu0
        %v846 = vadd.f32 %v832, %v845
        %847 = vdwg.mxu0
        %848 = vmatpush.bf16.msra.mxu0 %v721
        %849 = vmatpush.bf16.msra.mxu0 %v717
        %850 = vmatpush.bf16.msra.mxu0 %v713
        %851 = vmatpush.bf16.msra.mxu0 %v709
        %852 = vmatpush.bf16.msra.mxu0 %v705
        %853 = vmatpush.bf16.msra.mxu0 %v701
        %854 = vmatpush.bf16.msra.mxu0 %v697
        %855 = vmatpush.bf16.msra.mxu0 %v693
        %856 = vmatmul.bf16.gmra.mxu0 %v496
        %v857 = vpop.f32.mrf.mxu0
        %v858 = vadd.f32 0.0, %v857
        %v859 = vpop.f32.mrf.mxu0
        %v860 = vadd.f32 0.0, %v859
        %861 = vdwg.mxu0
        %862 = vmatpush.bf16.msra.mxu0 %v753
        %863 = vmatpush.bf16.msra.mxu0 %v749
        %864 = vmatpush.bf16.msra.mxu0 %v745
        %865 = vmatpush.bf16.msra.mxu0 %v741
        %866 = vmatpush.bf16.msra.mxu0 %v737
        %867 = vmatpush.bf16.msra.mxu0 %v733
        %868 = vmatpush.bf16.msra.mxu0 %v729
        %869 = vmatpush.bf16.msra.mxu0 %v725
        %870 = vmatmul.bf16.gmra.mxu0 %v497
        %v871 = vpop.f32.mrf.mxu0
        %v872 = vadd.f32 %v858, %v871
        %v873 = vpop.f32.mrf.mxu0
        %v874 = vadd.f32 %v860, %v873
        %875 = vdwg.mxu0
        %876 = vmatpush.bf16.msra.mxu0 %v722
        %877 = vmatpush.bf16.msra.mxu0 %v718
        %878 = vmatpush.bf16.msra.mxu0 %v714
        %879 = vmatpush.bf16.msra.mxu0 %v710
        %880 = vmatpush.bf16.msra.mxu0 %v706
        %881 = vmatpush.bf16.msra.mxu0 %v702
        %882 = vmatpush.bf16.msra.mxu0 %v698
        %883 = vmatpush.bf16.msra.mxu0 %v694
        %884 = vmatmul.bf16.gmra.mxu0 %v496
        %v885 = vpop.f32.mrf.mxu0
        %v886 = vadd.f32 0.0, %v885
        %v887 = vpop.f32.mrf.mxu0
        %v888 = vadd.f32 0.0, %v887
        %889 = vdwg.mxu0
        %890 = vmatpush.bf16.msra.mxu0 %v754
        %891 = vmatpush.bf16.msra.mxu0 %v750
        %892 = vmatpush.bf16.msra.mxu0 %v746
        %893 = vmatpush.bf16.msra.mxu0 %v742
        %894 = vmatpush.bf16.msra.mxu0 %v738
        %895 = vmatpush.bf16.msra.mxu0 %v734
        %896 = vmatpush.bf16.msra.mxu0 %v730
        %897 = vmatpush.bf16.msra.mxu0 %v726
        %898 = vmatmul.bf16.gmra.mxu0 %v497
        %v899 = vpop.f32.mrf.mxu0
        %v900 = vadd.f32 %v886, %v899
        %v901 = vpop.f32.mrf.mxu0
        %v902 = vadd.f32 %v888, %v901
        %903 = vdwg.mxu0
        %904 = vmatpush.bf16.msra.mxu0 %v723
        %905 = vmatpush.bf16.msra.mxu0 %v719
        %906 = vmatpush.bf16.msra.mxu0 %v715
        %907 = vmatpush.bf16.msra.mxu0 %v711
        %908 = vmatpush.bf16.msra.mxu0 %v707
        %909 = vmatpush.bf16.msra.mxu0 %v703
        %910 = vmatpush.bf16.msra.mxu0 %v699
        %911 = vmatpush.bf16.msra.mxu0 %v695
        %912 = vmatmul.bf16.gmra.mxu0 %v496
        %v913 = vpop.f32.mrf.mxu0
        %v914 = vadd.f32 0.0, %v913
        %v915 = vpop.f32.mrf.mxu0
        %v916 = vadd.f32 0.0, %v915
        %917 = vdwg.mxu0
        %918 = vmatpush.bf16.msra.mxu0 %v755
        %919 = vmatpush.bf16.msra.mxu0 %v751
        %920 = vmatpush.bf16.msra.mxu0 %v747
        %921 = vmatpush.bf16.msra.mxu0 %v743
        %922 = vmatpush.bf16.msra.mxu0 %v739
        %923 = vmatpush.bf16.msra.mxu0 %v735
        %924 = vmatpush.bf16.msra.mxu0 %v731
        %925 = vmatpush.bf16.msra.mxu0 %v727
        %926 = vmatmul.bf16.gmra.mxu0 %v497
        %v927 = vpop.f32.mrf.mxu0
        %v928 = vadd.f32 %v914, %v927
        %v929 = vpop.f32.mrf.mxu0
        %v930 = vadd.f32 %v916, %v929
        %931 = vdwg.mxu0
        %v932 = vadd.f32 %v416, %v844
        %v933 = vadd.f32 %v417, %v872
        %v934 = vadd.f32 %v418, %v900
        %v935 = vadd.f32 %v419, %v928
        %v936 = vadd.f32 %v420, %v846
        %v937 = vadd.f32 %v421, %v874
        %v938 = vadd.f32 %v422, %v902
        %v939 = vadd.f32 %v423, %v930
        %940 = vst [vmem:[#allocation2] sm:$0xff] %v932
        %941 = vst [vmem:[#allocation2 + $0x8] sm:$0xff] %v933
        %942 = vst [vmem:[#allocation2 + $0x10] sm:$0xff] %v934
        %943 = vst [vmem:[#allocation2 + $0x18] sm:$0xff] %v935
        %944 = vst [vmem:[#allocation2 + $0x20] sm:$0xff] %v936
        %945 = vst [vmem:[#allocation2 + $0x28] sm:$0xff] %v937
        %946 = vst [vmem:[#allocation2 + $0x30] sm:$0xff] %v938
        %947 = vst [vmem:[#allocation2 + $0x38] sm:$0xff] %v939
        // Predicated region
        $region60: #{_lambda_.29} parent=50 // pred_check
          %p948 = pneg %p404
        $region61: #{_lambda_.29} parent=50 // pred_check_branch
          %950 = sbr.rel (%p948) target = $region63
        $region62: #{_lambda_.29} parent=50 // pred_region
          %v951 = vld [vmem:[#allocation2] sm:$0xff]
          %v952 = vld [vmem:[#allocation2 + $0x8] sm:$0xff]
          %v953 = vld [vmem:[#allocation2 + $0x10] sm:$0xff]
          %v954 = vld [vmem:[#allocation2 + $0x18] sm:$0xff]
          %v955 = vld [vmem:[#allocation2 + $0x20] sm:$0xff]
          %v956 = vld [vmem:[#allocation2 + $0x28] sm:$0xff]
          %v957 = vld [vmem:[#allocation2 + $0x30] sm:$0xff]
          %v958 = vld [vmem:[#allocation2 + $0x38] sm:$0xff]
          %v959 = vld [vmem:[%s400] sm:$0xff]
          %v960 = vld [vmem:[%s400 + $0x8] sm:$0xff]
          %962 = vset.pattern.permute.xlu0 0
          %963 = vperm.xlu0 %962, %v959
          %v964 = vpop.permute.xlu0 %963
          %967 = vset.pattern.permute.xlu0 0
          %968 = vperm.xlu0 %967, %v960
          %v969 = vpop.permute.xlu0 %968
          %v971 = vadd.f32 %v951, %v964
          %v972 = vadd.f32 %v952, %v964
          %v973 = vadd.f32 %v953, %v964
          %v974 = vadd.f32 %v954, %v964
          %v975 = vadd.f32 %v955, %v969
          %v976 = vadd.f32 %v956, %v969
          %v977 = vadd.f32 %v957, %v969
          %v978 = vadd.f32 %v958, %v969
          %v979 = vtanh.pop %v971
          %v980 = vtanh.pop %v972
          %v981 = vtanh.pop %v973
          %v982 = vtanh.pop %v974
          %v983 = vtanh.pop %v975
          %v984 = vtanh.pop %v976
          %v985 = vtanh.pop %v977
          %v986 = vtanh.pop %v978
          %v987 = vpack.c.bf16 %v980, %v979
          %v988 = vpack.c.bf16 %v982, %v981
          %v989 = vpack.c.bf16 %v984, %v983
          %v990 = vpack.c.bf16 %v986, %v985
          %991 = vst [vmem:[%s381] sm:$0xff] %v987
          %992 = vst [vmem:[%s381 + $0x8] sm:$0xff] %v988
          %993 = vst [vmem:[%s381 + $0x10] sm:$0xff] %v989
          %994 = vst [vmem:[%s381 + $0x18] sm:$0xff] %v990
        $region63: #{_lambda_.29} parent=50 // pred_fallthru
          _
        %s995 = sand.u32 %s125, 1
        %s996 = sand.u32 %s125, 1
        %s997 = smul.addr %s996, 32
        %s998 = scalar_lea.vmem [#allocation4], %s997
        // Predicated region
        $region64: #{_lambda_.29} parent=50 // pred_check
          %p999 = pneg %p135
        $region65: #{_lambda_.29} parent=50 // pred_check_branch
          %1001 = sbr.rel (%p999) target = $region67
        $region66: #{_lambda_.29} parent=50 // pred_region
          %s1002 = smul.u32 2, %s19
          %s1003 = smul.u32 4, %s20
          %s1004 = smul.addr %s1002, 8
          %s1005 = sadd.s32 %s1003, %s1004
          %s1006 = smul.addr %s1005, 4
          %s1007 = scalar_lea.vmem %s3, %s1006
          // Predicated region
          $region68: #{_lambda_.29} parent=66 // pred_check
            _
          $region69: #{_lambda_.29} parent=66 // pred_check_branch
            %1009 = sbr.rel (0) target = $region71
          $region70: #{_lambda_.29} parent=66 // pred_region
            // Predicated region
            $region72: #{_lambda_.29} parent=70 // pred_check
              _
            $region73: #{_lambda_.29} parent=70 // pred_check_branch
              %1011 = sbr.rel (0) target = $region75
            $region74: #{_lambda_.29} parent=70 // pred_region
              loop: start=0, step=1, limit=1
              $region76: #{_lambda_.29} parent=74 // loop_pre_header
                _
              $region77: #{_lambda_.29} parent=74 // loop_header
                %s1013 = sphi 0, %s1017
                %p1014 = scmp.ge.s32.totalorder %s1013, 1
                %s1018 = sphi %s998, %s998
                %s1019 = sphi %s1007, %s1007
              $region78: #{_lambda_.29} parent=74 // loop_header_branch
                %1016 = sbr.rel (%p1014) target = $region82
              $region79: #{_lambda_.29} parent=74 // loop_body
                %v1020 = vld [vmem:[%s1018] sm:$0xff]
                %1021 = vst [vmem:[%s1019] sm:$0xff] %v1020
                %v1022 = vld [vmem:[%s1018 + $0x8] sm:$0xff]
                %1023 = vst [vmem:[%s1019 + $0x8] sm:$0xff] %v1022
                %v1024 = vld [vmem:[%s1018 + $0x10] sm:$0xff]
                %1025 = vst [vmem:[%s1019 + $0x20] sm:$0xff] %v1024
                %v1026 = vld [vmem:[%s1018 + $0x18] sm:$0xff]
                %1027 = vst [vmem:[%s1019 + $0x28] sm:$0xff] %v1026
              $region80: #{_lambda_.29} parent=74 // loop_footer
                %s1017 = sadd.s32 1, %s1013
              $region81: #{_lambda_.29} parent=74 // loop_footer_branch
                %1012 = sbr.rel target = $region77
              $region82: #{_lambda_.29} parent=74 // loop_exit
                _
            $region75: #{_lambda_.29} parent=70 // pred_fallthru
              _
            // Predicated region
            $region83: #{_lambda_.29} parent=70 // pred_check
              _
            $region84: #{_lambda_.29} parent=70 // pred_check_branch
              %1029 = sbr.rel target = $region86
            $region85: #{_lambda_.29} parent=70 // pred_region
              _
            $region86: #{_lambda_.29} parent=70 // pred_fallthru
              _
          $region71: #{_lambda_.29} parent=66 // pred_fallthru
            _
          %1030 = vnop
        $region67: #{_lambda_.29} parent=50 // pred_fallthru
          _
      $region51: #{_lambda_.29} parent=5 // pred_fallthru
        _
      %p1031 = scmp.le.s32.totalorder 2, %s9
      // Predicated region
      $region87: #{_lambda_.29} parent=5 // pred_check
        %p1032 = pneg %p1031
      $region88: #{_lambda_.29} parent=5 // pred_check_branch
        %1034 = sbr.rel (%p1032) target = $region90
      $region89: #{_lambda_.29} parent=5 // pred_region
        %s1035 = ssub.s32 %s9, 2
        // Predicated region
        $region91: #{_lambda_.29} parent=89 // pred_check
          %p1036 = pneg %p141
        $region92: #{_lambda_.29} parent=89 // pred_check_branch
          %1038 = sbr.rel (%p1036) target = $region94
        $region93: #{_lambda_.29} parent=89 // pred_region
          %s1039 = sand.u32 %s126, 1
          %s1040 = sand.u32 %s126, 1
          %s1041 = smul.addr %s1040, 32
          %s1042 = scalar_lea.vmem [#allocation4], %s1041
        $region94: #{_lambda_.29} parent=89 // pred_fallthru
          _
      $region90: #{_lambda_.29} parent=5 // pred_fallthru
        _
    $region6: #{_lambda_.29} parent=1 // loop_footer
      %s13 = sadd.s32 1, %s9
    $region7: #{_lambda_.29} parent=1 // loop_footer_branch
      %8 = sbr.rel target = $region3
    $region8: #{_lambda_.29} parent=1 // loop_exit
      _

</llo_original>
